<compile_context>
chip_gen: v7x
topology: tpu7x:2x2x1
jax: 0.10.0
libtpu: 0.0.40
codegen_flags: <defaults>
</compile_context>

<pallas_src>
import jax
import jax.numpy as jnp
from jax.experimental import pallas as pl
from jax.experimental.pallas import tpu as pltpu


# ----------------------------------------------------------------------------
# 1. Linear:  out = z @ W + b   (W already permuted to NHWC column order, bf16)
# ----------------------------------------------------------------------------
def _linear_kernel(z_ref, w_ref, b_ref, o_ref):
    z = z_ref[...].astype(jnp.bfloat16)
    o_ref[...] = (
        jnp.dot(z, w_ref[...], preferred_element_type=jnp.float32) + b_ref[...]
    )


def linear_nhwc(z, w_bf16, b):
    B, L = z.shape
    F = w_bf16.shape[1]
    FT = min(F, 512)
    assert F % FT == 0
    return pl.pallas_call(
        _linear_kernel,
        out_shape=jax.ShapeDtypeStruct((B, F), jnp.float32),
        grid=(F // FT,),
        in_specs=[
            pl.BlockSpec((B, L), lambda i: (0, 0)),
            pl.BlockSpec((L, FT), lambda i: (0, i)),
            pl.BlockSpec((1, FT), lambda i: (0, i)),
        ],
        out_specs=pl.BlockSpec((B, FT), lambda i: (0, i)),
        compiler_params=pltpu.CompilerParams(dimension_semantics=("parallel",)),
    )(z, w_bf16, b.reshape(1, F))


# ----------------------------------------------------------------------------
# 2. Per-channel batch statistics (sum, sum of squares) for the first BN.
#    Row-tiled with an accumulated (2, C) output block.
# ----------------------------------------------------------------------------
def _stats_kernel(x_ref, o_ref):
    x = x_ref[...]
    part = jnp.concatenate(
        [jnp.sum(x, axis=0, keepdims=True),
         jnp.sum(x * x, axis=0, keepdims=True)], axis=0)

    @pl.when(pl.program_id(0) == 0)
    def _():
        o_ref[...] = jnp.zeros_like(o_ref)

    o_ref[...] += part


def channel_stats(x2d):
    R, C = x2d.shape
    RT = min(R, 512)
    assert R % RT == 0
    return pl.pallas_call(
        _stats_kernel,
        out_shape=jax.ShapeDtypeStruct((2, C), jnp.float32),
        grid=(R // RT,),
        in_specs=[pl.BlockSpec((RT, C), lambda i: (i, 0))],
        out_specs=pl.BlockSpec((2, C), lambda i: (0, 0)),
        compiler_params=pltpu.CompilerParams(dimension_semantics=("arbitrary",)),
    )(x2d)


# ----------------------------------------------------------------------------
# Parity-collapsed weights for fused (nearest 2x upsample -> 3x3 same conv).
# out[2i+a, 2j+b] only sees a 2x2 neighbourhood of the source image; the 3x3
# weights collapse accordingly (done once on the tiny weight tensor).
# ----------------------------------------------------------------------------
def _parity_weights(w):
    def collapse(t):  # t: (3, ...) tap axis -> (2 parity, 2 tap, ...)
        p0 = jnp.stack([t[0], t[1] + t[2]], axis=0)   # offsets (-1, 0)
        p1 = jnp.stack([t[0] + t[1], t[2]], axis=0)   # offsets (0, +1)
        return jnp.stack([p0, p1], axis=0)

    cin, cout = w.shape[2], w.shape[3]
    wr = collapse(w)                               # (a, p, 3dx, cin, cout)
    wc = collapse(jnp.moveaxis(wr, 2, 0))          # (b, q, a, p, cin, cout)
    wp = jnp.transpose(wc, (2, 0, 3, 1, 4, 5))     # (a, b, p, q, cin, cout)
    return wp.reshape(2, 2, 4 * cin, cout).astype(jnp.bfloat16)


# ----------------------------------------------------------------------------
# 3/4. Fused BN (batch stats) + optional LeakyReLU + 2x upsample + 3x3 conv.
#      Also accumulates per-channel sum/sumsq of its own output (next BN).
# ----------------------------------------------------------------------------
def _make_upconv_kernel(h, w, cin, cout, eps, slope, count):
    inv_n = 1.0 / float(count)

    def kernel(stats_ref, g_ref, be_ref, x_ref, wp_ref, b_ref,
               o_ref, ostats_ref, pad_ref):
        # fused BatchNorm (biased batch variance) + optional LeakyReLU, in f32
        mean = stats_ref[0:1, :] * inv_n
        var = jnp.maximum(stats_ref[1:2, :] * inv_n - mean * mean, 0.0)
        scale = g_ref[...] * jax.lax.rsqrt(var + eps)
        shift = be_ref[...] - mean * scale
        y = x_ref[0] * scale.reshape(1, 1, cin) + shift.reshape(1, 1, cin)
        if slope is not None:
            y = jnp.where(y >= 0, y, slope * y)

        # 'same' padding fused into a VMEM halo scratch (no wrapper jnp.pad)
        pad_ref[...] = jnp.zeros_like(pad_ref)
        pad_ref[1:h + 1, 1:w + 1, :] = y

        # 9 shifted source patches, shared by the 4 output parities
        pats = [[pad_ref[r:r + h, c:c + w, :].reshape(h * w, cin)
                 for c in range(3)] for r in range(3)]

        bias = b_ref[...]
        s1 = jnp.zeros((1, cout), jnp.float32)
        s2 = jnp.zeros((1, cout), jnp.float32)
        for pa in range(2):
            for pb in range(2):
                # one K=4*cin matmul per parity (bf16 operands, f32 acc)
                op = jnp.concatenate(
                    [pats[pa][pb], pats[pa][pb + 1],
                     pats[pa + 1][pb], pats[pa + 1][pb + 1]],
                    axis=-1).astype(jnp.bfloat16)
                res = jnp.dot(op, wp_ref[pa, pb],
                              preferred_element_type=jnp.float32) + bias
                o_ref[0, pa, pb] = res.reshape(h, w, cout)
                s1 = s1 + jnp.sum(res, axis=0, keepdims=True)
                s2 = s2 + jnp.sum(res * res, axis=0, keepdims=True)

        # per-channel stats of this conv's output, accumulated over the batch
        @pl.when(pl.program_id(0) == 0)
        def _():
            ostats_ref[...] = jnp.zeros_like(ostats_ref)

        ostats_ref[...] += jnp.concatenate([s1, s2], axis=0)

    return kernel


def upsample_conv(x_nhwc, in_stats, gamma, beta, wpar_bf16, bias,
                  *, eps, slope, count):
    B, h, w, Cin = x_nhwc.shape
    Cout = wpar_bf16.shape[-1]
    kernel = _make_upconv_kernel(h, w, Cin, Cout, float(eps), slope, count)
    out, ostats = pl.pallas_call(
        kernel,
        out_shape=(
            jax.ShapeDtypeStruct((B, 2, 2, h, w, Cout), jnp.float32),
            jax.ShapeDtypeStruct((2, Cout), jnp.float32),
        ),
        grid=(B,),
        in_specs=[
            pl.BlockSpec((2, Cin), lambda i: (0, 0)),
            pl.BlockSpec((1, Cin), lambda i: (0, 0)),
            pl.BlockSpec((1, Cin), lambda i: (0, 0)),
            pl.BlockSpec((1, h, w, Cin), lambda i: (i, 0, 0, 0)),
            pl.BlockSpec((2, 2, 4 * Cin, Cout), lambda i: (0, 0, 0, 0)),
            pl.BlockSpec((1, Cout), lambda i: (0, 0)),
        ],
        out_specs=(
            pl.BlockSpec((1, 2, 2, h, w, Cout), lambda i: (i, 0, 0, 0, 0, 0)),
            pl.BlockSpec((2, Cout), lambda i: (0, 0)),
        ),
        scratch_shapes=[pltpu.VMEM((h + 2, w + 2, Cin), jnp.float32)],
        compiler_params=pltpu.CompilerParams(
            dimension_semantics=("arbitrary",)),  # stats block is revisited
    )(in_stats, gamma.reshape(1, Cin), beta.reshape(1, Cin),
      x_nhwc, wpar_bf16, bias.reshape(1, Cout))
    # interleave the parity blocks back to NHWC at 2x resolution (tiny XLA op)
    out = out.transpose(0, 3, 1, 4, 2, 5).reshape(B, 2 * h, 2 * w, Cout)
    return out, ostats


# ----------------------------------------------------------------------------
# 5. Fused BN + LeakyReLU + 3x3 'same' conv + tanh (lane-dense Cout=128).
# ----------------------------------------------------------------------------
def _make_conv3_kernel(h, w, cin, cout, eps, slope, count, tanh):
    inv_n = 1.0 / float(count)

    def kernel(stats_ref, g_ref, be_ref, x_ref, w_ref, b_ref, o_ref, pad_ref):
        mean = stats_ref[0:1, :] * inv_n
        var = jnp.maximum(stats_ref[1:2, :] * inv_n - mean * mean, 0.0)
        scale = g_ref[...] * jax.lax.rsqrt(var + eps)
        shift = be_ref[...] - mean * scale
        y = x_ref[0] * scale.reshape(1, 1, cin) + shift.reshape(1, 1, cin)
        if slope is not None:
            y = jnp.where(y >= 0, y, slope * y)

        pad_ref[...] = jnp.zeros_like(pad_ref)
        pad_ref[1:h + 1, 1:w + 1, :] = y

        # all 9 taps concatenated -> one (h*w, 9*cin) x (9*cin, cout) matmul
        op = jnp.concatenate(
            [pad_ref[dy:dy + h, dx:dx + w, :].reshape(h * w, cin)
             for dy in range(3) for dx in range(3)],
            axis=-1).astype(jnp.bfloat16)
        res = jnp.dot(op, w_ref[...], preferred_element_type=jnp.float32)
        res = res + b_ref[...]
        if tanh:
            res = jnp.tanh(res)
        o_ref[0] = res.reshape(h, w, cout)

    return kernel


def conv3x3_fused(x_nhwc, in_stats, gamma, beta, w9_bf16, bias,
                  *, eps, slope, count, tanh):
    B, H, W, Cin = x_nhwc.shape
    Cout = w9_bf16.shape[-1]
    kernel = _make_conv3_kernel(H, W, Cin, Cout, float(eps), slope, count, tanh)
    return pl.pallas_call(
        kernel,
        out_shape=jax.ShapeDtypeStruct((B, H, W, Cout), jnp.float32),
        grid=(B,),
        in_specs=[
            pl.BlockSpec((2, Cin), lambda i: (0, 0)),
            pl.BlockSpec((1, Cin), lambda i: (0, 0)),
            pl.BlockSpec((1, Cin), lambda i: (0, 0)),
            pl.BlockSpec((1, H, W, Cin), lambda i: (i, 0, 0, 0)),
            pl.BlockSpec((9 * Cin, Cout), lambda i: (0, 0)),
            pl.BlockSpec((1, Cout), lambda i: (0, 0)),
        ],
        out_specs=pl.BlockSpec((1, H, W, Cout), lambda i: (i, 0, 0, 0)),
        scratch_shapes=[pltpu.VMEM((H + 2, W + 2, Cin), jnp.float32)],
        compiler_params=pltpu.CompilerParams(dimension_semantics=("parallel",)),
    )(in_stats, gamma.reshape(1, Cin), beta.reshape(1, Cin),
      x_nhwc, w9_bf16, bias.reshape(1, Cout))


# ----------------------------------------------------------------------------
# Generator parameters (deterministic synthetic init, PyTorch-like layouts).
# ----------------------------------------------------------------------------
def init_generator_params(key, img_size, latent_dim, channels):
    s = img_size // 4
    feat = 128 * s * s
    ks = jax.random.split(key, 8)
    scale = 0.05
    return {
        "l1_w": jax.random.normal(ks[0], (latent_dim, feat), jnp.float32) * scale,
        "l1_b": jax.random.normal(ks[1], (feat,), jnp.float32) * scale,
        "bn0_g": jnp.ones((128,), jnp.float32),
        "bn0_b": jnp.zeros((128,), jnp.float32),
        "conv1_w": jax.random.normal(ks[2], (3, 3, 128, 128), jnp.float32) * scale,
        "conv1_b": jax.random.normal(ks[3], (128,), jnp.float32) * scale,
        "bn1_g": jnp.ones((128,), jnp.float32),
        "bn1_b": jnp.zeros((128,), jnp.float32),
        "conv2_w": jax.random.normal(ks[4], (3, 3, 128, 64), jnp.float32) * scale,
        "conv2_b": jax.random.normal(ks[5], (64,), jnp.float32) * scale,
        "bn2_g": jnp.ones((64,), jnp.float32),
        "bn2_b": jnp.zeros((64,), jnp.float32),
        "conv3_w": jax.random.normal(ks[6], (3, 3, 64, channels), jnp.float32) * scale,
        "conv3_b": jax.random.normal(ks[7], (channels,), jnp.float32) * scale,
    }


# ----------------------------------------------------------------------------
# Forward pass.
# ----------------------------------------------------------------------------
def generator_forward(params, z, img_size, channels):
    s = img_size // 4
    B = z.shape[0]

    # ---- one-time parameter massaging (all tiny, weight-side only) ---------
    # Permute linear columns so its output is already NHWC (no act. transpose).
    l1_w = params["l1_w"].reshape(-1, 128, s, s).transpose(0, 2, 3, 1)
    l1_w = l1_w.reshape(-1, s * s * 128).astype(jnp.bfloat16)
    l1_b = params["l1_b"].reshape(128, s, s).transpose(1, 2, 0).reshape(s * s * 128)
    wpar1 = _parity_weights(params["conv1_w"])                 # (2,2,512,128)
    wpar2 = _parity_weights(params["conv2_w"])                 # (2,2,512, 64)
    cpad = 128                                                 # lane-dense Cout
    w3 = jnp.pad(params["conv3_w"], ((0, 0), (0, 0), (0, 0), (0, cpad - channels)))
    w3 = w3.reshape(9 * w3.shape[2], cpad).astype(jnp.bfloat16)
    b3 = jnp.pad(params["conv3_b"], ((0, cpad - channels),))

    # ---- l1: Linear(latent_dim, 128*s*s), output directly in NHWC order ----
    out = linear_nhwc(z, l1_w, l1_b).reshape(B, s, s, 128)
    stats0 = channel_stats(out.reshape(B * s * s, 128))        # BN(128) stats

    # ---- BN(128) -> Upsample -> Conv(128,128,3,p=1)  (fused) ----------------
    out, stats1 = upsample_conv(out, stats0, params["bn0_g"], params["bn0_b"],
                                wpar1, params["conv1_b"],
                                eps=1e-5, slope=None, count=B * s * s)
    # ---- BN(128,0.8) -> LeakyReLU(0.2) -> Upsample -> Conv(128,64) (fused) --
    out, stats2 = upsample_conv(out, stats1, params["bn1_g"], params["bn1_b"],
                                wpar2, params["conv2_b"],
                                eps=0.8, slope=0.2, count=B * (2 * s) ** 2)
    # ---- BN(64,0.8) -> LeakyReLU(0.2) -> Conv(64,ch) -> Tanh  (fused) -------
    out = conv3x3_fused(out, stats2, params["bn2_g"], params["bn2_b"], w3, b3,
                        eps=0.8, slope=0.2, count=B * (4 * s) ** 2, tanh=True)
    out = out[..., :channels]            # drop the zero-padded output channels

    return out.transpose(0, 3, 1, 2)     # NCHW, matching the PyTorch module


if __name__ == "__main__":
    img_size, latent_dim, channels, batch = 16, 32, 3, 2
    key = jax.random.PRNGKey(0)
    pkey, zkey = jax.random.split(key)

    params = init_generator_params(pkey, img_size, latent_dim, channels)
    z = jax.random.normal(zkey, (batch, latent_dim), jnp.float32)

    fwd = jax.jit(lambda p, zz: generator_forward(p, zz, img_size, channels))
    img = fwd(params, z)
    jax.block_until_ready(img)

    assert img.shape == (batch, channels, img_size, img_size), img.shape
    assert img.dtype == jnp.float32
    print("KERNEL_OK")
</pallas_src>

<mosaic_0001>
module attributes {stable_mosaic.version = 11 : i64} {
  func.func @_stats_kernel(%arg0: i32, %arg1: memref<32x128xf32, #tpu.memory_space<vmem>>, %arg2: memref<2x128xf32, #tpu.memory_space<vmem>>) attributes {dimension_semantics = [#tpu.dimension_semantics<arbitrary>], iteration_bounds = array<i64: 1>, scalar_prefetch = 0 : i64, scratch_operands = 0 : i64, tpu.core_type = #tpu.core_type<tc>, window_params = [{transform_indices = @transform_0, window_bounds = array<i64: 32, 128>}, {pipeline_mode = #tpu.pipeline_mode<synchronous>, transform_indices = @transform_1, window_bounds = array<i64: 2, 128>}]} {
    %c0 = arith.constant 0 : index
    %c0_0 = arith.constant 0 : index
    %0 = vector.load %arg1[%c0, %c0_0] : memref<32x128xf32, #tpu.memory_space<vmem>>, vector<32x128xf32>
    %cst = arith.constant dense<0.000000e+00> : vector<128xf32>
    %1 = vector.multi_reduction <add>, %0, %cst [0] : vector<32x128xf32> to vector<128xf32>
    %2 = vector.shape_cast %1 : vector<128xf32> to vector<1x128xf32>
    %3 = arith.mulf %0, %0 : vector<32x128xf32>
    %cst_1 = arith.constant dense<0.000000e+00> : vector<128xf32>
    %4 = vector.multi_reduction <add>, %3, %cst_1 [0] : vector<32x128xf32> to vector<128xf32>
    %5 = vector.shape_cast %4 : vector<128xf32> to vector<1x128xf32>
    %6 = tpu.concatenate %2, %5 in 0 : vector<1x128xf32>, vector<1x128xf32> -> vector<2x128xf32>
    %c0_i32 = arith.constant 0 : i32
    %7 = arith.cmpi eq, %arg0, %c0_i32 : i32
    %8 = arith.extui %7 : i1 to i32
    %c0_i32_2 = arith.constant 0 : i32
    %9 = arith.cmpi ne, %8, %c0_i32_2 : i32
    scf.if %9 {
      %cst_7 = arith.constant 0.000000e+00 : f32
      %13 = vector.broadcast %cst_7 : f32 to vector<2x128xf32>
      %c0_8 = arith.constant 0 : index
      %c0_9 = arith.constant 0 : index
      %14 = vector.load %arg2[%c0_8, %c0_9] : memref<2x128xf32, #tpu.memory_space<vmem>>, vector<2x128xf32>
      tpu.vector_store %arg2[%c0_8, %c0_9], %13 {strides = array<i32>} : memref<2x128xf32, #tpu.memory_space<vmem>>, vector<2x128xf32>,
    } else {
    }
    %c0_3 = arith.constant 0 : index
    %c0_4 = arith.constant 0 : index
    %10 = vector.load %arg2[%c0_3, %c0_4] : memref<2x128xf32, #tpu.memory_space<vmem>>, vector<2x128xf32>
    %11 = arith.addf %10, %6 : vector<2x128xf32>
    %c0_5 = arith.constant 0 : index
    %c0_6 = arith.constant 0 : index
    %12 = vector.load %arg2[%c0_5, %c0_6] : memref<2x128xf32, #tpu.memory_space<vmem>>, vector<2x128xf32>
    tpu.vector_store %arg2[%c0_5, %c0_6], %11 {strides = array<i32>} : memref<2x128xf32, #tpu.memory_space<vmem>>, vector<2x128xf32>,
    return
  }
  func.func @transform_0(%arg0: i32) -> (i32, i32) {
    %c0_i32 = arith.constant 0 : i32
    %c0_i32_0 = arith.constant 0 : i32
    return %arg0, %c0_i32 : i32, i32
  }
  func.func @transform_1(%arg0: i32) -> (i32, i32) {
    %c0_i32 = arith.constant 0 : i32
    %c0_i32_0 = arith.constant 0 : i32
    %c0_i32_1 = arith.constant 0 : i32
    return %c0_i32, %c0_i32_0 : i32, i32
  }
}

module attributes {stable_mosaic.version = 11 : i64} {
  func.func @_linear_kernel(%arg0: i32, %arg1: memref<2x32xf32, #tpu.memory_space<vmem>>, %arg2: memref<32x512xbf16, #tpu.memory_space<vmem>>, %arg3: memref<1x512xf32, #tpu.memory_space<vmem>>, %arg4: memref<2x512xf32, #tpu.memory_space<vmem>>) attributes {dimension_semantics = [#tpu.dimension_semantics<parallel>], iteration_bounds = array<i64: 4>, scalar_prefetch = 0 : i64, scratch_operands = 0 : i64, tpu.core_type = #tpu.core_type<tc>, window_params = [{pipeline_mode = #tpu.pipeline_mode<synchronous>, transform_indices = @transform_0, window_bounds = array<i64: 2, 32>}, {transform_indices = @transform_1, window_bounds = array<i64: 32, 512>}, {transform_indices = @transform_2, window_bounds = array<i64: 1, 512>}, {transform_indices = @transform_3, window_bounds = array<i64: 2, 512>}]} {
    %c0 = arith.constant 0 : index
    %c0_0 = arith.constant 0 : index
    %0 = vector.load %arg1[%c0, %c0_0] : memref<2x32xf32, #tpu.memory_space<vmem>>, vector<2x32xf32>
    %1 = arith.truncf %0 : vector<2x32xf32> to vector<2x32xbf16>
    %c0_1 = arith.constant 0 : index
    %c0_2 = arith.constant 0 : index
    %2 = vector.load %arg2[%c0_1, %c0_2] : memref<32x512xbf16, #tpu.memory_space<vmem>>, vector<32x512xbf16>
    %cst = arith.constant dense<0.000000e+00> : vector<2x512xf32>
    %3 = tpu.matmul %1, %2, %cst {dimension_numbers = #tpu.dot_dimension_numbers<[1], [0], [0], [1], [0, 0, 1, 1], [], []>} : vector<2x32xbf16>, vector<32x512xbf16>, vector<2x512xf32> -> vector<2x512xf32>
    %c0_3 = arith.constant 0 : index
    %c0_4 = arith.constant 0 : index
    %4 = vector.load %arg3[%c0_3, %c0_4] : memref<1x512xf32, #tpu.memory_space<vmem>>, vector<1x512xf32>
    %5 = vector.broadcast %4 : vector<1x512xf32> to vector<2x512xf32>
    %6 = arith.addf %3, %5 : vector<2x512xf32>
    %c0_5 = arith.constant 0 : index
    %c0_6 = arith.constant 0 : index
    %7 = vector.load %arg4[%c0_5, %c0_6] : memref<2x512xf32, #tpu.memory_space<vmem>>, vector<2x512xf32>
    tpu.vector_store %arg4[%c0_5, %c0_6], %6 {strides = array<i32>} : memref<2x512xf32, #tpu.memory_space<vmem>>, vector<2x512xf32>,
    return
  }
  func.func @transform_0(%arg0: i32) -> (i32, i32) {
    %c0_i32 = arith.constant 0 : i32
    %c0_i32_0 = arith.constant 0 : i32
    %c0_i32_1 = arith.constant 0 : i32
    return %c0_i32, %c0_i32_0 : i32, i32
  }
  func.func @transform_1(%arg0: i32) -> (i32, i32) {
    %c0_i32 = arith.constant 0 : i32
    %c0_i32_0 = arith.constant 0 : i32
    return %c0_i32, %arg0 : i32, i32
  }
  func.func @transform_2(%arg0: i32) -> (i32, i32) {
    %c0_i32 = arith.constant 0 : i32
    %c0_i32_0 = arith.constant 0 : i32
    return %c0_i32, %arg0 : i32, i32
  }
  func.func @transform_3(%arg0: i32) -> (i32, i32) {
    %c0_i32 = arith.constant 0 : i32
    %c0_i32_0 = arith.constant 0 : i32
    return %c0_i32, %arg0 : i32, i32
  }
}

module attributes {stable_mosaic.version = 11 : i64} {
  func.func @kernel(%arg0: i32, %arg1: memref<2x128xf32, #tpu.memory_space<vmem>>, %arg2: memref<1x128xf32, #tpu.memory_space<vmem>>, %arg3: memref<1x128xf32, #tpu.memory_space<vmem>>, %arg4: memref<1x4x4x128xf32, #tpu.memory_space<vmem>>, %arg5: memref<2x2x512x128xbf16, #tpu.memory_space<vmem>>, %arg6: memref<1x128xf32, #tpu.memory_space<vmem>>, %arg7: memref<1x2x2x4x4x128xf32, #tpu.memory_space<vmem>>, %arg8: memref<2x128xf32, #tpu.memory_space<vmem>>, %arg9: memref<6x6x128xf32, #tpu.memory_space<vmem>>) attributes {dimension_semantics = [#tpu.dimension_semantics<arbitrary>], iteration_bounds = array<i64: 2>, scalar_prefetch = 0 : i64, scratch_operands = 1 : i64, tpu.core_type = #tpu.core_type<tc>, window_params = [{pipeline_mode = #tpu.pipeline_mode<synchronous>, transform_indices = @transform_0, window_bounds = array<i64: 2, 128>}, {pipeline_mode = #tpu.pipeline_mode<synchronous>, transform_indices = @transform_1, window_bounds = array<i64: 1, 128>}, {pipeline_mode = #tpu.pipeline_mode<synchronous>, transform_indices = @transform_2, window_bounds = array<i64: 1, 128>}, {transform_indices = @transform_3, window_bounds = array<i64: 1, 4, 4, 128>}, {pipeline_mode = #tpu.pipeline_mode<synchronous>, transform_indices = @transform_4, window_bounds = array<i64: 2, 2, 512, 128>}, {pipeline_mode = #tpu.pipeline_mode<synchronous>, transform_indices = @transform_5, window_bounds = array<i64: 1, 128>}, {transform_indices = @transform_6, window_bounds = array<i64: 1, 2, 2, 4, 4, 128>}, {pipeline_mode = #tpu.pipeline_mode<synchronous>, transform_indices = @transform_7, window_bounds = array<i64: 2, 128>}]} {
    %c0 = arith.constant 0 : index
    %c0_0 = arith.constant 0 : index
    %0 = vector.load %arg1[%c0, %c0_0] : memref<2x128xf32, #tpu.memory_space<vmem>>, vector<1x128xf32>
    %cst = arith.constant 3.125000e-02 : f32
    %1 = vector.broadcast %cst : f32 to vector<1x128xf32>
    %2 = arith.mulf %0, %1 : vector<1x128xf32>
    %c1 = arith.constant 1 : index
    %c0_1 = arith.constant 0 : index
    %3 = vector.load %arg1[%c1, %c0_1] : memref<2x128xf32, #tpu.memory_space<vmem>>, vector<1x128xf32>
    %cst_2 = arith.constant 3.125000e-02 : f32
    %4 = vector.broadcast %cst_2 : f32 to vector<1x128xf32>
    %5 = arith.mulf %3, %4 : vector<1x128xf32>
    %6 = arith.mulf %2, %2 : vector<1x128xf32>
    %7 = arith.subf %5, %6 : vector<1x128xf32>
    %cst_3 = arith.constant 0.000000e+00 : f32
    %8 = vector.broadcast %cst_3 : f32 to vector<1x128xf32>
    %9 = arith.maximumf %7, %8 : vector<1x128xf32>
    %c0_4 = arith.constant 0 : index
    %c0_5 = arith.constant 0 : index
    %10 = vector.load %arg2[%c0_4, %c0_5] : memref<1x128xf32, #tpu.memory_space<vmem>>, vector<1x128xf32>
    %cst_6 = arith.constant 9.99999974E-6 : f32
    %11 = vector.broadcast %cst_6 : f32 to vector<1x128xf32>
    %12 = arith.addf %9, %11 : vector<1x128xf32>
    %13 = math.rsqrt %12 : vector<1x128xf32>
    %14 = arith.mulf %10, %13 : vector<1x128xf32>
    %c0_7 = arith.constant 0 : index
    %c0_8 = arith.constant 0 : index
    %15 = vector.load %arg3[%c0_7, %c0_8] : memref<1x128xf32, #tpu.memory_space<vmem>>, vector<1x128xf32>
    %16 = arith.mulf %2, %14 : vector<1x128xf32>
    %17 = arith.subf %15, %16 : vector<1x128xf32>
    %c0_9 = arith.constant 0 : index
    %c0_10 = arith.constant 0 : index
    %c0_11 = arith.constant 0 : index
    %c0_12 = arith.constant 0 : index
    %18 = vector.load %arg4[%c0_9, %c0_10, %c0_11, %c0_12] : memref<1x4x4x128xf32, #tpu.memory_space<vmem>>, vector<1x4x4x128xf32>
    %19 = vector.shape_cast %18 : vector<1x4x4x128xf32> to vector<4x4x128xf32>
    %20 = vector.shape_cast %14 : vector<1x128xf32> to vector<1x1x128xf32>
    %21 = vector.broadcast %20 : vector<1x1x128xf32> to vector<4x4x128xf32>
    %22 = arith.mulf %19, %21 : vector<4x4x128xf32>
    %23 = vector.shape_cast %17 : vector<1x128xf32> to vector<1x1x128xf32>
    %24 = vector.broadcast %23 : vector<1x1x128xf32> to vector<4x4x128xf32>
    %25 = arith.addf %22, %24 : vector<4x4x128xf32>
    %cst_13 = arith.constant 0.000000e+00 : f32
    %26 = vector.broadcast %cst_13 : f32 to vector<6x6x128xf32>
    %c0_14 = arith.constant 0 : index
    %c0_15 = arith.constant 0 : index
    %c0_16 = arith.constant 0 : index
    %27 = vector.load %arg9[%c0_14, %c0_15, %c0_16] : memref<6x6x128xf32, #tpu.memory_space<vmem>>, vector<6x6x128xf32>
    tpu.vector_store %arg9[%c0_14, %c0_15, %c0_16], %26 {strides = array<i32>} : memref<6x6x128xf32, #tpu.memory_space<vmem>>, vector<6x6x128xf32>,
    %c1_17 = arith.constant 1 : index
    %c1_18 = arith.constant 1 : index
    %c0_19 = arith.constant 0 : index
    %28 = vector.load %arg9[%c1_17, %c1_18, %c0_19] : memref<6x6x128xf32, #tpu.memory_space<vmem>>, vector<4x4x128xf32>
    tpu.vector_store %arg9[%c1_17, %c1_18, %c0_19], %25 {strides = array<i32>} : memref<6x6x128xf32, #tpu.memory_space<vmem>>, vector<4x4x128xf32>,
    %c0_20 = arith.constant 0 : index
    %c0_21 = arith.constant 0 : index
    %c0_22 = arith.constant 0 : index
    %29 = vector.load %arg9[%c0_20, %c0_21, %c0_22] : memref<6x6x128xf32, #tpu.memory_space<vmem>>, vector<4x4x128xf32>
    %30 = vector.shape_cast %29 : vector<4x4x128xf32> to vector<16x128xf32>
    %c0_23 = arith.constant 0 : index
    %c1_24 = arith.constant 1 : index
    %c0_25 = arith.constant 0 : index
    %31 = vector.load %arg9[%c0_23, %c1_24, %c0_25] : memref<6x6x128xf32, #tpu.memory_space<vmem>>, vector<4x4x128xf32>
    %32 = vector.shape_cast %31 : vector<4x4x128xf32> to vector<16x128xf32>
    %c0_26 = arith.constant 0 : index
    %c2 = arith.constant 2 : index
    %c0_27 = arith.constant 0 : index
    %33 = vector.load %arg9[%c0_26, %c2, %c0_27] : memref<6x6x128xf32, #tpu.memory_space<vmem>>, vector<4x4x128xf32>
    %34 = vector.shape_cast %33 : vector<4x4x128xf32> to vector<16x128xf32>
    %c1_28 = arith.constant 1 : index
    %c0_29 = arith.constant 0 : index
    %c0_30 = arith.constant 0 : index
    %35 = vector.load %arg9[%c1_28, %c0_29, %c0_30] : memref<6x6x128xf32, #tpu.memory_space<vmem>>, vector<4x4x128xf32>
    %36 = vector.shape_cast %35 : vector<4x4x128xf32> to vector<16x128xf32>
    %c1_31 = arith.constant 1 : index
    %c1_32 = arith.constant 1 : index
    %c0_33 = arith.constant 0 : index
    %37 = vector.load %arg9[%c1_31, %c1_32, %c0_33] : memref<6x6x128xf32, #tpu.memory_space<vmem>>, vector<4x4x128xf32>
    %38 = vector.shape_cast %37 : vector<4x4x128xf32> to vector<16x128xf32>
    %c1_34 = arith.constant 1 : index
    %c2_35 = arith.constant 2 : index
    %c0_36 = arith.constant 0 : index
    %39 = vector.load %arg9[%c1_34, %c2_35, %c0_36] : memref<6x6x128xf32, #tpu.memory_space<vmem>>, vector<4x4x128xf32>
    %40 = vector.shape_cast %39 : vector<4x4x128xf32> to vector<16x128xf32>
    %c2_37 = arith.constant 2 : index
    %c0_38 = arith.constant 0 : index
    %c0_39 = arith.constant 0 : index
    %41 = vector.load %arg9[%c2_37, %c0_38, %c0_39] : memref<6x6x128xf32, #tpu.memory_space<vmem>>, vector<4x4x128xf32>
    %42 = vector.shape_cast %41 : vector<4x4x128xf32> to vector<16x128xf32>
    %c2_40 = arith.constant 2 : index
    %c1_41 = arith.constant 1 : index
    %c0_42 = arith.constant 0 : index
    %43 = vector.load %arg9[%c2_40, %c1_41, %c0_42] : memref<6x6x128xf32, #tpu.memory_space<vmem>>, vector<4x4x128xf32>
    %44 = vector.shape_cast %43 : vector<4x4x128xf32> to vector<16x128xf32>
    %c2_43 = arith.constant 2 : index
    %c2_44 = arith.constant 2 : index
    %c0_45 = arith.constant 0 : index
    %45 = vector.load %arg9[%c2_43, %c2_44, %c0_45] : memref<6x6x128xf32, #tpu.memory_space<vmem>>, vector<4x4x128xf32>
    %46 = vector.shape_cast %45 : vector<4x4x128xf32> to vector<16x128xf32>
    %c0_46 = arith.constant 0 : index
    %c0_47 = arith.constant 0 : index
    %47 = vector.load %arg6[%c0_46, %c0_47] : memref<1x128xf32, #tpu.memory_space<vmem>>, vector<1x128xf32>
    %cst_48 = arith.constant 0.000000e+00 : f32
    %48 = vector.broadcast %cst_48 : f32 to vector<1x128xf32>
    %cst_49 = arith.constant 0.000000e+00 : f32
    %49 = vector.broadcast %cst_49 : f32 to vector<1x128xf32>
    %50 = tpu.concatenate %30, %32, %36, %38 in 1 : vector<16x128xf32>, vector<16x128xf32>, vector<16x128xf32>, vector<16x128xf32> -> vector<16x512xf32>
    %51 = arith.truncf %50 : vector<16x512xf32> to vector<16x512xbf16>
    %c0_50 = arith.constant 0 : index
    %c0_51 = arith.constant 0 : index
    %c0_52 = arith.constant 0 : index
    %c0_53 = arith.constant 0 : index
    %52 = vector.load %arg5[%c0_50, %c0_51, %c0_52, %c0_53] : memref<2x2x512x128xbf16, #tpu.memory_space<vmem>>, vector<1x1x512x128xbf16>
    %53 = vector.shape_cast %52 : vector<1x1x512x128xbf16> to vector<512x128xbf16>
    %cst_54 = arith.constant dense<0.000000e+00> : vector<16x128xf32>
    %54 = tpu.matmul %51, %53, %cst_54 {dimension_numbers = #tpu.dot_dimension_numbers<[1], [0], [0], [1], [0, 0, 1, 1], [], []>} : vector<16x512xbf16>, vector<512x128xbf16>, vector<16x128xf32> -> vector<16x128xf32>
    %55 = vector.broadcast %47 : vector<1x128xf32> to vector<16x128xf32>
    %56 = arith.addf %54, %55 : vector<16x128xf32>
    %57 = vector.shape_cast %56 : vector<16x128xf32> to vector<4x4x128xf32>
    %c0_55 = arith.constant 0 : index
    %c0_56 = arith.constant 0 : index
    %c0_57 = arith.constant 0 : index
    %c0_58 = arith.constant 0 : index
    %c0_59 = arith.constant 0 : index
    %c0_60 = arith.constant 0 : index
    %58 = vector.load %arg7[%c0_55, %c0_56, %c0_57, %c0_58, %c0_59, %c0_60] : memref<1x2x2x4x4x128xf32, #tpu.memory_space<vmem>>, vector<1x1x1x4x4x128xf32>
    %59 = vector.shape_cast %58 : vector<1x1x1x4x4x128xf32> to vector<4x4x128xf32>
    %60 = vector.shape_cast %57 : vector<4x4x128xf32> to vector<1x1x1x4x4x128xf32>
    tpu.vector_store %arg7[%c0_55, %c0_56, %c0_57, %c0_58, %c0_59, %c0_60], %60 {strides = array<i32>} : memref<1x2x2x4x4x128xf32, #tpu.memory_space<vmem>>, vector<1x1x1x4x4x128xf32>,
    %cst_61 = arith.constant dense<0.000000e+00> : vector<128xf32>
    %61 = vector.multi_reduction <add>, %56, %cst_61 [0] : vector<16x128xf32> to vector<128xf32>
    %62 = vector.shape_cast %61 : vector<128xf32> to vector<1x128xf32>
    %63 = arith.addf %48, %62 : vector<1x128xf32>
    %64 = arith.mulf %56, %56 : vector<16x128xf32>
    %cst_62 = arith.constant dense<0.000000e+00> : vector<128xf32>
    %65 = vector.multi_reduction <add>, %64, %cst_62 [0] : vector<16x128xf32> to vector<128xf32>
    %66 = vector.shape_cast %65 : vector<128xf32> to vector<1x128xf32>
    %67 = arith.addf %49, %66 : vector<1x128xf32>
    %68 = tpu.concatenate %32, %34, %38, %40 in 1 : vector<16x128xf32>, vector<16x128xf32>, vector<16x128xf32>, vector<16x128xf32> -> vector<16x512xf32>
    %69 = arith.truncf %68 : vector<16x512xf32> to vector<16x512xbf16>
    %c0_63 = arith.constant 0 : index
    %c1_64 = arith.constant 1 : index
    %c0_65 = arith.constant 0 : index
    %c0_66 = arith.constant 0 : index
    %70 = vector.load %arg5[%c0_63, %c1_64, %c0_65, %c0_66] : memref<2x2x512x128xbf16, #tpu.memory_space<vmem>>, vector<1x1x512x128xbf16>
    %71 = vector.shape_cast %70 : vector<1x1x512x128xbf16> to vector<512x128xbf16>
    %cst_67 = arith.constant dense<0.000000e+00> : vector<16x128xf32>
    %72 = tpu.matmul %69, %71, %cst_67 {dimension_numbers = #tpu.dot_dimension_numbers<[1], [0], [0], [1], [0, 0, 1, 1], [], []>} : vector<16x512xbf16>, vector<512x128xbf16>, vector<16x128xf32> -> vector<16x128xf32>
    %73 = vector.broadcast %47 : vector<1x128xf32> to vector<16x128xf32>
    %74 = arith.addf %72, %73 : vector<16x128xf32>
    %75 = vector.shape_cast %74 : vector<16x128xf32> to vector<4x4x128xf32>
    %c0_68 = arith.constant 0 : index
    %c0_69 = arith.constant 0 : index
    %c1_70 = arith.constant 1 : index
    %c0_71 = arith.constant 0 : index
    %c0_72 = arith.constant 0 : index
    %c0_73 = arith.constant 0 : index
    %76 = vector.load %arg7[%c0_68, %c0_69, %c1_70, %c0_71, %c0_72, %c0_73] : memref<1x2x2x4x4x128xf32, #tpu.memory_space<vmem>>, vector<1x1x1x4x4x128xf32>
    %77 = vector.shape_cast %76 : vector<1x1x1x4x4x128xf32> to vector<4x4x128xf32>
    %78 = vector.shape_cast %75 : vector<4x4x128xf32> to vector<1x1x1x4x4x128xf32>
    tpu.vector_store %arg7[%c0_68, %c0_69, %c1_70, %c0_71, %c0_72, %c0_73], %78 {strides = array<i32>} : memref<1x2x2x4x4x128xf32, #tpu.memory_space<vmem>>, vector<1x1x1x4x4x128xf32>,
    %cst_74 = arith.constant dense<0.000000e+00> : vector<128xf32>
    %79 = vector.multi_reduction <add>, %74, %cst_74 [0] : vector<16x128xf32> to vector<128xf32>
    %80 = vector.shape_cast %79 : vector<128xf32> to vector<1x128xf32>
    %81 = arith.addf %63, %80 : vector<1x128xf32>
    %82 = arith.mulf %74, %74 : vector<16x128xf32>
    %cst_75 = arith.constant dense<0.000000e+00> : vector<128xf32>
    %83 = vector.multi_reduction <add>, %82, %cst_75 [0] : vector<16x128xf32> to vector<128xf32>
    %84 = vector.shape_cast %83 : vector<128xf32> to vector<1x128xf32>
    %85 = arith.addf %67, %84 : vector<1x128xf32>
    %86 = tpu.concatenate %36, %38, %42, %44 in 1 : vector<16x128xf32>, vector<16x128xf32>, vector<16x128xf32>, vector<16x128xf32> -> vector<16x512xf32>
    %87 = arith.truncf %86 : vector<16x512xf32> to vector<16x512xbf16>
    %c1_76 = arith.constant 1 : index
    %c0_77 = arith.constant 0 : index
    %c0_78 = arith.constant 0 : index
    %c0_79 = arith.constant 0 : index
    %88 = vector.load %arg5[%c1_76, %c0_77, %c0_78, %c0_79] : memref<2x2x512x128xbf16, #tpu.memory_space<vmem>>, vector<1x1x512x128xbf16>
    %89 = vector.shape_cast %88 : vector<1x1x512x128xbf16> to vector<512x128xbf16>
    %cst_80 = arith.constant dense<0.000000e+00> : vector<16x128xf32>
    %90 = tpu.matmul %87, %89, %cst_80 {dimension_numbers = #tpu.dot_dimension_numbers<[1], [0], [0], [1], [0, 0, 1, 1], [], []>} : vector<16x512xbf16>, vector<512x128xbf16>, vector<16x128xf32> -> vector<16x128xf32>
    %91 = vector.broadcast %47 : vector<1x128xf32> to vector<16x128xf32>
    %92 = arith.addf %90, %91 : vector<16x128xf32>
    %93 = vector.shape_cast %92 : vector<16x128xf32> to vector<4x4x128xf32>
    %c0_81 = arith.constant 0 : index
    %c1_82 = arith.constant 1 : index
    %c0_83 = arith.constant 0 : index
    %c0_84 = arith.constant 0 : index
    %c0_85 = arith.constant 0 : index
    %c0_86 = arith.constant 0 : index
    %94 = vector.load %arg7[%c0_81, %c1_82, %c0_83, %c0_84, %c0_85, %c0_86] : memref<1x2x2x4x4x128xf32, #tpu.memory_space<vmem>>, vector<1x1x1x4x4x128xf32>
    %95 = vector.shape_cast %94 : vector<1x1x1x4x4x128xf32> to vector<4x4x128xf32>
    %96 = vector.shape_cast %93 : vector<4x4x128xf32> to vector<1x1x1x4x4x128xf32>
    tpu.vector_store %arg7[%c0_81, %c1_82, %c0_83, %c0_84, %c0_85, %c0_86], %96 {strides = array<i32>} : memref<1x2x2x4x4x128xf32, #tpu.memory_space<vmem>>, vector<1x1x1x4x4x128xf32>,
    %cst_87 = arith.constant dense<0.000000e+00> : vector<128xf32>
    %97 = vector.multi_reduction <add>, %92, %cst_87 [0] : vector<16x128xf32> to vector<128xf32>
    %98 = vector.shape_cast %97 : vector<128xf32> to vector<1x128xf32>
    %99 = arith.addf %81, %98 : vector<1x128xf32>
    %100 = arith.mulf %92, %92 : vector<16x128xf32>
    %cst_88 = arith.constant dense<0.000000e+00> : vector<128xf32>
    %101 = vector.multi_reduction <add>, %100, %cst_88 [0] : vector<16x128xf32> to vector<128xf32>
    %102 = vector.shape_cast %101 : vector<128xf32> to vector<1x128xf32>
    %103 = arith.addf %85, %102 : vector<1x128xf32>
    %104 = tpu.concatenate %38, %40, %44, %46 in 1 : vector<16x128xf32>, vector<16x128xf32>, vector<16x128xf32>, vector<16x128xf32> -> vector<16x512xf32>
    %105 = arith.truncf %104 : vector<16x512xf32> to vector<16x512xbf16>
    %c1_89 = arith.constant 1 : index
    %c1_90 = arith.constant 1 : index
    %c0_91 = arith.constant 0 : index
    %c0_92 = arith.constant 0 : index
    %106 = vector.load %arg5[%c1_89, %c1_90, %c0_91, %c0_92] : memref<2x2x512x128xbf16, #tpu.memory_space<vmem>>, vector<1x1x512x128xbf16>
    %107 = vector.shape_cast %106 : vector<1x1x512x128xbf16> to vector<512x128xbf16>
    %cst_93 = arith.constant dense<0.000000e+00> : vector<16x128xf32>
    %108 = tpu.matmul %105, %107, %cst_93 {dimension_numbers = #tpu.dot_dimension_numbers<[1], [0], [0], [1], [0, 0, 1, 1], [], []>} : vector<16x512xbf16>, vector<512x128xbf16>, vector<16x128xf32> -> vector<16x128xf32>
    %109 = vector.broadcast %47 : vector<1x128xf32> to vector<16x128xf32>
    %110 = arith.addf %108, %109 : vector<16x128xf32>
    %111 = vector.shape_cast %110 : vector<16x128xf32> to vector<4x4x128xf32>
    %c0_94 = arith.constant 0 : index
    %c1_95 = arith.constant 1 : index
    %c1_96 = arith.constant 1 : index
    %c0_97 = arith.constant 0 : index
    %c0_98 = arith.constant 0 : index
    %c0_99 = arith.constant 0 : index
    %112 = vector.load %arg7[%c0_94, %c1_95, %c1_96, %c0_97, %c0_98, %c0_99] : memref<1x2x2x4x4x128xf32, #tpu.memory_space<vmem>>, vector<1x1x1x4x4x128xf32>
    %113 = vector.shape_cast %112 : vector<1x1x1x4x4x128xf32> to vector<4x4x128xf32>
    %114 = vector.shape_cast %111 : vector<4x4x128xf32> to vector<1x1x1x4x4x128xf32>
    tpu.vector_store %arg7[%c0_94, %c1_95, %c1_96, %c0_97, %c0_98, %c0_99], %114 {strides = array<i32>} : memref<1x2x2x4x4x128xf32, #tpu.memory_space<vmem>>, vector<1x1x1x4x4x128xf32>,
    %cst_100 = arith.constant dense<0.000000e+00> : vector<128xf32>
    %115 = vector.multi_reduction <add>, %110, %cst_100 [0] : vector<16x128xf32> to vector<128xf32>
    %116 = vector.shape_cast %115 : vector<128xf32> to vector<1x128xf32>
    %117 = arith.addf %99, %116 : vector<1x128xf32>
    %118 = arith.mulf %110, %110 : vector<16x128xf32>
    %cst_101 = arith.constant dense<0.000000e+00> : vector<128xf32>
    %119 = vector.multi_reduction <add>, %118, %cst_101 [0] : vector<16x128xf32> to vector<128xf32>
    %120 = vector.shape_cast %119 : vector<128xf32> to vector<1x128xf32>
    %121 = arith.addf %103, %120 : vector<1x128xf32>
    %c0_i32 = arith.constant 0 : i32
    %122 = arith.cmpi eq, %arg0, %c0_i32 : i32
    %123 = arith.extui %122 : i1 to i32
    %c0_i32_102 = arith.constant 0 : i32
    %124 = arith.cmpi ne, %123, %c0_i32_102 : i32
    scf.if %124 {
      %cst_107 = arith.constant 0.000000e+00 : f32
      %129 = vector.broadcast %cst_107 : f32 to vector<2x128xf32>
      %c0_108 = arith.constant 0 : index
      %c0_109 = arith.constant 0 : index
      %130 = vector.load %arg8[%c0_108, %c0_109] : memref<2x128xf32, #tpu.memory_space<vmem>>, vector<2x128xf32>
      tpu.vector_store %arg8[%c0_108, %c0_109], %129 {strides = array<i32>} : memref<2x128xf32, #tpu.memory_space<vmem>>, vector<2x128xf32>,
    } else {
    }
    %c0_103 = arith.constant 0 : index
    %c0_104 = arith.constant 0 : index
    %125 = vector.load %arg8[%c0_103, %c0_104] : memref<2x128xf32, #tpu.memory_space<vmem>>, vector<2x128xf32>
    %126 = tpu.concatenate %117, %121 in 0 : vector<1x128xf32>, vector<1x128xf32> -> vector<2x128xf32>
    %127 = arith.addf %125, %126 : vector<2x128xf32>
    %c0_105 = arith.constant 0 : index
    %c0_106 = arith.constant 0 : index
    %128 = vector.load %arg8[%c0_105, %c0_106] : memref<2x128xf32, #tpu.memory_space<vmem>>, vector<2x128xf32>
    tpu.vector_store %arg8[%c0_105, %c0_106], %127 {strides = array<i32>} : memref<2x128xf32, #tpu.memory_space<vmem>>, vector<2x128xf32>,
    return
  }
  func.func @transform_0(%arg0: i32) -> (i32, i32) {
    %c0_i32 = arith.constant 0 : i32
    %c0_i32_0 = arith.constant 0 : i32
    %c0_i32_1 = arith.constant 0 : i32
    return %c0_i32, %c0_i32_0 : i32, i32
  }
  func.func @transform_1(%arg0: i32) -> (i32, i32) {
    %c0_i32 = arith.constant 0 : i32
    %c0_i32_0 = arith.constant 0 : i32
    %c0_i32_1 = arith.constant 0 : i32
    return %c0_i32, %c0_i32_0 : i32, i32
  }
  func.func @transform_2(%arg0: i32) -> (i32, i32) {
    %c0_i32 = arith.constant 0 : i32
    %c0_i32_0 = arith.constant 0 : i32
    %c0_i32_1 = arith.constant 0 : i32
    return %c0_i32, %c0_i32_0 : i32, i32
  }
  func.func @transform_3(%arg0: i32) -> (i32, i32, i32, i32) {
    %c0_i32 = arith.constant 0 : i32
    %c0_i32_0 = arith.constant 0 : i32
    %c0_i32_1 = arith.constant 0 : i32
    %c0_i32_2 = arith.constant 0 : i32
    return %arg0, %c0_i32, %c0_i32_0, %c0_i32_1 : i32, i32, i32, i32
  }
  func.func @transform_4(%arg0: i32) -> (i32, i32, i32, i32) {
    %c0_i32 = arith.constant 0 : i32
    %c0_i32_0 = arith.constant 0 : i32
    %c0_i32_1 = arith.constant 0 : i32
    %c0_i32_2 = arith.constant 0 : i32
    %c0_i32_3 = arith.constant 0 : i32
    return %c0_i32, %c0_i32_0, %c0_i32_1, %c0_i32_2 : i32, i32, i32, i32
  }
  func.func @transform_5(%arg0: i32) -> (i32, i32) {
    %c0_i32 = arith.constant 0 : i32
    %c0_i32_0 = arith.constant 0 : i32
    %c0_i32_1 = arith.constant 0 : i32
    return %c0_i32, %c0_i32_0 : i32, i32
  }
  func.func @transform_6(%arg0: i32) -> (i32, i32, i32, i32, i32, i32) {
    %c0_i32 = arith.constant 0 : i32
    %c0_i32_0 = arith.constant 0 : i32
    %c0_i32_1 = arith.constant 0 : i32
    %c0_i32_2 = arith.constant 0 : i32
    %c0_i32_3 = arith.constant 0 : i32
    %c0_i32_4 = arith.constant 0 : i32
    return %arg0, %c0_i32, %c0_i32_0, %c0_i32_1, %c0_i32_2, %c0_i32_3 : i32, i32, i32, i32, i32, i32
  }
  func.func @transform_7(%arg0: i32) -> (i32, i32) {
    %c0_i32 = arith.constant 0 : i32
    %c0_i32_0 = arith.constant 0 : i32
    %c0_i32_1 = arith.constant 0 : i32
    return %c0_i32, %c0_i32_0 : i32, i32
  }
}

module attributes {stable_mosaic.version = 11 : i64} {
  func.func @kernel(%arg0: i32, %arg1: memref<2x128xf32, #tpu.memory_space<vmem>>, %arg2: memref<1x128xf32, #tpu.memory_space<vmem>>, %arg3: memref<1x128xf32, #tpu.memory_space<vmem>>, %arg4: memref<1x8x8x128xf32, #tpu.memory_space<vmem>>, %arg5: memref<2x2x512x64xbf16, #tpu.memory_space<vmem>>, %arg6: memref<1x64xf32, #tpu.memory_space<vmem>>, %arg7: memref<1x2x2x8x8x64xf32, #tpu.memory_space<vmem>>, %arg8: memref<2x64xf32, #tpu.memory_space<vmem>>, %arg9: memref<10x10x128xf32, #tpu.memory_space<vmem>>) attributes {dimension_semantics = [#tpu.dimension_semantics<arbitrary>], iteration_bounds = array<i64: 2>, scalar_prefetch = 0 : i64, scratch_operands = 1 : i64, tpu.core_type = #tpu.core_type<tc>, window_params = [{pipeline_mode = #tpu.pipeline_mode<synchronous>, transform_indices = @transform_0, window_bounds = array<i64: 2, 128>}, {pipeline_mode = #tpu.pipeline_mode<synchronous>, transform_indices = @transform_1, window_bounds = array<i64: 1, 128>}, {pipeline_mode = #tpu.pipeline_mode<synchronous>, transform_indices = @transform_2, window_bounds = array<i64: 1, 128>}, {transform_indices = @transform_3, window_bounds = array<i64: 1, 8, 8, 128>}, {pipeline_mode = #tpu.pipeline_mode<synchronous>, transform_indices = @transform_4, window_bounds = array<i64: 2, 2, 512, 64>}, {pipeline_mode = #tpu.pipeline_mode<synchronous>, transform_indices = @transform_5, window_bounds = array<i64: 1, 64>}, {transform_indices = @transform_6, window_bounds = array<i64: 1, 2, 2, 8, 8, 64>}, {pipeline_mode = #tpu.pipeline_mode<synchronous>, transform_indices = @transform_7, window_bounds = array<i64: 2, 64>}]} {
    %c0 = arith.constant 0 : index
    %c0_0 = arith.constant 0 : index
    %0 = vector.load %arg1[%c0, %c0_0] : memref<2x128xf32, #tpu.memory_space<vmem>>, vector<1x128xf32>
    %cst = arith.constant 7.812500e-03 : f32
    %1 = vector.broadcast %cst : f32 to vector<1x128xf32>
    %2 = arith.mulf %0, %1 : vector<1x128xf32>
    %c1 = arith.constant 1 : index
    %c0_1 = arith.constant 0 : index
    %3 = vector.load %arg1[%c1, %c0_1] : memref<2x128xf32, #tpu.memory_space<vmem>>, vector<1x128xf32>
    %cst_2 = arith.constant 7.812500e-03 : f32
    %4 = vector.broadcast %cst_2 : f32 to vector<1x128xf32>
    %5 = arith.mulf %3, %4 : vector<1x128xf32>
    %6 = arith.mulf %2, %2 : vector<1x128xf32>
    %7 = arith.subf %5, %6 : vector<1x128xf32>
    %cst_3 = arith.constant 0.000000e+00 : f32
    %8 = vector.broadcast %cst_3 : f32 to vector<1x128xf32>
    %9 = arith.maximumf %7, %8 : vector<1x128xf32>
    %c0_4 = arith.constant 0 : index
    %c0_5 = arith.constant 0 : index
    %10 = vector.load %arg2[%c0_4, %c0_5] : memref<1x128xf32, #tpu.memory_space<vmem>>, vector<1x128xf32>
    %cst_6 = arith.constant 8.000000e-01 : f32
    %11 = vector.broadcast %cst_6 : f32 to vector<1x128xf32>
    %12 = arith.addf %9, %11 : vector<1x128xf32>
    %13 = math.rsqrt %12 : vector<1x128xf32>
    %14 = arith.mulf %10, %13 : vector<1x128xf32>
    %c0_7 = arith.constant 0 : index
    %c0_8 = arith.constant 0 : index
    %15 = vector.load %arg3[%c0_7, %c0_8] : memref<1x128xf32, #tpu.memory_space<vmem>>, vector<1x128xf32>
    %16 = arith.mulf %2, %14 : vector<1x128xf32>
    %17 = arith.subf %15, %16 : vector<1x128xf32>
    %c0_9 = arith.constant 0 : index
    %c0_10 = arith.constant 0 : index
    %c0_11 = arith.constant 0 : index
    %c0_12 = arith.constant 0 : index
    %18 = vector.load %arg4[%c0_9, %c0_10, %c0_11, %c0_12] : memref<1x8x8x128xf32, #tpu.memory_space<vmem>>, vector<1x8x8x128xf32>
    %19 = vector.shape_cast %18 : vector<1x8x8x128xf32> to vector<8x8x128xf32>
    %20 = vector.shape_cast %14 : vector<1x128xf32> to vector<1x1x128xf32>
    %21 = vector.broadcast %20 : vector<1x1x128xf32> to vector<8x8x128xf32>
    %22 = arith.mulf %19, %21 : vector<8x8x128xf32>
    %23 = vector.shape_cast %17 : vector<1x128xf32> to vector<1x1x128xf32>
    %24 = vector.broadcast %23 : vector<1x1x128xf32> to vector<8x8x128xf32>
    %25 = arith.addf %22, %24 : vector<8x8x128xf32>
    %cst_13 = arith.constant 0.000000e+00 : f32
    %26 = vector.broadcast %cst_13 : f32 to vector<8x8x128xf32>
    %27 = arith.cmpf oge, %25, %26 : vector<8x8x128xf32>
    %cst_14 = arith.constant 2.000000e-01 : f32
    %28 = vector.broadcast %cst_14 : f32 to vector<8x8x128xf32>
    %29 = arith.mulf %28, %25 : vector<8x8x128xf32>
    %30 = arith.select %27, %25, %29 : vector<8x8x128xi1>, vector<8x8x128xf32>
    %cst_15 = arith.constant 0.000000e+00 : f32
    %31 = vector.broadcast %cst_15 : f32 to vector<10x10x128xf32>
    %c0_16 = arith.constant 0 : index
    %c0_17 = arith.constant 0 : index
    %c0_18 = arith.constant 0 : index
    %32 = vector.load %arg9[%c0_16, %c0_17, %c0_18] : memref<10x10x128xf32, #tpu.memory_space<vmem>>, vector<10x10x128xf32>
    tpu.vector_store %arg9[%c0_16, %c0_17, %c0_18], %31 {strides = array<i32>} : memref<10x10x128xf32, #tpu.memory_space<vmem>>, vector<10x10x128xf32>,
    %c1_19 = arith.constant 1 : index
    %c1_20 = arith.constant 1 : index
    %c0_21 = arith.constant 0 : index
    %33 = vector.load %arg9[%c1_19, %c1_20, %c0_21] : memref<10x10x128xf32, #tpu.memory_space<vmem>>, vector<8x8x128xf32>
    tpu.vector_store %arg9[%c1_19, %c1_20, %c0_21], %30 {strides = array<i32>} : memref<10x10x128xf32, #tpu.memory_space<vmem>>, vector<8x8x128xf32>,
    %c0_22 = arith.constant 0 : index
    %c0_23 = arith.constant 0 : index
    %c0_24 = arith.constant 0 : index
    %34 = vector.load %arg9[%c0_22, %c0_23, %c0_24] : memref<10x10x128xf32, #tpu.memory_space<vmem>>, vector<8x8x128xf32>
    %35 = vector.shape_cast %34 : vector<8x8x128xf32> to vector<64x128xf32>
    %c0_25 = arith.constant 0 : index
    %c1_26 = arith.constant 1 : index
    %c0_27 = arith.constant 0 : index
    %36 = vector.load %arg9[%c0_25, %c1_26, %c0_27] : memref<10x10x128xf32, #tpu.memory_space<vmem>>, vector<8x8x128xf32>
    %37 = vector.shape_cast %36 : vector<8x8x128xf32> to vector<64x128xf32>
    %c0_28 = arith.constant 0 : index
    %c2 = arith.constant 2 : index
    %c0_29 = arith.constant 0 : index
    %38 = vector.load %arg9[%c0_28, %c2, %c0_29] : memref<10x10x128xf32, #tpu.memory_space<vmem>>, vector<8x8x128xf32>
    %39 = vector.shape_cast %38 : vector<8x8x128xf32> to vector<64x128xf32>
    %c1_30 = arith.constant 1 : index
    %c0_31 = arith.constant 0 : index
    %c0_32 = arith.constant 0 : index
    %40 = vector.load %arg9[%c1_30, %c0_31, %c0_32] : memref<10x10x128xf32, #tpu.memory_space<vmem>>, vector<8x8x128xf32>
    %41 = vector.shape_cast %40 : vector<8x8x128xf32> to vector<64x128xf32>
    %c1_33 = arith.constant 1 : index
    %c1_34 = arith.constant 1 : index
    %c0_35 = arith.constant 0 : index
    %42 = vector.load %arg9[%c1_33, %c1_34, %c0_35] : memref<10x10x128xf32, #tpu.memory_space<vmem>>, vector<8x8x128xf32>
    %43 = vector.shape_cast %42 : vector<8x8x128xf32> to vector<64x128xf32>
    %c1_36 = arith.constant 1 : index
    %c2_37 = arith.constant 2 : index
    %c0_38 = arith.constant 0 : index
    %44 = vector.load %arg9[%c1_36, %c2_37, %c0_38] : memref<10x10x128xf32, #tpu.memory_space<vmem>>, vector<8x8x128xf32>
    %45 = vector.shape_cast %44 : vector<8x8x128xf32> to vector<64x128xf32>
    %c2_39 = arith.constant 2 : index
    %c0_40 = arith.constant 0 : index
    %c0_41 = arith.constant 0 : index
    %46 = vector.load %arg9[%c2_39, %c0_40, %c0_41] : memref<10x10x128xf32, #tpu.memory_space<vmem>>, vector<8x8x128xf32>
    %47 = vector.shape_cast %46 : vector<8x8x128xf32> to vector<64x128xf32>
    %c2_42 = arith.constant 2 : index
    %c1_43 = arith.constant 1 : index
    %c0_44 = arith.constant 0 : index
    %48 = vector.load %arg9[%c2_42, %c1_43, %c0_44] : memref<10x10x128xf32, #tpu.memory_space<vmem>>, vector<8x8x128xf32>
    %49 = vector.shape_cast %48 : vector<8x8x128xf32> to vector<64x128xf32>
    %c2_45 = arith.constant 2 : index
    %c2_46 = arith.constant 2 : index
    %c0_47 = arith.constant 0 : index
    %50 = vector.load %arg9[%c2_45, %c2_46, %c0_47] : memref<10x10x128xf32, #tpu.memory_space<vmem>>, vector<8x8x128xf32>
    %51 = vector.shape_cast %50 : vector<8x8x128xf32> to vector<64x128xf32>
    %c0_48 = arith.constant 0 : index
    %c0_49 = arith.constant 0 : index
    %52 = vector.load %arg6[%c0_48, %c0_49] : memref<1x64xf32, #tpu.memory_space<vmem>>, vector<1x64xf32>
    %cst_50 = arith.constant 0.000000e+00 : f32
    %53 = vector.broadcast %cst_50 : f32 to vector<1x64xf32>
    %cst_51 = arith.constant 0.000000e+00 : f32
    %54 = vector.broadcast %cst_51 : f32 to vector<1x64xf32>
    %55 = tpu.concatenate %35, %37, %41, %43 in 1 : vector<64x128xf32>, vector<64x128xf32>, vector<64x128xf32>, vector<64x128xf32> -> vector<64x512xf32>
    %56 = arith.truncf %55 : vector<64x512xf32> to vector<64x512xbf16>
    %c0_52 = arith.constant 0 : index
    %c0_53 = arith.constant 0 : index
    %c0_54 = arith.constant 0 : index
    %c0_55 = arith.constant 0 : index
    %57 = vector.load %arg5[%c0_52, %c0_53, %c0_54, %c0_55] : memref<2x2x512x64xbf16, #tpu.memory_space<vmem>>, vector<1x1x512x64xbf16>
    %58 = vector.shape_cast %57 : vector<1x1x512x64xbf16> to vector<512x64xbf16>
    %cst_56 = arith.constant dense<0.000000e+00> : vector<64x64xf32>
    %59 = tpu.matmul %56, %58, %cst_56 {dimension_numbers = #tpu.dot_dimension_numbers<[1], [0], [0], [1], [0, 0, 1, 1], [], []>} : vector<64x512xbf16>, vector<512x64xbf16>, vector<64x64xf32> -> vector<64x64xf32>
    %60 = vector.broadcast %52 : vector<1x64xf32> to vector<64x64xf32>
    %61 = arith.addf %59, %60 : vector<64x64xf32>
    %62 = vector.shape_cast %61 : vector<64x64xf32> to vector<8x8x64xf32>
    %c0_57 = arith.constant 0 : index
    %c0_58 = arith.constant 0 : index
    %c0_59 = arith.constant 0 : index
    %c0_60 = arith.constant 0 : index
    %c0_61 = arith.constant 0 : index
    %c0_62 = arith.constant 0 : index
    %63 = vector.load %arg7[%c0_57, %c0_58, %c0_59, %c0_60, %c0_61, %c0_62] : memref<1x2x2x8x8x64xf32, #tpu.memory_space<vmem>>, vector<1x1x1x8x8x64xf32>
    %64 = vector.shape_cast %63 : vector<1x1x1x8x8x64xf32> to vector<8x8x64xf32>
    %65 = vector.shape_cast %62 : vector<8x8x64xf32> to vector<1x1x1x8x8x64xf32>
    tpu.vector_store %arg7[%c0_57, %c0_58, %c0_59, %c0_60, %c0_61, %c0_62], %65 {strides = array<i32>} : memref<1x2x2x8x8x64xf32, #tpu.memory_space<vmem>>, vector<1x1x1x8x8x64xf32>,
    %cst_63 = arith.constant dense<0.000000e+00> : vector<64xf32>
    %66 = vector.multi_reduction <add>, %61, %cst_63 [0] : vector<64x64xf32> to vector<64xf32>
    %67 = vector.shape_cast %66 : vector<64xf32> to vector<1x64xf32>
    %68 = arith.addf %53, %67 : vector<1x64xf32>
    %69 = arith.mulf %61, %61 : vector<64x64xf32>
    %cst_64 = arith.constant dense<0.000000e+00> : vector<64xf32>
    %70 = vector.multi_reduction <add>, %69, %cst_64 [0] : vector<64x64xf32> to vector<64xf32>
    %71 = vector.shape_cast %70 : vector<64xf32> to vector<1x64xf32>
    %72 = arith.addf %54, %71 : vector<1x64xf32>
    %73 = tpu.concatenate %37, %39, %43, %45 in 1 : vector<64x128xf32>, vector<64x128xf32>, vector<64x128xf32>, vector<64x128xf32> -> vector<64x512xf32>
    %74 = arith.truncf %73 : vector<64x512xf32> to vector<64x512xbf16>
    %c0_65 = arith.constant 0 : index
    %c1_66 = arith.constant 1 : index
    %c0_67 = arith.constant 0 : index
    %c0_68 = arith.constant 0 : index
    %75 = vector.load %arg5[%c0_65, %c1_66, %c0_67, %c0_68] : memref<2x2x512x64xbf16, #tpu.memory_space<vmem>>, vector<1x1x512x64xbf16>
    %76 = vector.shape_cast %75 : vector<1x1x512x64xbf16> to vector<512x64xbf16>
    %cst_69 = arith.constant dense<0.000000e+00> : vector<64x64xf32>
    %77 = tpu.matmul %74, %76, %cst_69 {dimension_numbers = #tpu.dot_dimension_numbers<[1], [0], [0], [1], [0, 0, 1, 1], [], []>} : vector<64x512xbf16>, vector<512x64xbf16>, vector<64x64xf32> -> vector<64x64xf32>
    %78 = vector.broadcast %52 : vector<1x64xf32> to vector<64x64xf32>
    %79 = arith.addf %77, %78 : vector<64x64xf32>
    %80 = vector.shape_cast %79 : vector<64x64xf32> to vector<8x8x64xf32>
    %c0_70 = arith.constant 0 : index
    %c0_71 = arith.constant 0 : index
    %c1_72 = arith.constant 1 : index
    %c0_73 = arith.constant 0 : index
    %c0_74 = arith.constant 0 : index
    %c0_75 = arith.constant 0 : index
    %81 = vector.load %arg7[%c0_70, %c0_71, %c1_72, %c0_73, %c0_74, %c0_75] : memref<1x2x2x8x8x64xf32, #tpu.memory_space<vmem>>, vector<1x1x1x8x8x64xf32>
    %82 = vector.shape_cast %81 : vector<1x1x1x8x8x64xf32> to vector<8x8x64xf32>
    %83 = vector.shape_cast %80 : vector<8x8x64xf32> to vector<1x1x1x8x8x64xf32>
    tpu.vector_store %arg7[%c0_70, %c0_71, %c1_72, %c0_73, %c0_74, %c0_75], %83 {strides = array<i32>} : memref<1x2x2x8x8x64xf32, #tpu.memory_space<vmem>>, vector<1x1x1x8x8x64xf32>,
    %cst_76 = arith.constant dense<0.000000e+00> : vector<64xf32>
    %84 = vector.multi_reduction <add>, %79, %cst_76 [0] : vector<64x64xf32> to vector<64xf32>
    %85 = vector.shape_cast %84 : vector<64xf32> to vector<1x64xf32>
    %86 = arith.addf %68, %85 : vector<1x64xf32>
    %87 = arith.mulf %79, %79 : vector<64x64xf32>
    %cst_77 = arith.constant dense<0.000000e+00> : vector<64xf32>
    %88 = vector.multi_reduction <add>, %87, %cst_77 [0] : vector<64x64xf32> to vector<64xf32>
    %89 = vector.shape_cast %88 : vector<64xf32> to vector<1x64xf32>
    %90 = arith.addf %72, %89 : vector<1x64xf32>
    %91 = tpu.concatenate %41, %43, %47, %49 in 1 : vector<64x128xf32>, vector<64x128xf32>, vector<64x128xf32>, vector<64x128xf32> -> vector<64x512xf32>
    %92 = arith.truncf %91 : vector<64x512xf32> to vector<64x512xbf16>
    %c1_78 = arith.constant 1 : index
    %c0_79 = arith.constant 0 : index
    %c0_80 = arith.constant 0 : index
    %c0_81 = arith.constant 0 : index
    %93 = vector.load %arg5[%c1_78, %c0_79, %c0_80, %c0_81] : memref<2x2x512x64xbf16, #tpu.memory_space<vmem>>, vector<1x1x512x64xbf16>
    %94 = vector.shape_cast %93 : vector<1x1x512x64xbf16> to vector<512x64xbf16>
    %cst_82 = arith.constant dense<0.000000e+00> : vector<64x64xf32>
    %95 = tpu.matmul %92, %94, %cst_82 {dimension_numbers = #tpu.dot_dimension_numbers<[1], [0], [0], [1], [0, 0, 1, 1], [], []>} : vector<64x512xbf16>, vector<512x64xbf16>, vector<64x64xf32> -> vector<64x64xf32>
    %96 = vector.broadcast %52 : vector<1x64xf32> to vector<64x64xf32>
    %97 = arith.addf %95, %96 : vector<64x64xf32>
    %98 = vector.shape_cast %97 : vector<64x64xf32> to vector<8x8x64xf32>
    %c0_83 = arith.constant 0 : index
    %c1_84 = arith.constant 1 : index
    %c0_85 = arith.constant 0 : index
    %c0_86 = arith.constant 0 : index
    %c0_87 = arith.constant 0 : index
    %c0_88 = arith.constant 0 : index
    %99 = vector.load %arg7[%c0_83, %c1_84, %c0_85, %c0_86, %c0_87, %c0_88] : memref<1x2x2x8x8x64xf32, #tpu.memory_space<vmem>>, vector<1x1x1x8x8x64xf32>
    %100 = vector.shape_cast %99 : vector<1x1x1x8x8x64xf32> to vector<8x8x64xf32>
    %101 = vector.shape_cast %98 : vector<8x8x64xf32> to vector<1x1x1x8x8x64xf32>
    tpu.vector_store %arg7[%c0_83, %c1_84, %c0_85, %c0_86, %c0_87, %c0_88], %101 {strides = array<i32>} : memref<1x2x2x8x8x64xf32, #tpu.memory_space<vmem>>, vector<1x1x1x8x8x64xf32>,
    %cst_89 = arith.constant dense<0.000000e+00> : vector<64xf32>
    %102 = vector.multi_reduction <add>, %97, %cst_89 [0] : vector<64x64xf32> to vector<64xf32>
    %103 = vector.shape_cast %102 : vector<64xf32> to vector<1x64xf32>
    %104 = arith.addf %86, %103 : vector<1x64xf32>
    %105 = arith.mulf %97, %97 : vector<64x64xf32>
    %cst_90 = arith.constant dense<0.000000e+00> : vector<64xf32>
    %106 = vector.multi_reduction <add>, %105, %cst_90 [0] : vector<64x64xf32> to vector<64xf32>
    %107 = vector.shape_cast %106 : vector<64xf32> to vector<1x64xf32>
    %108 = arith.addf %90, %107 : vector<1x64xf32>
    %109 = tpu.concatenate %43, %45, %49, %51 in 1 : vector<64x128xf32>, vector<64x128xf32>, vector<64x128xf32>, vector<64x128xf32> -> vector<64x512xf32>
    %110 = arith.truncf %109 : vector<64x512xf32> to vector<64x512xbf16>
    %c1_91 = arith.constant 1 : index
    %c1_92 = arith.constant 1 : index
    %c0_93 = arith.constant 0 : index
    %c0_94 = arith.constant 0 : index
    %111 = vector.load %arg5[%c1_91, %c1_92, %c0_93, %c0_94] : memref<2x2x512x64xbf16, #tpu.memory_space<vmem>>, vector<1x1x512x64xbf16>
    %112 = vector.shape_cast %111 : vector<1x1x512x64xbf16> to vector<512x64xbf16>
    %cst_95 = arith.constant dense<0.000000e+00> : vector<64x64xf32>
    %113 = tpu.matmul %110, %112, %cst_95 {dimension_numbers = #tpu.dot_dimension_numbers<[1], [0], [0], [1], [0, 0, 1, 1], [], []>} : vector<64x512xbf16>, vector<512x64xbf16>, vector<64x64xf32> -> vector<64x64xf32>
    %114 = vector.broadcast %52 : vector<1x64xf32> to vector<64x64xf32>
    %115 = arith.addf %113, %114 : vector<64x64xf32>
    %116 = vector.shape_cast %115 : vector<64x64xf32> to vector<8x8x64xf32>
    %c0_96 = arith.constant 0 : index
    %c1_97 = arith.constant 1 : index
    %c1_98 = arith.constant 1 : index
    %c0_99 = arith.constant 0 : index
    %c0_100 = arith.constant 0 : index
    %c0_101 = arith.constant 0 : index
    %117 = vector.load %arg7[%c0_96, %c1_97, %c1_98, %c0_99, %c0_100, %c0_101] : memref<1x2x2x8x8x64xf32, #tpu.memory_space<vmem>>, vector<1x1x1x8x8x64xf32>
    %118 = vector.shape_cast %117 : vector<1x1x1x8x8x64xf32> to vector<8x8x64xf32>
    %119 = vector.shape_cast %116 : vector<8x8x64xf32> to vector<1x1x1x8x8x64xf32>
    tpu.vector_store %arg7[%c0_96, %c1_97, %c1_98, %c0_99, %c0_100, %c0_101], %119 {strides = array<i32>} : memref<1x2x2x8x8x64xf32, #tpu.memory_space<vmem>>, vector<1x1x1x8x8x64xf32>,
    %cst_102 = arith.constant dense<0.000000e+00> : vector<64xf32>
    %120 = vector.multi_reduction <add>, %115, %cst_102 [0] : vector<64x64xf32> to vector<64xf32>
    %121 = vector.shape_cast %120 : vector<64xf32> to vector<1x64xf32>
    %122 = arith.addf %104, %121 : vector<1x64xf32>
    %123 = arith.mulf %115, %115 : vector<64x64xf32>
    %cst_103 = arith.constant dense<0.000000e+00> : vector<64xf32>
    %124 = vector.multi_reduction <add>, %123, %cst_103 [0] : vector<64x64xf32> to vector<64xf32>
    %125 = vector.shape_cast %124 : vector<64xf32> to vector<1x64xf32>
    %126 = arith.addf %108, %125 : vector<1x64xf32>
    %c0_i32 = arith.constant 0 : i32
    %127 = arith.cmpi eq, %arg0, %c0_i32 : i32
    %128 = arith.extui %127 : i1 to i32
    %c0_i32_104 = arith.constant 0 : i32
    %129 = arith.cmpi ne, %128, %c0_i32_104 : i32
    scf.if %129 {
      %cst_109 = arith.constant 0.000000e+00 : f32
      %134 = vector.broadcast %cst_109 : f32 to vector<2x64xf32>
      %c0_110 = arith.constant 0 : index
      %c0_111 = arith.constant 0 : index
      %135 = vector.load %arg8[%c0_110, %c0_111] : memref<2x64xf32, #tpu.memory_space<vmem>>, vector<2x64xf32>
      tpu.vector_store %arg8[%c0_110, %c0_111], %134 {strides = array<i32>} : memref<2x64xf32, #tpu.memory_space<vmem>>, vector<2x64xf32>,
    } else {
    }
    %c0_105 = arith.constant 0 : index
    %c0_106 = arith.constant 0 : index
    %130 = vector.load %arg8[%c0_105, %c0_106] : memref<2x64xf32, #tpu.memory_space<vmem>>, vector<2x64xf32>
    %131 = tpu.concatenate %122, %126 in 0 : vector<1x64xf32>, vector<1x64xf32> -> vector<2x64xf32>
    %132 = arith.addf %130, %131 : vector<2x64xf32>
    %c0_107 = arith.constant 0 : index
    %c0_108 = arith.constant 0 : index
    %133 = vector.load %arg8[%c0_107, %c0_108] : memref<2x64xf32, #tpu.memory_space<vmem>>, vector<2x64xf32>
    tpu.vector_store %arg8[%c0_107, %c0_108], %132 {strides = array<i32>} : memref<2x64xf32, #tpu.memory_space<vmem>>, vector<2x64xf32>,
    return
  }
  func.func @transform_0(%arg0: i32) -> (i32, i32) {
    %c0_i32 = arith.constant 0 : i32
    %c0_i32_0 = arith.constant 0 : i32
    %c0_i32_1 = arith.constant 0 : i32
    return %c0_i32, %c0_i32_0 : i32, i32
  }
  func.func @transform_1(%arg0: i32) -> (i32, i32) {
    %c0_i32 = arith.constant 0 : i32
    %c0_i32_0 = arith.constant 0 : i32
    %c0_i32_1 = arith.constant 0 : i32
    return %c0_i32, %c0_i32_0 : i32, i32
  }
  func.func @transform_2(%arg0: i32) -> (i32, i32) {
    %c0_i32 = arith.constant 0 : i32
    %c0_i32_0 = arith.constant 0 : i32
    %c0_i32_1 = arith.constant 0 : i32
    return %c0_i32, %c0_i32_0 : i32, i32
  }
  func.func @transform_3(%arg0: i32) -> (i32, i32, i32, i32) {
    %c0_i32 = arith.constant 0 : i32
    %c0_i32_0 = arith.constant 0 : i32
    %c0_i32_1 = arith.constant 0 : i32
    %c0_i32_2 = arith.constant 0 : i32
    return %arg0, %c0_i32, %c0_i32_0, %c0_i32_1 : i32, i32, i32, i32
  }
  func.func @transform_4(%arg0: i32) -> (i32, i32, i32, i32) {
    %c0_i32 = arith.constant 0 : i32
    %c0_i32_0 = arith.constant 0 : i32
    %c0_i32_1 = arith.constant 0 : i32
    %c0_i32_2 = arith.constant 0 : i32
    %c0_i32_3 = arith.constant 0 : i32
    return %c0_i32, %c0_i32_0, %c0_i32_1, %c0_i32_2 : i32, i32, i32, i32
  }
  func.func @transform_5(%arg0: i32) -> (i32, i32) {
    %c0_i32 = arith.constant 0 : i32
    %c0_i32_0 = arith.constant 0 : i32
    %c0_i32_1 = arith.constant 0 : i32
    return %c0_i32, %c0_i32_0 : i32, i32
  }
  func.func @transform_6(%arg0: i32) -> (i32, i32, i32, i32, i32, i32) {
    %c0_i32 = arith.constant 0 : i32
    %c0_i32_0 = arith.constant 0 : i32
    %c0_i32_1 = arith.constant 0 : i32
    %c0_i32_2 = arith.constant 0 : i32
    %c0_i32_3 = arith.constant 0 : i32
    %c0_i32_4 = arith.constant 0 : i32
    return %arg0, %c0_i32, %c0_i32_0, %c0_i32_1, %c0_i32_2, %c0_i32_3 : i32, i32, i32, i32, i32, i32
  }
  func.func @transform_7(%arg0: i32) -> (i32, i32) {
    %c0_i32 = arith.constant 0 : i32
    %c0_i32_0 = arith.constant 0 : i32
    %c0_i32_1 = arith.constant 0 : i32
    return %c0_i32, %c0_i32_0 : i32, i32
  }
}

module attributes {stable_mosaic.version = 11 : i64} {
  func.func @kernel(%arg0: i32, %arg1: memref<2x64xf32, #tpu.memory_space<vmem>>, %arg2: memref<1x64xf32, #tpu.memory_space<vmem>>, %arg3: memref<1x64xf32, #tpu.memory_space<vmem>>, %arg4: memref<1x16x16x64xf32, #tpu.memory_space<vmem>>, %arg5: memref<576x128xbf16, #tpu.memory_space<vmem>>, %arg6: memref<1x128xf32, #tpu.memory_space<vmem>>, %arg7: memref<1x16x16x128xf32, #tpu.memory_space<vmem>>, %arg8: memref<18x18x64xf32, #tpu.memory_space<vmem>>) attributes {dimension_semantics = [#tpu.dimension_semantics<parallel>], iteration_bounds = array<i64: 2>, scalar_prefetch = 0 : i64, scratch_operands = 1 : i64, tpu.core_type = #tpu.core_type<tc>, window_params = [{pipeline_mode = #tpu.pipeline_mode<synchronous>, transform_indices = @transform_0, window_bounds = array<i64: 2, 64>}, {pipeline_mode = #tpu.pipeline_mode<synchronous>, transform_indices = @transform_1, window_bounds = array<i64: 1, 64>}, {pipeline_mode = #tpu.pipeline_mode<synchronous>, transform_indices = @transform_2, window_bounds = array<i64: 1, 64>}, {transform_indices = @transform_3, window_bounds = array<i64: 1, 16, 16, 64>}, {pipeline_mode = #tpu.pipeline_mode<synchronous>, transform_indices = @transform_4, window_bounds = array<i64: 576, 128>}, {pipeline_mode = #tpu.pipeline_mode<synchronous>, transform_indices = @transform_5, window_bounds = array<i64: 1, 128>}, {transform_indices = @transform_6, window_bounds = array<i64: 1, 16, 16, 128>}]} {
    %c0 = arith.constant 0 : index
    %c0_0 = arith.constant 0 : index
    %0 = vector.load %arg1[%c0, %c0_0] : memref<2x64xf32, #tpu.memory_space<vmem>>, vector<1x64xf32>
    %cst = arith.constant 0.001953125 : f32
    %1 = vector.broadcast %cst : f32 to vector<1x64xf32>
    %2 = arith.mulf %0, %1 : vector<1x64xf32>
    %c1 = arith.constant 1 : index
    %c0_1 = arith.constant 0 : index
    %3 = vector.load %arg1[%c1, %c0_1] : memref<2x64xf32, #tpu.memory_space<vmem>>, vector<1x64xf32>
    %cst_2 = arith.constant 0.001953125 : f32
    %4 = vector.broadcast %cst_2 : f32 to vector<1x64xf32>
    %5 = arith.mulf %3, %4 : vector<1x64xf32>
    %6 = arith.mulf %2, %2 : vector<1x64xf32>
    %7 = arith.subf %5, %6 : vector<1x64xf32>
    %cst_3 = arith.constant 0.000000e+00 : f32
    %8 = vector.broadcast %cst_3 : f32 to vector<1x64xf32>
    %9 = arith.maximumf %7, %8 : vector<1x64xf32>
    %c0_4 = arith.constant 0 : index
    %c0_5 = arith.constant 0 : index
    %10 = vector.load %arg2[%c0_4, %c0_5] : memref<1x64xf32, #tpu.memory_space<vmem>>, vector<1x64xf32>
    %cst_6 = arith.constant 8.000000e-01 : f32
    %11 = vector.broadcast %cst_6 : f32 to vector<1x64xf32>
    %12 = arith.addf %9, %11 : vector<1x64xf32>
    %13 = math.rsqrt %12 : vector<1x64xf32>
    %14 = arith.mulf %10, %13 : vector<1x64xf32>
    %c0_7 = arith.constant 0 : index
    %c0_8 = arith.constant 0 : index
    %15 = vector.load %arg3[%c0_7, %c0_8] : memref<1x64xf32, #tpu.memory_space<vmem>>, vector<1x64xf32>
    %16 = arith.mulf %2, %14 : vector<1x64xf32>
    %17 = arith.subf %15, %16 : vector<1x64xf32>
    %c0_9 = arith.constant 0 : index
    %c0_10 = arith.constant 0 : index
    %c0_11 = arith.constant 0 : index
    %c0_12 = arith.constant 0 : index
    %18 = vector.load %arg4[%c0_9, %c0_10, %c0_11, %c0_12] : memref<1x16x16x64xf32, #tpu.memory_space<vmem>>, vector<1x16x16x64xf32>
    %19 = vector.shape_cast %18 : vector<1x16x16x64xf32> to vector<16x16x64xf32>
    %20 = vector.shape_cast %14 : vector<1x64xf32> to vector<1x1x64xf32>
    %21 = vector.broadcast %20 : vector<1x1x64xf32> to vector<16x16x64xf32>
    %22 = arith.mulf %19, %21 : vector<16x16x64xf32>
    %23 = vector.shape_cast %17 : vector<1x64xf32> to vector<1x1x64xf32>
    %24 = vector.broadcast %23 : vector<1x1x64xf32> to vector<16x16x64xf32>
    %25 = arith.addf %22, %24 : vector<16x16x64xf32>
    %cst_13 = arith.constant 0.000000e+00 : f32
    %26 = vector.broadcast %cst_13 : f32 to vector<16x16x64xf32>
    %27 = arith.cmpf oge, %25, %26 : vector<16x16x64xf32>
    %cst_14 = arith.constant 2.000000e-01 : f32
    %28 = vector.broadcast %cst_14 : f32 to vector<16x16x64xf32>
    %29 = arith.mulf %28, %25 : vector<16x16x64xf32>
    %30 = arith.select %27, %25, %29 : vector<16x16x64xi1>, vector<16x16x64xf32>
    %cst_15 = arith.constant 0.000000e+00 : f32
    %31 = vector.broadcast %cst_15 : f32 to vector<18x18x64xf32>
    %c0_16 = arith.constant 0 : index
    %c0_17 = arith.constant 0 : index
    %c0_18 = arith.constant 0 : index
    %32 = vector.load %arg8[%c0_16, %c0_17, %c0_18] : memref<18x18x64xf32, #tpu.memory_space<vmem>>, vector<18x18x64xf32>
    tpu.vector_store %arg8[%c0_16, %c0_17, %c0_18], %31 {strides = array<i32>} : memref<18x18x64xf32, #tpu.memory_space<vmem>>, vector<18x18x64xf32>,
    %c1_19 = arith.constant 1 : index
    %c1_20 = arith.constant 1 : index
    %c0_21 = arith.constant 0 : index
    %33 = vector.load %arg8[%c1_19, %c1_20, %c0_21] : memref<18x18x64xf32, #tpu.memory_space<vmem>>, vector<16x16x64xf32>
    tpu.vector_store %arg8[%c1_19, %c1_20, %c0_21], %30 {strides = array<i32>} : memref<18x18x64xf32, #tpu.memory_space<vmem>>, vector<16x16x64xf32>,
    %c0_22 = arith.constant 0 : index
    %c0_23 = arith.constant 0 : index
    %c0_24 = arith.constant 0 : index
    %34 = vector.load %arg8[%c0_22, %c0_23, %c0_24] : memref<18x18x64xf32, #tpu.memory_space<vmem>>, vector<16x16x64xf32>
    %35 = vector.shape_cast %34 : vector<16x16x64xf32> to vector<256x64xf32>
    %c0_25 = arith.constant 0 : index
    %c1_26 = arith.constant 1 : index
    %c0_27 = arith.constant 0 : index
    %36 = vector.load %arg8[%c0_25, %c1_26, %c0_27] : memref<18x18x64xf32, #tpu.memory_space<vmem>>, vector<16x16x64xf32>
    %37 = vector.shape_cast %36 : vector<16x16x64xf32> to vector<256x64xf32>
    %c0_28 = arith.constant 0 : index
    %c2 = arith.constant 2 : index
    %c0_29 = arith.constant 0 : index
    %38 = vector.load %arg8[%c0_28, %c2, %c0_29] : memref<18x18x64xf32, #tpu.memory_space<vmem>>, vector<16x16x64xf32>
    %39 = vector.shape_cast %38 : vector<16x16x64xf32> to vector<256x64xf32>
    %c1_30 = arith.constant 1 : index
    %c0_31 = arith.constant 0 : index
    %c0_32 = arith.constant 0 : index
    %40 = vector.load %arg8[%c1_30, %c0_31, %c0_32] : memref<18x18x64xf32, #tpu.memory_space<vmem>>, vector<16x16x64xf32>
    %41 = vector.shape_cast %40 : vector<16x16x64xf32> to vector<256x64xf32>
    %c1_33 = arith.constant 1 : index
    %c1_34 = arith.constant 1 : index
    %c0_35 = arith.constant 0 : index
    %42 = vector.load %arg8[%c1_33, %c1_34, %c0_35] : memref<18x18x64xf32, #tpu.memory_space<vmem>>, vector<16x16x64xf32>
    %43 = vector.shape_cast %42 : vector<16x16x64xf32> to vector<256x64xf32>
    %c1_36 = arith.constant 1 : index
    %c2_37 = arith.constant 2 : index
    %c0_38 = arith.constant 0 : index
    %44 = vector.load %arg8[%c1_36, %c2_37, %c0_38] : memref<18x18x64xf32, #tpu.memory_space<vmem>>, vector<16x16x64xf32>
    %45 = vector.shape_cast %44 : vector<16x16x64xf32> to vector<256x64xf32>
    %c2_39 = arith.constant 2 : index
    %c0_40 = arith.constant 0 : index
    %c0_41 = arith.constant 0 : index
    %46 = vector.load %arg8[%c2_39, %c0_40, %c0_41] : memref<18x18x64xf32, #tpu.memory_space<vmem>>, vector<16x16x64xf32>
    %47 = vector.shape_cast %46 : vector<16x16x64xf32> to vector<256x64xf32>
    %c2_42 = arith.constant 2 : index
    %c1_43 = arith.constant 1 : index
    %c0_44 = arith.constant 0 : index
    %48 = vector.load %arg8[%c2_42, %c1_43, %c0_44] : memref<18x18x64xf32, #tpu.memory_space<vmem>>, vector<16x16x64xf32>
    %49 = vector.shape_cast %48 : vector<16x16x64xf32> to vector<256x64xf32>
    %c2_45 = arith.constant 2 : index
    %c2_46 = arith.constant 2 : index
    %c0_47 = arith.constant 0 : index
    %50 = vector.load %arg8[%c2_45, %c2_46, %c0_47] : memref<18x18x64xf32, #tpu.memory_space<vmem>>, vector<16x16x64xf32>
    %51 = vector.shape_cast %50 : vector<16x16x64xf32> to vector<256x64xf32>
    %52 = tpu.concatenate %35, %37, %39, %41, %43, %45, %47, %49, %51 in 1 : vector<256x64xf32>, vector<256x64xf32>, vector<256x64xf32>, vector<256x64xf32>, vector<256x64xf32>, vector<256x64xf32>, vector<256x64xf32>, vector<256x64xf32>, vector<256x64xf32> -> vector<256x576xf32>
    %53 = arith.truncf %52 : vector<256x576xf32> to vector<256x576xbf16>
    %c0_48 = arith.constant 0 : index
    %c0_49 = arith.constant 0 : index
    %54 = vector.load %arg5[%c0_48, %c0_49] : memref<576x128xbf16, #tpu.memory_space<vmem>>, vector<576x128xbf16>
    %cst_50 = arith.constant dense<0.000000e+00> : vector<256x128xf32>
    %55 = tpu.matmul %53, %54, %cst_50 {dimension_numbers = #tpu.dot_dimension_numbers<[1], [0], [0], [1], [0, 0, 1, 1], [], []>} : vector<256x576xbf16>, vector<576x128xbf16>, vector<256x128xf32> -> vector<256x128xf32>
    %c0_51 = arith.constant 0 : index
    %c0_52 = arith.constant 0 : index
    %56 = vector.load %arg6[%c0_51, %c0_52] : memref<1x128xf32, #tpu.memory_space<vmem>>, vector<1x128xf32>
    %57 = vector.broadcast %56 : vector<1x128xf32> to vector<256x128xf32>
    %58 = arith.addf %55, %57 : vector<256x128xf32>
    %59 = math.tanh %58 : vector<256x128xf32>
    %60 = vector.shape_cast %59 : vector<256x128xf32> to vector<16x16x128xf32>
    %c0_53 = arith.constant 0 : index
    %c0_54 = arith.constant 0 : index
    %c0_55 = arith.constant 0 : index
    %c0_56 = arith.constant 0 : index
    %61 = vector.load %arg7[%c0_53, %c0_54, %c0_55, %c0_56] : memref<1x16x16x128xf32, #tpu.memory_space<vmem>>, vector<1x16x16x128xf32>
    %62 = vector.shape_cast %61 : vector<1x16x16x128xf32> to vector<16x16x128xf32>
    %63 = vector.shape_cast %60 : vector<16x16x128xf32> to vector<1x16x16x128xf32>
    tpu.vector_store %arg7[%c0_53, %c0_54, %c0_55, %c0_56], %63 {strides = array<i32>} : memref<1x16x16x128xf32, #tpu.memory_space<vmem>>, vector<1x16x16x128xf32>,
    return
  }
  func.func @transform_0(%arg0: i32) -> (i32, i32) {
    %c0_i32 = arith.constant 0 : i32
    %c0_i32_0 = arith.constant 0 : i32
    %c0_i32_1 = arith.constant 0 : i32
    return %c0_i32, %c0_i32_0 : i32, i32
  }
  func.func @transform_1(%arg0: i32) -> (i32, i32) {
    %c0_i32 = arith.constant 0 : i32
    %c0_i32_0 = arith.constant 0 : i32
    %c0_i32_1 = arith.constant 0 : i32
    return %c0_i32, %c0_i32_0 : i32, i32
  }
  func.func @transform_2(%arg0: i32) -> (i32, i32) {
    %c0_i32 = arith.constant 0 : i32
    %c0_i32_0 = arith.constant 0 : i32
    %c0_i32_1 = arith.constant 0 : i32
    return %c0_i32, %c0_i32_0 : i32, i32
  }
  func.func @transform_3(%arg0: i32) -> (i32, i32, i32, i32) {
    %c0_i32 = arith.constant 0 : i32
    %c0_i32_0 = arith.constant 0 : i32
    %c0_i32_1 = arith.constant 0 : i32
    %c0_i32_2 = arith.constant 0 : i32
    return %arg0, %c0_i32, %c0_i32_0, %c0_i32_1 : i32, i32, i32, i32
  }
  func.func @transform_4(%arg0: i32) -> (i32, i32) {
    %c0_i32 = arith.constant 0 : i32
    %c0_i32_0 = arith.constant 0 : i32
    %c0_i32_1 = arith.constant 0 : i32
    return %c0_i32, %c0_i32_0 : i32, i32
  }
  func.func @transform_5(%arg0: i32) -> (i32, i32) {
    %c0_i32 = arith.constant 0 : i32
    %c0_i32_0 = arith.constant 0 : i32
    %c0_i32_1 = arith.constant 0 : i32
    return %c0_i32, %c0_i32_0 : i32, i32
  }
  func.func @transform_6(%arg0: i32) -> (i32, i32, i32, i32) {
    %c0_i32 = arith.constant 0 : i32
    %c0_i32_0 = arith.constant 0 : i32
    %c0_i32_1 = arith.constant 0 : i32
    %c0_i32_2 = arith.constant 0 : i32
    return %arg0, %c0_i32, %c0_i32_0, %c0_i32_1 : i32, i32, i32, i32
  }
}

</mosaic_0001>

<llo_original>
// kernel: _lambda_.6
$region0: #{_lambda_.6}
  #allocation0 [shape = 'u32[]', space=smem, size = 0x4, offset = 0x4, fixed_abs, tag = 'smem constant byte address 0x4 - core index']
  #allocation1 [shape = 'u32[144,128]{1,0:T(1,128)}', space=vmem, size = 0x12000, scoped, tag = 'internal scratch']
  %s0 = inlined_call_operand.vmem [shape: f32[32,128], index: 0, kind: input, shape index: {}]
  %s1 = inlined_call_operand.vmem [shape: f32[2,128], index: 1, kind: output, shape index: {}]
  %s2 = sld [smem:[#allocation0]]
  $region18: #{_lambda_.6} parent=0
    _
  %s4 = ssub.s32 1, %s2
  %s5 = scalar_select 0, %s4, %s2
  // Predicated region
  $region2: #{_lambda_.6} parent=0 // pred_check
    _
  $region3: #{_lambda_.6} parent=0 // pred_check_branch
    %7 = sbr.rel (0) target = $region5
  $region4: #{_lambda_.6} parent=0 // pred_region
    _
  $region5: #{_lambda_.6} parent=0 // pred_fallthru
    _
  %v8 = vld [vmem:[%s0] sm:$0xff]
  %v9 = vld [vmem:[%s0 + $0x8] sm:$0xff]
  %v10 = vld [vmem:[%s0 + $0x10] sm:$0xff]
  %v11 = vld [vmem:[%s0 + $0x18] sm:$0xff]
  %v12 = vadd.f32 %v8, %v9
  %v13 = vadd.f32 %v12, %v10
  %v14 = vadd.f32 %v13, %v11
  %v15 = vrot.slane %v14, 4
  %v16 = vadd.f32 %v14, %v15
  %v17 = vrot.slane %v16, 2
  %v18 = vadd.f32 %v16, %v17
  %v19 = vrot.slane %v18, 1
  %v20 = vadd.f32 %v18, %v19
  %v21 = vmul.f32 %v8, %v8
  %v22 = vmul.f32 %v9, %v9
  %v23 = vmul.f32 %v10, %v10
  %v24 = vmul.f32 %v11, %v11
  %v25 = vadd.f32 %v21, %v22
  %v26 = vadd.f32 %v25, %v23
  %v27 = vadd.f32 %v26, %v24
  %v28 = vrot.slane %v27, 4
  %v29 = vadd.f32 %v27, %v28
  %v30 = vrot.slane %v29, 2
  %v31 = vadd.f32 %v29, %v30
  %v32 = vrot.slane %v31, 1
  %v33 = vadd.f32 %v31, %v32
  %vm34 = vcmask 1040384
  %v35 = vsel %vm34, %v20, %v33
  %p36 = scmp.eq.s32.totalorder 0, 0
  // Predicated region
  $region6: #{_lambda_.6} parent=0 // pred_check
    %p37 = pneg %p36
  $region7: #{_lambda_.6} parent=0 // pred_check_branch
    %39 = sbr.rel (%p37) target = $region9
  $region8: #{_lambda_.6} parent=0 // pred_region
    %40 = vst [vmem:[%s1] sm:$0x3] 0.0
  $region9: #{_lambda_.6} parent=0 // pred_fallthru
    _
  %v41 = vld [vmem:[%s1] sm:$0x3]
  %v42 = vadd.f32 %v41, %v35
  %43 = vst [vmem:[%s1] sm:$0x3] %v42
  // Predicated region
  $region10: #{_lambda_.6} parent=0 // pred_check
    _
  $region11: #{_lambda_.6} parent=0 // pred_check_branch
    %45 = sbr.rel (0) target = $region13
  $region12: #{_lambda_.6} parent=0 // pred_region
    _
  $region13: #{_lambda_.6} parent=0 // pred_fallthru
    _
  // Predicated region
  $region14: #{_lambda_.6} parent=0 // pred_check
    _
  $region15: #{_lambda_.6} parent=0 // pred_check_branch
    %47 = sbr.rel (0) target = $region17
  $region16: #{_lambda_.6} parent=0 // pred_region
    _
  $region17: #{_lambda_.6} parent=0 // pred_fallthru
    _

// kernel: _lambda_.5
$region0: #{_lambda_.5}
  #allocation0 [shape = 'u32[]', space=smem, size = 0x4, offset = 0x4, fixed_abs, tag = 'smem constant byte address 0x4 - core index']
  #allocation1 [shape = 'u32[144,128]{1,0:T(1,128)}', space=vmem, size = 0x12000, scoped, tag = 'internal scratch']
  %s0 = inlined_call_operand.vmem [shape: f32[2,32], index: 0, kind: input, shape index: {}]
  %s1 = inlined_call_operand.vmem [shape: bf16[32,2048], index: 1, kind: input, shape index: {}]
  %s2 = inlined_call_operand.vmem [shape: f32[1,2048], index: 2, kind: input, shape index: {}]
  %s3 = inlined_call_operand.vmem [shape: f32[2,2048], index: 3, kind: output, shape index: {}]
  %s4 = sld [smem:[#allocation0]]
  $region68: #{_lambda_.5} parent=0
    _
  %s6 = ssub.s32 1, %s4
  %s7 = scalar_select 0, %s6, %s4
  $region1: #{_lambda_.5} parent=0
    #allocation2 [shape = 'u8[65536]{0}', space=vmem, size = 0x10000, scoped, tag = 'input window, operand 1']
    loop: start=0, step=1, limit=6
    $region2: #{_lambda_.5} parent=1 // loop_pre_header
      _
    $region3: #{_lambda_.5} parent=1 // loop_header
      %s9 = sphi 0, %s13
      %p10 = scmp.ge.s32.totalorder %s9, 6
      %s17 = sphi 0, %s17
      %s19 = sphi 0, %s17
      %s20 = sphi 0, %s19
      %s34 = sphi 0, %s20
      %s40 = sphi 0, %s42
      %s43 = sphi 0, %s40
      %s44 = sphi 0, %s43
      %s60 = sphi 0, %s44
      %s66 = sphi 0, %s68
      %s69 = sphi 0, %s66
      %s70 = sphi 0, %s69
      %s86 = sphi 0, %s70
      %s92 = sphi 0, %s94
      %s95 = sphi 0, %s92
      %s96 = sphi 0, %s95
      %s112 = sphi 0, %s96
    $region4: #{_lambda_.5} parent=1 // loop_header_branch
      %12 = sbr.rel (%p10) target = $region8
    $region5: #{_lambda_.5} parent=1 // loop_body
      %s14 = ssub.s32 %s9, 1
      %s15 = ssub.s32 %s9, 2
      %s16 = sadd.s32 %s9, 1
      %s18 = sadd.s32 %s17, 1
      %p21 = scmp.eq.s32.totalorder %s9, 3
      %p22 = scmp.ne.s32.totalorder %s17, %s19
      %p23 = scmp.eq.s32.totalorder %s9, 0
      %p24 = por %p22, %p23
      %p25 = scmp.ne.s32.totalorder %s17, %s19
      %p26 = scmp.eq.s32.totalorder %s14, 3
      %p27 = por %p25, %p26
      %p28 = scmp.ne.s32.totalorder %s19, %s20
      %p29 = scmp.eq.s32.totalorder %s14, 0
      %p30 = por %p28, %p29
      %p31 = scmp.ne.s32.totalorder %s19, %s20
      %p32 = scmp.eq.s32.totalorder %s15, 3
      %p33 = por %p31, %p32
      %p35 = scmp.ne.s32.totalorder %s20, %s34
      %p36 = scmp.eq.s32.totalorder %s15, 0
      %p37 = por %p35, %p36
      %s38 = ssub.s32 %s9, %s16
      %p39 = scmp.eq.s32.totalorder %s38, 0
      %s41 = sadd.s32 %s40, 1
      %s42 = scalar_select %p39, %s40, %s41
      %p45 = pneg %p39
      %p46 = scmp.eq.s32.totalorder %s9, 3
      %p47 = por %p45, %p46
      %p48 = scmp.ne.s32.totalorder %s40, %s43
      %p49 = scmp.eq.s32.totalorder %s9, 0
      %p50 = por %p48, %p49
      %p51 = scmp.ne.s32.totalorder %s40, %s43
      %p52 = scmp.eq.s32.totalorder %s14, 3
      %p53 = por %p51, %p52
      %p54 = scmp.ne.s32.totalorder %s43, %s44
      %p55 = scmp.eq.s32.totalorder %s14, 0
      %p56 = por %p54, %p55
      %p57 = scmp.ne.s32.totalorder %s43, %s44
      %p58 = scmp.eq.s32.totalorder %s15, 3
      %p59 = por %p57, %p58
      %p61 = scmp.ne.s32.totalorder %s44, %s60
      %p62 = scmp.eq.s32.totalorder %s15, 0
      %p63 = por %p61, %p62
      %s64 = ssub.s32 %s9, %s16
      %p65 = scmp.eq.s32.totalorder %s64, 0
      %s67 = sadd.s32 %s66, 1
      %s68 = scalar_select %p65, %s66, %s67
      %p71 = pneg %p65
      %p72 = scmp.eq.s32.totalorder %s9, 3
      %p73 = por %p71, %p72
      %p74 = scmp.ne.s32.totalorder %s66, %s69
      %p75 = scmp.eq.s32.totalorder %s9, 0
      %p76 = por %p74, %p75
      %p77 = scmp.ne.s32.totalorder %s66, %s69
      %p78 = scmp.eq.s32.totalorder %s14, 3
      %p79 = por %p77, %p78
      %p80 = scmp.ne.s32.totalorder %s69, %s70
      %p81 = scmp.eq.s32.totalorder %s14, 0
      %p82 = por %p80, %p81
      %p83 = scmp.ne.s32.totalorder %s69, %s70
      %p84 = scmp.eq.s32.totalorder %s15, 3
      %p85 = por %p83, %p84
      %p87 = scmp.ne.s32.totalorder %s70, %s86
      %p88 = scmp.eq.s32.totalorder %s15, 0
      %p89 = por %p87, %p88
      %s90 = ssub.s32 %s9, %s16
      %p91 = scmp.eq.s32.totalorder %s90, 0
      %s93 = sadd.s32 %s92, 1
      %s94 = scalar_select %p91, %s92, %s93
      %p97 = pneg %p91
      %p98 = scmp.eq.s32.totalorder %s9, 3
      %p99 = por %p97, %p98
      %p100 = scmp.ne.s32.totalorder %s92, %s95
      %p101 = scmp.eq.s32.totalorder %s9, 0
      %p102 = por %p100, %p101
      %p103 = scmp.ne.s32.totalorder %s92, %s95
      %p104 = scmp.eq.s32.totalorder %s14, 3
      %p105 = por %p103, %p104
      %p106 = scmp.ne.s32.totalorder %s95, %s96
      %p107 = scmp.eq.s32.totalorder %s14, 0
      %p108 = por %p106, %p107
      %p109 = scmp.ne.s32.totalorder %s95, %s96
      %p110 = scmp.eq.s32.totalorder %s15, 3
      %p111 = por %p109, %p110
      %p113 = scmp.ne.s32.totalorder %s96, %s112
      %p114 = scmp.eq.s32.totalorder %s15, 0
      %p115 = por %p113, %p114
      %p116 = scmp.le.s32.totalorder 1, %s9
      %p117 = scmp.lt.s32.totalorder %s9, 5
      %p118 = pnand %p116, %p117
      %p119 = pneg %p118
      // Predicated region
      $region9: #{_lambda_.5} parent=5 // pred_check
        _
      $region10: #{_lambda_.5} parent=5 // pred_check_branch
        %121 = sbr.rel (%p118) target = $region12
      $region11: #{_lambda_.5} parent=5 // pred_region
        %s122 = ssub.s32 %s9, 1
        // Predicated region
        $region13: #{_lambda_.5} parent=11 // pred_check
          %p123 = pneg %p30
        $region14: #{_lambda_.5} parent=11 // pred_check_branch
          %125 = sbr.rel (%p123) target = $region16
        $region15: #{_lambda_.5} parent=11 // pred_region
          _
        $region16: #{_lambda_.5} parent=11 // pred_fallthru
          _
      $region12: #{_lambda_.5} parent=5 // pred_fallthru
        _
      %p126 = scmp.lt.s32.totalorder %s9, 4
      // Predicated region
      $region17: #{_lambda_.5} parent=5 // pred_check
        %p127 = pneg %p126
      $region18: #{_lambda_.5} parent=5 // pred_check_branch
        %129 = sbr.rel (%p127) target = $region20
      $region19: #{_lambda_.5} parent=5 // pred_region
        // Predicated region
        $region21: #{_lambda_.5} parent=19 // pred_check
          %p130 = pneg %p50
        $region22: #{_lambda_.5} parent=19 // pred_check_branch
          %132 = sbr.rel (%p130) target = $region24
        $region23: #{_lambda_.5} parent=19 // pred_region
          %s133 = sand.u32 %s40, 1
          %s134 = sand.u32 %s40, 1
          %s135 = smul.addr %s134, 64
          %s136 = scalar_lea.vmem [#allocation2], %s135
          %s137 = smul.u32 4, %s9
          %s138 = smul.addr %s137, 4
          %s139 = scalar_lea.vmem %s1, %s138
          // Predicated region
          $region25: #{_lambda_.5} parent=23 // pred_check
            _
          $region26: #{_lambda_.5} parent=23 // pred_check_branch
            %141 = sbr.rel (0) target = $region28
          $region27: #{_lambda_.5} parent=23 // pred_region
            // Predicated region
            $region29: #{_lambda_.5} parent=27 // pred_check
              _
            $region30: #{_lambda_.5} parent=27 // pred_check_branch
              %143 = sbr.rel (0) target = $region32
            $region31: #{_lambda_.5} parent=27 // pred_region
              loop: start=0, step=1, limit=1
              $region33: #{_lambda_.5} parent=31 // loop_pre_header
                _
              $region34: #{_lambda_.5} parent=31 // loop_header
                %s145 = sphi 0, %s149
                %p146 = scmp.ge.s32.totalorder %s145, 1
                %s150 = sphi %s139, %s139
                %s151 = sphi %s136, %s136
              $region35: #{_lambda_.5} parent=31 // loop_header_branch
                %148 = sbr.rel (%p146) target = $region39
              $region36: #{_lambda_.5} parent=31 // loop_body
                %v152 = vld [vmem:[%s150] sm:$0xff]
                %153 = vst [vmem:[%s151] sm:$0xff] %v152
                %v154 = vld [vmem:[%s150 + $0x8] sm:$0xff]
                %155 = vst [vmem:[%s151 + $0x8] sm:$0xff] %v154
                %v156 = vld [vmem:[%s150 + $0x40] sm:$0xff]
                %157 = vst [vmem:[%s151 + $0x10] sm:$0xff] %v156
                %v158 = vld [vmem:[%s150 + $0x48] sm:$0xff]
                %159 = vst [vmem:[%s151 + $0x18] sm:$0xff] %v158
                %v160 = vld [vmem:[%s150 + $0x80] sm:$0xff]
                %161 = vst [vmem:[%s151 + $0x20] sm:$0xff] %v160
                %v162 = vld [vmem:[%s150 + $0x88] sm:$0xff]
                %163 = vst [vmem:[%s151 + $0x28] sm:$0xff] %v162
                %v164 = vld [vmem:[%s150 + $0xc0] sm:$0xff]
                %165 = vst [vmem:[%s151 + $0x30] sm:$0xff] %v164
                %v166 = vld [vmem:[%s150 + $0xc8] sm:$0xff]
                %167 = vst [vmem:[%s151 + $0x38] sm:$0xff] %v166
              $region37: #{_lambda_.5} parent=31 // loop_footer
                %s149 = sadd.s32 1, %s145
              $region38: #{_lambda_.5} parent=31 // loop_footer_branch
                %144 = sbr.rel target = $region34
              $region39: #{_lambda_.5} parent=31 // loop_exit
                _
            $region32: #{_lambda_.5} parent=27 // pred_fallthru
              _
            // Predicated region
            $region40: #{_lambda_.5} parent=27 // pred_check
              _
            $region41: #{_lambda_.5} parent=27 // pred_check_branch
              %169 = sbr.rel target = $region43
            $region42: #{_lambda_.5} parent=27 // pred_region
              _
            $region43: #{_lambda_.5} parent=27 // pred_fallthru
              _
          $region28: #{_lambda_.5} parent=23 // pred_fallthru
            _
          %170 = vnop
        $region24: #{_lambda_.5} parent=19 // pred_fallthru
          _
        // Predicated region
        $region44: #{_lambda_.5} parent=19 // pred_check
          %p171 = pneg %p76
        $region45: #{_lambda_.5} parent=19 // pred_check_branch
          %173 = sbr.rel (%p171) target = $region47
        $region46: #{_lambda_.5} parent=19 // pred_region
          %s174 = smul.u32 4, %s9
          %p175 = scmp.lt.s32.totalorder %s174, 15
          %s176 = scalar_select %p175, %s174, 15
          %s177 = scalar_lea.vmem %s2, %s176
          %s178 = smul.u32 4, %s9
        $region47: #{_lambda_.5} parent=19 // pred_fallthru
          _
      $region20: #{_lambda_.5} parent=5 // pred_fallthru
        _
      %p179 = scmp.le.s32.totalorder 1, %s9
      %p180 = scmp.lt.s32.totalorder %s9, 5
      %p181 = pnand %p179, %p180
      %p182 = pneg %p181
      // Predicated region
      $region48: #{_lambda_.5} parent=5 // pred_check
        _
      $region49: #{_lambda_.5} parent=5 // pred_check_branch
        %184 = sbr.rel (%p181) target = $region51
      $region50: #{_lambda_.5} parent=5 // pred_region
        %s185 = ssub.s32 %s9, 1
        %s186 = sand.u32 %s43, 1
        %s187 = sand.u32 %s43, 1
        %s188 = smul.addr %s187, 64
        %s189 = scalar_lea.vmem [#allocation2], %s188
        // Predicated region
        $region52: #{_lambda_.5} parent=50 // pred_check
          %p190 = pneg %p56
        $region53: #{_lambda_.5} parent=50 // pred_check_branch
          %192 = sbr.rel (%p190) target = $region55
        $region54: #{_lambda_.5} parent=50 // pred_region
          _
        $region55: #{_lambda_.5} parent=50 // pred_fallthru
          _
        %p193 = pneg %p30
        %p194 = pneg %p27
        %s195 = sand.u32 %s43, 1
        %s196 = sand.u32 %s43, 1
        %s197 = smul.addr %s196, 64
        %s198 = scalar_lea.vmem [#allocation2], %s197
        %p199 = pneg %p56
        %p200 = pneg %p53
        %s201 = smul.u32 4, %s14
        %p202 = scmp.lt.s32.totalorder %s201, 15
        %s203 = scalar_select %p202, %s201, 15
        %s204 = scalar_lea.vmem %s2, %s203
        %p205 = pneg %p82
        %p206 = pneg %p79
        %p207 = pneg %p108
        %p208 = pneg %p105
        %s209 = smul.u32 4, %s14
        %p210 = scmp.lt.s32.totalorder %s209, 15
        %s211 = scalar_select %p210, %s209, 15
        %s212 = smul.addr %s211, 2
        %s213 = scalar_lea.vmem %s3, %s212
        %s214 = smul.u32 4, %s14
        %s215 = smul.u32 4, %s14
        %p216 = scmp.lt.s32.totalorder %s215, 15
        %s217 = scalar_select %p216, %s215, 15
        %s218 = scalar_lea.vmem %s2, %s217
        %s219 = smul.u32 4, %s14
        %s220 = smul.u32 4, %s14
        %p221 = scmp.lt.s32.totalorder %s220, 15
        %s222 = scalar_select %p221, %s220, 15
        %s223 = smul.addr %s222, 2
        %s224 = scalar_lea.vmem %s3, %s223
        %s225 = smul.u32 4, %s14
        %v227 = vld [vmem:[%s0] sm:$0x3]
        %v228 = vpack.c.bf16 %v227, %v227
        %v229 = vld [vmem:[%s189] sm:$0xff]
        %v230 = vld [vmem:[%s189 + $0x8] sm:$0xff]
        %v231 = vld [vmem:[%s189 + $0x10] sm:$0xff]
        %v232 = vld [vmem:[%s189 + $0x18] sm:$0xff]
        %v233 = vld [vmem:[%s189 + $0x20] sm:$0xff]
        %v234 = vld [vmem:[%s189 + $0x28] sm:$0xff]
        %v235 = vld [vmem:[%s189 + $0x30] sm:$0xff]
        %v236 = vld [vmem:[%s189 + $0x38] sm:$0xff]
        %v237 = vld [vmem:[%s218] sm:$0xf]
        %v239 = vlaneseq
        %v240 = vshrl.u32 %v239, 7
        %v241 = vsub.s32 0, %v240
        %v242 = vrot.slane %v237, %v241
        %v243 = vlaneseq
        %v244 = vshrl.u32 %v243, 7
        %v245 = vsub.s32 1, %v244
        %v246 = vrot.slane %v237, %v245
        %v247 = vlaneseq
        %v248 = vshrl.u32 %v247, 7
        %v249 = vsub.s32 2, %v248
        %v250 = vrot.slane %v237, %v249
        %v251 = vlaneseq
        %v252 = vshrl.u32 %v251, 7
        %v253 = vsub.s32 3, %v252
        %v254 = vrot.slane %v237, %v253
        %v267 = vunpack.c.l.b16 %v229
        %v268 = vunpack.c.h.b16 %v229
        %v269 = vunpack.c.l.b16 %v230
        %v270 = vunpack.c.h.b16 %v230
        %v271 = vunpack.c.l.b16 %v231
        %v272 = vunpack.c.h.b16 %v231
        %v273 = vunpack.c.l.b16 %v232
        %v274 = vunpack.c.h.b16 %v232
        %v275 = vunpack.c.l.b16 %v233
        %v276 = vunpack.c.h.b16 %v233
        %v277 = vunpack.c.l.b16 %v234
        %v278 = vunpack.c.h.b16 %v234
        %v279 = vunpack.c.l.b16 %v235
        %v280 = vunpack.c.h.b16 %v235
        %v281 = vunpack.c.l.b16 %v236
        %v282 = vunpack.c.h.b16 %v236
        %v283 = vpack.c.b16 %v271, %v267
        %v284 = vpack.c.b16 %v272, %v268
        %v285 = vpack.c.b16 %v273, %v269
        %v286 = vpack.c.b16 %v274, %v270
        %v287 = vpack.c.b16 %v279, %v275
        %v288 = vpack.c.b16 %v280, %v276
        %v289 = vpack.c.b16 %v281, %v277
        %v290 = vpack.c.b16 %v282, %v278
        %vm299 = vcmask 261120
        %v301 = vsel %vm299, %v228, 0
        %303 = vmatprep.subr.bf16.mxu0 %v284
        %304 = vmatpush1.bf16.msra.mxu0 %v283
        %305 = vmatprep.subr.bf16.mxu0 %v288
        %306 = vmatpush1.bf16.msra.mxu0 %v287
        %307 = vmatprep.subr.bf16.mxu0 0
        %308 = vmatpush1.bf16.msra.mxu0 0
        %309 = vmatprep.subr.bf16.mxu0 0
        %310 = vmatpush1.bf16.msra.mxu0 0
        %311 = vmatprep.subr.bf16.mxu0 0
        %312 = vmatpush1.bf16.msra.mxu0 0
        %313 = vmatprep.subr.bf16.mxu0 0
        %314 = vmatpush1.bf16.msra.mxu0 0
        %315 = vmatprep.subr.bf16.mxu0 0
        %316 = vmatpush1.bf16.msra.mxu0 0
        %317 = vmatprep.subr.bf16.mxu0 0
        %318 = vmatpush1.bf16.msra.mxu0 0
        %319 = vmatprep.subr.bf16.mxu0 0
        %320 = vmatpush1.bf16.msra.mxu0 0
        %321 = vmatprep.subr.bf16.mxu0 0
        %322 = vmatpush1.bf16.msra.mxu0 0
        %323 = vmatprep.subr.bf16.mxu0 0
        %324 = vmatpush1.bf16.msra.mxu0 0
        %325 = vmatprep.subr.bf16.mxu0 0
        %326 = vmatpush1.bf16.msra.mxu0 0
        %327 = vmatprep.subr.bf16.mxu0 0
        %328 = vmatpush1.bf16.msra.mxu0 0
        %329 = vmatprep.subr.bf16.mxu0 0
        %330 = vmatpush1.bf16.msra.mxu0 0
        %331 = vmatprep.subr.bf16.mxu0 0
        %332 = vmatpush1.bf16.msra.mxu0 0
        %333 = vmatprep.subr.bf16.mxu0 0
        %334 = vmatpush1.bf16.msra.mxu0 0
        %335 = vmatprep.mubr.bf16.mxu0 0
        %336 = vmatmul.mubr.bf16.gmra.mrb[0].mxu0 %v301
        %v337 = vpop.f32.mrb[0].mxu0
        %v338 = vadd.f32 %v242, %v337
        %v339 = vpop.f32.mrb[0].mxu0
        %v340 = vadd.f32 %v246, %v339
        %v341 = vpop.f32.mrb[0].mxu0
        %v342 = vpop.f32.mrb[0].mxu0
        %343 = vdwg.mxu0
        %344 = vmatprep.subr.bf16.mxu0 %v286
        %345 = vmatpush1.bf16.msra.mxu0 %v285
        %346 = vmatprep.subr.bf16.mxu0 %v290
        %347 = vmatpush1.bf16.msra.mxu0 %v289
        %348 = vmatprep.subr.bf16.mxu0 0
        %349 = vmatpush1.bf16.msra.mxu0 0
        %350 = vmatprep.subr.bf16.mxu0 0
        %351 = vmatpush1.bf16.msra.mxu0 0
        %352 = vmatprep.subr.bf16.mxu0 0
        %353 = vmatpush1.bf16.msra.mxu0 0
        %354 = vmatprep.subr.bf16.mxu0 0
        %355 = vmatpush1.bf16.msra.mxu0 0
        %356 = vmatprep.subr.bf16.mxu0 0
        %357 = vmatpush1.bf16.msra.mxu0 0
        %358 = vmatprep.subr.bf16.mxu0 0
        %359 = vmatpush1.bf16.msra.mxu0 0
        %360 = vmatprep.subr.bf16.mxu0 0
        %361 = vmatpush1.bf16.msra.mxu0 0
        %362 = vmatprep.subr.bf16.mxu0 0
        %363 = vmatpush1.bf16.msra.mxu0 0
        %364 = vmatprep.subr.bf16.mxu0 0
        %365 = vmatpush1.bf16.msra.mxu0 0
        %366 = vmatprep.subr.bf16.mxu0 0
        %367 = vmatpush1.bf16.msra.mxu0 0
        %368 = vmatprep.subr.bf16.mxu0 0
        %369 = vmatpush1.bf16.msra.mxu0 0
        %370 = vmatprep.subr.bf16.mxu0 0
        %371 = vmatpush1.bf16.msra.mxu0 0
        %372 = vmatprep.subr.bf16.mxu0 0
        %373 = vmatpush1.bf16.msra.mxu0 0
        %374 = vmatprep.subr.bf16.mxu0 0
        %375 = vmatpush1.bf16.msra.mxu0 0
        %376 = vmatprep.mubr.bf16.mxu0 0
        %377 = vmatmul.mubr.bf16.gmra.mrb[0].mxu0 %v301
        %v378 = vpop.f32.mrb[0].mxu0
        %v379 = vadd.f32 %v250, %v378
        %v380 = vpop.f32.mrb[0].mxu0
        %v381 = vadd.f32 %v254, %v380
        %v382 = vpop.f32.mrb[0].mxu0
        %v383 = vpop.f32.mrb[0].mxu0
        %384 = vdwg.mxu0
        %v389 = vcombine.low %v338, %v340
        %v390 = vcombine.low %v379, %v381
        %v392 = vunpack.c.l.s4 1983009808
        %v393 = vunpack.c.0.s8 %v392
        %v394 = vlaneseq
        %v395 = vshrl.u32 %v394, 7
        %v396 = vsub.s32 %v393, %v395
        %v397 = vrot.slane %v389, %v396
        %v399 = vunpack.c.l.s4 1983009808
        %v400 = vunpack.c.0.s8 %v399
        %v401 = vlaneseq
        %v402 = vshrl.u32 %v401, 7
        %v403 = vsub.s32 %v400, %v402
        %v404 = vrot.slane %v390, %v403
        %v405 = vcombine.low %v397, %v404
        %407 = vst [vmem:[%s224] sm:$0xff] %v405
        %s408 = smul.u32 4, %s14
        %p409 = scmp.lt.s32.totalorder %s408, 15
        %s410 = scalar_select %p409, %s408, 15
        %s411 = smul.addr %s410, 2
        %s412 = scalar_lea.vmem %s3, %s411
        // Predicated region
        $region56: #{_lambda_.5} parent=50 // pred_check
          %p413 = pneg %p105
        $region57: #{_lambda_.5} parent=50 // pred_check_branch
          %415 = sbr.rel (%p413) target = $region59
        $region58: #{_lambda_.5} parent=50 // pred_region
          %s416 = smul.u32 4, %s14
        $region59: #{_lambda_.5} parent=50 // pred_fallthru
          _
      $region51: #{_lambda_.5} parent=5 // pred_fallthru
        _
      %p417 = scmp.le.s32.totalorder 2, %s9
      // Predicated region
      $region60: #{_lambda_.5} parent=5 // pred_check
        %p418 = pneg %p417
      $region61: #{_lambda_.5} parent=5 // pred_check_branch
        %420 = sbr.rel (%p418) target = $region63
      $region62: #{_lambda_.5} parent=5 // pred_region
        %s421 = ssub.s32 %s9, 2
        // Predicated region
        $region64: #{_lambda_.5} parent=62 // pred_check
          %p422 = pneg %p111
        $region65: #{_lambda_.5} parent=62 // pred_check_branch
          %424 = sbr.rel (%p422) target = $region67
        $region66: #{_lambda_.5} parent=62 // pred_region
          %s425 = smul.u32 4, %s15
          %p426 = scmp.lt.s32.totalorder %s425, 15
          %s427 = scalar_select %p426, %s425, 15
          %s428 = smul.addr %s427, 2
          %s429 = scalar_lea.vmem %s3, %s428
        $region67: #{_lambda_.5} parent=62 // pred_fallthru
          _
      $region63: #{_lambda_.5} parent=5 // pred_fallthru
        _
    $region6: #{_lambda_.5} parent=1 // loop_footer
      %s13 = sadd.s32 1, %s9
    $region7: #{_lambda_.5} parent=1 // loop_footer_branch
      %8 = sbr.rel target = $region3
    $region8: #{_lambda_.5} parent=1 // loop_exit
      _

// kernel: _lambda_.7
$region0: #{_lambda_.7}
  #allocation0 [shape = 'u32[]', space=smem, size = 0x4, offset = 0x4, fixed_abs, tag = 'smem constant byte address 0x4 - core index']
  #allocation1 [shape = 'u32[144,128]{1,0:T(1,128)}', space=vmem, size = 0x12000, scoped, tag = 'internal scratch']
  #allocation2 [shape = 'f32[6,6,128]{2,1,0:T(8,128)}', space=vmem, size = 0x6000, scoped, tag = 'scratch operand']
  %s0 = inlined_call_operand.vmem [shape: f32[2,128], index: 0, kind: input, shape index: {}]
  %s1 = inlined_call_operand.vmem [shape: f32[1,128], index: 1, kind: input, shape index: {}]
  %s2 = inlined_call_operand.vmem [shape: f32[1,128], index: 2, kind: input, shape index: {}]
  %s3 = inlined_call_operand.vmem [shape: f32[2,4,4,128], index: 3, kind: input, shape index: {}]
  %s4 = inlined_call_operand.vmem [shape: bf16[2,2,512,128], index: 4, kind: input, shape index: {}]
  %s5 = inlined_call_operand.vmem [shape: f32[1,128], index: 5, kind: input, shape index: {}]
  %s6 = inlined_call_operand.vmem [shape: f32[2,2,2,4,4,128], index: 6, kind: output, shape index: {0}]
  %s7 = inlined_call_operand.vmem [shape: f32[2,128], index: 7, kind: output, shape index: {1}]
  %8 = xla_tuple %s6, %s7
  %s9 = sld [smem:[#allocation0]]
  $region69: #{_lambda_.7} parent=0
    _
  %s11 = ssub.s32 1, %s9
  %s12 = scalar_select 0, %s11, %s9
  loop: start=0, step=1, limit=4
  $region2: #{_lambda_.7} parent=0 // loop_pre_header
    _
  $region3: #{_lambda_.7} parent=0 // loop_header
    %s14 = sphi 0, %s18
    %p15 = scmp.ge.s32.totalorder %s14, 4
    %s22 = sphi 0, %s22
    %s24 = sphi 0, %s22
    %s25 = sphi 0, %s24
    %s39 = sphi 0, %s25
    %s43 = sphi 0, %s43
    %s45 = sphi 0, %s43
    %s46 = sphi 0, %s45
    %s60 = sphi 0, %s46
    %s64 = sphi 0, %s64
    %s66 = sphi 0, %s64
    %s67 = sphi 0, %s66
    %s81 = sphi 0, %s67
    %s87 = sphi 0, %s89
    %s90 = sphi 0, %s87
    %s91 = sphi 0, %s90
    %s107 = sphi 0, %s91
    %s111 = sphi 0, %s111
    %s113 = sphi 0, %s111
    %s114 = sphi 0, %s113
    %s128 = sphi 0, %s114
    %s132 = sphi 0, %s132
    %s134 = sphi 0, %s132
    %s135 = sphi 0, %s134
    %s149 = sphi 0, %s135
    %s155 = sphi 0, %s157
    %s158 = sphi 0, %s155
    %s159 = sphi 0, %s158
    %s175 = sphi 0, %s159
    %s179 = sphi 0, %s179
    %s181 = sphi 0, %s179
    %s182 = sphi 0, %s181
    %s196 = sphi 0, %s182
  $region4: #{_lambda_.7} parent=0 // loop_header_branch
    %17 = sbr.rel (%p15) target = $region8
  $region5: #{_lambda_.7} parent=0 // loop_body
    %s19 = ssub.s32 %s14, 1
    %s20 = ssub.s32 %s14, 2
    %s21 = sadd.s32 %s14, 1
    %s23 = sadd.s32 %s22, 1
    %p26 = scmp.eq.s32.totalorder %s14, 1
    %p27 = scmp.ne.s32.totalorder %s22, %s24
    %p28 = scmp.eq.s32.totalorder %s14, 0
    %p29 = por %p27, %p28
    %p30 = scmp.ne.s32.totalorder %s22, %s24
    %p31 = scmp.eq.s32.totalorder %s19, 1
    %p32 = por %p30, %p31
    %p33 = scmp.ne.s32.totalorder %s24, %s25
    %p34 = scmp.eq.s32.totalorder %s19, 0
    %p35 = por %p33, %p34
    %p36 = scmp.ne.s32.totalorder %s24, %s25
    %p37 = scmp.eq.s32.totalorder %s20, 1
    %p38 = por %p36, %p37
    %p40 = scmp.ne.s32.totalorder %s25, %s39
    %p41 = scmp.eq.s32.totalorder %s20, 0
    %p42 = por %p40, %p41
    %s44 = sadd.s32 %s43, 1
    %p47 = scmp.eq.s32.totalorder %s14, 1
    %p48 = scmp.ne.s32.totalorder %s43, %s45
    %p49 = scmp.eq.s32.totalorder %s14, 0
    %p50 = por %p48, %p49
    %p51 = scmp.ne.s32.totalorder %s43, %s45
    %p52 = scmp.eq.s32.totalorder %s19, 1
    %p53 = por %p51, %p52
    %p54 = scmp.ne.s32.totalorder %s45, %s46
    %p55 = scmp.eq.s32.totalorder %s19, 0
    %p56 = por %p54, %p55
    %p57 = scmp.ne.s32.totalorder %s45, %s46
    %p58 = scmp.eq.s32.totalorder %s20, 1
    %p59 = por %p57, %p58
    %p61 = scmp.ne.s32.totalorder %s46, %s60
    %p62 = scmp.eq.s32.totalorder %s20, 0
    %p63 = por %p61, %p62
    %s65 = sadd.s32 %s64, 1
    %p68 = scmp.eq.s32.totalorder %s14, 1
    %p69 = scmp.ne.s32.totalorder %s64, %s66
    %p70 = scmp.eq.s32.totalorder %s14, 0
    %p71 = por %p69, %p70
    %p72 = scmp.ne.s32.totalorder %s64, %s66
    %p73 = scmp.eq.s32.totalorder %s19, 1
    %p74 = por %p72, %p73
    %p75 = scmp.ne.s32.totalorder %s66, %s67
    %p76 = scmp.eq.s32.totalorder %s19, 0
    %p77 = por %p75, %p76
    %p78 = scmp.ne.s32.totalorder %s66, %s67
    %p79 = scmp.eq.s32.totalorder %s20, 1
    %p80 = por %p78, %p79
    %p82 = scmp.ne.s32.totalorder %s67, %s81
    %p83 = scmp.eq.s32.totalorder %s20, 0
    %p84 = por %p82, %p83
    %s85 = ssub.s32 %s14, %s21
    %p86 = scmp.eq.s32.totalorder %s85, 0
    %s88 = sadd.s32 %s87, 1
    %s89 = scalar_select %p86, %s87, %s88
    %p92 = pneg %p86
    %p93 = scmp.eq.s32.totalorder %s14, 1
    %p94 = por %p92, %p93
    %p95 = scmp.ne.s32.totalorder %s87, %s90
    %p96 = scmp.eq.s32.totalorder %s14, 0
    %p97 = por %p95, %p96
    %p98 = scmp.ne.s32.totalorder %s87, %s90
    %p99 = scmp.eq.s32.totalorder %s19, 1
    %p100 = por %p98, %p99
    %p101 = scmp.ne.s32.totalorder %s90, %s91
    %p102 = scmp.eq.s32.totalorder %s19, 0
    %p103 = por %p101, %p102
    %p104 = scmp.ne.s32.totalorder %s90, %s91
    %p105 = scmp.eq.s32.totalorder %s20, 1
    %p106 = por %p104, %p105
    %p108 = scmp.ne.s32.totalorder %s91, %s107
    %p109 = scmp.eq.s32.totalorder %s20, 0
    %p110 = por %p108, %p109
    %s112 = sadd.s32 %s111, 1
    %p115 = scmp.eq.s32.totalorder %s14, 1
    %p116 = scmp.ne.s32.totalorder %s111, %s113
    %p117 = scmp.eq.s32.totalorder %s14, 0
    %p118 = por %p116, %p117
    %p119 = scmp.ne.s32.totalorder %s111, %s113
    %p120 = scmp.eq.s32.totalorder %s19, 1
    %p121 = por %p119, %p120
    %p122 = scmp.ne.s32.totalorder %s113, %s114
    %p123 = scmp.eq.s32.totalorder %s19, 0
    %p124 = por %p122, %p123
    %p125 = scmp.ne.s32.totalorder %s113, %s114
    %p126 = scmp.eq.s32.totalorder %s20, 1
    %p127 = por %p125, %p126
    %p129 = scmp.ne.s32.totalorder %s114, %s128
    %p130 = scmp.eq.s32.totalorder %s20, 0
    %p131 = por %p129, %p130
    %s133 = sadd.s32 %s132, 1
    %p136 = scmp.eq.s32.totalorder %s14, 1
    %p137 = scmp.ne.s32.totalorder %s132, %s134
    %p138 = scmp.eq.s32.totalorder %s14, 0
    %p139 = por %p137, %p138
    %p140 = scmp.ne.s32.totalorder %s132, %s134
    %p141 = scmp.eq.s32.totalorder %s19, 1
    %p142 = por %p140, %p141
    %p143 = scmp.ne.s32.totalorder %s134, %s135
    %p144 = scmp.eq.s32.totalorder %s19, 0
    %p145 = por %p143, %p144
    %p146 = scmp.ne.s32.totalorder %s134, %s135
    %p147 = scmp.eq.s32.totalorder %s20, 1
    %p148 = por %p146, %p147
    %p150 = scmp.ne.s32.totalorder %s135, %s149
    %p151 = scmp.eq.s32.totalorder %s20, 0
    %p152 = por %p150, %p151
    %s153 = ssub.s32 %s14, %s21
    %p154 = scmp.eq.s32.totalorder %s153, 0
    %s156 = sadd.s32 %s155, 1
    %s157 = scalar_select %p154, %s155, %s156
    %p160 = pneg %p154
    %p161 = scmp.eq.s32.totalorder %s14, 1
    %p162 = por %p160, %p161
    %p163 = scmp.ne.s32.totalorder %s155, %s158
    %p164 = scmp.eq.s32.totalorder %s14, 0
    %p165 = por %p163, %p164
    %p166 = scmp.ne.s32.totalorder %s155, %s158
    %p167 = scmp.eq.s32.totalorder %s19, 1
    %p168 = por %p166, %p167
    %p169 = scmp.ne.s32.totalorder %s158, %s159
    %p170 = scmp.eq.s32.totalorder %s19, 0
    %p171 = por %p169, %p170
    %p172 = scmp.ne.s32.totalorder %s158, %s159
    %p173 = scmp.eq.s32.totalorder %s20, 1
    %p174 = por %p172, %p173
    %p176 = scmp.ne.s32.totalorder %s159, %s175
    %p177 = scmp.eq.s32.totalorder %s20, 0
    %p178 = por %p176, %p177
    %s180 = sadd.s32 %s179, 1
    %p183 = scmp.eq.s32.totalorder %s14, 1
    %p184 = scmp.ne.s32.totalorder %s179, %s181
    %p185 = scmp.eq.s32.totalorder %s14, 0
    %p186 = por %p184, %p185
    %p187 = scmp.ne.s32.totalorder %s179, %s181
    %p188 = scmp.eq.s32.totalorder %s19, 1
    %p189 = por %p187, %p188
    %p190 = scmp.ne.s32.totalorder %s181, %s182
    %p191 = scmp.eq.s32.totalorder %s19, 0
    %p192 = por %p190, %p191
    %p193 = scmp.ne.s32.totalorder %s181, %s182
    %p194 = scmp.eq.s32.totalorder %s20, 1
    %p195 = por %p193, %p194
    %p197 = scmp.ne.s32.totalorder %s182, %s196
    %p198 = scmp.eq.s32.totalorder %s20, 0
    %p199 = por %p197, %p198
    %p200 = scmp.le.s32.totalorder 1, %s14
    %p201 = scmp.lt.s32.totalorder %s14, 3
    %p202 = pnand %p200, %p201
    %p203 = pneg %p202
    // Predicated region
    $region9: #{_lambda_.7} parent=5 // pred_check
      _
    $region10: #{_lambda_.7} parent=5 // pred_check_branch
      %205 = sbr.rel (%p202) target = $region12
    $region11: #{_lambda_.7} parent=5 // pred_region
      %s206 = ssub.s32 %s14, 1
      // Predicated region
      $region13: #{_lambda_.7} parent=11 // pred_check
        %p207 = pneg %p35
      $region14: #{_lambda_.7} parent=11 // pred_check_branch
        %209 = sbr.rel (%p207) target = $region16
      $region15: #{_lambda_.7} parent=11 // pred_region
        _
      $region16: #{_lambda_.7} parent=11 // pred_fallthru
        _
      // Predicated region
      $region17: #{_lambda_.7} parent=11 // pred_check
        %p210 = pneg %p56
      $region18: #{_lambda_.7} parent=11 // pred_check_branch
        %212 = sbr.rel (%p210) target = $region20
      $region19: #{_lambda_.7} parent=11 // pred_region
        _
      $region20: #{_lambda_.7} parent=11 // pred_fallthru
        _
      // Predicated region
      $region21: #{_lambda_.7} parent=11 // pred_check
        %p213 = pneg %p77
      $region22: #{_lambda_.7} parent=11 // pred_check_branch
        %215 = sbr.rel (%p213) target = $region24
      $region23: #{_lambda_.7} parent=11 // pred_region
        _
      $region24: #{_lambda_.7} parent=11 // pred_fallthru
        _
      // Predicated region
      $region25: #{_lambda_.7} parent=11 // pred_check
        %p216 = pneg %p124
      $region26: #{_lambda_.7} parent=11 // pred_check_branch
        %218 = sbr.rel (%p216) target = $region28
      $region27: #{_lambda_.7} parent=11 // pred_region
        _
      $region28: #{_lambda_.7} parent=11 // pred_fallthru
        _
      // Predicated region
      $region29: #{_lambda_.7} parent=11 // pred_check
        %p219 = pneg %p145
      $region30: #{_lambda_.7} parent=11 // pred_check_branch
        %221 = sbr.rel (%p219) target = $region32
      $region31: #{_lambda_.7} parent=11 // pred_region
        _
      $region32: #{_lambda_.7} parent=11 // pred_fallthru
        _
    $region12: #{_lambda_.7} parent=5 // pred_fallthru
      _
    %p222 = scmp.lt.s32.totalorder %s14, 2
    // Predicated region
    $region33: #{_lambda_.7} parent=5 // pred_check
      %p223 = pneg %p222
    $region34: #{_lambda_.7} parent=5 // pred_check_branch
      %225 = sbr.rel (%p223) target = $region36
    $region35: #{_lambda_.7} parent=5 // pred_region
      // Predicated region
      $region37: #{_lambda_.7} parent=35 // pred_check
        %p226 = pneg %p97
      $region38: #{_lambda_.7} parent=35 // pred_check_branch
        %228 = sbr.rel (%p226) target = $region40
      $region39: #{_lambda_.7} parent=35 // pred_region
        %p229 = scmp.lt.s32.totalorder %s14, 1
        %s230 = scalar_select %p229, %s14, 1
        %s231 = smul.addr %s230, 4
        %s232 = smul.addr %s231, 4
        %s233 = scalar_lea.vmem %s3, %s232
      $region40: #{_lambda_.7} parent=35 // pred_fallthru
        _
    $region36: #{_lambda_.7} parent=5 // pred_fallthru
      _
    %p234 = scmp.le.s32.totalorder 1, %s14
    %p235 = scmp.lt.s32.totalorder %s14, 3
    %p236 = pnand %p234, %p235
    %p237 = pneg %p236
    // Predicated region
    $region41: #{_lambda_.7} parent=5 // pred_check
      _
    $region42: #{_lambda_.7} parent=5 // pred_check_branch
      %239 = sbr.rel (%p236) target = $region44
    $region43: #{_lambda_.7} parent=5 // pred_region
      %s240 = ssub.s32 %s14, 1
      %p241 = pneg %p35
      %p242 = pneg %p32
      %p243 = pneg %p56
      %p244 = pneg %p53
      %p245 = pneg %p77
      %p246 = pneg %p74
      %p247 = scmp.lt.s32.totalorder %s19, 1
      %s248 = scalar_select %p247, %s19, 1
      %s249 = smul.addr %s248, 4
      %s250 = smul.addr %s249, 4
      %s251 = scalar_lea.vmem %s3, %s250
      %p252 = pneg %p103
      %p253 = pneg %p100
      %p254 = pneg %p124
      %p255 = pneg %p121
      %p256 = pneg %p145
      %p257 = pneg %p142
      %p258 = pneg %p171
      %p259 = pneg %p168
      %p260 = scmp.lt.s32.totalorder %s19, 1
      %s261 = scalar_select %p260, %s19, 1
      %s262 = smul.addr %s261, 16
      %s263 = smul.addr %s262, 4
      %s264 = scalar_lea.vmem %s6, %s263
      %p265 = pneg %p192
      %p266 = pneg %p189
      %p267 = scmp.lt.s32.totalorder %s19, 1
      %s268 = scalar_select %p267, %s19, 1
      %s269 = smul.addr %s268, 4
      %s270 = smul.addr %s269, 4
      %s271 = scalar_lea.vmem %s3, %s270
      %p272 = scmp.lt.s32.totalorder %s19, 1
      %s273 = scalar_select %p272, %s19, 1
      %s274 = smul.addr %s273, 16
      %s275 = smul.addr %s274, 4
      %s276 = scalar_lea.vmem %s6, %s275
      %v278 = vld [vmem:[%s0] sm:$0x1]
      %v279 = vmul.f32 %v278, 0.03125
      %v280 = vld [vmem:[%s0 + $0x1] sm:$0x1]
      %v281 = vmul.f32 %v280, 0.03125
      %v282 = vmul.f32 %v279, %v279
      %v283 = vsub.f32 %v281, %v282
      %v284 = vmax.f32 %v283, 0.0
      %v285 = vld [vmem:[%s1] sm:$0x1]
      %v286 = vadd.f32 %v284, 1e-05
      %v287 = vrsqrt.pop %v286
      %v288 = vmul.f32 %v285, %v287
      %v289 = vld [vmem:[%s2] sm:$0x1]
      %v290 = vmul.f32 %v279, %v288
      %v291 = vsub.f32 %v289, %v290
      %v292 = vld [vmem:[%s271] sm:$0xf]
      %v293 = vld [vmem:[%s271 + $0x4] sm:$0xf]
      %v294 = vld [vmem:[%s271 + $0x8] sm:$0xf]
      %v295 = vld [vmem:[%s271 + $0xc] sm:$0xf]
      %v297 = vlaneseq
      %v298 = vshrl.u32 %v297, 7
      %v299 = vsub.s32 0, %v298
      %v300 = vrot.slane %v288, %v299
      %v302 = vmul.f32 %v292, %v300
      %v303 = vmul.f32 %v293, %v300
      %v304 = vmul.f32 %v294, %v300
      %v305 = vmul.f32 %v295, %v300
      %v307 = vlaneseq
      %v308 = vshrl.u32 %v307, 7
      %v309 = vsub.s32 0, %v308
      %v310 = vrot.slane %v291, %v309
      %v312 = vadd.f32 %v302, %v310
      %v313 = vadd.f32 %v303, %v310
      %v314 = vadd.f32 %v304, %v310
      %v315 = vadd.f32 %v305, %v310
      %316 = vst [vmem:[#allocation2] sm:$0x3f] 0.0
      %317 = vst [vmem:[#allocation2 + $0x8] sm:$0x3f] 0.0
      %318 = vst [vmem:[#allocation2 + $0x10] sm:$0x3f] 0.0
      %319 = vst [vmem:[#allocation2 + $0x18] sm:$0x3f] 0.0
      %320 = vst [vmem:[#allocation2 + $0x20] sm:$0x3f] 0.0
      %321 = vst [vmem:[#allocation2 + $0x28] sm:$0x3f] 0.0
      %s322 = scalar_lea.vmem [#allocation2], 8
      %323 = vst [vmem:[%s322 + $0x1] sm:$0xf] %v312
      %324 = vst [vmem:[%s322 + $0x9] sm:$0xf] %v313
      %325 = vst [vmem:[%s322 + $0x11] sm:$0xf] %v314
      %326 = vst [vmem:[%s322 + $0x19] sm:$0xf] %v315
      %v327 = vld [vmem:[#allocation2] sm:$0xf]
      %v328 = vld [vmem:[#allocation2 + $0x8] sm:$0xf]
      %v329 = vld [vmem:[#allocation2 + $0x10] sm:$0xf]
      %v330 = vld [vmem:[#allocation2 + $0x18] sm:$0xf]
      %v331 = vld [vmem:[#allocation2 + $0x1] sm:$0xf]
      %v332 = vld [vmem:[#allocation2 + $0x9] sm:$0xf]
      %v333 = vld [vmem:[#allocation2 + $0x11] sm:$0xf]
      %v334 = vld [vmem:[#allocation2 + $0x19] sm:$0xf]
      %v335 = vld [vmem:[#allocation2 + $0x2] sm:$0xf]
      %v336 = vld [vmem:[#allocation2 + $0xa] sm:$0xf]
      %v337 = vld [vmem:[#allocation2 + $0x12] sm:$0xf]
      %v338 = vld [vmem:[#allocation2 + $0x1a] sm:$0xf]
      %v339 = vld [vmem:[%s322] sm:$0xf]
      %v340 = vld [vmem:[%s322 + $0x8] sm:$0xf]
      %v341 = vld [vmem:[%s322 + $0x10] sm:$0xf]
      %v342 = vld [vmem:[%s322 + $0x18] sm:$0xf]
      %v343 = vld [vmem:[%s322 + $0x1] sm:$0xf]
      %v344 = vld [vmem:[%s322 + $0x9] sm:$0xf]
      %v345 = vld [vmem:[%s322 + $0x11] sm:$0xf]
      %v346 = vld [vmem:[%s322 + $0x19] sm:$0xf]
      %v347 = vld [vmem:[%s322 + $0x2] sm:$0xf]
      %v348 = vld [vmem:[%s322 + $0xa] sm:$0xf]
      %v349 = vld [vmem:[%s322 + $0x12] sm:$0xf]
      %v350 = vld [vmem:[%s322 + $0x1a] sm:$0xf]
      %s351 = scalar_lea.vmem [#allocation2], 16
      %v352 = vld [vmem:[%s351] sm:$0xf]
      %v353 = vld [vmem:[%s351 + $0x8] sm:$0xf]
      %v354 = vld [vmem:[%s351 + $0x10] sm:$0xf]
      %v355 = vld [vmem:[%s351 + $0x18] sm:$0xf]
      %v356 = vld [vmem:[%s351 + $0x1] sm:$0xf]
      %v357 = vld [vmem:[%s351 + $0x9] sm:$0xf]
      %v358 = vld [vmem:[%s351 + $0x11] sm:$0xf]
      %v359 = vld [vmem:[%s351 + $0x19] sm:$0xf]
      %v360 = vld [vmem:[%s351 + $0x2] sm:$0xf]
      %v361 = vld [vmem:[%s351 + $0xa] sm:$0xf]
      %v362 = vld [vmem:[%s351 + $0x12] sm:$0xf]
      %v363 = vld [vmem:[%s351 + $0x1a] sm:$0xf]
      %v364 = vld [vmem:[%s5] sm:$0x1]
      %v369 = vcombine.low %v327, %v328
      %v370 = vcombine.low %v329, %v330
      %v377 = vcombine.low %v331, %v332
      %v378 = vcombine.low %v333, %v334
      %v385 = vcombine.low %v339, %v340
      %v386 = vcombine.low %v341, %v342
      %v393 = vcombine.low %v343, %v344
      %v394 = vcombine.low %v345, %v346
      %v397 = vpack.c.bf16 %v370, %v369
      %v398 = vpack.c.bf16 %v378, %v377
      %v399 = vpack.c.bf16 %v386, %v385
      %v400 = vpack.c.bf16 %v394, %v393
      %v401 = vld [vmem:[%s4] sm:$0xf]
      %v402 = vld [vmem:[%s4 + $0x4] sm:$0xf]
      %v403 = vld [vmem:[%s4 + $0x8] sm:$0xf]
      %v404 = vld [vmem:[%s4 + $0xc] sm:$0xf]
      %v405 = vld [vmem:[%s4 + $0x10] sm:$0xf]
      %v406 = vld [vmem:[%s4 + $0x14] sm:$0xf]
      %v407 = vld [vmem:[%s4 + $0x18] sm:$0xf]
      %v408 = vld [vmem:[%s4 + $0x1c] sm:$0xf]
      %v409 = vld [vmem:[%s4 + $0x20] sm:$0xf]
      %v410 = vld [vmem:[%s4 + $0x24] sm:$0xf]
      %v411 = vld [vmem:[%s4 + $0x28] sm:$0xf]
      %v412 = vld [vmem:[%s4 + $0x2c] sm:$0xf]
      %v413 = vld [vmem:[%s4 + $0x30] sm:$0xf]
      %v414 = vld [vmem:[%s4 + $0x34] sm:$0xf]
      %v415 = vld [vmem:[%s4 + $0x38] sm:$0xf]
      %v416 = vld [vmem:[%s4 + $0x3c] sm:$0xf]
      %v417 = vld [vmem:[%s4 + $0x40] sm:$0xf]
      %v418 = vld [vmem:[%s4 + $0x44] sm:$0xf]
      %v419 = vld [vmem:[%s4 + $0x48] sm:$0xf]
      %v420 = vld [vmem:[%s4 + $0x4c] sm:$0xf]
      %v421 = vld [vmem:[%s4 + $0x50] sm:$0xf]
      %v422 = vld [vmem:[%s4 + $0x54] sm:$0xf]
      %v423 = vld [vmem:[%s4 + $0x58] sm:$0xf]
      %v424 = vld [vmem:[%s4 + $0x5c] sm:$0xf]
      %v425 = vld [vmem:[%s4 + $0x60] sm:$0xf]
      %v426 = vld [vmem:[%s4 + $0x64] sm:$0xf]
      %v427 = vld [vmem:[%s4 + $0x68] sm:$0xf]
      %v428 = vld [vmem:[%s4 + $0x6c] sm:$0xf]
      %v429 = vld [vmem:[%s4 + $0x70] sm:$0xf]
      %v430 = vld [vmem:[%s4 + $0x74] sm:$0xf]
      %v431 = vld [vmem:[%s4 + $0x78] sm:$0xf]
      %v432 = vld [vmem:[%s4 + $0x7c] sm:$0xf]
      %v433 = vld [vmem:[%s4 + $0x80] sm:$0xf]
      %v434 = vld [vmem:[%s4 + $0x84] sm:$0xf]
      %v435 = vld [vmem:[%s4 + $0x88] sm:$0xf]
      %v436 = vld [vmem:[%s4 + $0x8c] sm:$0xf]
      %v437 = vld [vmem:[%s4 + $0x90] sm:$0xf]
      %v438 = vld [vmem:[%s4 + $0x94] sm:$0xf]
      %v439 = vld [vmem:[%s4 + $0x98] sm:$0xf]
      %v440 = vld [vmem:[%s4 + $0x9c] sm:$0xf]
      %v441 = vld [vmem:[%s4 + $0xa0] sm:$0xf]
      %v442 = vld [vmem:[%s4 + $0xa4] sm:$0xf]
      %v443 = vld [vmem:[%s4 + $0xa8] sm:$0xf]
      %v444 = vld [vmem:[%s4 + $0xac] sm:$0xf]
      %v445 = vld [vmem:[%s4 + $0xb0] sm:$0xf]
      %v446 = vld [vmem:[%s4 + $0xb4] sm:$0xf]
      %v447 = vld [vmem:[%s4 + $0xb8] sm:$0xf]
      %v448 = vld [vmem:[%s4 + $0xbc] sm:$0xf]
      %v449 = vld [vmem:[%s4 + $0xc0] sm:$0xf]
      %v450 = vld [vmem:[%s4 + $0xc4] sm:$0xf]
      %v451 = vld [vmem:[%s4 + $0xc8] sm:$0xf]
      %v452 = vld [vmem:[%s4 + $0xcc] sm:$0xf]
      %v453 = vld [vmem:[%s4 + $0xd0] sm:$0xf]
      %v454 = vld [vmem:[%s4 + $0xd4] sm:$0xf]
      %v455 = vld [vmem:[%s4 + $0xd8] sm:$0xf]
      %v456 = vld [vmem:[%s4 + $0xdc] sm:$0xf]
      %v457 = vld [vmem:[%s4 + $0xe0] sm:$0xf]
      %v458 = vld [vmem:[%s4 + $0xe4] sm:$0xf]
      %v459 = vld [vmem:[%s4 + $0xe8] sm:$0xf]
      %v460 = vld [vmem:[%s4 + $0xec] sm:$0xf]
      %v461 = vld [vmem:[%s4 + $0xf0] sm:$0xf]
      %v462 = vld [vmem:[%s4 + $0xf4] sm:$0xf]
      %v463 = vld [vmem:[%s4 + $0xf8] sm:$0xf]
      %v464 = vld [vmem:[%s4 + $0xfc] sm:$0xf]
      %v466 = vlaneseq
      %v467 = vshrl.u32 %v466, 7
      %v468 = vsub.s32 0, %v467
      %v469 = vrot.slane %v364, %v468
      %v535 = vunpack.c.l.b16 %v401
      %v536 = vunpack.c.l.b16 %v402
      %v537 = vunpack.c.l.b16 %v403
      %v538 = vunpack.c.l.b16 %v404
      %v539 = vunpack.c.l.b16 %v405
      %v540 = vunpack.c.l.b16 %v406
      %v541 = vunpack.c.l.b16 %v407
      %v542 = vunpack.c.l.b16 %v408
      %v543 = vunpack.c.l.b16 %v409
      %v544 = vunpack.c.l.b16 %v410
      %v545 = vunpack.c.l.b16 %v411
      %v546 = vunpack.c.l.b16 %v412
      %v547 = vunpack.c.l.b16 %v413
      %v548 = vunpack.c.l.b16 %v414
      %v549 = vunpack.c.l.b16 %v415
      %v550 = vunpack.c.l.b16 %v416
      %v551 = vunpack.c.l.b16 %v417
      %v552 = vunpack.c.l.b16 %v418
      %v553 = vunpack.c.l.b16 %v419
      %v554 = vunpack.c.l.b16 %v420
      %v555 = vunpack.c.l.b16 %v421
      %v556 = vunpack.c.l.b16 %v422
      %v557 = vunpack.c.l.b16 %v423
      %v558 = vunpack.c.l.b16 %v424
      %v559 = vunpack.c.l.b16 %v425
      %v560 = vunpack.c.l.b16 %v426
      %v561 = vunpack.c.l.b16 %v427
      %v562 = vunpack.c.l.b16 %v428
      %v563 = vunpack.c.l.b16 %v429
      %v564 = vunpack.c.l.b16 %v430
      %v565 = vunpack.c.l.b16 %v431
      %v566 = vunpack.c.l.b16 %v432
      %v567 = vunpack.c.l.b16 %v433
      %v568 = vunpack.c.l.b16 %v434
      %v569 = vunpack.c.l.b16 %v435
      %v570 = vunpack.c.l.b16 %v436
      %v571 = vunpack.c.l.b16 %v437
      %v572 = vunpack.c.l.b16 %v438
      %v573 = vunpack.c.l.b16 %v439
      %v574 = vunpack.c.l.b16 %v440
      %v575 = vunpack.c.l.b16 %v441
      %v576 = vunpack.c.l.b16 %v442
      %v577 = vunpack.c.l.b16 %v443
      %v578 = vunpack.c.l.b16 %v444
      %v579 = vunpack.c.l.b16 %v445
      %v580 = vunpack.c.l.b16 %v446
      %v581 = vunpack.c.l.b16 %v447
      %v582 = vunpack.c.l.b16 %v448
      %v583 = vunpack.c.l.b16 %v449
      %v584 = vunpack.c.l.b16 %v450
      %v585 = vunpack.c.l.b16 %v451
      %v586 = vunpack.c.l.b16 %v452
      %v587 = vunpack.c.l.b16 %v453
      %v588 = vunpack.c.l.b16 %v454
      %v589 = vunpack.c.l.b16 %v455
      %v590 = vunpack.c.l.b16 %v456
      %v591 = vunpack.c.l.b16 %v457
      %v592 = vunpack.c.l.b16 %v458
      %v593 = vunpack.c.l.b16 %v459
      %v594 = vunpack.c.l.b16 %v460
      %v595 = vunpack.c.l.b16 %v461
      %v596 = vunpack.c.l.b16 %v462
      %v597 = vunpack.c.l.b16 %v463
      %v598 = vunpack.c.l.b16 %v464
      %v599 = vpack.c.b16 %v536, %v535
      %v600 = vpack.c.b16 %v538, %v537
      %v601 = vpack.c.b16 %v540, %v539
      %v602 = vpack.c.b16 %v542, %v541
      %v603 = vpack.c.b16 %v544, %v543
      %v604 = vpack.c.b16 %v546, %v545
      %v605 = vpack.c.b16 %v548, %v547
      %v606 = vpack.c.b16 %v550, %v549
      %v607 = vpack.c.b16 %v552, %v551
      %v608 = vpack.c.b16 %v554, %v553
      %v609 = vpack.c.b16 %v556, %v555
      %v610 = vpack.c.b16 %v558, %v557
      %v611 = vpack.c.b16 %v560, %v559
      %v612 = vpack.c.b16 %v562, %v561
      %v613 = vpack.c.b16 %v564, %v563
      %v614 = vpack.c.b16 %v566, %v565
      %v615 = vpack.c.b16 %v568, %v567
      %v616 = vpack.c.b16 %v570, %v569
      %v617 = vpack.c.b16 %v572, %v571
      %v618 = vpack.c.b16 %v574, %v573
      %v619 = vpack.c.b16 %v576, %v575
      %v620 = vpack.c.b16 %v578, %v577
      %v621 = vpack.c.b16 %v580, %v579
      %v622 = vpack.c.b16 %v582, %v581
      %v623 = vpack.c.b16 %v584, %v583
      %v624 = vpack.c.b16 %v586, %v585
      %v625 = vpack.c.b16 %v588, %v587
      %v626 = vpack.c.b16 %v590, %v589
      %v627 = vpack.c.b16 %v592, %v591
      %v628 = vpack.c.b16 %v594, %v593
      %v629 = vpack.c.b16 %v596, %v595
      %v630 = vpack.c.b16 %v598, %v597
      %663 = vmatprep.subr.bf16.mxu0 0
      %664 = vmatpush1.bf16.msra.mxu0 %v599
      %665 = vmatprep.subr.bf16.mxu0 0
      %666 = vmatpush1.bf16.msra.mxu0 %v600
      %667 = vmatprep.subr.bf16.mxu0 0
      %668 = vmatpush1.bf16.msra.mxu0 %v601
      %669 = vmatprep.subr.bf16.mxu0 0
      %670 = vmatpush1.bf16.msra.mxu0 %v602
      %671 = vmatprep.subr.bf16.mxu0 0
      %672 = vmatpush1.bf16.msra.mxu0 %v603
      %673 = vmatprep.subr.bf16.mxu0 0
      %674 = vmatpush1.bf16.msra.mxu0 %v604
      %675 = vmatprep.subr.bf16.mxu0 0
      %676 = vmatpush1.bf16.msra.mxu0 %v605
      %677 = vmatprep.subr.bf16.mxu0 0
      %678 = vmatpush1.bf16.msra.mxu0 %v606
      %679 = vmatprep.subr.bf16.mxu0 0
      %680 = vmatpush1.bf16.msra.mxu0 %v607
      %681 = vmatprep.subr.bf16.mxu0 0
      %682 = vmatpush1.bf16.msra.mxu0 %v608
      %683 = vmatprep.subr.bf16.mxu0 0
      %684 = vmatpush1.bf16.msra.mxu0 %v609
      %685 = vmatprep.subr.bf16.mxu0 0
      %686 = vmatpush1.bf16.msra.mxu0 %v610
      %687 = vmatprep.subr.bf16.mxu0 0
      %688 = vmatpush1.bf16.msra.mxu0 %v611
      %689 = vmatprep.subr.bf16.mxu0 0
      %690 = vmatpush1.bf16.msra.mxu0 %v612
      %691 = vmatprep.subr.bf16.mxu0 0
      %692 = vmatpush1.bf16.msra.mxu0 %v613
      %693 = vmatprep.subr.bf16.mxu0 0
      %694 = vmatpush1.bf16.msra.mxu0 %v614
      %695 = vmatprep.mubr.bf16.mxu0 %v398
      %696 = vmatmul.mubr.bf16.gmra.mrb[0].mxu0 %v397
      %v697 = vpop.f32.mrb[0].mxu0
      %v698 = vadd.f32 %v469, %v697
      %v699 = vpop.f32.mrb[0].mxu0
      %v700 = vpop.f32.mrb[0].mxu0
      %v701 = vadd.f32 %v469, %v700
      %v702 = vpop.f32.mrb[0].mxu0
      %703 = vdwg.mxu0
      %704 = vmatprep.subr.bf16.mxu0 0
      %705 = vmatpush1.bf16.msra.mxu0 %v615
      %706 = vmatprep.subr.bf16.mxu0 0
      %707 = vmatpush1.bf16.msra.mxu0 %v616
      %708 = vmatprep.subr.bf16.mxu0 0
      %709 = vmatpush1.bf16.msra.mxu0 %v617
      %710 = vmatprep.subr.bf16.mxu0 0
      %711 = vmatpush1.bf16.msra.mxu0 %v618
      %712 = vmatprep.subr.bf16.mxu0 0
      %713 = vmatpush1.bf16.msra.mxu0 %v619
      %714 = vmatprep.subr.bf16.mxu0 0
      %715 = vmatpush1.bf16.msra.mxu0 %v620
      %716 = vmatprep.subr.bf16.mxu0 0
      %717 = vmatpush1.bf16.msra.mxu0 %v621
      %718 = vmatprep.subr.bf16.mxu0 0
      %719 = vmatpush1.bf16.msra.mxu0 %v622
      %720 = vmatprep.subr.bf16.mxu0 0
      %721 = vmatpush1.bf16.msra.mxu0 %v623
      %722 = vmatprep.subr.bf16.mxu0 0
      %723 = vmatpush1.bf16.msra.mxu0 %v624
      %724 = vmatprep.subr.bf16.mxu0 0
      %725 = vmatpush1.bf16.msra.mxu0 %v625
      %726 = vmatprep.subr.bf16.mxu0 0
      %727 = vmatpush1.bf16.msra.mxu0 %v626
      %728 = vmatprep.subr.bf16.mxu0 0
      %729 = vmatpush1.bf16.msra.mxu0 %v627
      %730 = vmatprep.subr.bf16.mxu0 0
      %731 = vmatpush1.bf16.msra.mxu0 %v628
      %732 = vmatprep.subr.bf16.mxu0 0
      %733 = vmatpush1.bf16.msra.mxu0 %v629
      %734 = vmatprep.subr.bf16.mxu0 0
      %735 = vmatpush1.bf16.msra.mxu0 %v630
      %736 = vmatprep.mubr.bf16.mxu0 %v400
      %737 = vmatmul.mubr.bf16.gmra.mrb[0].mxu0 %v399
      %v738 = vpop.f32.mrb[0].mxu0
      %v739 = vadd.f32 %v698, %v738
      %v740 = vpop.f32.mrb[0].mxu0
      %v741 = vpop.f32.mrb[0].mxu0
      %v742 = vadd.f32 %v701, %v741
      %v743 = vpop.f32.mrb[0].mxu0
      %744 = vdwg.mxu0
      %v747 = vcombine.high %v739, %v739
      %v748 = vcombine.high %v742, %v742
      %751 = vst [vmem:[%s276] sm:$0xf] %v739
      %752 = vst [vmem:[%s276 + $0x4] sm:$0xf] %v747
      %753 = vst [vmem:[%s276 + $0x8] sm:$0xf] %v742
      %754 = vst [vmem:[%s276 + $0xc] sm:$0xf] %v748
      %v755 = vadd.f32 %v739, %v742
      %v756 = vrot.slane %v755, 4
      %v757 = vadd.f32 %v755, %v756
      %v758 = vrot.slane %v757, 2
      %v759 = vadd.f32 %v757, %v758
      %v760 = vrot.slane %v759, 1
      %v761 = vadd.f32 %v759, %v760
      %v762 = vadd.f32 %v761, 0.0
      %v763 = vmul.f32 %v739, %v739
      %v764 = vmul.f32 %v742, %v742
      %v765 = vadd.f32 %v763, %v764
      %v766 = vrot.slane %v765, 4
      %v767 = vadd.f32 %v765, %v766
      %v768 = vrot.slane %v767, 2
      %v769 = vadd.f32 %v767, %v768
      %v770 = vrot.slane %v769, 1
      %v771 = vadd.f32 %v769, %v770
      %v772 = vadd.f32 %v771, 0.0
      %v777 = vcombine.low %v335, %v336
      %v778 = vcombine.low %v337, %v338
      %v785 = vcombine.low %v347, %v348
      %v786 = vcombine.low %v349, %v350
      %v789 = vpack.c.bf16 %v778, %v777
      %v790 = vpack.c.bf16 %v786, %v785
      %s791 = scalar_lea.vmem %s4, 256
      %v792 = vld [vmem:[%s791] sm:$0xf]
      %v793 = vld [vmem:[%s791 + $0x4] sm:$0xf]
      %v794 = vld [vmem:[%s791 + $0x8] sm:$0xf]
      %v795 = vld [vmem:[%s791 + $0xc] sm:$0xf]
      %v796 = vld [vmem:[%s791 + $0x10] sm:$0xf]
      %v797 = vld [vmem:[%s791 + $0x14] sm:$0xf]
      %v798 = vld [vmem:[%s791 + $0x18] sm:$0xf]
      %v799 = vld [vmem:[%s791 + $0x1c] sm:$0xf]
      %v800 = vld [vmem:[%s791 + $0x20] sm:$0xf]
      %v801 = vld [vmem:[%s791 + $0x24] sm:$0xf]
      %v802 = vld [vmem:[%s791 + $0x28] sm:$0xf]
      %v803 = vld [vmem:[%s791 + $0x2c] sm:$0xf]
      %v804 = vld [vmem:[%s791 + $0x30] sm:$0xf]
      %v805 = vld [vmem:[%s791 + $0x34] sm:$0xf]
      %v806 = vld [vmem:[%s791 + $0x38] sm:$0xf]
      %v807 = vld [vmem:[%s791 + $0x3c] sm:$0xf]
      %v808 = vld [vmem:[%s791 + $0x40] sm:$0xf]
      %v809 = vld [vmem:[%s791 + $0x44] sm:$0xf]
      %v810 = vld [vmem:[%s791 + $0x48] sm:$0xf]
      %v811 = vld [vmem:[%s791 + $0x4c] sm:$0xf]
      %v812 = vld [vmem:[%s791 + $0x50] sm:$0xf]
      %v813 = vld [vmem:[%s791 + $0x54] sm:$0xf]
      %v814 = vld [vmem:[%s791 + $0x58] sm:$0xf]
      %v815 = vld [vmem:[%s791 + $0x5c] sm:$0xf]
      %v816 = vld [vmem:[%s791 + $0x60] sm:$0xf]
      %v817 = vld [vmem:[%s791 + $0x64] sm:$0xf]
      %v818 = vld [vmem:[%s791 + $0x68] sm:$0xf]
      %v819 = vld [vmem:[%s791 + $0x6c] sm:$0xf]
      %v820 = vld [vmem:[%s791 + $0x70] sm:$0xf]
      %v821 = vld [vmem:[%s791 + $0x74] sm:$0xf]
      %v822 = vld [vmem:[%s791 + $0x78] sm:$0xf]
      %v823 = vld [vmem:[%s791 + $0x7c] sm:$0xf]
      %v824 = vld [vmem:[%s791 + $0x80] sm:$0xf]
      %v825 = vld [vmem:[%s791 + $0x84] sm:$0xf]
      %v826 = vld [vmem:[%s791 + $0x88] sm:$0xf]
      %v827 = vld [vmem:[%s791 + $0x8c] sm:$0xf]
      %v828 = vld [vmem:[%s791 + $0x90] sm:$0xf]
      %v829 = vld [vmem:[%s791 + $0x94] sm:$0xf]
      %v830 = vld [vmem:[%s791 + $0x98] sm:$0xf]
      %v831 = vld [vmem:[%s791 + $0x9c] sm:$0xf]
      %v832 = vld [vmem:[%s791 + $0xa0] sm:$0xf]
      %v833 = vld [vmem:[%s791 + $0xa4] sm:$0xf]
      %v834 = vld [vmem:[%s791 + $0xa8] sm:$0xf]
      %v835 = vld [vmem:[%s791 + $0xac] sm:$0xf]
      %v836 = vld [vmem:[%s791 + $0xb0] sm:$0xf]
      %v837 = vld [vmem:[%s791 + $0xb4] sm:$0xf]
      %v838 = vld [vmem:[%s791 + $0xb8] sm:$0xf]
      %v839 = vld [vmem:[%s791 + $0xbc] sm:$0xf]
      %v840 = vld [vmem:[%s791 + $0xc0] sm:$0xf]
      %v841 = vld [vmem:[%s791 + $0xc4] sm:$0xf]
      %v842 = vld [vmem:[%s791 + $0xc8] sm:$0xf]
      %v843 = vld [vmem:[%s791 + $0xcc] sm:$0xf]
      %v844 = vld [vmem:[%s791 + $0xd0] sm:$0xf]
      %v845 = vld [vmem:[%s791 + $0xd4] sm:$0xf]
      %v846 = vld [vmem:[%s791 + $0xd8] sm:$0xf]
      %v847 = vld [vmem:[%s791 + $0xdc] sm:$0xf]
      %v848 = vld [vmem:[%s791 + $0xe0] sm:$0xf]
      %v849 = vld [vmem:[%s791 + $0xe4] sm:$0xf]
      %v850 = vld [vmem:[%s791 + $0xe8] sm:$0xf]
      %v851 = vld [vmem:[%s791 + $0xec] sm:$0xf]
      %v852 = vld [vmem:[%s791 + $0xf0] sm:$0xf]
      %v853 = vld [vmem:[%s791 + $0xf4] sm:$0xf]
      %v854 = vld [vmem:[%s791 + $0xf8] sm:$0xf]
      %v855 = vld [vmem:[%s791 + $0xfc] sm:$0xf]
      %v920 = vunpack.c.l.b16 %v792
      %v921 = vunpack.c.l.b16 %v793
      %v922 = vunpack.c.l.b16 %v794
      %v923 = vunpack.c.l.b16 %v795
      %v924 = vunpack.c.l.b16 %v796
      %v925 = vunpack.c.l.b16 %v797
      %v926 = vunpack.c.l.b16 %v798
      %v927 = vunpack.c.l.b16 %v799
      %v928 = vunpack.c.l.b16 %v800
      %v929 = vunpack.c.l.b16 %v801
      %v930 = vunpack.c.l.b16 %v802
      %v931 = vunpack.c.l.b16 %v803
      %v932 = vunpack.c.l.b16 %v804
      %v933 = vunpack.c.l.b16 %v805
      %v934 = vunpack.c.l.b16 %v806
      %v935 = vunpack.c.l.b16 %v807
      %v936 = vunpack.c.l.b16 %v808
      %v937 = vunpack.c.l.b16 %v809
      %v938 = vunpack.c.l.b16 %v810
      %v939 = vunpack.c.l.b16 %v811
      %v940 = vunpack.c.l.b16 %v812
      %v941 = vunpack.c.l.b16 %v813
      %v942 = vunpack.c.l.b16 %v814
      %v943 = vunpack.c.l.b16 %v815
      %v944 = vunpack.c.l.b16 %v816
      %v945 = vunpack.c.l.b16 %v817
      %v946 = vunpack.c.l.b16 %v818
      %v947 = vunpack.c.l.b16 %v819
      %v948 = vunpack.c.l.b16 %v820
      %v949 = vunpack.c.l.b16 %v821
      %v950 = vunpack.c.l.b16 %v822
      %v951 = vunpack.c.l.b16 %v823
      %v952 = vunpack.c.l.b16 %v824
      %v953 = vunpack.c.l.b16 %v825
      %v954 = vunpack.c.l.b16 %v826
      %v955 = vunpack.c.l.b16 %v827
      %v956 = vunpack.c.l.b16 %v828
      %v957 = vunpack.c.l.b16 %v829
      %v958 = vunpack.c.l.b16 %v830
      %v959 = vunpack.c.l.b16 %v831
      %v960 = vunpack.c.l.b16 %v832
      %v961 = vunpack.c.l.b16 %v833
      %v962 = vunpack.c.l.b16 %v834
      %v963 = vunpack.c.l.b16 %v835
      %v964 = vunpack.c.l.b16 %v836
      %v965 = vunpack.c.l.b16 %v837
      %v966 = vunpack.c.l.b16 %v838
      %v967 = vunpack.c.l.b16 %v839
      %v968 = vunpack.c.l.b16 %v840
      %v969 = vunpack.c.l.b16 %v841
      %v970 = vunpack.c.l.b16 %v842
      %v971 = vunpack.c.l.b16 %v843
      %v972 = vunpack.c.l.b16 %v844
      %v973 = vunpack.c.l.b16 %v845
      %v974 = vunpack.c.l.b16 %v846
      %v975 = vunpack.c.l.b16 %v847
      %v976 = vunpack.c.l.b16 %v848
      %v977 = vunpack.c.l.b16 %v849
      %v978 = vunpack.c.l.b16 %v850
      %v979 = vunpack.c.l.b16 %v851
      %v980 = vunpack.c.l.b16 %v852
      %v981 = vunpack.c.l.b16 %v853
      %v982 = vunpack.c.l.b16 %v854
      %v983 = vunpack.c.l.b16 %v855
      %v984 = vpack.c.b16 %v921, %v920
      %v985 = vpack.c.b16 %v923, %v922
      %v986 = vpack.c.b16 %v925, %v924
      %v987 = vpack.c.b16 %v927, %v926
      %v988 = vpack.c.b16 %v929, %v928
      %v989 = vpack.c.b16 %v931, %v930
      %v990 = vpack.c.b16 %v933, %v932
      %v991 = vpack.c.b16 %v935, %v934
      %v992 = vpack.c.b16 %v937, %v936
      %v993 = vpack.c.b16 %v939, %v938
      %v994 = vpack.c.b16 %v941, %v940
      %v995 = vpack.c.b16 %v943, %v942
      %v996 = vpack.c.b16 %v945, %v944
      %v997 = vpack.c.b16 %v947, %v946
      %v998 = vpack.c.b16 %v949, %v948
      %v999 = vpack.c.b16 %v951, %v950
      %v1000 = vpack.c.b16 %v953, %v952
      %v1001 = vpack.c.b16 %v955, %v954
      %v1002 = vpack.c.b16 %v957, %v956
      %v1003 = vpack.c.b16 %v959, %v958
      %v1004 = vpack.c.b16 %v961, %v960
      %v1005 = vpack.c.b16 %v963, %v962
      %v1006 = vpack.c.b16 %v965, %v964
      %v1007 = vpack.c.b16 %v967, %v966
      %v1008 = vpack.c.b16 %v969, %v968
      %v1009 = vpack.c.b16 %v971, %v970
      %v1010 = vpack.c.b16 %v973, %v972
      %v1011 = vpack.c.b16 %v975, %v974
      %v1012 = vpack.c.b16 %v977, %v976
      %v1013 = vpack.c.b16 %v979, %v978
      %v1014 = vpack.c.b16 %v981, %v980
      %v1015 = vpack.c.b16 %v983, %v982
      %1048 = vmatprep.subr.bf16.mxu0 0
      %1049 = vmatpush1.bf16.msra.mxu0 %v984
      %1050 = vmatprep.subr.bf16.mxu0 0
      %1051 = vmatpush1.bf16.msra.mxu0 %v985
      %1052 = vmatprep.subr.bf16.mxu0 0
      %1053 = vmatpush1.bf16.msra.mxu0 %v986
      %1054 = vmatprep.subr.bf16.mxu0 0
      %1055 = vmatpush1.bf16.msra.mxu0 %v987
      %1056 = vmatprep.subr.bf16.mxu0 0
      %1057 = vmatpush1.bf16.msra.mxu0 %v988
      %1058 = vmatprep.subr.bf16.mxu0 0
      %1059 = vmatpush1.bf16.msra.mxu0 %v989
      %1060 = vmatprep.subr.bf16.mxu0 0
      %1061 = vmatpush1.bf16.msra.mxu0 %v990
      %1062 = vmatprep.subr.bf16.mxu0 0
      %1063 = vmatpush1.bf16.msra.mxu0 %v991
      %1064 = vmatprep.subr.bf16.mxu0 0
      %1065 = vmatpush1.bf16.msra.mxu0 %v992
      %1066 = vmatprep.subr.bf16.mxu0 0
      %1067 = vmatpush1.bf16.msra.mxu0 %v993
      %1068 = vmatprep.subr.bf16.mxu0 0
      %1069 = vmatpush1.bf16.msra.mxu0 %v994
      %1070 = vmatprep.subr.bf16.mxu0 0
      %1071 = vmatpush1.bf16.msra.mxu0 %v995
      %1072 = vmatprep.subr.bf16.mxu0 0
      %1073 = vmatpush1.bf16.msra.mxu0 %v996
      %1074 = vmatprep.subr.bf16.mxu0 0
      %1075 = vmatpush1.bf16.msra.mxu0 %v997
      %1076 = vmatprep.subr.bf16.mxu0 0
      %1077 = vmatpush1.bf16.msra.mxu0 %v998
      %1078 = vmatprep.subr.bf16.mxu0 0
      %1079 = vmatpush1.bf16.msra.mxu0 %v999
      %1080 = vmatprep.mubr.bf16.mxu0 %v789
      %1081 = vmatmul.mubr.bf16.gmra.mrb[0].mxu0 %v398
      %v1082 = vpop.f32.mrb[0].mxu0
      %v1083 = vadd.f32 %v469, %v1082
      %v1084 = vpop.f32.mrb[0].mxu0
      %v1085 = vpop.f32.mrb[0].mxu0
      %v1086 = vadd.f32 %v469, %v1085
      %v1087 = vpop.f32.mrb[0].mxu0
      %1088 = vdwg.mxu0
      %1089 = vmatprep.subr.bf16.mxu0 0
      %1090 = vmatpush1.bf16.msra.mxu0 %v1000
      %1091 = vmatprep.subr.bf16.mxu0 0
      %1092 = vmatpush1.bf16.msra.mxu0 %v1001
      %1093 = vmatprep.subr.bf16.mxu0 0
      %1094 = vmatpush1.bf16.msra.mxu0 %v1002
      %1095 = vmatprep.subr.bf16.mxu0 0
      %1096 = vmatpush1.bf16.msra.mxu0 %v1003
      %1097 = vmatprep.subr.bf16.mxu0 0
      %1098 = vmatpush1.bf16.msra.mxu0 %v1004
      %1099 = vmatprep.subr.bf16.mxu0 0
      %1100 = vmatpush1.bf16.msra.mxu0 %v1005
      %1101 = vmatprep.subr.bf16.mxu0 0
      %1102 = vmatpush1.bf16.msra.mxu0 %v1006
      %1103 = vmatprep.subr.bf16.mxu0 0
      %1104 = vmatpush1.bf16.msra.mxu0 %v1007
      %1105 = vmatprep.subr.bf16.mxu0 0
      %1106 = vmatpush1.bf16.msra.mxu0 %v1008
      %1107 = vmatprep.subr.bf16.mxu0 0
      %1108 = vmatpush1.bf16.msra.mxu0 %v1009
      %1109 = vmatprep.subr.bf16.mxu0 0
      %1110 = vmatpush1.bf16.msra.mxu0 %v1010
      %1111 = vmatprep.subr.bf16.mxu0 0
      %1112 = vmatpush1.bf16.msra.mxu0 %v1011
      %1113 = vmatprep.subr.bf16.mxu0 0
      %1114 = vmatpush1.bf16.msra.mxu0 %v1012
      %1115 = vmatprep.subr.bf16.mxu0 0
      %1116 = vmatpush1.bf16.msra.mxu0 %v1013
      %1117 = vmatprep.subr.bf16.mxu0 0
      %1118 = vmatpush1.bf16.msra.mxu0 %v1014
      %1119 = vmatprep.subr.bf16.mxu0 0
      %1120 = vmatpush1.bf16.msra.mxu0 %v1015
      %1121 = vmatprep.mubr.bf16.mxu0 %v790
      %1122 = vmatmul.mubr.bf16.gmra.mrb[0].mxu0 %v400
      %v1123 = vpop.f32.mrb[0].mxu0
      %v1124 = vadd.f32 %v1083, %v1123
      %v1125 = vpop.f32.mrb[0].mxu0
      %v1126 = vpop.f32.mrb[0].mxu0
      %v1127 = vadd.f32 %v1086, %v1126
      %v1128 = vpop.f32.mrb[0].mxu0
      %1129 = vdwg.mxu0
      %v1132 = vcombine.high %v1124, %v1124
      %v1133 = vcombine.high %v1127, %v1127
      %s1136 = scalar_lea.vmem %s276, 16
      %1137 = vst [vmem:[%s1136] sm:$0xf] %v1124
      %1138 = vst [vmem:[%s1136 + $0x4] sm:$0xf] %v1132
      %1139 = vst [vmem:[%s1136 + $0x8] sm:$0xf] %v1127
      %1140 = vst [vmem:[%s1136 + $0xc] sm:$0xf] %v1133
      %v1141 = vadd.f32 %v1124, %v1127
      %v1142 = vrot.slane %v1141, 4
      %v1143 = vadd.f32 %v1141, %v1142
      %v1144 = vrot.slane %v1143, 2
      %v1145 = vadd.f32 %v1143, %v1144
      %v1146 = vrot.slane %v1145, 1
      %v1147 = vadd.f32 %v1145, %v1146
      %v1148 = vadd.f32 %v762, %v1147
      %v1149 = vmul.f32 %v1124, %v1124
      %v1150 = vmul.f32 %v1127, %v1127
      %v1151 = vadd.f32 %v1149, %v1150
      %v1152 = vrot.slane %v1151, 4
      %v1153 = vadd.f32 %v1151, %v1152
      %v1154 = vrot.slane %v1153, 2
      %v1155 = vadd.f32 %v1153, %v1154
      %v1156 = vrot.slane %v1155, 1
      %v1157 = vadd.f32 %v1155, %v1156
      %v1158 = vadd.f32 %v772, %v1157
      %v1163 = vcombine.low %v352, %v353
      %v1164 = vcombine.low %v354, %v355
      %v1171 = vcombine.low %v356, %v357
      %v1172 = vcombine.low %v358, %v359
      %v1175 = vpack.c.bf16 %v1164, %v1163
      %v1176 = vpack.c.bf16 %v1172, %v1171
      %s1177 = scalar_lea.vmem %s4, 512
      %v1178 = vld [vmem:[%s1177] sm:$0xf]
      %v1179 = vld [vmem:[%s1177 + $0x4] sm:$0xf]
      %v1180 = vld [vmem:[%s1177 + $0x8] sm:$0xf]
      %v1181 = vld [vmem:[%s1177 + $0xc] sm:$0xf]
      %v1182 = vld [vmem:[%s1177 + $0x10] sm:$0xf]
      %v1183 = vld [vmem:[%s1177 + $0x14] sm:$0xf]
      %v1184 = vld [vmem:[%s1177 + $0x18] sm:$0xf]
      %v1185 = vld [vmem:[%s1177 + $0x1c] sm:$0xf]
      %v1186 = vld [vmem:[%s1177 + $0x20] sm:$0xf]
      %v1187 = vld [vmem:[%s1177 + $0x24] sm:$0xf]
      %v1188 = vld [vmem:[%s1177 + $0x28] sm:$0xf]
      %v1189 = vld [vmem:[%s1177 + $0x2c] sm:$0xf]
      %v1190 = vld [vmem:[%s1177 + $0x30] sm:$0xf]
      %v1191 = vld [vmem:[%s1177 + $0x34] sm:$0xf]
      %v1192 = vld [vmem:[%s1177 + $0x38] sm:$0xf]
      %v1193 = vld [vmem:[%s1177 + $0x3c] sm:$0xf]
      %v1194 = vld [vmem:[%s1177 + $0x40] sm:$0xf]
      %v1195 = vld [vmem:[%s1177 + $0x44] sm:$0xf]
      %v1196 = vld [vmem:[%s1177 + $0x48] sm:$0xf]
      %v1197 = vld [vmem:[%s1177 + $0x4c] sm:$0xf]
      %v1198 = vld [vmem:[%s1177 + $0x50] sm:$0xf]
      %v1199 = vld [vmem:[%s1177 + $0x54] sm:$0xf]
      %v1200 = vld [vmem:[%s1177 + $0x58] sm:$0xf]
      %v1201 = vld [vmem:[%s1177 + $0x5c] sm:$0xf]
      %v1202 = vld [vmem:[%s1177 + $0x60] sm:$0xf]
      %v1203 = vld [vmem:[%s1177 + $0x64] sm:$0xf]
      %v1204 = vld [vmem:[%s1177 + $0x68] sm:$0xf]
      %v1205 = vld [vmem:[%s1177 + $0x6c] sm:$0xf]
      %v1206 = vld [vmem:[%s1177 + $0x70] sm:$0xf]
      %v1207 = vld [vmem:[%s1177 + $0x74] sm:$0xf]
      %v1208 = vld [vmem:[%s1177 + $0x78] sm:$0xf]
      %v1209 = vld [vmem:[%s1177 + $0x7c] sm:$0xf]
      %v1210 = vld [vmem:[%s1177 + $0x80] sm:$0xf]
      %v1211 = vld [vmem:[%s1177 + $0x84] sm:$0xf]
      %v1212 = vld [vmem:[%s1177 + $0x88] sm:$0xf]
      %v1213 = vld [vmem:[%s1177 + $0x8c] sm:$0xf]
      %v1214 = vld [vmem:[%s1177 + $0x90] sm:$0xf]
      %v1215 = vld [vmem:[%s1177 + $0x94] sm:$0xf]
      %v1216 = vld [vmem:[%s1177 + $0x98] sm:$0xf]
      %v1217 = vld [vmem:[%s1177 + $0x9c] sm:$0xf]
      %v1218 = vld [vmem:[%s1177 + $0xa0] sm:$0xf]
      %v1219 = vld [vmem:[%s1177 + $0xa4] sm:$0xf]
      %v1220 = vld [vmem:[%s1177 + $0xa8] sm:$0xf]
      %v1221 = vld [vmem:[%s1177 + $0xac] sm:$0xf]
      %v1222 = vld [vmem:[%s1177 + $0xb0] sm:$0xf]
      %v1223 = vld [vmem:[%s1177 + $0xb4] sm:$0xf]
      %v1224 = vld [vmem:[%s1177 + $0xb8] sm:$0xf]
      %v1225 = vld [vmem:[%s1177 + $0xbc] sm:$0xf]
      %v1226 = vld [vmem:[%s1177 + $0xc0] sm:$0xf]
      %v1227 = vld [vmem:[%s1177 + $0xc4] sm:$0xf]
      %v1228 = vld [vmem:[%s1177 + $0xc8] sm:$0xf]
      %v1229 = vld [vmem:[%s1177 + $0xcc] sm:$0xf]
      %v1230 = vld [vmem:[%s1177 + $0xd0] sm:$0xf]
      %v1231 = vld [vmem:[%s1177 + $0xd4] sm:$0xf]
      %v1232 = vld [vmem:[%s1177 + $0xd8] sm:$0xf]
      %v1233 = vld [vmem:[%s1177 + $0xdc] sm:$0xf]
      %v1234 = vld [vmem:[%s1177 + $0xe0] sm:$0xf]
      %v1235 = vld [vmem:[%s1177 + $0xe4] sm:$0xf]
      %v1236 = vld [vmem:[%s1177 + $0xe8] sm:$0xf]
      %v1237 = vld [vmem:[%s1177 + $0xec] sm:$0xf]
      %v1238 = vld [vmem:[%s1177 + $0xf0] sm:$0xf]
      %v1239 = vld [vmem:[%s1177 + $0xf4] sm:$0xf]
      %v1240 = vld [vmem:[%s1177 + $0xf8] sm:$0xf]
      %v1241 = vld [vmem:[%s1177 + $0xfc] sm:$0xf]
      %v1306 = vunpack.c.l.b16 %v1178
      %v1307 = vunpack.c.l.b16 %v1179
      %v1308 = vunpack.c.l.b16 %v1180
      %v1309 = vunpack.c.l.b16 %v1181
      %v1310 = vunpack.c.l.b16 %v1182
      %v1311 = vunpack.c.l.b16 %v1183
      %v1312 = vunpack.c.l.b16 %v1184
      %v1313 = vunpack.c.l.b16 %v1185
      %v1314 = vunpack.c.l.b16 %v1186
      %v1315 = vunpack.c.l.b16 %v1187
      %v1316 = vunpack.c.l.b16 %v1188
      %v1317 = vunpack.c.l.b16 %v1189
      %v1318 = vunpack.c.l.b16 %v1190
      %v1319 = vunpack.c.l.b16 %v1191
      %v1320 = vunpack.c.l.b16 %v1192
      %v1321 = vunpack.c.l.b16 %v1193
      %v1322 = vunpack.c.l.b16 %v1194
      %v1323 = vunpack.c.l.b16 %v1195
      %v1324 = vunpack.c.l.b16 %v1196
      %v1325 = vunpack.c.l.b16 %v1197
      %v1326 = vunpack.c.l.b16 %v1198
      %v1327 = vunpack.c.l.b16 %v1199
      %v1328 = vunpack.c.l.b16 %v1200
      %v1329 = vunpack.c.l.b16 %v1201
      %v1330 = vunpack.c.l.b16 %v1202
      %v1331 = vunpack.c.l.b16 %v1203
      %v1332 = vunpack.c.l.b16 %v1204
      %v1333 = vunpack.c.l.b16 %v1205
      %v1334 = vunpack.c.l.b16 %v1206
      %v1335 = vunpack.c.l.b16 %v1207
      %v1336 = vunpack.c.l.b16 %v1208
      %v1337 = vunpack.c.l.b16 %v1209
      %v1338 = vunpack.c.l.b16 %v1210
      %v1339 = vunpack.c.l.b16 %v1211
      %v1340 = vunpack.c.l.b16 %v1212
      %v1341 = vunpack.c.l.b16 %v1213
      %v1342 = vunpack.c.l.b16 %v1214
      %v1343 = vunpack.c.l.b16 %v1215
      %v1344 = vunpack.c.l.b16 %v1216
      %v1345 = vunpack.c.l.b16 %v1217
      %v1346 = vunpack.c.l.b16 %v1218
      %v1347 = vunpack.c.l.b16 %v1219
      %v1348 = vunpack.c.l.b16 %v1220
      %v1349 = vunpack.c.l.b16 %v1221
      %v1350 = vunpack.c.l.b16 %v1222
      %v1351 = vunpack.c.l.b16 %v1223
      %v1352 = vunpack.c.l.b16 %v1224
      %v1353 = vunpack.c.l.b16 %v1225
      %v1354 = vunpack.c.l.b16 %v1226
      %v1355 = vunpack.c.l.b16 %v1227
      %v1356 = vunpack.c.l.b16 %v1228
      %v1357 = vunpack.c.l.b16 %v1229
      %v1358 = vunpack.c.l.b16 %v1230
      %v1359 = vunpack.c.l.b16 %v1231
      %v1360 = vunpack.c.l.b16 %v1232
      %v1361 = vunpack.c.l.b16 %v1233
      %v1362 = vunpack.c.l.b16 %v1234
      %v1363 = vunpack.c.l.b16 %v1235
      %v1364 = vunpack.c.l.b16 %v1236
      %v1365 = vunpack.c.l.b16 %v1237
      %v1366 = vunpack.c.l.b16 %v1238
      %v1367 = vunpack.c.l.b16 %v1239
      %v1368 = vunpack.c.l.b16 %v1240
      %v1369 = vunpack.c.l.b16 %v1241
      %v1370 = vpack.c.b16 %v1307, %v1306
      %v1371 = vpack.c.b16 %v1309, %v1308
      %v1372 = vpack.c.b16 %v1311, %v1310
      %v1373 = vpack.c.b16 %v1313, %v1312
      %v1374 = vpack.c.b16 %v1315, %v1314
      %v1375 = vpack.c.b16 %v1317, %v1316
      %v1376 = vpack.c.b16 %v1319, %v1318
      %v1377 = vpack.c.b16 %v1321, %v1320
      %v1378 = vpack.c.b16 %v1323, %v1322
      %v1379 = vpack.c.b16 %v1325, %v1324
      %v1380 = vpack.c.b16 %v1327, %v1326
      %v1381 = vpack.c.b16 %v1329, %v1328
      %v1382 = vpack.c.b16 %v1331, %v1330
      %v1383 = vpack.c.b16 %v1333, %v1332
      %v1384 = vpack.c.b16 %v1335, %v1334
      %v1385 = vpack.c.b16 %v1337, %v1336
      %v1386 = vpack.c.b16 %v1339, %v1338
      %v1387 = vpack.c.b16 %v1341, %v1340
      %v1388 = vpack.c.b16 %v1343, %v1342
      %v1389 = vpack.c.b16 %v1345, %v1344
      %v1390 = vpack.c.b16 %v1347, %v1346
      %v1391 = vpack.c.b16 %v1349, %v1348
      %v1392 = vpack.c.b16 %v1351, %v1350
      %v1393 = vpack.c.b16 %v1353, %v1352
      %v1394 = vpack.c.b16 %v1355, %v1354
      %v1395 = vpack.c.b16 %v1357, %v1356
      %v1396 = vpack.c.b16 %v1359, %v1358
      %v1397 = vpack.c.b16 %v1361, %v1360
      %v1398 = vpack.c.b16 %v1363, %v1362
      %v1399 = vpack.c.b16 %v1365, %v1364
      %v1400 = vpack.c.b16 %v1367, %v1366
      %v1401 = vpack.c.b16 %v1369, %v1368
      %1434 = vmatprep.subr.bf16.mxu0 0
      %1435 = vmatpush1.bf16.msra.mxu0 %v1370
      %1436 = vmatprep.subr.bf16.mxu0 0
      %1437 = vmatpush1.bf16.msra.mxu0 %v1371
      %1438 = vmatprep.subr.bf16.mxu0 0
      %1439 = vmatpush1.bf16.msra.mxu0 %v1372
      %1440 = vmatprep.subr.bf16.mxu0 0
      %1441 = vmatpush1.bf16.msra.mxu0 %v1373
      %1442 = vmatprep.subr.bf16.mxu0 0
      %1443 = vmatpush1.bf16.msra.mxu0 %v1374
      %1444 = vmatprep.subr.bf16.mxu0 0
      %1445 = vmatpush1.bf16.msra.mxu0 %v1375
      %1446 = vmatprep.subr.bf16.mxu0 0
      %1447 = vmatpush1.bf16.msra.mxu0 %v1376
      %1448 = vmatprep.subr.bf16.mxu0 0
      %1449 = vmatpush1.bf16.msra.mxu0 %v1377
      %1450 = vmatprep.subr.bf16.mxu0 0
      %1451 = vmatpush1.bf16.msra.mxu0 %v1378
      %1452 = vmatprep.subr.bf16.mxu0 0
      %1453 = vmatpush1.bf16.msra.mxu0 %v1379
      %1454 = vmatprep.subr.bf16.mxu0 0
      %1455 = vmatpush1.bf16.msra.mxu0 %v1380
      %1456 = vmatprep.subr.bf16.mxu0 0
      %1457 = vmatpush1.bf16.msra.mxu0 %v1381
      %1458 = vmatprep.subr.bf16.mxu0 0
      %1459 = vmatpush1.bf16.msra.mxu0 %v1382
      %1460 = vmatprep.subr.bf16.mxu0 0
      %1461 = vmatpush1.bf16.msra.mxu0 %v1383
      %1462 = vmatprep.subr.bf16.mxu0 0
      %1463 = vmatpush1.bf16.msra.mxu0 %v1384
      %1464 = vmatprep.subr.bf16.mxu0 0
      %1465 = vmatpush1.bf16.msra.mxu0 %v1385
      %1466 = vmatprep.mubr.bf16.mxu0 %v400
      %1467 = vmatmul.mubr.bf16.gmra.mrb[0].mxu0 %v399
      %v1468 = vpop.f32.mrb[0].mxu0
      %v1469 = vadd.f32 %v469, %v1468
      %v1470 = vpop.f32.mrb[0].mxu0
      %v1471 = vpop.f32.mrb[0].mxu0
      %v1472 = vadd.f32 %v469, %v1471
      %v1473 = vpop.f32.mrb[0].mxu0
      %1474 = vdwg.mxu0
      %1475 = vmatprep.subr.bf16.mxu0 0
      %1476 = vmatpush1.bf16.msra.mxu0 %v1386
      %1477 = vmatprep.subr.bf16.mxu0 0
      %1478 = vmatpush1.bf16.msra.mxu0 %v1387
      %1479 = vmatprep.subr.bf16.mxu0 0
      %1480 = vmatpush1.bf16.msra.mxu0 %v1388
      %1481 = vmatprep.subr.bf16.mxu0 0
      %1482 = vmatpush1.bf16.msra.mxu0 %v1389
      %1483 = vmatprep.subr.bf16.mxu0 0
      %1484 = vmatpush1.bf16.msra.mxu0 %v1390
      %1485 = vmatprep.subr.bf16.mxu0 0
      %1486 = vmatpush1.bf16.msra.mxu0 %v1391
      %1487 = vmatprep.subr.bf16.mxu0 0
      %1488 = vmatpush1.bf16.msra.mxu0 %v1392
      %1489 = vmatprep.subr.bf16.mxu0 0
      %1490 = vmatpush1.bf16.msra.mxu0 %v1393
      %1491 = vmatprep.subr.bf16.mxu0 0
      %1492 = vmatpush1.bf16.msra.mxu0 %v1394
      %1493 = vmatprep.subr.bf16.mxu0 0
      %1494 = vmatpush1.bf16.msra.mxu0 %v1395
      %1495 = vmatprep.subr.bf16.mxu0 0
      %1496 = vmatpush1.bf16.msra.mxu0 %v1396
      %1497 = vmatprep.subr.bf16.mxu0 0
      %1498 = vmatpush1.bf16.msra.mxu0 %v1397
      %1499 = vmatprep.subr.bf16.mxu0 0
      %1500 = vmatpush1.bf16.msra.mxu0 %v1398
      %1501 = vmatprep.subr.bf16.mxu0 0
      %1502 = vmatpush1.bf16.msra.mxu0 %v1399
      %1503 = vmatprep.subr.bf16.mxu0 0
      %1504 = vmatpush1.bf16.msra.mxu0 %v1400
      %1505 = vmatprep.subr.bf16.mxu0 0
      %1506 = vmatpush1.bf16.msra.mxu0 %v1401
      %1507 = vmatprep.mubr.bf16.mxu0 %v1176
      %1508 = vmatmul.mubr.bf16.gmra.mrb[0].mxu0 %v1175
      %v1509 = vpop.f32.mrb[0].mxu0
      %v1510 = vadd.f32 %v1469, %v1509
      %v1511 = vpop.f32.mrb[0].mxu0
      %v1512 = vpop.f32.mrb[0].mxu0
      %v1513 = vadd.f32 %v1472, %v1512
      %v1514 = vpop.f32.mrb[0].mxu0
      %1515 = vdwg.mxu0
      %v1518 = vcombine.high %v1510, %v1510
      %v1519 = vcombine.high %v1513, %v1513
      %s1522 = scalar_lea.vmem %s276, 32
      %1523 = vst [vmem:[%s1522] sm:$0xf] %v1510
      %1524 = vst [vmem:[%s1522 + $0x4] sm:$0xf] %v1518
      %1525 = vst [vmem:[%s1522 + $0x8] sm:$0xf] %v1513
      %1526 = vst [vmem:[%s1522 + $0xc] sm:$0xf] %v1519
      %v1527 = vadd.f32 %v1510, %v1513
      %v1528 = vrot.slane %v1527, 4
      %v1529 = vadd.f32 %v1527, %v1528
      %v1530 = vrot.slane %v1529, 2
      %v1531 = vadd.f32 %v1529, %v1530
      %v1532 = vrot.slane %v1531, 1
      %v1533 = vadd.f32 %v1531, %v1532
      %v1534 = vadd.f32 %v1148, %v1533
      %v1535 = vmul.f32 %v1510, %v1510
      %v1536 = vmul.f32 %v1513, %v1513
      %v1537 = vadd.f32 %v1535, %v1536
      %v1538 = vrot.slane %v1537, 4
      %v1539 = vadd.f32 %v1537, %v1538
      %v1540 = vrot.slane %v1539, 2
      %v1541 = vadd.f32 %v1539, %v1540
      %v1542 = vrot.slane %v1541, 1
      %v1543 = vadd.f32 %v1541, %v1542
      %v1544 = vadd.f32 %v1158, %v1543
      %v1549 = vcombine.low %v360, %v361
      %v1550 = vcombine.low %v362, %v363
      %v1553 = vpack.c.bf16 %v1550, %v1549
      %s1554 = scalar_lea.vmem %s4, 768
      %v1555 = vld [vmem:[%s1554] sm:$0xf]
      %v1556 = vld [vmem:[%s1554 + $0x4] sm:$0xf]
      %v1557 = vld [vmem:[%s1554 + $0x8] sm:$0xf]
      %v1558 = vld [vmem:[%s1554 + $0xc] sm:$0xf]
      %v1559 = vld [vmem:[%s1554 + $0x10] sm:$0xf]
      %v1560 = vld [vmem:[%s1554 + $0x14] sm:$0xf]
      %v1561 = vld [vmem:[%s1554 + $0x18] sm:$0xf]
      %v1562 = vld [vmem:[%s1554 + $0x1c] sm:$0xf]
      %v1563 = vld [vmem:[%s1554 + $0x20] sm:$0xf]
      %v1564 = vld [vmem:[%s1554 + $0x24] sm:$0xf]
      %v1565 = vld [vmem:[%s1554 + $0x28] sm:$0xf]
      %v1566 = vld [vmem:[%s1554 + $0x2c] sm:$0xf]
      %v1567 = vld [vmem:[%s1554 + $0x30] sm:$0xf]
      %v1568 = vld [vmem:[%s1554 + $0x34] sm:$0xf]
      %v1569 = vld [vmem:[%s1554 + $0x38] sm:$0xf]
      %v1570 = vld [vmem:[%s1554 + $0x3c] sm:$0xf]
      %v1571 = vld [vmem:[%s1554 + $0x40] sm:$0xf]
      %v1572 = vld [vmem:[%s1554 + $0x44] sm:$0xf]
      %v1573 = vld [vmem:[%s1554 + $0x48] sm:$0xf]
      %v1574 = vld [vmem:[%s1554 + $0x4c] sm:$0xf]
      %v1575 = vld [vmem:[%s1554 + $0x50] sm:$0xf]
      %v1576 = vld [vmem:[%s1554 + $0x54] sm:$0xf]
      %v1577 = vld [vmem:[%s1554 + $0x58] sm:$0xf]
      %v1578 = vld [vmem:[%s1554 + $0x5c] sm:$0xf]
      %v1579 = vld [vmem:[%s1554 + $0x60] sm:$0xf]
      %v1580 = vld [vmem:[%s1554 + $0x64] sm:$0xf]
      %v1581 = vld [vmem:[%s1554 + $0x68] sm:$0xf]
      %v1582 = vld [vmem:[%s1554 + $0x6c] sm:$0xf]
      %v1583 = vld [vmem:[%s1554 + $0x70] sm:$0xf]
      %v1584 = vld [vmem:[%s1554 + $0x74] sm:$0xf]
      %v1585 = vld [vmem:[%s1554 + $0x78] sm:$0xf]
      %v1586 = vld [vmem:[%s1554 + $0x7c] sm:$0xf]
      %v1587 = vld [vmem:[%s1554 + $0x80] sm:$0xf]
      %v1588 = vld [vmem:[%s1554 + $0x84] sm:$0xf]
      %v1589 = vld [vmem:[%s1554 + $0x88] sm:$0xf]
      %v1590 = vld [vmem:[%s1554 + $0x8c] sm:$0xf]
      %v1591 = vld [vmem:[%s1554 + $0x90] sm:$0xf]
      %v1592 = vld [vmem:[%s1554 + $0x94] sm:$0xf]
      %v1593 = vld [vmem:[%s1554 + $0x98] sm:$0xf]
      %v1594 = vld [vmem:[%s1554 + $0x9c] sm:$0xf]
      %v1595 = vld [vmem:[%s1554 + $0xa0] sm:$0xf]
      %v1596 = vld [vmem:[%s1554 + $0xa4] sm:$0xf]
      %v1597 = vld [vmem:[%s1554 + $0xa8] sm:$0xf]
      %v1598 = vld [vmem:[%s1554 + $0xac] sm:$0xf]
      %v1599 = vld [vmem:[%s1554 + $0xb0] sm:$0xf]
      %v1600 = vld [vmem:[%s1554 + $0xb4] sm:$0xf]
      %v1601 = vld [vmem:[%s1554 + $0xb8] sm:$0xf]
      %v1602 = vld [vmem:[%s1554 + $0xbc] sm:$0xf]
      %v1603 = vld [vmem:[%s1554 + $0xc0] sm:$0xf]
      %v1604 = vld [vmem:[%s1554 + $0xc4] sm:$0xf]
      %v1605 = vld [vmem:[%s1554 + $0xc8] sm:$0xf]
      %v1606 = vld [vmem:[%s1554 + $0xcc] sm:$0xf]
      %v1607 = vld [vmem:[%s1554 + $0xd0] sm:$0xf]
      %v1608 = vld [vmem:[%s1554 + $0xd4] sm:$0xf]
      %v1609 = vld [vmem:[%s1554 + $0xd8] sm:$0xf]
      %v1610 = vld [vmem:[%s1554 + $0xdc] sm:$0xf]
      %v1611 = vld [vmem:[%s1554 + $0xe0] sm:$0xf]
      %v1612 = vld [vmem:[%s1554 + $0xe4] sm:$0xf]
      %v1613 = vld [vmem:[%s1554 + $0xe8] sm:$0xf]
      %v1614 = vld [vmem:[%s1554 + $0xec] sm:$0xf]
      %v1615 = vld [vmem:[%s1554 + $0xf0] sm:$0xf]
      %v1616 = vld [vmem:[%s1554 + $0xf4] sm:$0xf]
      %v1617 = vld [vmem:[%s1554 + $0xf8] sm:$0xf]
      %v1618 = vld [vmem:[%s1554 + $0xfc] sm:$0xf]
      %v1683 = vunpack.c.l.b16 %v1555
      %v1684 = vunpack.c.l.b16 %v1556
      %v1685 = vunpack.c.l.b16 %v1557
      %v1686 = vunpack.c.l.b16 %v1558
      %v1687 = vunpack.c.l.b16 %v1559
      %v1688 = vunpack.c.l.b16 %v1560
      %v1689 = vunpack.c.l.b16 %v1561
      %v1690 = vunpack.c.l.b16 %v1562
      %v1691 = vunpack.c.l.b16 %v1563
      %v1692 = vunpack.c.l.b16 %v1564
      %v1693 = vunpack.c.l.b16 %v1565
      %v1694 = vunpack.c.l.b16 %v1566
      %v1695 = vunpack.c.l.b16 %v1567
      %v1696 = vunpack.c.l.b16 %v1568
      %v1697 = vunpack.c.l.b16 %v1569
      %v1698 = vunpack.c.l.b16 %v1570
      %v1699 = vunpack.c.l.b16 %v1571
      %v1700 = vunpack.c.l.b16 %v1572
      %v1701 = vunpack.c.l.b16 %v1573
      %v1702 = vunpack.c.l.b16 %v1574
      %v1703 = vunpack.c.l.b16 %v1575
      %v1704 = vunpack.c.l.b16 %v1576
      %v1705 = vunpack.c.l.b16 %v1577
      %v1706 = vunpack.c.l.b16 %v1578
      %v1707 = vunpack.c.l.b16 %v1579
      %v1708 = vunpack.c.l.b16 %v1580
      %v1709 = vunpack.c.l.b16 %v1581
      %v1710 = vunpack.c.l.b16 %v1582
      %v1711 = vunpack.c.l.b16 %v1583
      %v1712 = vunpack.c.l.b16 %v1584
      %v1713 = vunpack.c.l.b16 %v1585
      %v1714 = vunpack.c.l.b16 %v1586
      %v1715 = vunpack.c.l.b16 %v1587
      %v1716 = vunpack.c.l.b16 %v1588
      %v1717 = vunpack.c.l.b16 %v1589
      %v1718 = vunpack.c.l.b16 %v1590
      %v1719 = vunpack.c.l.b16 %v1591
      %v1720 = vunpack.c.l.b16 %v1592
      %v1721 = vunpack.c.l.b16 %v1593
      %v1722 = vunpack.c.l.b16 %v1594
      %v1723 = vunpack.c.l.b16 %v1595
      %v1724 = vunpack.c.l.b16 %v1596
      %v1725 = vunpack.c.l.b16 %v1597
      %v1726 = vunpack.c.l.b16 %v1598
      %v1727 = vunpack.c.l.b16 %v1599
      %v1728 = vunpack.c.l.b16 %v1600
      %v1729 = vunpack.c.l.b16 %v1601
      %v1730 = vunpack.c.l.b16 %v1602
      %v1731 = vunpack.c.l.b16 %v1603
      %v1732 = vunpack.c.l.b16 %v1604
      %v1733 = vunpack.c.l.b16 %v1605
      %v1734 = vunpack.c.l.b16 %v1606
      %v1735 = vunpack.c.l.b16 %v1607
      %v1736 = vunpack.c.l.b16 %v1608
      %v1737 = vunpack.c.l.b16 %v1609
      %v1738 = vunpack.c.l.b16 %v1610
      %v1739 = vunpack.c.l.b16 %v1611
      %v1740 = vunpack.c.l.b16 %v1612
      %v1741 = vunpack.c.l.b16 %v1613
      %v1742 = vunpack.c.l.b16 %v1614
      %v1743 = vunpack.c.l.b16 %v1615
      %v1744 = vunpack.c.l.b16 %v1616
      %v1745 = vunpack.c.l.b16 %v1617
      %v1746 = vunpack.c.l.b16 %v1618
      %v1747 = vpack.c.b16 %v1684, %v1683
      %v1748 = vpack.c.b16 %v1686, %v1685
      %v1749 = vpack.c.b16 %v1688, %v1687
      %v1750 = vpack.c.b16 %v1690, %v1689
      %v1751 = vpack.c.b16 %v1692, %v1691
      %v1752 = vpack.c.b16 %v1694, %v1693
      %v1753 = vpack.c.b16 %v1696, %v1695
      %v1754 = vpack.c.b16 %v1698, %v1697
      %v1755 = vpack.c.b16 %v1700, %v1699
      %v1756 = vpack.c.b16 %v1702, %v1701
      %v1757 = vpack.c.b16 %v1704, %v1703
      %v1758 = vpack.c.b16 %v1706, %v1705
      %v1759 = vpack.c.b16 %v1708, %v1707
      %v1760 = vpack.c.b16 %v1710, %v1709
      %v1761 = vpack.c.b16 %v1712, %v1711
      %v1762 = vpack.c.b16 %v1714, %v1713
      %v1763 = vpack.c.b16 %v1716, %v1715
      %v1764 = vpack.c.b16 %v1718, %v1717
      %v1765 = vpack.c.b16 %v1720, %v1719
      %v1766 = vpack.c.b16 %v1722, %v1721
      %v1767 = vpack.c.b16 %v1724, %v1723
      %v1768 = vpack.c.b16 %v1726, %v1725
      %v1769 = vpack.c.b16 %v1728, %v1727
      %v1770 = vpack.c.b16 %v1730, %v1729
      %v1771 = vpack.c.b16 %v1732, %v1731
      %v1772 = vpack.c.b16 %v1734, %v1733
      %v1773 = vpack.c.b16 %v1736, %v1735
      %v1774 = vpack.c.b16 %v1738, %v1737
      %v1775 = vpack.c.b16 %v1740, %v1739
      %v1776 = vpack.c.b16 %v1742, %v1741
      %v1777 = vpack.c.b16 %v1744, %v1743
      %v1778 = vpack.c.b16 %v1746, %v1745
      %1811 = vmatprep.subr.bf16.mxu0 0
      %1812 = vmatpush1.bf16.msra.mxu0 %v1747
      %1813 = vmatprep.subr.bf16.mxu0 0
      %1814 = vmatpush1.bf16.msra.mxu0 %v1748
      %1815 = vmatprep.subr.bf16.mxu0 0
      %1816 = vmatpush1.bf16.msra.mxu0 %v1749
      %1817 = vmatprep.subr.bf16.mxu0 0
      %1818 = vmatpush1.bf16.msra.mxu0 %v1750
      %1819 = vmatprep.subr.bf16.mxu0 0
      %1820 = vmatpush1.bf16.msra.mxu0 %v1751
      %1821 = vmatprep.subr.bf16.mxu0 0
      %1822 = vmatpush1.bf16.msra.mxu0 %v1752
      %1823 = vmatprep.subr.bf16.mxu0 0
      %1824 = vmatpush1.bf16.msra.mxu0 %v1753
      %1825 = vmatprep.subr.bf16.mxu0 0
      %1826 = vmatpush1.bf16.msra.mxu0 %v1754
      %1827 = vmatprep.subr.bf16.mxu0 0
      %1828 = vmatpush1.bf16.msra.mxu0 %v1755
      %1829 = vmatprep.subr.bf16.mxu0 0
      %1830 = vmatpush1.bf16.msra.mxu0 %v1756
      %1831 = vmatprep.subr.bf16.mxu0 0
      %1832 = vmatpush1.bf16.msra.mxu0 %v1757
      %1833 = vmatprep.subr.bf16.mxu0 0
      %1834 = vmatpush1.bf16.msra.mxu0 %v1758
      %1835 = vmatprep.subr.bf16.mxu0 0
      %1836 = vmatpush1.bf16.msra.mxu0 %v1759
      %1837 = vmatprep.subr.bf16.mxu0 0
      %1838 = vmatpush1.bf16.msra.mxu0 %v1760
      %1839 = vmatprep.subr.bf16.mxu0 0
      %1840 = vmatpush1.bf16.msra.mxu0 %v1761
      %1841 = vmatprep.subr.bf16.mxu0 0
      %1842 = vmatpush1.bf16.msra.mxu0 %v1762
      %1843 = vmatprep.mubr.bf16.mxu0 %v790
      %1844 = vmatmul.mubr.bf16.gmra.mrb[0].mxu0 %v400
      %v1845 = vpop.f32.mrb[0].mxu0
      %v1846 = vadd.f32 %v469, %v1845
      %v1847 = vpop.f32.mrb[0].mxu0
      %v1848 = vpop.f32.mrb[0].mxu0
      %v1849 = vadd.f32 %v469, %v1848
      %v1850 = vpop.f32.mrb[0].mxu0
      %1851 = vdwg.mxu0
      %1852 = vmatprep.subr.bf16.mxu0 0
      %1853 = vmatpush1.bf16.msra.mxu0 %v1763
      %1854 = vmatprep.subr.bf16.mxu0 0
      %1855 = vmatpush1.bf16.msra.mxu0 %v1764
      %1856 = vmatprep.subr.bf16.mxu0 0
      %1857 = vmatpush1.bf16.msra.mxu0 %v1765
      %1858 = vmatprep.subr.bf16.mxu0 0
      %1859 = vmatpush1.bf16.msra.mxu0 %v1766
      %1860 = vmatprep.subr.bf16.mxu0 0
      %1861 = vmatpush1.bf16.msra.mxu0 %v1767
      %1862 = vmatprep.subr.bf16.mxu0 0
      %1863 = vmatpush1.bf16.msra.mxu0 %v1768
      %1864 = vmatprep.subr.bf16.mxu0 0
      %1865 = vmatpush1.bf16.msra.mxu0 %v1769
      %1866 = vmatprep.subr.bf16.mxu0 0
      %1867 = vmatpush1.bf16.msra.mxu0 %v1770
      %1868 = vmatprep.subr.bf16.mxu0 0
      %1869 = vmatpush1.bf16.msra.mxu0 %v1771
      %1870 = vmatprep.subr.bf16.mxu0 0
      %1871 = vmatpush1.bf16.msra.mxu0 %v1772
      %1872 = vmatprep.subr.bf16.mxu0 0
      %1873 = vmatpush1.bf16.msra.mxu0 %v1773
      %1874 = vmatprep.subr.bf16.mxu0 0
      %1875 = vmatpush1.bf16.msra.mxu0 %v1774
      %1876 = vmatprep.subr.bf16.mxu0 0
      %1877 = vmatpush1.bf16.msra.mxu0 %v1775
      %1878 = vmatprep.subr.bf16.mxu0 0
      %1879 = vmatpush1.bf16.msra.mxu0 %v1776
      %1880 = vmatprep.subr.bf16.mxu0 0
      %1881 = vmatpush1.bf16.msra.mxu0 %v1777
      %1882 = vmatprep.subr.bf16.mxu0 0
      %1883 = vmatpush1.bf16.msra.mxu0 %v1778
      %1884 = vmatprep.mubr.bf16.mxu0 %v1553
      %1885 = vmatmul.mubr.bf16.gmra.mrb[0].mxu0 %v1176
      %v1886 = vpop.f32.mrb[0].mxu0
      %v1887 = vadd.f32 %v1846, %v1886
      %v1888 = vpop.f32.mrb[0].mxu0
      %v1889 = vpop.f32.mrb[0].mxu0
      %v1890 = vadd.f32 %v1849, %v1889
      %v1891 = vpop.f32.mrb[0].mxu0
      %1892 = vdwg.mxu0
      %v1895 = vcombine.high %v1887, %v1887
      %v1896 = vcombine.high %v1890, %v1890
      %s1899 = scalar_lea.vmem %s276, 48
      %1900 = vst [vmem:[%s1899] sm:$0xf] %v1887
      %1901 = vst [vmem:[%s1899 + $0x4] sm:$0xf] %v1895
      %1902 = vst [vmem:[%s1899 + $0x8] sm:$0xf] %v1890
      %1903 = vst [vmem:[%s1899 + $0xc] sm:$0xf] %v1896
      %v1904 = vadd.f32 %v1887, %v1890
      %v1905 = vrot.slane %v1904, 4
      %v1906 = vadd.f32 %v1904, %v1905
      %v1907 = vrot.slane %v1906, 2
      %v1908 = vadd.f32 %v1906, %v1907
      %v1909 = vrot.slane %v1908, 1
      %v1910 = vadd.f32 %v1908, %v1909
      %v1911 = vadd.f32 %v1534, %v1910
      %v1912 = vmul.f32 %v1887, %v1887
      %v1913 = vmul.f32 %v1890, %v1890
      %v1914 = vadd.f32 %v1912, %v1913
      %v1915 = vrot.slane %v1914, 4
      %v1916 = vadd.f32 %v1914, %v1915
      %v1917 = vrot.slane %v1916, 2
      %v1918 = vadd.f32 %v1916, %v1917
      %v1919 = vrot.slane %v1918, 1
      %v1920 = vadd.f32 %v1918, %v1919
      %v1921 = vadd.f32 %v1544, %v1920
      %p1922 = scmp.eq.s32.totalorder %s19, 0
      // Predicated region
      $region45: #{_lambda_.7} parent=43 // pred_check
        %p1923 = pneg %p1922
      $region46: #{_lambda_.7} parent=43 // pred_check_branch
        %1925 = sbr.rel (%p1923) target = $region48
      $region47: #{_lambda_.7} parent=43 // pred_region
        %1926 = vst [vmem:[%s7] sm:$0x3] 0.0
      $region48: #{_lambda_.7} parent=43 // pred_fallthru
        _
      %v1927 = vld [vmem:[%s7] sm:$0x3]
      %vm1928 = vcmask 1040384
      %v1929 = vsel %vm1928, %v1911, %v1921
      %v1930 = vadd.f32 %v1927, %v1929
      %1931 = vst [vmem:[%s7] sm:$0x3] %v1930
      %p1932 = scmp.lt.s32.totalorder %s19, 1
      %s1933 = scalar_select %p1932, %s19, 1
      %s1934 = smul.addr %s1933, 16
      %s1935 = smul.addr %s1934, 4
      %s1936 = scalar_lea.vmem %s6, %s1935
      // Predicated region
      $region49: #{_lambda_.7} parent=43 // pred_check
        %p1937 = pneg %p168
      $region50: #{_lambda_.7} parent=43 // pred_check_branch
        %1939 = sbr.rel (%p1937) target = $region52
      $region51: #{_lambda_.7} parent=43 // pred_region
        _
      $region52: #{_lambda_.7} parent=43 // pred_fallthru
        _
      // Predicated region
      $region53: #{_lambda_.7} parent=43 // pred_check
        %p1940 = pneg %p189
      $region54: #{_lambda_.7} parent=43 // pred_check_branch
        %1942 = sbr.rel (%p1940) target = $region56
      $region55: #{_lambda_.7} parent=43 // pred_region
        _
      $region56: #{_lambda_.7} parent=43 // pred_fallthru
        _
      // Predicated region
      $region57: #{_lambda_.7} parent=43 // pred_check
        %p1943 = pneg %p189
      $region58: #{_lambda_.7} parent=43 // pred_check_branch
        %1945 = sbr.rel (%p1943) target = $region60
      $region59: #{_lambda_.7} parent=43 // pred_region
        _
      $region60: #{_lambda_.7} parent=43 // pred_fallthru
        _
    $region44: #{_lambda_.7} parent=5 // pred_fallthru
      _
    %p1946 = scmp.le.s32.totalorder 2, %s14
    // Predicated region
    $region61: #{_lambda_.7} parent=5 // pred_check
      %p1947 = pneg %p1946
    $region62: #{_lambda_.7} parent=5 // pred_check_branch
      %1949 = sbr.rel (%p1947) target = $region64
    $region63: #{_lambda_.7} parent=5 // pred_region
      %s1950 = ssub.s32 %s14, 2
      // Predicated region
      $region65: #{_lambda_.7} parent=63 // pred_check
        %p1951 = pneg %p174
      $region66: #{_lambda_.7} parent=63 // pred_check_branch
        %1953 = sbr.rel (%p1951) target = $region68
      $region67: #{_lambda_.7} parent=63 // pred_region
        %p1954 = scmp.lt.s32.totalorder %s20, 1
        %s1955 = scalar_select %p1954, %s20, 1
        %s1956 = smul.addr %s1955, 16
        %s1957 = smul.addr %s1956, 4
        %s1958 = scalar_lea.vmem %s6, %s1957
      $region68: #{_lambda_.7} parent=63 // pred_fallthru
        _
    $region64: #{_lambda_.7} parent=5 // pred_fallthru
      _
  $region6: #{_lambda_.7} parent=0 // loop_footer
    %s18 = sadd.s32 1, %s14
  $region7: #{_lambda_.7} parent=0 // loop_footer_branch
    %13 = sbr.rel target = $region3
  $region8: #{_lambda_.7} parent=0 // loop_exit
    _

// kernel: _lambda_.8
$region0: #{_lambda_.8}
  #allocation0 [shape = 'u32[]', space=smem, size = 0x4, offset = 0x4, fixed_abs, tag = 'smem constant byte address 0x4 - core index']
  #allocation1 [shape = 'u32[144,128]{1,0:T(1,128)}', space=vmem, size = 0x12000, scoped, tag = 'internal scratch']
  #allocation2 [shape = 'f32[10,10,128]{2,1,0:T(8,128)}', space=vmem, size = 0x14000, scoped, tag = 'scratch operand']
  %s0 = inlined_call_operand.vmem [shape: f32[2,128], index: 0, kind: input, shape index: {}]
  %s1 = inlined_call_operand.vmem [shape: f32[1,128], index: 1, kind: input, shape index: {}]
  %s2 = inlined_call_operand.vmem [shape: f32[1,128], index: 2, kind: input, shape index: {}]
  %s3 = inlined_call_operand.vmem [shape: f32[2,8,8,128], index: 3, kind: input, shape index: {}]
  %s4 = inlined_call_operand.vmem [shape: bf16[2,2,512,64], index: 4, kind: input, shape index: {}]
  %s5 = inlined_call_operand.vmem [shape: f32[1,64], index: 5, kind: input, shape index: {}]
  %s6 = inlined_call_operand.vmem [shape: f32[2,2,2,8,8,64], index: 6, kind: output, shape index: {0}]
  %s7 = inlined_call_operand.vmem [shape: f32[2,64], index: 7, kind: output, shape index: {1}]
  %8 = xla_tuple %s6, %s7
  %s9 = sld [smem:[#allocation0]]
  $region69: #{_lambda_.8} parent=0
    _
  %s11 = ssub.s32 1, %s9
  %s12 = scalar_select 0, %s11, %s9
  loop: start=0, step=1, limit=4
  $region2: #{_lambda_.8} parent=0 // loop_pre_header
    _
  $region3: #{_lambda_.8} parent=0 // loop_header
    %s14 = sphi 0, %s18
    %p15 = scmp.ge.s32.totalorder %s14, 4
    %s22 = sphi 0, %s22
    %s24 = sphi 0, %s22
    %s25 = sphi 0, %s24
    %s39 = sphi 0, %s25
    %s43 = sphi 0, %s43
    %s45 = sphi 0, %s43
    %s46 = sphi 0, %s45
    %s60 = sphi 0, %s46
    %s64 = sphi 0, %s64
    %s66 = sphi 0, %s64
    %s67 = sphi 0, %s66
    %s81 = sphi 0, %s67
    %s87 = sphi 0, %s89
    %s90 = sphi 0, %s87
    %s91 = sphi 0, %s90
    %s107 = sphi 0, %s91
    %s111 = sphi 0, %s111
    %s113 = sphi 0, %s111
    %s114 = sphi 0, %s113
    %s128 = sphi 0, %s114
    %s132 = sphi 0, %s132
    %s134 = sphi 0, %s132
    %s135 = sphi 0, %s134
    %s149 = sphi 0, %s135
    %s155 = sphi 0, %s157
    %s158 = sphi 0, %s155
    %s159 = sphi 0, %s158
    %s175 = sphi 0, %s159
    %s179 = sphi 0, %s179
    %s181 = sphi 0, %s179
    %s182 = sphi 0, %s181
    %s196 = sphi 0, %s182
  $region4: #{_lambda_.8} parent=0 // loop_header_branch
    %17 = sbr.rel (%p15) target = $region8
  $region5: #{_lambda_.8} parent=0 // loop_body
    %s19 = ssub.s32 %s14, 1
    %s20 = ssub.s32 %s14, 2
    %s21 = sadd.s32 %s14, 1
    %s23 = sadd.s32 %s22, 1
    %p26 = scmp.eq.s32.totalorder %s14, 1
    %p27 = scmp.ne.s32.totalorder %s22, %s24
    %p28 = scmp.eq.s32.totalorder %s14, 0
    %p29 = por %p27, %p28
    %p30 = scmp.ne.s32.totalorder %s22, %s24
    %p31 = scmp.eq.s32.totalorder %s19, 1
    %p32 = por %p30, %p31
    %p33 = scmp.ne.s32.totalorder %s24, %s25
    %p34 = scmp.eq.s32.totalorder %s19, 0
    %p35 = por %p33, %p34
    %p36 = scmp.ne.s32.totalorder %s24, %s25
    %p37 = scmp.eq.s32.totalorder %s20, 1
    %p38 = por %p36, %p37
    %p40 = scmp.ne.s32.totalorder %s25, %s39
    %p41 = scmp.eq.s32.totalorder %s20, 0
    %p42 = por %p40, %p41
    %s44 = sadd.s32 %s43, 1
    %p47 = scmp.eq.s32.totalorder %s14, 1
    %p48 = scmp.ne.s32.totalorder %s43, %s45
    %p49 = scmp.eq.s32.totalorder %s14, 0
    %p50 = por %p48, %p49
    %p51 = scmp.ne.s32.totalorder %s43, %s45
    %p52 = scmp.eq.s32.totalorder %s19, 1
    %p53 = por %p51, %p52
    %p54 = scmp.ne.s32.totalorder %s45, %s46
    %p55 = scmp.eq.s32.totalorder %s19, 0
    %p56 = por %p54, %p55
    %p57 = scmp.ne.s32.totalorder %s45, %s46
    %p58 = scmp.eq.s32.totalorder %s20, 1
    %p59 = por %p57, %p58
    %p61 = scmp.ne.s32.totalorder %s46, %s60
    %p62 = scmp.eq.s32.totalorder %s20, 0
    %p63 = por %p61, %p62
    %s65 = sadd.s32 %s64, 1
    %p68 = scmp.eq.s32.totalorder %s14, 1
    %p69 = scmp.ne.s32.totalorder %s64, %s66
    %p70 = scmp.eq.s32.totalorder %s14, 0
    %p71 = por %p69, %p70
    %p72 = scmp.ne.s32.totalorder %s64, %s66
    %p73 = scmp.eq.s32.totalorder %s19, 1
    %p74 = por %p72, %p73
    %p75 = scmp.ne.s32.totalorder %s66, %s67
    %p76 = scmp.eq.s32.totalorder %s19, 0
    %p77 = por %p75, %p76
    %p78 = scmp.ne.s32.totalorder %s66, %s67
    %p79 = scmp.eq.s32.totalorder %s20, 1
    %p80 = por %p78, %p79
    %p82 = scmp.ne.s32.totalorder %s67, %s81
    %p83 = scmp.eq.s32.totalorder %s20, 0
    %p84 = por %p82, %p83
    %s85 = ssub.s32 %s14, %s21
    %p86 = scmp.eq.s32.totalorder %s85, 0
    %s88 = sadd.s32 %s87, 1
    %s89 = scalar_select %p86, %s87, %s88
    %p92 = pneg %p86
    %p93 = scmp.eq.s32.totalorder %s14, 1
    %p94 = por %p92, %p93
    %p95 = scmp.ne.s32.totalorder %s87, %s90
    %p96 = scmp.eq.s32.totalorder %s14, 0
    %p97 = por %p95, %p96
    %p98 = scmp.ne.s32.totalorder %s87, %s90
    %p99 = scmp.eq.s32.totalorder %s19, 1
    %p100 = por %p98, %p99
    %p101 = scmp.ne.s32.totalorder %s90, %s91
    %p102 = scmp.eq.s32.totalorder %s19, 0
    %p103 = por %p101, %p102
    %p104 = scmp.ne.s32.totalorder %s90, %s91
    %p105 = scmp.eq.s32.totalorder %s20, 1
    %p106 = por %p104, %p105
    %p108 = scmp.ne.s32.totalorder %s91, %s107
    %p109 = scmp.eq.s32.totalorder %s20, 0
    %p110 = por %p108, %p109
    %s112 = sadd.s32 %s111, 1
    %p115 = scmp.eq.s32.totalorder %s14, 1
    %p116 = scmp.ne.s32.totalorder %s111, %s113
    %p117 = scmp.eq.s32.totalorder %s14, 0
    %p118 = por %p116, %p117
    %p119 = scmp.ne.s32.totalorder %s111, %s113
    %p120 = scmp.eq.s32.totalorder %s19, 1
    %p121 = por %p119, %p120
    %p122 = scmp.ne.s32.totalorder %s113, %s114
    %p123 = scmp.eq.s32.totalorder %s19, 0
    %p124 = por %p122, %p123
    %p125 = scmp.ne.s32.totalorder %s113, %s114
    %p126 = scmp.eq.s32.totalorder %s20, 1
    %p127 = por %p125, %p126
    %p129 = scmp.ne.s32.totalorder %s114, %s128
    %p130 = scmp.eq.s32.totalorder %s20, 0
    %p131 = por %p129, %p130
    %s133 = sadd.s32 %s132, 1
    %p136 = scmp.eq.s32.totalorder %s14, 1
    %p137 = scmp.ne.s32.totalorder %s132, %s134
    %p138 = scmp.eq.s32.totalorder %s14, 0
    %p139 = por %p137, %p138
    %p140 = scmp.ne.s32.totalorder %s132, %s134
    %p141 = scmp.eq.s32.totalorder %s19, 1
    %p142 = por %p140, %p141
    %p143 = scmp.ne.s32.totalorder %s134, %s135
    %p144 = scmp.eq.s32.totalorder %s19, 0
    %p145 = por %p143, %p144
    %p146 = scmp.ne.s32.totalorder %s134, %s135
    %p147 = scmp.eq.s32.totalorder %s20, 1
    %p148 = por %p146, %p147
    %p150 = scmp.ne.s32.totalorder %s135, %s149
    %p151 = scmp.eq.s32.totalorder %s20, 0
    %p152 = por %p150, %p151
    %s153 = ssub.s32 %s14, %s21
    %p154 = scmp.eq.s32.totalorder %s153, 0
    %s156 = sadd.s32 %s155, 1
    %s157 = scalar_select %p154, %s155, %s156
    %p160 = pneg %p154
    %p161 = scmp.eq.s32.totalorder %s14, 1
    %p162 = por %p160, %p161
    %p163 = scmp.ne.s32.totalorder %s155, %s158
    %p164 = scmp.eq.s32.totalorder %s14, 0
    %p165 = por %p163, %p164
    %p166 = scmp.ne.s32.totalorder %s155, %s158
    %p167 = scmp.eq.s32.totalorder %s19, 1
    %p168 = por %p166, %p167
    %p169 = scmp.ne.s32.totalorder %s158, %s159
    %p170 = scmp.eq.s32.totalorder %s19, 0
    %p171 = por %p169, %p170
    %p172 = scmp.ne.s32.totalorder %s158, %s159
    %p173 = scmp.eq.s32.totalorder %s20, 1
    %p174 = por %p172, %p173
    %p176 = scmp.ne.s32.totalorder %s159, %s175
    %p177 = scmp.eq.s32.totalorder %s20, 0
    %p178 = por %p176, %p177
    %s180 = sadd.s32 %s179, 1
    %p183 = scmp.eq.s32.totalorder %s14, 1
    %p184 = scmp.ne.s32.totalorder %s179, %s181
    %p185 = scmp.eq.s32.totalorder %s14, 0
    %p186 = por %p184, %p185
    %p187 = scmp.ne.s32.totalorder %s179, %s181
    %p188 = scmp.eq.s32.totalorder %s19, 1
    %p189 = por %p187, %p188
    %p190 = scmp.ne.s32.totalorder %s181, %s182
    %p191 = scmp.eq.s32.totalorder %s19, 0
    %p192 = por %p190, %p191
    %p193 = scmp.ne.s32.totalorder %s181, %s182
    %p194 = scmp.eq.s32.totalorder %s20, 1
    %p195 = por %p193, %p194
    %p197 = scmp.ne.s32.totalorder %s182, %s196
    %p198 = scmp.eq.s32.totalorder %s20, 0
    %p199 = por %p197, %p198
    %p200 = scmp.le.s32.totalorder 1, %s14
    %p201 = scmp.lt.s32.totalorder %s14, 3
    %p202 = pnand %p200, %p201
    %p203 = pneg %p202
    // Predicated region
    $region9: #{_lambda_.8} parent=5 // pred_check
      _
    $region10: #{_lambda_.8} parent=5 // pred_check_branch
      %205 = sbr.rel (%p202) target = $region12
    $region11: #{_lambda_.8} parent=5 // pred_region
      %s206 = ssub.s32 %s14, 1
      // Predicated region
      $region13: #{_lambda_.8} parent=11 // pred_check
        %p207 = pneg %p35
      $region14: #{_lambda_.8} parent=11 // pred_check_branch
        %209 = sbr.rel (%p207) target = $region16
      $region15: #{_lambda_.8} parent=11 // pred_region
        _
      $region16: #{_lambda_.8} parent=11 // pred_fallthru
        _
      // Predicated region
      $region17: #{_lambda_.8} parent=11 // pred_check
        %p210 = pneg %p56
      $region18: #{_lambda_.8} parent=11 // pred_check_branch
        %212 = sbr.rel (%p210) target = $region20
      $region19: #{_lambda_.8} parent=11 // pred_region
        _
      $region20: #{_lambda_.8} parent=11 // pred_fallthru
        _
      // Predicated region
      $region21: #{_lambda_.8} parent=11 // pred_check
        %p213 = pneg %p77
      $region22: #{_lambda_.8} parent=11 // pred_check_branch
        %215 = sbr.rel (%p213) target = $region24
      $region23: #{_lambda_.8} parent=11 // pred_region
        _
      $region24: #{_lambda_.8} parent=11 // pred_fallthru
        _
      // Predicated region
      $region25: #{_lambda_.8} parent=11 // pred_check
        %p216 = pneg %p124
      $region26: #{_lambda_.8} parent=11 // pred_check_branch
        %218 = sbr.rel (%p216) target = $region28
      $region27: #{_lambda_.8} parent=11 // pred_region
        _
      $region28: #{_lambda_.8} parent=11 // pred_fallthru
        _
      // Predicated region
      $region29: #{_lambda_.8} parent=11 // pred_check
        %p219 = pneg %p145
      $region30: #{_lambda_.8} parent=11 // pred_check_branch
        %221 = sbr.rel (%p219) target = $region32
      $region31: #{_lambda_.8} parent=11 // pred_region
        _
      $region32: #{_lambda_.8} parent=11 // pred_fallthru
        _
    $region12: #{_lambda_.8} parent=5 // pred_fallthru
      _
    %p222 = scmp.lt.s32.totalorder %s14, 2
    // Predicated region
    $region33: #{_lambda_.8} parent=5 // pred_check
      %p223 = pneg %p222
    $region34: #{_lambda_.8} parent=5 // pred_check_branch
      %225 = sbr.rel (%p223) target = $region36
    $region35: #{_lambda_.8} parent=5 // pred_region
      // Predicated region
      $region37: #{_lambda_.8} parent=35 // pred_check
        %p226 = pneg %p97
      $region38: #{_lambda_.8} parent=35 // pred_check_branch
        %228 = sbr.rel (%p226) target = $region40
      $region39: #{_lambda_.8} parent=35 // pred_region
        %p229 = scmp.lt.s32.totalorder %s14, 1
        %s230 = scalar_select %p229, %s14, 1
        %s231 = smul.addr %s230, 8
        %s232 = smul.addr %s231, 8
        %s233 = scalar_lea.vmem %s3, %s232
      $region40: #{_lambda_.8} parent=35 // pred_fallthru
        _
    $region36: #{_lambda_.8} parent=5 // pred_fallthru
      _
    %p234 = scmp.le.s32.totalorder 1, %s14
    %p235 = scmp.lt.s32.totalorder %s14, 3
    %p236 = pnand %p234, %p235
    %p237 = pneg %p236
    // Predicated region
    $region41: #{_lambda_.8} parent=5 // pred_check
      _
    $region42: #{_lambda_.8} parent=5 // pred_check_branch
      %239 = sbr.rel (%p236) target = $region44
    $region43: #{_lambda_.8} parent=5 // pred_region
      %s240 = ssub.s32 %s14, 1
      %p241 = pneg %p35
      %p242 = pneg %p32
      %p243 = pneg %p56
      %p244 = pneg %p53
      %p245 = pneg %p77
      %p246 = pneg %p74
      %p247 = scmp.lt.s32.totalorder %s19, 1
      %s248 = scalar_select %p247, %s19, 1
      %s249 = smul.addr %s248, 8
      %s250 = smul.addr %s249, 8
      %s251 = scalar_lea.vmem %s3, %s250
      %p252 = pneg %p103
      %p253 = pneg %p100
      %p254 = pneg %p124
      %p255 = pneg %p121
      %p256 = pneg %p145
      %p257 = pneg %p142
      %p258 = pneg %p171
      %p259 = pneg %p168
      %p260 = scmp.lt.s32.totalorder %s19, 1
      %s261 = scalar_select %p260, %s19, 1
      %s262 = smul.addr %s261, 32
      %s263 = smul.addr %s262, 8
      %s264 = scalar_lea.vmem %s6, %s263
      %p265 = pneg %p192
      %p266 = pneg %p189
      %p267 = scmp.lt.s32.totalorder %s19, 1
      %s268 = scalar_select %p267, %s19, 1
      %s269 = smul.addr %s268, 8
      %s270 = smul.addr %s269, 8
      %s271 = scalar_lea.vmem %s3, %s270
      %p272 = scmp.lt.s32.totalorder %s19, 1
      %s273 = scalar_select %p272, %s19, 1
      %s274 = smul.addr %s273, 32
      %s275 = smul.addr %s274, 8
      %s276 = scalar_lea.vmem %s6, %s275
      %v278 = vld [vmem:[%s0] sm:$0x1]
      %v279 = vmul.f32 %v278, 0.0078125
      %v280 = vld [vmem:[%s0 + $0x1] sm:$0x1]
      %v281 = vmul.f32 %v280, 0.0078125
      %v282 = vmul.f32 %v279, %v279
      %v283 = vsub.f32 %v281, %v282
      %v284 = vmax.f32 %v283, 0.0
      %v285 = vld [vmem:[%s1] sm:$0x1]
      %v286 = vadd.f32 %v284, 0.8
      %v287 = vrsqrt.pop %v286
      %v288 = vmul.f32 %v285, %v287
      %v289 = vld [vmem:[%s2] sm:$0x1]
      %v290 = vmul.f32 %v279, %v288
      %v291 = vsub.f32 %v289, %v290
      %v292 = vld [vmem:[%s271] sm:$0xff]
      %v293 = vld [vmem:[%s271 + $0x8] sm:$0xff]
      %v294 = vld [vmem:[%s271 + $0x10] sm:$0xff]
      %v295 = vld [vmem:[%s271 + $0x18] sm:$0xff]
      %v296 = vld [vmem:[%s271 + $0x20] sm:$0xff]
      %v297 = vld [vmem:[%s271 + $0x28] sm:$0xff]
      %v298 = vld [vmem:[%s271 + $0x30] sm:$0xff]
      %v299 = vld [vmem:[%s271 + $0x38] sm:$0xff]
      %v301 = vlaneseq
      %v302 = vshrl.u32 %v301, 7
      %v303 = vsub.s32 0, %v302
      %v304 = vrot.slane %v288, %v303
      %v306 = vmul.f32 %v292, %v304
      %v307 = vmul.f32 %v293, %v304
      %v308 = vmul.f32 %v294, %v304
      %v309 = vmul.f32 %v295, %v304
      %v310 = vmul.f32 %v296, %v304
      %v311 = vmul.f32 %v297, %v304
      %v312 = vmul.f32 %v298, %v304
      %v313 = vmul.f32 %v299, %v304
      %v315 = vlaneseq
      %v316 = vshrl.u32 %v315, 7
      %v317 = vsub.s32 0, %v316
      %v318 = vrot.slane %v291, %v317
      %v320 = vadd.f32 %v306, %v318
      %v321 = vadd.f32 %v307, %v318
      %v322 = vadd.f32 %v308, %v318
      %v323 = vadd.f32 %v309, %v318
      %v324 = vadd.f32 %v310, %v318
      %v325 = vadd.f32 %v311, %v318
      %v326 = vadd.f32 %v312, %v318
      %v327 = vadd.f32 %v313, %v318
      %vm328 = vcmp.ge.f32.partialorder %v320, 0.0
      %vm329 = vcmp.ge.f32.partialorder %v321, 0.0
      %vm330 = vcmp.ge.f32.partialorder %v322, 0.0
      %vm331 = vcmp.ge.f32.partialorder %v323, 0.0
      %vm332 = vcmp.ge.f32.partialorder %v324, 0.0
      %vm333 = vcmp.ge.f32.partialorder %v325, 0.0
      %vm334 = vcmp.ge.f32.partialorder %v326, 0.0
      %vm335 = vcmp.ge.f32.partialorder %v327, 0.0
      %v336 = vmul.f32 %v320, 0.2
      %v337 = vmul.f32 %v321, 0.2
      %v338 = vmul.f32 %v322, 0.2
      %v339 = vmul.f32 %v323, 0.2
      %v340 = vmul.f32 %v324, 0.2
      %v341 = vmul.f32 %v325, 0.2
      %v342 = vmul.f32 %v326, 0.2
      %v343 = vmul.f32 %v327, 0.2
      %v344 = vsel %vm328, %v320, %v336
      %v345 = vsel %vm329, %v321, %v337
      %v346 = vsel %vm330, %v322, %v338
      %v347 = vsel %vm331, %v323, %v339
      %v348 = vsel %vm332, %v324, %v340
      %v349 = vsel %vm333, %v325, %v341
      %v350 = vsel %vm334, %v326, %v342
      %v351 = vsel %vm335, %v327, %v343
      %352 = vst [vmem:[#allocation2] sm:$0xff] 0.0
      %353 = vst [vmem:[#allocation2 + $0x8] sm:$0x3] 0.0
      %354 = vst [vmem:[#allocation2 + $0x10] sm:$0xff] 0.0
      %355 = vst [vmem:[#allocation2 + $0x18] sm:$0x3] 0.0
      %356 = vst [vmem:[#allocation2 + $0x20] sm:$0xff] 0.0
      %357 = vst [vmem:[#allocation2 + $0x28] sm:$0x3] 0.0
      %358 = vst [vmem:[#allocation2 + $0x30] sm:$0xff] 0.0
      %359 = vst [vmem:[#allocation2 + $0x38] sm:$0x3] 0.0
      %360 = vst [vmem:[#allocation2 + $0x40] sm:$0xff] 0.0
      %361 = vst [vmem:[#allocation2 + $0x48] sm:$0x3] 0.0
      %362 = vst [vmem:[#allocation2 + $0x50] sm:$0xff] 0.0
      %363 = vst [vmem:[#allocation2 + $0x58] sm:$0x3] 0.0
      %364 = vst [vmem:[#allocation2 + $0x60] sm:$0xff] 0.0
      %365 = vst [vmem:[#allocation2 + $0x68] sm:$0x3] 0.0
      %366 = vst [vmem:[#allocation2 + $0x70] sm:$0xff] 0.0
      %367 = vst [vmem:[#allocation2 + $0x78] sm:$0x3] 0.0
      %368 = vst [vmem:[#allocation2 + $0x80] sm:$0xff] 0.0
      %369 = vst [vmem:[#allocation2 + $0x88] sm:$0x3] 0.0
      %370 = vst [vmem:[#allocation2 + $0x90] sm:$0xff] 0.0
      %371 = vst [vmem:[#allocation2 + $0x98] sm:$0x3] 0.0
      %s372 = scalar_lea.vmem [#allocation2], 16
      %373 = vst [vmem:[%s372 + $0x1] sm:$0xff] %v344
      %374 = vst [vmem:[%s372 + $0x11] sm:$0xff] %v345
      %375 = vst [vmem:[%s372 + $0x21] sm:$0xff] %v346
      %376 = vst [vmem:[%s372 + $0x31] sm:$0xff] %v347
      %377 = vst [vmem:[%s372 + $0x41] sm:$0xff] %v348
      %378 = vst [vmem:[%s372 + $0x51] sm:$0xff] %v349
      %379 = vst [vmem:[%s372 + $0x61] sm:$0xff] %v350
      %380 = vst [vmem:[%s372 + $0x71] sm:$0xff] %v351
      %v381 = vld [vmem:[#allocation2] sm:$0xff]
      %v382 = vld [vmem:[#allocation2 + $0x10] sm:$0xff]
      %v383 = vld [vmem:[#allocation2 + $0x20] sm:$0xff]
      %v384 = vld [vmem:[#allocation2 + $0x30] sm:$0xff]
      %v385 = vld [vmem:[#allocation2 + $0x40] sm:$0xff]
      %v386 = vld [vmem:[#allocation2 + $0x50] sm:$0xff]
      %v387 = vld [vmem:[#allocation2 + $0x60] sm:$0xff]
      %v388 = vld [vmem:[#allocation2 + $0x70] sm:$0xff]
      %v389 = vld [vmem:[#allocation2 + $0x1] sm:$0xff]
      %v390 = vld [vmem:[#allocation2 + $0x11] sm:$0xff]
      %v391 = vld [vmem:[#allocation2 + $0x21] sm:$0xff]
      %v392 = vld [vmem:[#allocation2 + $0x31] sm:$0xff]
      %v393 = vld [vmem:[#allocation2 + $0x41] sm:$0xff]
      %v394 = vld [vmem:[#allocation2 + $0x51] sm:$0xff]
      %v395 = vld [vmem:[#allocation2 + $0x61] sm:$0xff]
      %v396 = vld [vmem:[#allocation2 + $0x71] sm:$0xff]
      %v397 = vld [vmem:[#allocation2 + $0x2] sm:$0xff]
      %v398 = vld [vmem:[#allocation2 + $0x12] sm:$0xff]
      %v399 = vld [vmem:[#allocation2 + $0x22] sm:$0xff]
      %v400 = vld [vmem:[#allocation2 + $0x32] sm:$0xff]
      %v401 = vld [vmem:[#allocation2 + $0x42] sm:$0xff]
      %v402 = vld [vmem:[#allocation2 + $0x52] sm:$0xff]
      %v403 = vld [vmem:[#allocation2 + $0x62] sm:$0xff]
      %v404 = vld [vmem:[#allocation2 + $0x72] sm:$0xff]
      %v405 = vld [vmem:[%s372] sm:$0xff]
      %v406 = vld [vmem:[%s372 + $0x10] sm:$0xff]
      %v407 = vld [vmem:[%s372 + $0x20] sm:$0xff]
      %v408 = vld [vmem:[%s372 + $0x30] sm:$0xff]
      %v409 = vld [vmem:[%s372 + $0x40] sm:$0xff]
      %v410 = vld [vmem:[%s372 + $0x50] sm:$0xff]
      %v411 = vld [vmem:[%s372 + $0x60] sm:$0xff]
      %v412 = vld [vmem:[%s372 + $0x70] sm:$0xff]
      %v413 = vld [vmem:[%s372 + $0x1] sm:$0xff]
      %v414 = vld [vmem:[%s372 + $0x11] sm:$0xff]
      %v415 = vld [vmem:[%s372 + $0x21] sm:$0xff]
      %v416 = vld [vmem:[%s372 + $0x31] sm:$0xff]
      %v417 = vld [vmem:[%s372 + $0x41] sm:$0xff]
      %v418 = vld [vmem:[%s372 + $0x51] sm:$0xff]
      %v419 = vld [vmem:[%s372 + $0x61] sm:$0xff]
      %v420 = vld [vmem:[%s372 + $0x71] sm:$0xff]
      %v421 = vld [vmem:[%s372 + $0x2] sm:$0xff]
      %v422 = vld [vmem:[%s372 + $0x12] sm:$0xff]
      %v423 = vld [vmem:[%s372 + $0x22] sm:$0xff]
      %v424 = vld [vmem:[%s372 + $0x32] sm:$0xff]
      %v425 = vld [vmem:[%s372 + $0x42] sm:$0xff]
      %v426 = vld [vmem:[%s372 + $0x52] sm:$0xff]
      %v427 = vld [vmem:[%s372 + $0x62] sm:$0xff]
      %v428 = vld [vmem:[%s372 + $0x72] sm:$0xff]
      %s429 = scalar_lea.vmem [#allocation2], 32
      %v430 = vld [vmem:[%s429] sm:$0xff]
      %v431 = vld [vmem:[%s429 + $0x10] sm:$0xff]
      %v432 = vld [vmem:[%s429 + $0x20] sm:$0xff]
      %v433 = vld [vmem:[%s429 + $0x30] sm:$0xff]
      %v434 = vld [vmem:[%s429 + $0x40] sm:$0xff]
      %v435 = vld [vmem:[%s429 + $0x50] sm:$0xff]
      %v436 = vld [vmem:[%s429 + $0x60] sm:$0xff]
      %v437 = vld [vmem:[%s429 + $0x70] sm:$0xff]
      %v438 = vld [vmem:[%s429 + $0x1] sm:$0xff]
      %v439 = vld [vmem:[%s429 + $0x11] sm:$0xff]
      %v440 = vld [vmem:[%s429 + $0x21] sm:$0xff]
      %v441 = vld [vmem:[%s429 + $0x31] sm:$0xff]
      %v442 = vld [vmem:[%s429 + $0x41] sm:$0xff]
      %v443 = vld [vmem:[%s429 + $0x51] sm:$0xff]
      %v444 = vld [vmem:[%s429 + $0x61] sm:$0xff]
      %v445 = vld [vmem:[%s429 + $0x71] sm:$0xff]
      %v446 = vld [vmem:[%s429 + $0x2] sm:$0xff]
      %v447 = vld [vmem:[%s429 + $0x12] sm:$0xff]
      %v448 = vld [vmem:[%s429 + $0x22] sm:$0xff]
      %v449 = vld [vmem:[%s429 + $0x32] sm:$0xff]
      %v450 = vld [vmem:[%s429 + $0x42] sm:$0xff]
      %v451 = vld [vmem:[%s429 + $0x52] sm:$0xff]
      %v452 = vld [vmem:[%s429 + $0x62] sm:$0xff]
      %v453 = vld [vmem:[%s429 + $0x72] sm:$0xff]
      %v454 = vld [vmem:[%s5] sm:$0x1]
      %v455 = vpack.c.bf16 %v382, %v381
      %v456 = vpack.c.bf16 %v390, %v389
      %v457 = vpack.c.bf16 %v406, %v405
      %v458 = vpack.c.bf16 %v414, %v413
      %v459 = vpack.c.bf16 %v384, %v383
      %v460 = vpack.c.bf16 %v392, %v391
      %v461 = vpack.c.bf16 %v408, %v407
      %v462 = vpack.c.bf16 %v416, %v415
      %v463 = vpack.c.bf16 %v386, %v385
      %v464 = vpack.c.bf16 %v394, %v393
      %v465 = vpack.c.bf16 %v410, %v409
      %v466 = vpack.c.bf16 %v418, %v417
      %v467 = vpack.c.bf16 %v388, %v387
      %v468 = vpack.c.bf16 %v396, %v395
      %v469 = vpack.c.bf16 %v412, %v411
      %v470 = vpack.c.bf16 %v420, %v419
      %v471 = vld [vmem:[%s4] sm:$0xf]
      %v472 = vld [vmem:[%s4 + $0x4] sm:$0xf]
      %v473 = vld [vmem:[%s4 + $0x8] sm:$0xf]
      %v474 = vld [vmem:[%s4 + $0xc] sm:$0xf]
      %v475 = vld [vmem:[%s4 + $0x10] sm:$0xf]
      %v476 = vld [vmem:[%s4 + $0x14] sm:$0xf]
      %v477 = vld [vmem:[%s4 + $0x18] sm:$0xf]
      %v478 = vld [vmem:[%s4 + $0x1c] sm:$0xf]
      %v479 = vld [vmem:[%s4 + $0x20] sm:$0xf]
      %v480 = vld [vmem:[%s4 + $0x24] sm:$0xf]
      %v481 = vld [vmem:[%s4 + $0x28] sm:$0xf]
      %v482 = vld [vmem:[%s4 + $0x2c] sm:$0xf]
      %v483 = vld [vmem:[%s4 + $0x30] sm:$0xf]
      %v484 = vld [vmem:[%s4 + $0x34] sm:$0xf]
      %v485 = vld [vmem:[%s4 + $0x38] sm:$0xf]
      %v486 = vld [vmem:[%s4 + $0x3c] sm:$0xf]
      %v487 = vld [vmem:[%s4 + $0x40] sm:$0xf]
      %v488 = vld [vmem:[%s4 + $0x44] sm:$0xf]
      %v489 = vld [vmem:[%s4 + $0x48] sm:$0xf]
      %v490 = vld [vmem:[%s4 + $0x4c] sm:$0xf]
      %v491 = vld [vmem:[%s4 + $0x50] sm:$0xf]
      %v492 = vld [vmem:[%s4 + $0x54] sm:$0xf]
      %v493 = vld [vmem:[%s4 + $0x58] sm:$0xf]
      %v494 = vld [vmem:[%s4 + $0x5c] sm:$0xf]
      %v495 = vld [vmem:[%s4 + $0x60] sm:$0xf]
      %v496 = vld [vmem:[%s4 + $0x64] sm:$0xf]
      %v497 = vld [vmem:[%s4 + $0x68] sm:$0xf]
      %v498 = vld [vmem:[%s4 + $0x6c] sm:$0xf]
      %v499 = vld [vmem:[%s4 + $0x70] sm:$0xf]
      %v500 = vld [vmem:[%s4 + $0x74] sm:$0xf]
      %v501 = vld [vmem:[%s4 + $0x78] sm:$0xf]
      %v502 = vld [vmem:[%s4 + $0x7c] sm:$0xf]
      %v503 = vld [vmem:[%s4 + $0x80] sm:$0xf]
      %v504 = vld [vmem:[%s4 + $0x84] sm:$0xf]
      %v505 = vld [vmem:[%s4 + $0x88] sm:$0xf]
      %v506 = vld [vmem:[%s4 + $0x8c] sm:$0xf]
      %v507 = vld [vmem:[%s4 + $0x90] sm:$0xf]
      %v508 = vld [vmem:[%s4 + $0x94] sm:$0xf]
      %v509 = vld [vmem:[%s4 + $0x98] sm:$0xf]
      %v510 = vld [vmem:[%s4 + $0x9c] sm:$0xf]
      %v511 = vld [vmem:[%s4 + $0xa0] sm:$0xf]
      %v512 = vld [vmem:[%s4 + $0xa4] sm:$0xf]
      %v513 = vld [vmem:[%s4 + $0xa8] sm:$0xf]
      %v514 = vld [vmem:[%s4 + $0xac] sm:$0xf]
      %v515 = vld [vmem:[%s4 + $0xb0] sm:$0xf]
      %v516 = vld [vmem:[%s4 + $0xb4] sm:$0xf]
      %v517 = vld [vmem:[%s4 + $0xb8] sm:$0xf]
      %v518 = vld [vmem:[%s4 + $0xbc] sm:$0xf]
      %v519 = vld [vmem:[%s4 + $0xc0] sm:$0xf]
      %v520 = vld [vmem:[%s4 + $0xc4] sm:$0xf]
      %v521 = vld [vmem:[%s4 + $0xc8] sm:$0xf]
      %v522 = vld [vmem:[%s4 + $0xcc] sm:$0xf]
      %v523 = vld [vmem:[%s4 + $0xd0] sm:$0xf]
      %v524 = vld [vmem:[%s4 + $0xd4] sm:$0xf]
      %v525 = vld [vmem:[%s4 + $0xd8] sm:$0xf]
      %v526 = vld [vmem:[%s4 + $0xdc] sm:$0xf]
      %v527 = vld [vmem:[%s4 + $0xe0] sm:$0xf]
      %v528 = vld [vmem:[%s4 + $0xe4] sm:$0xf]
      %v529 = vld [vmem:[%s4 + $0xe8] sm:$0xf]
      %v530 = vld [vmem:[%s4 + $0xec] sm:$0xf]
      %v531 = vld [vmem:[%s4 + $0xf0] sm:$0xf]
      %v532 = vld [vmem:[%s4 + $0xf4] sm:$0xf]
      %v533 = vld [vmem:[%s4 + $0xf8] sm:$0xf]
      %v534 = vld [vmem:[%s4 + $0xfc] sm:$0xf]
      %v536 = vlaneseq
      %v537 = vshrl.u32 %v536, 7
      %v538 = vsub.s32 0, %v537
      %v539 = vrot.slane %v454, %v538
      %v605 = vunpack.c.l.b16 %v471
      %v606 = vunpack.c.l.b16 %v472
      %v607 = vunpack.c.l.b16 %v473
      %v608 = vunpack.c.l.b16 %v474
      %v609 = vunpack.c.l.b16 %v475
      %v610 = vunpack.c.l.b16 %v476
      %v611 = vunpack.c.l.b16 %v477
      %v612 = vunpack.c.l.b16 %v478
      %v613 = vunpack.c.l.b16 %v479
      %v614 = vunpack.c.l.b16 %v480
      %v615 = vunpack.c.l.b16 %v481
      %v616 = vunpack.c.l.b16 %v482
      %v617 = vunpack.c.l.b16 %v483
      %v618 = vunpack.c.l.b16 %v484
      %v619 = vunpack.c.l.b16 %v485
      %v620 = vunpack.c.l.b16 %v486
      %v621 = vunpack.c.l.b16 %v487
      %v622 = vunpack.c.l.b16 %v488
      %v623 = vunpack.c.l.b16 %v489
      %v624 = vunpack.c.l.b16 %v490
      %v625 = vunpack.c.l.b16 %v491
      %v626 = vunpack.c.l.b16 %v492
      %v627 = vunpack.c.l.b16 %v493
      %v628 = vunpack.c.l.b16 %v494
      %v629 = vunpack.c.l.b16 %v495
      %v630 = vunpack.c.l.b16 %v496
      %v631 = vunpack.c.l.b16 %v497
      %v632 = vunpack.c.l.b16 %v498
      %v633 = vunpack.c.l.b16 %v499
      %v634 = vunpack.c.l.b16 %v500
      %v635 = vunpack.c.l.b16 %v501
      %v636 = vunpack.c.l.b16 %v502
      %v637 = vunpack.c.l.b16 %v503
      %v638 = vunpack.c.l.b16 %v504
      %v639 = vunpack.c.l.b16 %v505
      %v640 = vunpack.c.l.b16 %v506
      %v641 = vunpack.c.l.b16 %v507
      %v642 = vunpack.c.l.b16 %v508
      %v643 = vunpack.c.l.b16 %v509
      %v644 = vunpack.c.l.b16 %v510
      %v645 = vunpack.c.l.b16 %v511
      %v646 = vunpack.c.l.b16 %v512
      %v647 = vunpack.c.l.b16 %v513
      %v648 = vunpack.c.l.b16 %v514
      %v649 = vunpack.c.l.b16 %v515
      %v650 = vunpack.c.l.b16 %v516
      %v651 = vunpack.c.l.b16 %v517
      %v652 = vunpack.c.l.b16 %v518
      %v653 = vunpack.c.l.b16 %v519
      %v654 = vunpack.c.l.b16 %v520
      %v655 = vunpack.c.l.b16 %v521
      %v656 = vunpack.c.l.b16 %v522
      %v657 = vunpack.c.l.b16 %v523
      %v658 = vunpack.c.l.b16 %v524
      %v659 = vunpack.c.l.b16 %v525
      %v660 = vunpack.c.l.b16 %v526
      %v661 = vunpack.c.l.b16 %v527
      %v662 = vunpack.c.l.b16 %v528
      %v663 = vunpack.c.l.b16 %v529
      %v664 = vunpack.c.l.b16 %v530
      %v665 = vunpack.c.l.b16 %v531
      %v666 = vunpack.c.l.b16 %v532
      %v667 = vunpack.c.l.b16 %v533
      %v668 = vunpack.c.l.b16 %v534
      %v669 = vpack.c.b16 %v606, %v605
      %v670 = vpack.c.b16 %v608, %v607
      %v671 = vpack.c.b16 %v610, %v609
      %v672 = vpack.c.b16 %v612, %v611
      %v673 = vpack.c.b16 %v614, %v613
      %v674 = vpack.c.b16 %v616, %v615
      %v675 = vpack.c.b16 %v618, %v617
      %v676 = vpack.c.b16 %v620, %v619
      %v677 = vpack.c.b16 %v622, %v621
      %v678 = vpack.c.b16 %v624, %v623
      %v679 = vpack.c.b16 %v626, %v625
      %v680 = vpack.c.b16 %v628, %v627
      %v681 = vpack.c.b16 %v630, %v629
      %v682 = vpack.c.b16 %v632, %v631
      %v683 = vpack.c.b16 %v634, %v633
      %v684 = vpack.c.b16 %v636, %v635
      %v685 = vpack.c.b16 %v638, %v637
      %v686 = vpack.c.b16 %v640, %v639
      %v687 = vpack.c.b16 %v642, %v641
      %v688 = vpack.c.b16 %v644, %v643
      %v689 = vpack.c.b16 %v646, %v645
      %v690 = vpack.c.b16 %v648, %v647
      %v691 = vpack.c.b16 %v650, %v649
      %v692 = vpack.c.b16 %v652, %v651
      %v693 = vpack.c.b16 %v654, %v653
      %v694 = vpack.c.b16 %v656, %v655
      %v695 = vpack.c.b16 %v658, %v657
      %v696 = vpack.c.b16 %v660, %v659
      %v697 = vpack.c.b16 %v662, %v661
      %v698 = vpack.c.b16 %v664, %v663
      %v699 = vpack.c.b16 %v666, %v665
      %v700 = vpack.c.b16 %v668, %v667
      %733 = vmatprep.subr.bf16.mxu0 0
      %734 = vmatpush1.bf16.msra.mxu0 %v669
      %735 = vmatprep.subr.bf16.mxu0 0
      %736 = vmatpush1.bf16.msra.mxu0 %v670
      %737 = vmatprep.subr.bf16.mxu0 0
      %738 = vmatpush1.bf16.msra.mxu0 %v671
      %739 = vmatprep.subr.bf16.mxu0 0
      %740 = vmatpush1.bf16.msra.mxu0 %v672
      %741 = vmatprep.subr.bf16.mxu0 0
      %742 = vmatpush1.bf16.msra.mxu0 %v673
      %743 = vmatprep.subr.bf16.mxu0 0
      %744 = vmatpush1.bf16.msra.mxu0 %v674
      %745 = vmatprep.subr.bf16.mxu0 0
      %746 = vmatpush1.bf16.msra.mxu0 %v675
      %747 = vmatprep.subr.bf16.mxu0 0
      %748 = vmatpush1.bf16.msra.mxu0 %v676
      %749 = vmatprep.subr.bf16.mxu0 0
      %750 = vmatpush1.bf16.msra.mxu0 %v677
      %751 = vmatprep.subr.bf16.mxu0 0
      %752 = vmatpush1.bf16.msra.mxu0 %v678
      %753 = vmatprep.subr.bf16.mxu0 0
      %754 = vmatpush1.bf16.msra.mxu0 %v679
      %755 = vmatprep.subr.bf16.mxu0 0
      %756 = vmatpush1.bf16.msra.mxu0 %v680
      %757 = vmatprep.subr.bf16.mxu0 0
      %758 = vmatpush1.bf16.msra.mxu0 %v681
      %759 = vmatprep.subr.bf16.mxu0 0
      %760 = vmatpush1.bf16.msra.mxu0 %v682
      %761 = vmatprep.subr.bf16.mxu0 0
      %762 = vmatpush1.bf16.msra.mxu0 %v683
      %763 = vmatprep.subr.bf16.mxu0 0
      %764 = vmatpush1.bf16.msra.mxu0 %v684
      %765 = vmatprep.mubr.bf16.mxu0 %v456
      %766 = vmatmul.mubr.bf16.gmra.mrb[0].mxu0 %v455
      %v767 = vpop.f32.mrb[0].mxu0
      %v768 = vadd.f32 %v539, %v767
      %v769 = vpop.f32.mrb[0].mxu0
      %v770 = vpop.f32.mrb[0].mxu0
      %v771 = vadd.f32 %v539, %v770
      %v772 = vpop.f32.mrb[0].mxu0
      %773 = vmatprep.mubr.bf16.mxu0 %v460
      %774 = vmatmul.mubr.bf16.gmra.mrb[0].mxu0 %v459
      %v775 = vpop.f32.mrb[0].mxu0
      %v776 = vadd.f32 %v539, %v775
      %v777 = vpop.f32.mrb[0].mxu0
      %v778 = vpop.f32.mrb[0].mxu0
      %v779 = vadd.f32 %v539, %v778
      %v780 = vpop.f32.mrb[0].mxu0
      %781 = vmatprep.mubr.bf16.mxu0 %v464
      %782 = vmatmul.mubr.bf16.gmra.mrb[0].mxu0 %v463
      %v783 = vpop.f32.mrb[0].mxu0
      %v784 = vadd.f32 %v539, %v783
      %v785 = vpop.f32.mrb[0].mxu0
      %v786 = vpop.f32.mrb[0].mxu0
      %v787 = vadd.f32 %v539, %v786
      %v788 = vpop.f32.mrb[0].mxu0
      %789 = vmatprep.mubr.bf16.mxu0 %v468
      %790 = vmatmul.mubr.bf16.gmra.mrb[0].mxu0 %v467
      %v791 = vpop.f32.mrb[0].mxu0
      %v792 = vadd.f32 %v539, %v791
      %v793 = vpop.f32.mrb[0].mxu0
      %v794 = vpop.f32.mrb[0].mxu0
      %v795 = vadd.f32 %v539, %v794
      %v796 = vpop.f32.mrb[0].mxu0
      %797 = vdwg.mxu0
      %798 = vmatprep.subr.bf16.mxu0 0
      %799 = vmatpush1.bf16.msra.mxu0 %v685
      %800 = vmatprep.subr.bf16.mxu0 0
      %801 = vmatpush1.bf16.msra.mxu0 %v686
      %802 = vmatprep.subr.bf16.mxu0 0
      %803 = vmatpush1.bf16.msra.mxu0 %v687
      %804 = vmatprep.subr.bf16.mxu0 0
      %805 = vmatpush1.bf16.msra.mxu0 %v688
      %806 = vmatprep.subr.bf16.mxu0 0
      %807 = vmatpush1.bf16.msra.mxu0 %v689
      %808 = vmatprep.subr.bf16.mxu0 0
      %809 = vmatpush1.bf16.msra.mxu0 %v690
      %810 = vmatprep.subr.bf16.mxu0 0
      %811 = vmatpush1.bf16.msra.mxu0 %v691
      %812 = vmatprep.subr.bf16.mxu0 0
      %813 = vmatpush1.bf16.msra.mxu0 %v692
      %814 = vmatprep.subr.bf16.mxu0 0
      %815 = vmatpush1.bf16.msra.mxu0 %v693
      %816 = vmatprep.subr.bf16.mxu0 0
      %817 = vmatpush1.bf16.msra.mxu0 %v694
      %818 = vmatprep.subr.bf16.mxu0 0
      %819 = vmatpush1.bf16.msra.mxu0 %v695
      %820 = vmatprep.subr.bf16.mxu0 0
      %821 = vmatpush1.bf16.msra.mxu0 %v696
      %822 = vmatprep.subr.bf16.mxu0 0
      %823 = vmatpush1.bf16.msra.mxu0 %v697
      %824 = vmatprep.subr.bf16.mxu0 0
      %825 = vmatpush1.bf16.msra.mxu0 %v698
      %826 = vmatprep.subr.bf16.mxu0 0
      %827 = vmatpush1.bf16.msra.mxu0 %v699
      %828 = vmatprep.subr.bf16.mxu0 0
      %829 = vmatpush1.bf16.msra.mxu0 %v700
      %830 = vmatprep.mubr.bf16.mxu0 %v458
      %831 = vmatmul.mubr.bf16.gmra.mrb[0].mxu0 %v457
      %v832 = vpop.f32.mrb[0].mxu0
      %v833 = vadd.f32 %v768, %v832
      %v834 = vpop.f32.mrb[0].mxu0
      %v835 = vpop.f32.mrb[0].mxu0
      %v836 = vadd.f32 %v771, %v835
      %v837 = vpop.f32.mrb[0].mxu0
      %838 = vmatprep.mubr.bf16.mxu0 %v462
      %839 = vmatmul.mubr.bf16.gmra.mrb[0].mxu0 %v461
      %v840 = vpop.f32.mrb[0].mxu0
      %v841 = vadd.f32 %v776, %v840
      %v842 = vpop.f32.mrb[0].mxu0
      %v843 = vpop.f32.mrb[0].mxu0
      %v844 = vadd.f32 %v779, %v843
      %v845 = vpop.f32.mrb[0].mxu0
      %846 = vmatprep.mubr.bf16.mxu0 %v466
      %847 = vmatmul.mubr.bf16.gmra.mrb[0].mxu0 %v465
      %v848 = vpop.f32.mrb[0].mxu0
      %v849 = vadd.f32 %v784, %v848
      %v850 = vpop.f32.mrb[0].mxu0
      %v851 = vpop.f32.mrb[0].mxu0
      %v852 = vadd.f32 %v787, %v851
      %v853 = vpop.f32.mrb[0].mxu0
      %854 = vmatprep.mubr.bf16.mxu0 %v470
      %855 = vmatmul.mubr.bf16.gmra.mrb[0].mxu0 %v469
      %v856 = vpop.f32.mrb[0].mxu0
      %v857 = vadd.f32 %v792, %v856
      %v858 = vpop.f32.mrb[0].mxu0
      %v859 = vpop.f32.mrb[0].mxu0
      %v860 = vadd.f32 %v795, %v859
      %v861 = vpop.f32.mrb[0].mxu0
      %862 = vdwg.mxu0
      %vm863 = vcmask 523264
      %864 = vst.msk [vmem:[%s276] sm:$0xff] %vm863, %v833
      %865 = vst.msk [vmem:[%s276 + $0x8] sm:$0xff] %vm863, %v836
      %866 = vst.msk [vmem:[%s276 + $0x10] sm:$0xff] %vm863, %v841
      %867 = vst.msk [vmem:[%s276 + $0x18] sm:$0xff] %vm863, %v844
      %868 = vst.msk [vmem:[%s276 + $0x20] sm:$0xff] %vm863, %v849
      %869 = vst.msk [vmem:[%s276 + $0x28] sm:$0xff] %vm863, %v852
      %870 = vst.msk [vmem:[%s276 + $0x30] sm:$0xff] %vm863, %v857
      %871 = vst.msk [vmem:[%s276 + $0x38] sm:$0xff] %vm863, %v860
      %v872 = vsel %vm863, %v833, 0.0
      %v873 = vsel %vm863, %v836, 0.0
      %v874 = vadd.f32 %v872, %v873
      %v875 = vsel %vm863, %v841, 0.0
      %v876 = vadd.f32 %v874, %v875
      %v877 = vsel %vm863, %v844, 0.0
      %v878 = vadd.f32 %v876, %v877
      %v879 = vsel %vm863, %v849, 0.0
      %v880 = vadd.f32 %v878, %v879
      %v881 = vsel %vm863, %v852, 0.0
      %v882 = vadd.f32 %v880, %v881
      %v883 = vsel %vm863, %v857, 0.0
      %v884 = vadd.f32 %v882, %v883
      %v885 = vsel %vm863, %v860, 0.0
      %v886 = vadd.f32 %v884, %v885
      %v887 = vrot.slane %v886, 4
      %v888 = vadd.f32 %v886, %v887
      %v889 = vrot.slane %v888, 2
      %v890 = vadd.f32 %v888, %v889
      %v891 = vrot.slane %v890, 1
      %v892 = vadd.f32 %v890, %v891
      %v893 = vadd.f32 %v892, 0.0
      %v894 = vmul.f32 %v833, %v833
      %v895 = vmul.f32 %v836, %v836
      %v896 = vmul.f32 %v841, %v841
      %v897 = vmul.f32 %v844, %v844
      %v898 = vmul.f32 %v849, %v849
      %v899 = vmul.f32 %v852, %v852
      %v900 = vmul.f32 %v857, %v857
      %v901 = vmul.f32 %v860, %v860
      %v902 = vsel %vm863, %v894, 0.0
      %v903 = vsel %vm863, %v895, 0.0
      %v904 = vadd.f32 %v902, %v903
      %v905 = vsel %vm863, %v896, 0.0
      %v906 = vadd.f32 %v904, %v905
      %v907 = vsel %vm863, %v897, 0.0
      %v908 = vadd.f32 %v906, %v907
      %v909 = vsel %vm863, %v898, 0.0
      %v910 = vadd.f32 %v908, %v909
      %v911 = vsel %vm863, %v899, 0.0
      %v912 = vadd.f32 %v910, %v911
      %v913 = vsel %vm863, %v900, 0.0
      %v914 = vadd.f32 %v912, %v913
      %v915 = vsel %vm863, %v901, 0.0
      %v916 = vadd.f32 %v914, %v915
      %v917 = vrot.slane %v916, 4
      %v918 = vadd.f32 %v916, %v917
      %v919 = vrot.slane %v918, 2
      %v920 = vadd.f32 %v918, %v919
      %v921 = vrot.slane %v920, 1
      %v922 = vadd.f32 %v920, %v921
      %v923 = vadd.f32 %v922, 0.0
      %v924 = vpack.c.bf16 %v398, %v397
      %v925 = vpack.c.bf16 %v422, %v421
      %v926 = vpack.c.bf16 %v400, %v399
      %v927 = vpack.c.bf16 %v424, %v423
      %v928 = vpack.c.bf16 %v402, %v401
      %v929 = vpack.c.bf16 %v426, %v425
      %v930 = vpack.c.bf16 %v404, %v403
      %v931 = vpack.c.bf16 %v428, %v427
      %s932 = scalar_lea.vmem %s4, 256
      %v933 = vld [vmem:[%s932] sm:$0xf]
      %v934 = vld [vmem:[%s932 + $0x4] sm:$0xf]
      %v935 = vld [vmem:[%s932 + $0x8] sm:$0xf]
      %v936 = vld [vmem:[%s932 + $0xc] sm:$0xf]
      %v937 = vld [vmem:[%s932 + $0x10] sm:$0xf]
      %v938 = vld [vmem:[%s932 + $0x14] sm:$0xf]
      %v939 = vld [vmem:[%s932 + $0x18] sm:$0xf]
      %v940 = vld [vmem:[%s932 + $0x1c] sm:$0xf]
      %v941 = vld [vmem:[%s932 + $0x20] sm:$0xf]
      %v942 = vld [vmem:[%s932 + $0x24] sm:$0xf]
      %v943 = vld [vmem:[%s932 + $0x28] sm:$0xf]
      %v944 = vld [vmem:[%s932 + $0x2c] sm:$0xf]
      %v945 = vld [vmem:[%s932 + $0x30] sm:$0xf]
      %v946 = vld [vmem:[%s932 + $0x34] sm:$0xf]
      %v947 = vld [vmem:[%s932 + $0x38] sm:$0xf]
      %v948 = vld [vmem:[%s932 + $0x3c] sm:$0xf]
      %v949 = vld [vmem:[%s932 + $0x40] sm:$0xf]
      %v950 = vld [vmem:[%s932 + $0x44] sm:$0xf]
      %v951 = vld [vmem:[%s932 + $0x48] sm:$0xf]
      %v952 = vld [vmem:[%s932 + $0x4c] sm:$0xf]
      %v953 = vld [vmem:[%s932 + $0x50] sm:$0xf]
      %v954 = vld [vmem:[%s932 + $0x54] sm:$0xf]
      %v955 = vld [vmem:[%s932 + $0x58] sm:$0xf]
      %v956 = vld [vmem:[%s932 + $0x5c] sm:$0xf]
      %v957 = vld [vmem:[%s932 + $0x60] sm:$0xf]
      %v958 = vld [vmem:[%s932 + $0x64] sm:$0xf]
      %v959 = vld [vmem:[%s932 + $0x68] sm:$0xf]
      %v960 = vld [vmem:[%s932 + $0x6c] sm:$0xf]
      %v961 = vld [vmem:[%s932 + $0x70] sm:$0xf]
      %v962 = vld [vmem:[%s932 + $0x74] sm:$0xf]
      %v963 = vld [vmem:[%s932 + $0x78] sm:$0xf]
      %v964 = vld [vmem:[%s932 + $0x7c] sm:$0xf]
      %v965 = vld [vmem:[%s932 + $0x80] sm:$0xf]
      %v966 = vld [vmem:[%s932 + $0x84] sm:$0xf]
      %v967 = vld [vmem:[%s932 + $0x88] sm:$0xf]
      %v968 = vld [vmem:[%s932 + $0x8c] sm:$0xf]
      %v969 = vld [vmem:[%s932 + $0x90] sm:$0xf]
      %v970 = vld [vmem:[%s932 + $0x94] sm:$0xf]
      %v971 = vld [vmem:[%s932 + $0x98] sm:$0xf]
      %v972 = vld [vmem:[%s932 + $0x9c] sm:$0xf]
      %v973 = vld [vmem:[%s932 + $0xa0] sm:$0xf]
      %v974 = vld [vmem:[%s932 + $0xa4] sm:$0xf]
      %v975 = vld [vmem:[%s932 + $0xa8] sm:$0xf]
      %v976 = vld [vmem:[%s932 + $0xac] sm:$0xf]
      %v977 = vld [vmem:[%s932 + $0xb0] sm:$0xf]
      %v978 = vld [vmem:[%s932 + $0xb4] sm:$0xf]
      %v979 = vld [vmem:[%s932 + $0xb8] sm:$0xf]
      %v980 = vld [vmem:[%s932 + $0xbc] sm:$0xf]
      %v981 = vld [vmem:[%s932 + $0xc0] sm:$0xf]
      %v982 = vld [vmem:[%s932 + $0xc4] sm:$0xf]
      %v983 = vld [vmem:[%s932 + $0xc8] sm:$0xf]
      %v984 = vld [vmem:[%s932 + $0xcc] sm:$0xf]
      %v985 = vld [vmem:[%s932 + $0xd0] sm:$0xf]
      %v986 = vld [vmem:[%s932 + $0xd4] sm:$0xf]
      %v987 = vld [vmem:[%s932 + $0xd8] sm:$0xf]
      %v988 = vld [vmem:[%s932 + $0xdc] sm:$0xf]
      %v989 = vld [vmem:[%s932 + $0xe0] sm:$0xf]
      %v990 = vld [vmem:[%s932 + $0xe4] sm:$0xf]
      %v991 = vld [vmem:[%s932 + $0xe8] sm:$0xf]
      %v992 = vld [vmem:[%s932 + $0xec] sm:$0xf]
      %v993 = vld [vmem:[%s932 + $0xf0] sm:$0xf]
      %v994 = vld [vmem:[%s932 + $0xf4] sm:$0xf]
      %v995 = vld [vmem:[%s932 + $0xf8] sm:$0xf]
      %v996 = vld [vmem:[%s932 + $0xfc] sm:$0xf]
      %v1061 = vunpack.c.l.b16 %v933
      %v1062 = vunpack.c.l.b16 %v934
      %v1063 = vunpack.c.l.b16 %v935
      %v1064 = vunpack.c.l.b16 %v936
      %v1065 = vunpack.c.l.b16 %v937
      %v1066 = vunpack.c.l.b16 %v938
      %v1067 = vunpack.c.l.b16 %v939
      %v1068 = vunpack.c.l.b16 %v940
      %v1069 = vunpack.c.l.b16 %v941
      %v1070 = vunpack.c.l.b16 %v942
      %v1071 = vunpack.c.l.b16 %v943
      %v1072 = vunpack.c.l.b16 %v944
      %v1073 = vunpack.c.l.b16 %v945
      %v1074 = vunpack.c.l.b16 %v946
      %v1075 = vunpack.c.l.b16 %v947
      %v1076 = vunpack.c.l.b16 %v948
      %v1077 = vunpack.c.l.b16 %v949
      %v1078 = vunpack.c.l.b16 %v950
      %v1079 = vunpack.c.l.b16 %v951
      %v1080 = vunpack.c.l.b16 %v952
      %v1081 = vunpack.c.l.b16 %v953
      %v1082 = vunpack.c.l.b16 %v954
      %v1083 = vunpack.c.l.b16 %v955
      %v1084 = vunpack.c.l.b16 %v956
      %v1085 = vunpack.c.l.b16 %v957
      %v1086 = vunpack.c.l.b16 %v958
      %v1087 = vunpack.c.l.b16 %v959
      %v1088 = vunpack.c.l.b16 %v960
      %v1089 = vunpack.c.l.b16 %v961
      %v1090 = vunpack.c.l.b16 %v962
      %v1091 = vunpack.c.l.b16 %v963
      %v1092 = vunpack.c.l.b16 %v964
      %v1093 = vunpack.c.l.b16 %v965
      %v1094 = vunpack.c.l.b16 %v966
      %v1095 = vunpack.c.l.b16 %v967
      %v1096 = vunpack.c.l.b16 %v968
      %v1097 = vunpack.c.l.b16 %v969
      %v1098 = vunpack.c.l.b16 %v970
      %v1099 = vunpack.c.l.b16 %v971
      %v1100 = vunpack.c.l.b16 %v972
      %v1101 = vunpack.c.l.b16 %v973
      %v1102 = vunpack.c.l.b16 %v974
      %v1103 = vunpack.c.l.b16 %v975
      %v1104 = vunpack.c.l.b16 %v976
      %v1105 = vunpack.c.l.b16 %v977
      %v1106 = vunpack.c.l.b16 %v978
      %v1107 = vunpack.c.l.b16 %v979
      %v1108 = vunpack.c.l.b16 %v980
      %v1109 = vunpack.c.l.b16 %v981
      %v1110 = vunpack.c.l.b16 %v982
      %v1111 = vunpack.c.l.b16 %v983
      %v1112 = vunpack.c.l.b16 %v984
      %v1113 = vunpack.c.l.b16 %v985
      %v1114 = vunpack.c.l.b16 %v986
      %v1115 = vunpack.c.l.b16 %v987
      %v1116 = vunpack.c.l.b16 %v988
      %v1117 = vunpack.c.l.b16 %v989
      %v1118 = vunpack.c.l.b16 %v990
      %v1119 = vunpack.c.l.b16 %v991
      %v1120 = vunpack.c.l.b16 %v992
      %v1121 = vunpack.c.l.b16 %v993
      %v1122 = vunpack.c.l.b16 %v994
      %v1123 = vunpack.c.l.b16 %v995
      %v1124 = vunpack.c.l.b16 %v996
      %v1125 = vpack.c.b16 %v1062, %v1061
      %v1126 = vpack.c.b16 %v1064, %v1063
      %v1127 = vpack.c.b16 %v1066, %v1065
      %v1128 = vpack.c.b16 %v1068, %v1067
      %v1129 = vpack.c.b16 %v1070, %v1069
      %v1130 = vpack.c.b16 %v1072, %v1071
      %v1131 = vpack.c.b16 %v1074, %v1073
      %v1132 = vpack.c.b16 %v1076, %v1075
      %v1133 = vpack.c.b16 %v1078, %v1077
      %v1134 = vpack.c.b16 %v1080, %v1079
      %v1135 = vpack.c.b16 %v1082, %v1081
      %v1136 = vpack.c.b16 %v1084, %v1083
      %v1137 = vpack.c.b16 %v1086, %v1085
      %v1138 = vpack.c.b16 %v1088, %v1087
      %v1139 = vpack.c.b16 %v1090, %v1089
      %v1140 = vpack.c.b16 %v1092, %v1091
      %v1141 = vpack.c.b16 %v1094, %v1093
      %v1142 = vpack.c.b16 %v1096, %v1095
      %v1143 = vpack.c.b16 %v1098, %v1097
      %v1144 = vpack.c.b16 %v1100, %v1099
      %v1145 = vpack.c.b16 %v1102, %v1101
      %v1146 = vpack.c.b16 %v1104, %v1103
      %v1147 = vpack.c.b16 %v1106, %v1105
      %v1148 = vpack.c.b16 %v1108, %v1107
      %v1149 = vpack.c.b16 %v1110, %v1109
      %v1150 = vpack.c.b16 %v1112, %v1111
      %v1151 = vpack.c.b16 %v1114, %v1113
      %v1152 = vpack.c.b16 %v1116, %v1115
      %v1153 = vpack.c.b16 %v1118, %v1117
      %v1154 = vpack.c.b16 %v1120, %v1119
      %v1155 = vpack.c.b16 %v1122, %v1121
      %v1156 = vpack.c.b16 %v1124, %v1123
      %1189 = vmatprep.subr.bf16.mxu0 0
      %1190 = vmatpush1.bf16.msra.mxu0 %v1125
      %1191 = vmatprep.subr.bf16.mxu0 0
      %1192 = vmatpush1.bf16.msra.mxu0 %v1126
      %1193 = vmatprep.subr.bf16.mxu0 0
      %1194 = vmatpush1.bf16.msra.mxu0 %v1127
      %1195 = vmatprep.subr.bf16.mxu0 0
      %1196 = vmatpush1.bf16.msra.mxu0 %v1128
      %1197 = vmatprep.subr.bf16.mxu0 0
      %1198 = vmatpush1.bf16.msra.mxu0 %v1129
      %1199 = vmatprep.subr.bf16.mxu0 0
      %1200 = vmatpush1.bf16.msra.mxu0 %v1130
      %1201 = vmatprep.subr.bf16.mxu0 0
      %1202 = vmatpush1.bf16.msra.mxu0 %v1131
      %1203 = vmatprep.subr.bf16.mxu0 0
      %1204 = vmatpush1.bf16.msra.mxu0 %v1132
      %1205 = vmatprep.subr.bf16.mxu0 0
      %1206 = vmatpush1.bf16.msra.mxu0 %v1133
      %1207 = vmatprep.subr.bf16.mxu0 0
      %1208 = vmatpush1.bf16.msra.mxu0 %v1134
      %1209 = vmatprep.subr.bf16.mxu0 0
      %1210 = vmatpush1.bf16.msra.mxu0 %v1135
      %1211 = vmatprep.subr.bf16.mxu0 0
      %1212 = vmatpush1.bf16.msra.mxu0 %v1136
      %1213 = vmatprep.subr.bf16.mxu0 0
      %1214 = vmatpush1.bf16.msra.mxu0 %v1137
      %1215 = vmatprep.subr.bf16.mxu0 0
      %1216 = vmatpush1.bf16.msra.mxu0 %v1138
      %1217 = vmatprep.subr.bf16.mxu0 0
      %1218 = vmatpush1.bf16.msra.mxu0 %v1139
      %1219 = vmatprep.subr.bf16.mxu0 0
      %1220 = vmatpush1.bf16.msra.mxu0 %v1140
      %1221 = vmatprep.mubr.bf16.mxu0 %v924
      %1222 = vmatmul.mubr.bf16.gmra.mrb[0].mxu0 %v456
      %v1223 = vpop.f32.mrb[0].mxu0
      %v1224 = vadd.f32 %v539, %v1223
      %v1225 = vpop.f32.mrb[0].mxu0
      %v1226 = vpop.f32.mrb[0].mxu0
      %v1227 = vadd.f32 %v539, %v1226
      %v1228 = vpop.f32.mrb[0].mxu0
      %1229 = vmatprep.mubr.bf16.mxu0 %v926
      %1230 = vmatmul.mubr.bf16.gmra.mrb[0].mxu0 %v460
      %v1231 = vpop.f32.mrb[0].mxu0
      %v1232 = vadd.f32 %v539, %v1231
      %v1233 = vpop.f32.mrb[0].mxu0
      %v1234 = vpop.f32.mrb[0].mxu0
      %v1235 = vadd.f32 %v539, %v1234
      %v1236 = vpop.f32.mrb[0].mxu0
      %1237 = vmatprep.mubr.bf16.mxu0 %v928
      %1238 = vmatmul.mubr.bf16.gmra.mrb[0].mxu0 %v464
      %v1239 = vpop.f32.mrb[0].mxu0
      %v1240 = vadd.f32 %v539, %v1239
      %v1241 = vpop.f32.mrb[0].mxu0
      %v1242 = vpop.f32.mrb[0].mxu0
      %v1243 = vadd.f32 %v539, %v1242
      %v1244 = vpop.f32.mrb[0].mxu0
      %1245 = vmatprep.mubr.bf16.mxu0 %v930
      %1246 = vmatmul.mubr.bf16.gmra.mrb[0].mxu0 %v468
      %v1247 = vpop.f32.mrb[0].mxu0
      %v1248 = vadd.f32 %v539, %v1247
      %v1249 = vpop.f32.mrb[0].mxu0
      %v1250 = vpop.f32.mrb[0].mxu0
      %v1251 = vadd.f32 %v539, %v1250
      %v1252 = vpop.f32.mrb[0].mxu0
      %1253 = vdwg.mxu0
      %1254 = vmatprep.subr.bf16.mxu0 0
      %1255 = vmatpush1.bf16.msra.mxu0 %v1141
      %1256 = vmatprep.subr.bf16.mxu0 0
      %1257 = vmatpush1.bf16.msra.mxu0 %v1142
      %1258 = vmatprep.subr.bf16.mxu0 0
      %1259 = vmatpush1.bf16.msra.mxu0 %v1143
      %1260 = vmatprep.subr.bf16.mxu0 0
      %1261 = vmatpush1.bf16.msra.mxu0 %v1144
      %1262 = vmatprep.subr.bf16.mxu0 0
      %1263 = vmatpush1.bf16.msra.mxu0 %v1145
      %1264 = vmatprep.subr.bf16.mxu0 0
      %1265 = vmatpush1.bf16.msra.mxu0 %v1146
      %1266 = vmatprep.subr.bf16.mxu0 0
      %1267 = vmatpush1.bf16.msra.mxu0 %v1147
      %1268 = vmatprep.subr.bf16.mxu0 0
      %1269 = vmatpush1.bf16.msra.mxu0 %v1148
      %1270 = vmatprep.subr.bf16.mxu0 0
      %1271 = vmatpush1.bf16.msra.mxu0 %v1149
      %1272 = vmatprep.subr.bf16.mxu0 0
      %1273 = vmatpush1.bf16.msra.mxu0 %v1150
      %1274 = vmatprep.subr.bf16.mxu0 0
      %1275 = vmatpush1.bf16.msra.mxu0 %v1151
      %1276 = vmatprep.subr.bf16.mxu0 0
      %1277 = vmatpush1.bf16.msra.mxu0 %v1152
      %1278 = vmatprep.subr.bf16.mxu0 0
      %1279 = vmatpush1.bf16.msra.mxu0 %v1153
      %1280 = vmatprep.subr.bf16.mxu0 0
      %1281 = vmatpush1.bf16.msra.mxu0 %v1154
      %1282 = vmatprep.subr.bf16.mxu0 0
      %1283 = vmatpush1.bf16.msra.mxu0 %v1155
      %1284 = vmatprep.subr.bf16.mxu0 0
      %1285 = vmatpush1.bf16.msra.mxu0 %v1156
      %1286 = vmatprep.mubr.bf16.mxu0 %v925
      %1287 = vmatmul.mubr.bf16.gmra.mrb[0].mxu0 %v458
      %v1288 = vpop.f32.mrb[0].mxu0
      %v1289 = vadd.f32 %v1224, %v1288
      %v1290 = vpop.f32.mrb[0].mxu0
      %v1291 = vpop.f32.mrb[0].mxu0
      %v1292 = vadd.f32 %v1227, %v1291
      %v1293 = vpop.f32.mrb[0].mxu0
      %1294 = vmatprep.mubr.bf16.mxu0 %v927
      %1295 = vmatmul.mubr.bf16.gmra.mrb[0].mxu0 %v462
      %v1296 = vpop.f32.mrb[0].mxu0
      %v1297 = vadd.f32 %v1232, %v1296
      %v1298 = vpop.f32.mrb[0].mxu0
      %v1299 = vpop.f32.mrb[0].mxu0
      %v1300 = vadd.f32 %v1235, %v1299
      %v1301 = vpop.f32.mrb[0].mxu0
      %1302 = vmatprep.mubr.bf16.mxu0 %v929
      %1303 = vmatmul.mubr.bf16.gmra.mrb[0].mxu0 %v466
      %v1304 = vpop.f32.mrb[0].mxu0
      %v1305 = vadd.f32 %v1240, %v1304
      %v1306 = vpop.f32.mrb[0].mxu0
      %v1307 = vpop.f32.mrb[0].mxu0
      %v1308 = vadd.f32 %v1243, %v1307
      %v1309 = vpop.f32.mrb[0].mxu0
      %1310 = vmatprep.mubr.bf16.mxu0 %v931
      %1311 = vmatmul.mubr.bf16.gmra.mrb[0].mxu0 %v470
      %v1312 = vpop.f32.mrb[0].mxu0
      %v1313 = vadd.f32 %v1248, %v1312
      %v1314 = vpop.f32.mrb[0].mxu0
      %v1315 = vpop.f32.mrb[0].mxu0
      %v1316 = vadd.f32 %v1251, %v1315
      %v1317 = vpop.f32.mrb[0].mxu0
      %1318 = vdwg.mxu0
      %s1319 = scalar_lea.vmem %s276, 64
      %1320 = vst.msk [vmem:[%s1319] sm:$0xff] %vm863, %v1289
      %1321 = vst.msk [vmem:[%s1319 + $0x8] sm:$0xff] %vm863, %v1292
      %1322 = vst.msk [vmem:[%s1319 + $0x10] sm:$0xff] %vm863, %v1297
      %1323 = vst.msk [vmem:[%s1319 + $0x18] sm:$0xff] %vm863, %v1300
      %1324 = vst.msk [vmem:[%s1319 + $0x20] sm:$0xff] %vm863, %v1305
      %1325 = vst.msk [vmem:[%s1319 + $0x28] sm:$0xff] %vm863, %v1308
      %1326 = vst.msk [vmem:[%s1319 + $0x30] sm:$0xff] %vm863, %v1313
      %1327 = vst.msk [vmem:[%s1319 + $0x38] sm:$0xff] %vm863, %v1316
      %v1328 = vsel %vm863, %v1289, 0.0
      %v1329 = vsel %vm863, %v1292, 0.0
      %v1330 = vadd.f32 %v1328, %v1329
      %v1331 = vsel %vm863, %v1297, 0.0
      %v1332 = vadd.f32 %v1330, %v1331
      %v1333 = vsel %vm863, %v1300, 0.0
      %v1334 = vadd.f32 %v1332, %v1333
      %v1335 = vsel %vm863, %v1305, 0.0
      %v1336 = vadd.f32 %v1334, %v1335
      %v1337 = vsel %vm863, %v1308, 0.0
      %v1338 = vadd.f32 %v1336, %v1337
      %v1339 = vsel %vm863, %v1313, 0.0
      %v1340 = vadd.f32 %v1338, %v1339
      %v1341 = vsel %vm863, %v1316, 0.0
      %v1342 = vadd.f32 %v1340, %v1341
      %v1343 = vrot.slane %v1342, 4
      %v1344 = vadd.f32 %v1342, %v1343
      %v1345 = vrot.slane %v1344, 2
      %v1346 = vadd.f32 %v1344, %v1345
      %v1347 = vrot.slane %v1346, 1
      %v1348 = vadd.f32 %v1346, %v1347
      %v1349 = vadd.f32 %v893, %v1348
      %v1350 = vmul.f32 %v1289, %v1289
      %v1351 = vmul.f32 %v1292, %v1292
      %v1352 = vmul.f32 %v1297, %v1297
      %v1353 = vmul.f32 %v1300, %v1300
      %v1354 = vmul.f32 %v1305, %v1305
      %v1355 = vmul.f32 %v1308, %v1308
      %v1356 = vmul.f32 %v1313, %v1313
      %v1357 = vmul.f32 %v1316, %v1316
      %v1358 = vsel %vm863, %v1350, 0.0
      %v1359 = vsel %vm863, %v1351, 0.0
      %v1360 = vadd.f32 %v1358, %v1359
      %v1361 = vsel %vm863, %v1352, 0.0
      %v1362 = vadd.f32 %v1360, %v1361
      %v1363 = vsel %vm863, %v1353, 0.0
      %v1364 = vadd.f32 %v1362, %v1363
      %v1365 = vsel %vm863, %v1354, 0.0
      %v1366 = vadd.f32 %v1364, %v1365
      %v1367 = vsel %vm863, %v1355, 0.0
      %v1368 = vadd.f32 %v1366, %v1367
      %v1369 = vsel %vm863, %v1356, 0.0
      %v1370 = vadd.f32 %v1368, %v1369
      %v1371 = vsel %vm863, %v1357, 0.0
      %v1372 = vadd.f32 %v1370, %v1371
      %v1373 = vrot.slane %v1372, 4
      %v1374 = vadd.f32 %v1372, %v1373
      %v1375 = vrot.slane %v1374, 2
      %v1376 = vadd.f32 %v1374, %v1375
      %v1377 = vrot.slane %v1376, 1
      %v1378 = vadd.f32 %v1376, %v1377
      %v1379 = vadd.f32 %v923, %v1378
      %v1380 = vpack.c.bf16 %v431, %v430
      %v1381 = vpack.c.bf16 %v439, %v438
      %v1382 = vpack.c.bf16 %v433, %v432
      %v1383 = vpack.c.bf16 %v441, %v440
      %v1384 = vpack.c.bf16 %v435, %v434
      %v1385 = vpack.c.bf16 %v443, %v442
      %v1386 = vpack.c.bf16 %v437, %v436
      %v1387 = vpack.c.bf16 %v445, %v444
      %s1388 = scalar_lea.vmem %s4, 512
      %v1389 = vld [vmem:[%s1388] sm:$0xf]
      %v1390 = vld [vmem:[%s1388 + $0x4] sm:$0xf]
      %v1391 = vld [vmem:[%s1388 + $0x8] sm:$0xf]
      %v1392 = vld [vmem:[%s1388 + $0xc] sm:$0xf]
      %v1393 = vld [vmem:[%s1388 + $0x10] sm:$0xf]
      %v1394 = vld [vmem:[%s1388 + $0x14] sm:$0xf]
      %v1395 = vld [vmem:[%s1388 + $0x18] sm:$0xf]
      %v1396 = vld [vmem:[%s1388 + $0x1c] sm:$0xf]
      %v1397 = vld [vmem:[%s1388 + $0x20] sm:$0xf]
      %v1398 = vld [vmem:[%s1388 + $0x24] sm:$0xf]
      %v1399 = vld [vmem:[%s1388 + $0x28] sm:$0xf]
      %v1400 = vld [vmem:[%s1388 + $0x2c] sm:$0xf]
      %v1401 = vld [vmem:[%s1388 + $0x30] sm:$0xf]
      %v1402 = vld [vmem:[%s1388 + $0x34] sm:$0xf]
      %v1403 = vld [vmem:[%s1388 + $0x38] sm:$0xf]
      %v1404 = vld [vmem:[%s1388 + $0x3c] sm:$0xf]
      %v1405 = vld [vmem:[%s1388 + $0x40] sm:$0xf]
      %v1406 = vld [vmem:[%s1388 + $0x44] sm:$0xf]
      %v1407 = vld [vmem:[%s1388 + $0x48] sm:$0xf]
      %v1408 = vld [vmem:[%s1388 + $0x4c] sm:$0xf]
      %v1409 = vld [vmem:[%s1388 + $0x50] sm:$0xf]
      %v1410 = vld [vmem:[%s1388 + $0x54] sm:$0xf]
      %v1411 = vld [vmem:[%s1388 + $0x58] sm:$0xf]
      %v1412 = vld [vmem:[%s1388 + $0x5c] sm:$0xf]
      %v1413 = vld [vmem:[%s1388 + $0x60] sm:$0xf]
      %v1414 = vld [vmem:[%s1388 + $0x64] sm:$0xf]
      %v1415 = vld [vmem:[%s1388 + $0x68] sm:$0xf]
      %v1416 = vld [vmem:[%s1388 + $0x6c] sm:$0xf]
      %v1417 = vld [vmem:[%s1388 + $0x70] sm:$0xf]
      %v1418 = vld [vmem:[%s1388 + $0x74] sm:$0xf]
      %v1419 = vld [vmem:[%s1388 + $0x78] sm:$0xf]
      %v1420 = vld [vmem:[%s1388 + $0x7c] sm:$0xf]
      %v1421 = vld [vmem:[%s1388 + $0x80] sm:$0xf]
      %v1422 = vld [vmem:[%s1388 + $0x84] sm:$0xf]
      %v1423 = vld [vmem:[%s1388 + $0x88] sm:$0xf]
      %v1424 = vld [vmem:[%s1388 + $0x8c] sm:$0xf]
      %v1425 = vld [vmem:[%s1388 + $0x90] sm:$0xf]
      %v1426 = vld [vmem:[%s1388 + $0x94] sm:$0xf]
      %v1427 = vld [vmem:[%s1388 + $0x98] sm:$0xf]
      %v1428 = vld [vmem:[%s1388 + $0x9c] sm:$0xf]
      %v1429 = vld [vmem:[%s1388 + $0xa0] sm:$0xf]
      %v1430 = vld [vmem:[%s1388 + $0xa4] sm:$0xf]
      %v1431 = vld [vmem:[%s1388 + $0xa8] sm:$0xf]
      %v1432 = vld [vmem:[%s1388 + $0xac] sm:$0xf]
      %v1433 = vld [vmem:[%s1388 + $0xb0] sm:$0xf]
      %v1434 = vld [vmem:[%s1388 + $0xb4] sm:$0xf]
      %v1435 = vld [vmem:[%s1388 + $0xb8] sm:$0xf]
      %v1436 = vld [vmem:[%s1388 + $0xbc] sm:$0xf]
      %v1437 = vld [vmem:[%s1388 + $0xc0] sm:$0xf]
      %v1438 = vld [vmem:[%s1388 + $0xc4] sm:$0xf]
      %v1439 = vld [vmem:[%s1388 + $0xc8] sm:$0xf]
      %v1440 = vld [vmem:[%s1388 + $0xcc] sm:$0xf]
      %v1441 = vld [vmem:[%s1388 + $0xd0] sm:$0xf]
      %v1442 = vld [vmem:[%s1388 + $0xd4] sm:$0xf]
      %v1443 = vld [vmem:[%s1388 + $0xd8] sm:$0xf]
      %v1444 = vld [vmem:[%s1388 + $0xdc] sm:$0xf]
      %v1445 = vld [vmem:[%s1388 + $0xe0] sm:$0xf]
      %v1446 = vld [vmem:[%s1388 + $0xe4] sm:$0xf]
      %v1447 = vld [vmem:[%s1388 + $0xe8] sm:$0xf]
      %v1448 = vld [vmem:[%s1388 + $0xec] sm:$0xf]
      %v1449 = vld [vmem:[%s1388 + $0xf0] sm:$0xf]
      %v1450 = vld [vmem:[%s1388 + $0xf4] sm:$0xf]
      %v1451 = vld [vmem:[%s1388 + $0xf8] sm:$0xf]
      %v1452 = vld [vmem:[%s1388 + $0xfc] sm:$0xf]
      %v1517 = vunpack.c.l.b16 %v1389
      %v1518 = vunpack.c.l.b16 %v1390
      %v1519 = vunpack.c.l.b16 %v1391
      %v1520 = vunpack.c.l.b16 %v1392
      %v1521 = vunpack.c.l.b16 %v1393
      %v1522 = vunpack.c.l.b16 %v1394
      %v1523 = vunpack.c.l.b16 %v1395
      %v1524 = vunpack.c.l.b16 %v1396
      %v1525 = vunpack.c.l.b16 %v1397
      %v1526 = vunpack.c.l.b16 %v1398
      %v1527 = vunpack.c.l.b16 %v1399
      %v1528 = vunpack.c.l.b16 %v1400
      %v1529 = vunpack.c.l.b16 %v1401
      %v1530 = vunpack.c.l.b16 %v1402
      %v1531 = vunpack.c.l.b16 %v1403
      %v1532 = vunpack.c.l.b16 %v1404
      %v1533 = vunpack.c.l.b16 %v1405
      %v1534 = vunpack.c.l.b16 %v1406
      %v1535 = vunpack.c.l.b16 %v1407
      %v1536 = vunpack.c.l.b16 %v1408
      %v1537 = vunpack.c.l.b16 %v1409
      %v1538 = vunpack.c.l.b16 %v1410
      %v1539 = vunpack.c.l.b16 %v1411
      %v1540 = vunpack.c.l.b16 %v1412
      %v1541 = vunpack.c.l.b16 %v1413
      %v1542 = vunpack.c.l.b16 %v1414
      %v1543 = vunpack.c.l.b16 %v1415
      %v1544 = vunpack.c.l.b16 %v1416
      %v1545 = vunpack.c.l.b16 %v1417
      %v1546 = vunpack.c.l.b16 %v1418
      %v1547 = vunpack.c.l.b16 %v1419
      %v1548 = vunpack.c.l.b16 %v1420
      %v1549 = vunpack.c.l.b16 %v1421
      %v1550 = vunpack.c.l.b16 %v1422
      %v1551 = vunpack.c.l.b16 %v1423
      %v1552 = vunpack.c.l.b16 %v1424
      %v1553 = vunpack.c.l.b16 %v1425
      %v1554 = vunpack.c.l.b16 %v1426
      %v1555 = vunpack.c.l.b16 %v1427
      %v1556 = vunpack.c.l.b16 %v1428
      %v1557 = vunpack.c.l.b16 %v1429
      %v1558 = vunpack.c.l.b16 %v1430
      %v1559 = vunpack.c.l.b16 %v1431
      %v1560 = vunpack.c.l.b16 %v1432
      %v1561 = vunpack.c.l.b16 %v1433
      %v1562 = vunpack.c.l.b16 %v1434
      %v1563 = vunpack.c.l.b16 %v1435
      %v1564 = vunpack.c.l.b16 %v1436
      %v1565 = vunpack.c.l.b16 %v1437
      %v1566 = vunpack.c.l.b16 %v1438
      %v1567 = vunpack.c.l.b16 %v1439
      %v1568 = vunpack.c.l.b16 %v1440
      %v1569 = vunpack.c.l.b16 %v1441
      %v1570 = vunpack.c.l.b16 %v1442
      %v1571 = vunpack.c.l.b16 %v1443
      %v1572 = vunpack.c.l.b16 %v1444
      %v1573 = vunpack.c.l.b16 %v1445
      %v1574 = vunpack.c.l.b16 %v1446
      %v1575 = vunpack.c.l.b16 %v1447
      %v1576 = vunpack.c.l.b16 %v1448
      %v1577 = vunpack.c.l.b16 %v1449
      %v1578 = vunpack.c.l.b16 %v1450
      %v1579 = vunpack.c.l.b16 %v1451
      %v1580 = vunpack.c.l.b16 %v1452
      %v1581 = vpack.c.b16 %v1518, %v1517
      %v1582 = vpack.c.b16 %v1520, %v1519
      %v1583 = vpack.c.b16 %v1522, %v1521
      %v1584 = vpack.c.b16 %v1524, %v1523
      %v1585 = vpack.c.b16 %v1526, %v1525
      %v1586 = vpack.c.b16 %v1528, %v1527
      %v1587 = vpack.c.b16 %v1530, %v1529
      %v1588 = vpack.c.b16 %v1532, %v1531
      %v1589 = vpack.c.b16 %v1534, %v1533
      %v1590 = vpack.c.b16 %v1536, %v1535
      %v1591 = vpack.c.b16 %v1538, %v1537
      %v1592 = vpack.c.b16 %v1540, %v1539
      %v1593 = vpack.c.b16 %v1542, %v1541
      %v1594 = vpack.c.b16 %v1544, %v1543
      %v1595 = vpack.c.b16 %v1546, %v1545
      %v1596 = vpack.c.b16 %v1548, %v1547
      %v1597 = vpack.c.b16 %v1550, %v1549
      %v1598 = vpack.c.b16 %v1552, %v1551
      %v1599 = vpack.c.b16 %v1554, %v1553
      %v1600 = vpack.c.b16 %v1556, %v1555
      %v1601 = vpack.c.b16 %v1558, %v1557
      %v1602 = vpack.c.b16 %v1560, %v1559
      %v1603 = vpack.c.b16 %v1562, %v1561
      %v1604 = vpack.c.b16 %v1564, %v1563
      %v1605 = vpack.c.b16 %v1566, %v1565
      %v1606 = vpack.c.b16 %v1568, %v1567
      %v1607 = vpack.c.b16 %v1570, %v1569
      %v1608 = vpack.c.b16 %v1572, %v1571
      %v1609 = vpack.c.b16 %v1574, %v1573
      %v1610 = vpack.c.b16 %v1576, %v1575
      %v1611 = vpack.c.b16 %v1578, %v1577
      %v1612 = vpack.c.b16 %v1580, %v1579
      %1645 = vmatprep.subr.bf16.mxu0 0
      %1646 = vmatpush1.bf16.msra.mxu0 %v1581
      %1647 = vmatprep.subr.bf16.mxu0 0
      %1648 = vmatpush1.bf16.msra.mxu0 %v1582
      %1649 = vmatprep.subr.bf16.mxu0 0
      %1650 = vmatpush1.bf16.msra.mxu0 %v1583
      %1651 = vmatprep.subr.bf16.mxu0 0
      %1652 = vmatpush1.bf16.msra.mxu0 %v1584
      %1653 = vmatprep.subr.bf16.mxu0 0
      %1654 = vmatpush1.bf16.msra.mxu0 %v1585
      %1655 = vmatprep.subr.bf16.mxu0 0
      %1656 = vmatpush1.bf16.msra.mxu0 %v1586
      %1657 = vmatprep.subr.bf16.mxu0 0
      %1658 = vmatpush1.bf16.msra.mxu0 %v1587
      %1659 = vmatprep.subr.bf16.mxu0 0
      %1660 = vmatpush1.bf16.msra.mxu0 %v1588
      %1661 = vmatprep.subr.bf16.mxu0 0
      %1662 = vmatpush1.bf16.msra.mxu0 %v1589
      %1663 = vmatprep.subr.bf16.mxu0 0
      %1664 = vmatpush1.bf16.msra.mxu0 %v1590
      %1665 = vmatprep.subr.bf16.mxu0 0
      %1666 = vmatpush1.bf16.msra.mxu0 %v1591
      %1667 = vmatprep.subr.bf16.mxu0 0
      %1668 = vmatpush1.bf16.msra.mxu0 %v1592
      %1669 = vmatprep.subr.bf16.mxu0 0
      %1670 = vmatpush1.bf16.msra.mxu0 %v1593
      %1671 = vmatprep.subr.bf16.mxu0 0
      %1672 = vmatpush1.bf16.msra.mxu0 %v1594
      %1673 = vmatprep.subr.bf16.mxu0 0
      %1674 = vmatpush1.bf16.msra.mxu0 %v1595
      %1675 = vmatprep.subr.bf16.mxu0 0
      %1676 = vmatpush1.bf16.msra.mxu0 %v1596
      %1677 = vmatprep.mubr.bf16.mxu0 %v458
      %1678 = vmatmul.mubr.bf16.gmra.mrb[0].mxu0 %v457
      %v1679 = vpop.f32.mrb[0].mxu0
      %v1680 = vadd.f32 %v539, %v1679
      %v1681 = vpop.f32.mrb[0].mxu0
      %v1682 = vpop.f32.mrb[0].mxu0
      %v1683 = vadd.f32 %v539, %v1682
      %v1684 = vpop.f32.mrb[0].mxu0
      %1685 = vmatprep.mubr.bf16.mxu0 %v462
      %1686 = vmatmul.mubr.bf16.gmra.mrb[0].mxu0 %v461
      %v1687 = vpop.f32.mrb[0].mxu0
      %v1688 = vadd.f32 %v539, %v1687
      %v1689 = vpop.f32.mrb[0].mxu0
      %v1690 = vpop.f32.mrb[0].mxu0
      %v1691 = vadd.f32 %v539, %v1690
      %v1692 = vpop.f32.mrb[0].mxu0
      %1693 = vmatprep.mubr.bf16.mxu0 %v466
      %1694 = vmatmul.mubr.bf16.gmra.mrb[0].mxu0 %v465
      %v1695 = vpop.f32.mrb[0].mxu0
      %v1696 = vadd.f32 %v539, %v1695
      %v1697 = vpop.f32.mrb[0].mxu0
      %v1698 = vpop.f32.mrb[0].mxu0
      %v1699 = vadd.f32 %v539, %v1698
      %v1700 = vpop.f32.mrb[0].mxu0
      %1701 = vmatprep.mubr.bf16.mxu0 %v470
      %1702 = vmatmul.mubr.bf16.gmra.mrb[0].mxu0 %v469
      %v1703 = vpop.f32.mrb[0].mxu0
      %v1704 = vadd.f32 %v539, %v1703
      %v1705 = vpop.f32.mrb[0].mxu0
      %v1706 = vpop.f32.mrb[0].mxu0
      %v1707 = vadd.f32 %v539, %v1706
      %v1708 = vpop.f32.mrb[0].mxu0
      %1709 = vdwg.mxu0
      %1710 = vmatprep.subr.bf16.mxu0 0
      %1711 = vmatpush1.bf16.msra.mxu0 %v1597
      %1712 = vmatprep.subr.bf16.mxu0 0
      %1713 = vmatpush1.bf16.msra.mxu0 %v1598
      %1714 = vmatprep.subr.bf16.mxu0 0
      %1715 = vmatpush1.bf16.msra.mxu0 %v1599
      %1716 = vmatprep.subr.bf16.mxu0 0
      %1717 = vmatpush1.bf16.msra.mxu0 %v1600
      %1718 = vmatprep.subr.bf16.mxu0 0
      %1719 = vmatpush1.bf16.msra.mxu0 %v1601
      %1720 = vmatprep.subr.bf16.mxu0 0
      %1721 = vmatpush1.bf16.msra.mxu0 %v1602
      %1722 = vmatprep.subr.bf16.mxu0 0
      %1723 = vmatpush1.bf16.msra.mxu0 %v1603
      %1724 = vmatprep.subr.bf16.mxu0 0
      %1725 = vmatpush1.bf16.msra.mxu0 %v1604
      %1726 = vmatprep.subr.bf16.mxu0 0
      %1727 = vmatpush1.bf16.msra.mxu0 %v1605
      %1728 = vmatprep.subr.bf16.mxu0 0
      %1729 = vmatpush1.bf16.msra.mxu0 %v1606
      %1730 = vmatprep.subr.bf16.mxu0 0
      %1731 = vmatpush1.bf16.msra.mxu0 %v1607
      %1732 = vmatprep.subr.bf16.mxu0 0
      %1733 = vmatpush1.bf16.msra.mxu0 %v1608
      %1734 = vmatprep.subr.bf16.mxu0 0
      %1735 = vmatpush1.bf16.msra.mxu0 %v1609
      %1736 = vmatprep.subr.bf16.mxu0 0
      %1737 = vmatpush1.bf16.msra.mxu0 %v1610
      %1738 = vmatprep.subr.bf16.mxu0 0
      %1739 = vmatpush1.bf16.msra.mxu0 %v1611
      %1740 = vmatprep.subr.bf16.mxu0 0
      %1741 = vmatpush1.bf16.msra.mxu0 %v1612
      %1742 = vmatprep.mubr.bf16.mxu0 %v1381
      %1743 = vmatmul.mubr.bf16.gmra.mrb[0].mxu0 %v1380
      %v1744 = vpop.f32.mrb[0].mxu0
      %v1745 = vadd.f32 %v1680, %v1744
      %v1746 = vpop.f32.mrb[0].mxu0
      %v1747 = vpop.f32.mrb[0].mxu0
      %v1748 = vadd.f32 %v1683, %v1747
      %v1749 = vpop.f32.mrb[0].mxu0
      %1750 = vmatprep.mubr.bf16.mxu0 %v1383
      %1751 = vmatmul.mubr.bf16.gmra.mrb[0].mxu0 %v1382
      %v1752 = vpop.f32.mrb[0].mxu0
      %v1753 = vadd.f32 %v1688, %v1752
      %v1754 = vpop.f32.mrb[0].mxu0
      %v1755 = vpop.f32.mrb[0].mxu0
      %v1756 = vadd.f32 %v1691, %v1755
      %v1757 = vpop.f32.mrb[0].mxu0
      %1758 = vmatprep.mubr.bf16.mxu0 %v1385
      %1759 = vmatmul.mubr.bf16.gmra.mrb[0].mxu0 %v1384
      %v1760 = vpop.f32.mrb[0].mxu0
      %v1761 = vadd.f32 %v1696, %v1760
      %v1762 = vpop.f32.mrb[0].mxu0
      %v1763 = vpop.f32.mrb[0].mxu0
      %v1764 = vadd.f32 %v1699, %v1763
      %v1765 = vpop.f32.mrb[0].mxu0
      %1766 = vmatprep.mubr.bf16.mxu0 %v1387
      %1767 = vmatmul.mubr.bf16.gmra.mrb[0].mxu0 %v1386
      %v1768 = vpop.f32.mrb[0].mxu0
      %v1769 = vadd.f32 %v1704, %v1768
      %v1770 = vpop.f32.mrb[0].mxu0
      %v1771 = vpop.f32.mrb[0].mxu0
      %v1772 = vadd.f32 %v1707, %v1771
      %v1773 = vpop.f32.mrb[0].mxu0
      %1774 = vdwg.mxu0
      %s1775 = scalar_lea.vmem %s276, 128
      %1776 = vst.msk [vmem:[%s1775] sm:$0xff] %vm863, %v1745
      %1777 = vst.msk [vmem:[%s1775 + $0x8] sm:$0xff] %vm863, %v1748
      %1778 = vst.msk [vmem:[%s1775 + $0x10] sm:$0xff] %vm863, %v1753
      %1779 = vst.msk [vmem:[%s1775 + $0x18] sm:$0xff] %vm863, %v1756
      %1780 = vst.msk [vmem:[%s1775 + $0x20] sm:$0xff] %vm863, %v1761
      %1781 = vst.msk [vmem:[%s1775 + $0x28] sm:$0xff] %vm863, %v1764
      %1782 = vst.msk [vmem:[%s1775 + $0x30] sm:$0xff] %vm863, %v1769
      %1783 = vst.msk [vmem:[%s1775 + $0x38] sm:$0xff] %vm863, %v1772
      %v1784 = vsel %vm863, %v1745, 0.0
      %v1785 = vsel %vm863, %v1748, 0.0
      %v1786 = vadd.f32 %v1784, %v1785
      %v1787 = vsel %vm863, %v1753, 0.0
      %v1788 = vadd.f32 %v1786, %v1787
      %v1789 = vsel %vm863, %v1756, 0.0
      %v1790 = vadd.f32 %v1788, %v1789
      %v1791 = vsel %vm863, %v1761, 0.0
      %v1792 = vadd.f32 %v1790, %v1791
      %v1793 = vsel %vm863, %v1764, 0.0
      %v1794 = vadd.f32 %v1792, %v1793
      %v1795 = vsel %vm863, %v1769, 0.0
      %v1796 = vadd.f32 %v1794, %v1795
      %v1797 = vsel %vm863, %v1772, 0.0
      %v1798 = vadd.f32 %v1796, %v1797
      %v1799 = vrot.slane %v1798, 4
      %v1800 = vadd.f32 %v1798, %v1799
      %v1801 = vrot.slane %v1800, 2
      %v1802 = vadd.f32 %v1800, %v1801
      %v1803 = vrot.slane %v1802, 1
      %v1804 = vadd.f32 %v1802, %v1803
      %v1805 = vadd.f32 %v1349, %v1804
      %v1806 = vmul.f32 %v1745, %v1745
      %v1807 = vmul.f32 %v1748, %v1748
      %v1808 = vmul.f32 %v1753, %v1753
      %v1809 = vmul.f32 %v1756, %v1756
      %v1810 = vmul.f32 %v1761, %v1761
      %v1811 = vmul.f32 %v1764, %v1764
      %v1812 = vmul.f32 %v1769, %v1769
      %v1813 = vmul.f32 %v1772, %v1772
      %v1814 = vsel %vm863, %v1806, 0.0
      %v1815 = vsel %vm863, %v1807, 0.0
      %v1816 = vadd.f32 %v1814, %v1815
      %v1817 = vsel %vm863, %v1808, 0.0
      %v1818 = vadd.f32 %v1816, %v1817
      %v1819 = vsel %vm863, %v1809, 0.0
      %v1820 = vadd.f32 %v1818, %v1819
      %v1821 = vsel %vm863, %v1810, 0.0
      %v1822 = vadd.f32 %v1820, %v1821
      %v1823 = vsel %vm863, %v1811, 0.0
      %v1824 = vadd.f32 %v1822, %v1823
      %v1825 = vsel %vm863, %v1812, 0.0
      %v1826 = vadd.f32 %v1824, %v1825
      %v1827 = vsel %vm863, %v1813, 0.0
      %v1828 = vadd.f32 %v1826, %v1827
      %v1829 = vrot.slane %v1828, 4
      %v1830 = vadd.f32 %v1828, %v1829
      %v1831 = vrot.slane %v1830, 2
      %v1832 = vadd.f32 %v1830, %v1831
      %v1833 = vrot.slane %v1832, 1
      %v1834 = vadd.f32 %v1832, %v1833
      %v1835 = vadd.f32 %v1379, %v1834
      %v1836 = vpack.c.bf16 %v447, %v446
      %v1837 = vpack.c.bf16 %v449, %v448
      %v1838 = vpack.c.bf16 %v451, %v450
      %v1839 = vpack.c.bf16 %v453, %v452
      %s1840 = scalar_lea.vmem %s4, 768
      %v1841 = vld [vmem:[%s1840] sm:$0xf]
      %v1842 = vld [vmem:[%s1840 + $0x4] sm:$0xf]
      %v1843 = vld [vmem:[%s1840 + $0x8] sm:$0xf]
      %v1844 = vld [vmem:[%s1840 + $0xc] sm:$0xf]
      %v1845 = vld [vmem:[%s1840 + $0x10] sm:$0xf]
      %v1846 = vld [vmem:[%s1840 + $0x14] sm:$0xf]
      %v1847 = vld [vmem:[%s1840 + $0x18] sm:$0xf]
      %v1848 = vld [vmem:[%s1840 + $0x1c] sm:$0xf]
      %v1849 = vld [vmem:[%s1840 + $0x20] sm:$0xf]
      %v1850 = vld [vmem:[%s1840 + $0x24] sm:$0xf]
      %v1851 = vld [vmem:[%s1840 + $0x28] sm:$0xf]
      %v1852 = vld [vmem:[%s1840 + $0x2c] sm:$0xf]
      %v1853 = vld [vmem:[%s1840 + $0x30] sm:$0xf]
      %v1854 = vld [vmem:[%s1840 + $0x34] sm:$0xf]
      %v1855 = vld [vmem:[%s1840 + $0x38] sm:$0xf]
      %v1856 = vld [vmem:[%s1840 + $0x3c] sm:$0xf]
      %v1857 = vld [vmem:[%s1840 + $0x40] sm:$0xf]
      %v1858 = vld [vmem:[%s1840 + $0x44] sm:$0xf]
      %v1859 = vld [vmem:[%s1840 + $0x48] sm:$0xf]
      %v1860 = vld [vmem:[%s1840 + $0x4c] sm:$0xf]
      %v1861 = vld [vmem:[%s1840 + $0x50] sm:$0xf]
      %v1862 = vld [vmem:[%s1840 + $0x54] sm:$0xf]
      %v1863 = vld [vmem:[%s1840 + $0x58] sm:$0xf]
      %v1864 = vld [vmem:[%s1840 + $0x5c] sm:$0xf]
      %v1865 = vld [vmem:[%s1840 + $0x60] sm:$0xf]
      %v1866 = vld [vmem:[%s1840 + $0x64] sm:$0xf]
      %v1867 = vld [vmem:[%s1840 + $0x68] sm:$0xf]
      %v1868 = vld [vmem:[%s1840 + $0x6c] sm:$0xf]
      %v1869 = vld [vmem:[%s1840 + $0x70] sm:$0xf]
      %v1870 = vld [vmem:[%s1840 + $0x74] sm:$0xf]
      %v1871 = vld [vmem:[%s1840 + $0x78] sm:$0xf]
      %v1872 = vld [vmem:[%s1840 + $0x7c] sm:$0xf]
      %v1873 = vld [vmem:[%s1840 + $0x80] sm:$0xf]
      %v1874 = vld [vmem:[%s1840 + $0x84] sm:$0xf]
      %v1875 = vld [vmem:[%s1840 + $0x88] sm:$0xf]
      %v1876 = vld [vmem:[%s1840 + $0x8c] sm:$0xf]
      %v1877 = vld [vmem:[%s1840 + $0x90] sm:$0xf]
      %v1878 = vld [vmem:[%s1840 + $0x94] sm:$0xf]
      %v1879 = vld [vmem:[%s1840 + $0x98] sm:$0xf]
      %v1880 = vld [vmem:[%s1840 + $0x9c] sm:$0xf]
      %v1881 = vld [vmem:[%s1840 + $0xa0] sm:$0xf]
      %v1882 = vld [vmem:[%s1840 + $0xa4] sm:$0xf]
      %v1883 = vld [vmem:[%s1840 + $0xa8] sm:$0xf]
      %v1884 = vld [vmem:[%s1840 + $0xac] sm:$0xf]
      %v1885 = vld [vmem:[%s1840 + $0xb0] sm:$0xf]
      %v1886 = vld [vmem:[%s1840 + $0xb4] sm:$0xf]
      %v1887 = vld [vmem:[%s1840 + $0xb8] sm:$0xf]
      %v1888 = vld [vmem:[%s1840 + $0xbc] sm:$0xf]
      %v1889 = vld [vmem:[%s1840 + $0xc0] sm:$0xf]
      %v1890 = vld [vmem:[%s1840 + $0xc4] sm:$0xf]
      %v1891 = vld [vmem:[%s1840 + $0xc8] sm:$0xf]
      %v1892 = vld [vmem:[%s1840 + $0xcc] sm:$0xf]
      %v1893 = vld [vmem:[%s1840 + $0xd0] sm:$0xf]
      %v1894 = vld [vmem:[%s1840 + $0xd4] sm:$0xf]
      %v1895 = vld [vmem:[%s1840 + $0xd8] sm:$0xf]
      %v1896 = vld [vmem:[%s1840 + $0xdc] sm:$0xf]
      %v1897 = vld [vmem:[%s1840 + $0xe0] sm:$0xf]
      %v1898 = vld [vmem:[%s1840 + $0xe4] sm:$0xf]
      %v1899 = vld [vmem:[%s1840 + $0xe8] sm:$0xf]
      %v1900 = vld [vmem:[%s1840 + $0xec] sm:$0xf]
      %v1901 = vld [vmem:[%s1840 + $0xf0] sm:$0xf]
      %v1902 = vld [vmem:[%s1840 + $0xf4] sm:$0xf]
      %v1903 = vld [vmem:[%s1840 + $0xf8] sm:$0xf]
      %v1904 = vld [vmem:[%s1840 + $0xfc] sm:$0xf]
      %v1969 = vunpack.c.l.b16 %v1841
      %v1970 = vunpack.c.l.b16 %v1842
      %v1971 = vunpack.c.l.b16 %v1843
      %v1972 = vunpack.c.l.b16 %v1844
      %v1973 = vunpack.c.l.b16 %v1845
      %v1974 = vunpack.c.l.b16 %v1846
      %v1975 = vunpack.c.l.b16 %v1847
      %v1976 = vunpack.c.l.b16 %v1848
      %v1977 = vunpack.c.l.b16 %v1849
      %v1978 = vunpack.c.l.b16 %v1850
      %v1979 = vunpack.c.l.b16 %v1851
      %v1980 = vunpack.c.l.b16 %v1852
      %v1981 = vunpack.c.l.b16 %v1853
      %v1982 = vunpack.c.l.b16 %v1854
      %v1983 = vunpack.c.l.b16 %v1855
      %v1984 = vunpack.c.l.b16 %v1856
      %v1985 = vunpack.c.l.b16 %v1857
      %v1986 = vunpack.c.l.b16 %v1858
      %v1987 = vunpack.c.l.b16 %v1859
      %v1988 = vunpack.c.l.b16 %v1860
      %v1989 = vunpack.c.l.b16 %v1861
      %v1990 = vunpack.c.l.b16 %v1862
      %v1991 = vunpack.c.l.b16 %v1863
      %v1992 = vunpack.c.l.b16 %v1864
      %v1993 = vunpack.c.l.b16 %v1865
      %v1994 = vunpack.c.l.b16 %v1866
      %v1995 = vunpack.c.l.b16 %v1867
      %v1996 = vunpack.c.l.b16 %v1868
      %v1997 = vunpack.c.l.b16 %v1869
      %v1998 = vunpack.c.l.b16 %v1870
      %v1999 = vunpack.c.l.b16 %v1871
      %v2000 = vunpack.c.l.b16 %v1872
      %v2001 = vunpack.c.l.b16 %v1873
      %v2002 = vunpack.c.l.b16 %v1874
      %v2003 = vunpack.c.l.b16 %v1875
      %v2004 = vunpack.c.l.b16 %v1876
      %v2005 = vunpack.c.l.b16 %v1877
      %v2006 = vunpack.c.l.b16 %v1878
      %v2007 = vunpack.c.l.b16 %v1879
      %v2008 = vunpack.c.l.b16 %v1880
      %v2009 = vunpack.c.l.b16 %v1881
      %v2010 = vunpack.c.l.b16 %v1882
      %v2011 = vunpack.c.l.b16 %v1883
      %v2012 = vunpack.c.l.b16 %v1884
      %v2013 = vunpack.c.l.b16 %v1885
      %v2014 = vunpack.c.l.b16 %v1886
      %v2015 = vunpack.c.l.b16 %v1887
      %v2016 = vunpack.c.l.b16 %v1888
      %v2017 = vunpack.c.l.b16 %v1889
      %v2018 = vunpack.c.l.b16 %v1890
      %v2019 = vunpack.c.l.b16 %v1891
      %v2020 = vunpack.c.l.b16 %v1892
      %v2021 = vunpack.c.l.b16 %v1893
      %v2022 = vunpack.c.l.b16 %v1894
      %v2023 = vunpack.c.l.b16 %v1895
      %v2024 = vunpack.c.l.b16 %v1896
      %v2025 = vunpack.c.l.b16 %v1897
      %v2026 = vunpack.c.l.b16 %v1898
      %v2027 = vunpack.c.l.b16 %v1899
      %v2028 = vunpack.c.l.b16 %v1900
      %v2029 = vunpack.c.l.b16 %v1901
      %v2030 = vunpack.c.l.b16 %v1902
      %v2031 = vunpack.c.l.b16 %v1903
      %v2032 = vunpack.c.l.b16 %v1904
      %v2033 = vpack.c.b16 %v1970, %v1969
      %v2034 = vpack.c.b16 %v1972, %v1971
      %v2035 = vpack.c.b16 %v1974, %v1973
      %v2036 = vpack.c.b16 %v1976, %v1975
      %v2037 = vpack.c.b16 %v1978, %v1977
      %v2038 = vpack.c.b16 %v1980, %v1979
      %v2039 = vpack.c.b16 %v1982, %v1981
      %v2040 = vpack.c.b16 %v1984, %v1983
      %v2041 = vpack.c.b16 %v1986, %v1985
      %v2042 = vpack.c.b16 %v1988, %v1987
      %v2043 = vpack.c.b16 %v1990, %v1989
      %v2044 = vpack.c.b16 %v1992, %v1991
      %v2045 = vpack.c.b16 %v1994, %v1993
      %v2046 = vpack.c.b16 %v1996, %v1995
      %v2047 = vpack.c.b16 %v1998, %v1997
      %v2048 = vpack.c.b16 %v2000, %v1999
      %v2049 = vpack.c.b16 %v2002, %v2001
      %v2050 = vpack.c.b16 %v2004, %v2003
      %v2051 = vpack.c.b16 %v2006, %v2005
      %v2052 = vpack.c.b16 %v2008, %v2007
      %v2053 = vpack.c.b16 %v2010, %v2009
      %v2054 = vpack.c.b16 %v2012, %v2011
      %v2055 = vpack.c.b16 %v2014, %v2013
      %v2056 = vpack.c.b16 %v2016, %v2015
      %v2057 = vpack.c.b16 %v2018, %v2017
      %v2058 = vpack.c.b16 %v2020, %v2019
      %v2059 = vpack.c.b16 %v2022, %v2021
      %v2060 = vpack.c.b16 %v2024, %v2023
      %v2061 = vpack.c.b16 %v2026, %v2025
      %v2062 = vpack.c.b16 %v2028, %v2027
      %v2063 = vpack.c.b16 %v2030, %v2029
      %v2064 = vpack.c.b16 %v2032, %v2031
      %2097 = vmatprep.subr.bf16.mxu0 0
      %2098 = vmatpush1.bf16.msra.mxu0 %v2033
      %2099 = vmatprep.subr.bf16.mxu0 0
      %2100 = vmatpush1.bf16.msra.mxu0 %v2034
      %2101 = vmatprep.subr.bf16.mxu0 0
      %2102 = vmatpush1.bf16.msra.mxu0 %v2035
      %2103 = vmatprep.subr.bf16.mxu0 0
      %2104 = vmatpush1.bf16.msra.mxu0 %v2036
      %2105 = vmatprep.subr.bf16.mxu0 0
      %2106 = vmatpush1.bf16.msra.mxu0 %v2037
      %2107 = vmatprep.subr.bf16.mxu0 0
      %2108 = vmatpush1.bf16.msra.mxu0 %v2038
      %2109 = vmatprep.subr.bf16.mxu0 0
      %2110 = vmatpush1.bf16.msra.mxu0 %v2039
      %2111 = vmatprep.subr.bf16.mxu0 0
      %2112 = vmatpush1.bf16.msra.mxu0 %v2040
      %2113 = vmatprep.subr.bf16.mxu0 0
      %2114 = vmatpush1.bf16.msra.mxu0 %v2041
      %2115 = vmatprep.subr.bf16.mxu0 0
      %2116 = vmatpush1.bf16.msra.mxu0 %v2042
      %2117 = vmatprep.subr.bf16.mxu0 0
      %2118 = vmatpush1.bf16.msra.mxu0 %v2043
      %2119 = vmatprep.subr.bf16.mxu0 0
      %2120 = vmatpush1.bf16.msra.mxu0 %v2044
      %2121 = vmatprep.subr.bf16.mxu0 0
      %2122 = vmatpush1.bf16.msra.mxu0 %v2045
      %2123 = vmatprep.subr.bf16.mxu0 0
      %2124 = vmatpush1.bf16.msra.mxu0 %v2046
      %2125 = vmatprep.subr.bf16.mxu0 0
      %2126 = vmatpush1.bf16.msra.mxu0 %v2047
      %2127 = vmatprep.subr.bf16.mxu0 0
      %2128 = vmatpush1.bf16.msra.mxu0 %v2048
      %2129 = vmatprep.mubr.bf16.mxu0 %v925
      %2130 = vmatmul.mubr.bf16.gmra.mrb[0].mxu0 %v458
      %v2131 = vpop.f32.mrb[0].mxu0
      %v2132 = vadd.f32 %v539, %v2131
      %v2133 = vpop.f32.mrb[0].mxu0
      %v2134 = vpop.f32.mrb[0].mxu0
      %v2135 = vadd.f32 %v539, %v2134
      %v2136 = vpop.f32.mrb[0].mxu0
      %2137 = vmatprep.mubr.bf16.mxu0 %v927
      %2138 = vmatmul.mubr.bf16.gmra.mrb[0].mxu0 %v462
      %v2139 = vpop.f32.mrb[0].mxu0
      %v2140 = vadd.f32 %v539, %v2139
      %v2141 = vpop.f32.mrb[0].mxu0
      %v2142 = vpop.f32.mrb[0].mxu0
      %v2143 = vadd.f32 %v539, %v2142
      %v2144 = vpop.f32.mrb[0].mxu0
      %2145 = vmatprep.mubr.bf16.mxu0 %v929
      %2146 = vmatmul.mubr.bf16.gmra.mrb[0].mxu0 %v466
      %v2147 = vpop.f32.mrb[0].mxu0
      %v2148 = vadd.f32 %v539, %v2147
      %v2149 = vpop.f32.mrb[0].mxu0
      %v2150 = vpop.f32.mrb[0].mxu0
      %v2151 = vadd.f32 %v539, %v2150
      %v2152 = vpop.f32.mrb[0].mxu0
      %2153 = vmatprep.mubr.bf16.mxu0 %v931
      %2154 = vmatmul.mubr.bf16.gmra.mrb[0].mxu0 %v470
      %v2155 = vpop.f32.mrb[0].mxu0
      %v2156 = vadd.f32 %v539, %v2155
      %v2157 = vpop.f32.mrb[0].mxu0
      %v2158 = vpop.f32.mrb[0].mxu0
      %v2159 = vadd.f32 %v539, %v2158
      %v2160 = vpop.f32.mrb[0].mxu0
      %2161 = vdwg.mxu0
      %2162 = vmatprep.subr.bf16.mxu0 0
      %2163 = vmatpush1.bf16.msra.mxu0 %v2049
      %2164 = vmatprep.subr.bf16.mxu0 0
      %2165 = vmatpush1.bf16.msra.mxu0 %v2050
      %2166 = vmatprep.subr.bf16.mxu0 0
      %2167 = vmatpush1.bf16.msra.mxu0 %v2051
      %2168 = vmatprep.subr.bf16.mxu0 0
      %2169 = vmatpush1.bf16.msra.mxu0 %v2052
      %2170 = vmatprep.subr.bf16.mxu0 0
      %2171 = vmatpush1.bf16.msra.mxu0 %v2053
      %2172 = vmatprep.subr.bf16.mxu0 0
      %2173 = vmatpush1.bf16.msra.mxu0 %v2054
      %2174 = vmatprep.subr.bf16.mxu0 0
      %2175 = vmatpush1.bf16.msra.mxu0 %v2055
      %2176 = vmatprep.subr.bf16.mxu0 0
      %2177 = vmatpush1.bf16.msra.mxu0 %v2056
      %2178 = vmatprep.subr.bf16.mxu0 0
      %2179 = vmatpush1.bf16.msra.mxu0 %v2057
      %2180 = vmatprep.subr.bf16.mxu0 0
      %2181 = vmatpush1.bf16.msra.mxu0 %v2058
      %2182 = vmatprep.subr.bf16.mxu0 0
      %2183 = vmatpush1.bf16.msra.mxu0 %v2059
      %2184 = vmatprep.subr.bf16.mxu0 0
      %2185 = vmatpush1.bf16.msra.mxu0 %v2060
      %2186 = vmatprep.subr.bf16.mxu0 0
      %2187 = vmatpush1.bf16.msra.mxu0 %v2061
      %2188 = vmatprep.subr.bf16.mxu0 0
      %2189 = vmatpush1.bf16.msra.mxu0 %v2062
      %2190 = vmatprep.subr.bf16.mxu0 0
      %2191 = vmatpush1.bf16.msra.mxu0 %v2063
      %2192 = vmatprep.subr.bf16.mxu0 0
      %2193 = vmatpush1.bf16.msra.mxu0 %v2064
      %2194 = vmatprep.mubr.bf16.mxu0 %v1836
      %2195 = vmatmul.mubr.bf16.gmra.mrb[0].mxu0 %v1381
      %v2196 = vpop.f32.mrb[0].mxu0
      %v2197 = vadd.f32 %v2132, %v2196
      %v2198 = vpop.f32.mrb[0].mxu0
      %v2199 = vpop.f32.mrb[0].mxu0
      %v2200 = vadd.f32 %v2135, %v2199
      %v2201 = vpop.f32.mrb[0].mxu0
      %2202 = vmatprep.mubr.bf16.mxu0 %v1837
      %2203 = vmatmul.mubr.bf16.gmra.mrb[0].mxu0 %v1383
      %v2204 = vpop.f32.mrb[0].mxu0
      %v2205 = vadd.f32 %v2140, %v2204
      %v2206 = vpop.f32.mrb[0].mxu0
      %v2207 = vpop.f32.mrb[0].mxu0
      %v2208 = vadd.f32 %v2143, %v2207
      %v2209 = vpop.f32.mrb[0].mxu0
      %2210 = vmatprep.mubr.bf16.mxu0 %v1838
      %2211 = vmatmul.mubr.bf16.gmra.mrb[0].mxu0 %v1385
      %v2212 = vpop.f32.mrb[0].mxu0
      %v2213 = vadd.f32 %v2148, %v2212
      %v2214 = vpop.f32.mrb[0].mxu0
      %v2215 = vpop.f32.mrb[0].mxu0
      %v2216 = vadd.f32 %v2151, %v2215
      %v2217 = vpop.f32.mrb[0].mxu0
      %2218 = vmatprep.mubr.bf16.mxu0 %v1839
      %2219 = vmatmul.mubr.bf16.gmra.mrb[0].mxu0 %v1387
      %v2220 = vpop.f32.mrb[0].mxu0
      %v2221 = vadd.f32 %v2156, %v2220
      %v2222 = vpop.f32.mrb[0].mxu0
      %v2223 = vpop.f32.mrb[0].mxu0
      %v2224 = vadd.f32 %v2159, %v2223
      %v2225 = vpop.f32.mrb[0].mxu0
      %2226 = vdwg.mxu0
      %s2227 = scalar_lea.vmem %s276, 192
      %2228 = vst.msk [vmem:[%s2227] sm:$0xff] %vm863, %v2197
      %2229 = vst.msk [vmem:[%s2227 + $0x8] sm:$0xff] %vm863, %v2200
      %2230 = vst.msk [vmem:[%s2227 + $0x10] sm:$0xff] %vm863, %v2205
      %2231 = vst.msk [vmem:[%s2227 + $0x18] sm:$0xff] %vm863, %v2208
      %2232 = vst.msk [vmem:[%s2227 + $0x20] sm:$0xff] %vm863, %v2213
      %2233 = vst.msk [vmem:[%s2227 + $0x28] sm:$0xff] %vm863, %v2216
      %2234 = vst.msk [vmem:[%s2227 + $0x30] sm:$0xff] %vm863, %v2221
      %2235 = vst.msk [vmem:[%s2227 + $0x38] sm:$0xff] %vm863, %v2224
      %v2236 = vsel %vm863, %v2197, 0.0
      %v2237 = vsel %vm863, %v2200, 0.0
      %v2238 = vadd.f32 %v2236, %v2237
      %v2239 = vsel %vm863, %v2205, 0.0
      %v2240 = vadd.f32 %v2238, %v2239
      %v2241 = vsel %vm863, %v2208, 0.0
      %v2242 = vadd.f32 %v2240, %v2241
      %v2243 = vsel %vm863, %v2213, 0.0
      %v2244 = vadd.f32 %v2242, %v2243
      %v2245 = vsel %vm863, %v2216, 0.0
      %v2246 = vadd.f32 %v2244, %v2245
      %v2247 = vsel %vm863, %v2221, 0.0
      %v2248 = vadd.f32 %v2246, %v2247
      %v2249 = vsel %vm863, %v2224, 0.0
      %v2250 = vadd.f32 %v2248, %v2249
      %v2251 = vrot.slane %v2250, 4
      %v2252 = vadd.f32 %v2250, %v2251
      %v2253 = vrot.slane %v2252, 2
      %v2254 = vadd.f32 %v2252, %v2253
      %v2255 = vrot.slane %v2254, 1
      %v2256 = vadd.f32 %v2254, %v2255
      %v2257 = vadd.f32 %v1805, %v2256
      %v2258 = vmul.f32 %v2197, %v2197
      %v2259 = vmul.f32 %v2200, %v2200
      %v2260 = vmul.f32 %v2205, %v2205
      %v2261 = vmul.f32 %v2208, %v2208
      %v2262 = vmul.f32 %v2213, %v2213
      %v2263 = vmul.f32 %v2216, %v2216
      %v2264 = vmul.f32 %v2221, %v2221
      %v2265 = vmul.f32 %v2224, %v2224
      %v2266 = vsel %vm863, %v2258, 0.0
      %v2267 = vsel %vm863, %v2259, 0.0
      %v2268 = vadd.f32 %v2266, %v2267
      %v2269 = vsel %vm863, %v2260, 0.0
      %v2270 = vadd.f32 %v2268, %v2269
      %v2271 = vsel %vm863, %v2261, 0.0
      %v2272 = vadd.f32 %v2270, %v2271
      %v2273 = vsel %vm863, %v2262, 0.0
      %v2274 = vadd.f32 %v2272, %v2273
      %v2275 = vsel %vm863, %v2263, 0.0
      %v2276 = vadd.f32 %v2274, %v2275
      %v2277 = vsel %vm863, %v2264, 0.0
      %v2278 = vadd.f32 %v2276, %v2277
      %v2279 = vsel %vm863, %v2265, 0.0
      %v2280 = vadd.f32 %v2278, %v2279
      %v2281 = vrot.slane %v2280, 4
      %v2282 = vadd.f32 %v2280, %v2281
      %v2283 = vrot.slane %v2282, 2
      %v2284 = vadd.f32 %v2282, %v2283
      %v2285 = vrot.slane %v2284, 1
      %v2286 = vadd.f32 %v2284, %v2285
      %v2287 = vadd.f32 %v1835, %v2286
      %p2288 = scmp.eq.s32.totalorder %s19, 0
      // Predicated region
      $region45: #{_lambda_.8} parent=43 // pred_check
        %p2289 = pneg %p2288
      $region46: #{_lambda_.8} parent=43 // pred_check_branch
        %2291 = sbr.rel (%p2289) target = $region48
      $region47: #{_lambda_.8} parent=43 // pred_region
        %vm2292 = vcmask 517120
        %2293 = vst.msk [vmem:[%s7] sm:$0x3] %vm2292, 0.0
      $region48: #{_lambda_.8} parent=43 // pred_fallthru
        _
      %v2294 = vld [vmem:[%s7] sm:$0x3]
      %vm2295 = vcmask 1040384
      %v2296 = vsel %vm2295, %v2257, %v2287
      %v2297 = vadd.f32 %v2294, %v2296
      %vm2298 = vcmask 517120
      %2299 = vst.msk [vmem:[%s7] sm:$0x3] %vm2298, %v2297
      %p2300 = scmp.lt.s32.totalorder %s19, 1
      %s2301 = scalar_select %p2300, %s19, 1
      %s2302 = smul.addr %s2301, 32
      %s2303 = smul.addr %s2302, 8
      %s2304 = scalar_lea.vmem %s6, %s2303
      // Predicated region
      $region49: #{_lambda_.8} parent=43 // pred_check
        %p2305 = pneg %p168
      $region50: #{_lambda_.8} parent=43 // pred_check_branch
        %2307 = sbr.rel (%p2305) target = $region52
      $region51: #{_lambda_.8} parent=43 // pred_region
        _
      $region52: #{_lambda_.8} parent=43 // pred_fallthru
        _
      // Predicated region
      $region53: #{_lambda_.8} parent=43 // pred_check
        %p2308 = pneg %p189
      $region54: #{_lambda_.8} parent=43 // pred_check_branch
        %2310 = sbr.rel (%p2308) target = $region56
      $region55: #{_lambda_.8} parent=43 // pred_region
        _
      $region56: #{_lambda_.8} parent=43 // pred_fallthru
        _
      // Predicated region
      $region57: #{_lambda_.8} parent=43 // pred_check
        %p2311 = pneg %p189
      $region58: #{_lambda_.8} parent=43 // pred_check_branch
        %2313 = sbr.rel (%p2311) target = $region60
      $region59: #{_lambda_.8} parent=43 // pred_region
        _
      $region60: #{_lambda_.8} parent=43 // pred_fallthru
        _
    $region44: #{_lambda_.8} parent=5 // pred_fallthru
      _
    %p2314 = scmp.le.s32.totalorder 2, %s14
    // Predicated region
    $region61: #{_lambda_.8} parent=5 // pred_check
      %p2315 = pneg %p2314
    $region62: #{_lambda_.8} parent=5 // pred_check_branch
      %2317 = sbr.rel (%p2315) target = $region64
    $region63: #{_lambda_.8} parent=5 // pred_region
      %s2318 = ssub.s32 %s14, 2
      // Predicated region
      $region65: #{_lambda_.8} parent=63 // pred_check
        %p2319 = pneg %p174
      $region66: #{_lambda_.8} parent=63 // pred_check_branch
        %2321 = sbr.rel (%p2319) target = $region68
      $region67: #{_lambda_.8} parent=63 // pred_region
        %p2322 = scmp.lt.s32.totalorder %s20, 1
        %s2323 = scalar_select %p2322, %s20, 1
        %s2324 = smul.addr %s2323, 32
        %s2325 = smul.addr %s2324, 8
        %s2326 = scalar_lea.vmem %s6, %s2325
      $region68: #{_lambda_.8} parent=63 // pred_fallthru
        _
    $region64: #{_lambda_.8} parent=5 // pred_fallthru
      _
  $region6: #{_lambda_.8} parent=0 // loop_footer
    %s18 = sadd.s32 1, %s14
  $region7: #{_lambda_.8} parent=0 // loop_footer_branch
    %13 = sbr.rel target = $region3
  $region8: #{_lambda_.8} parent=0 // loop_exit
    _

// kernel: _lambda_.9
$region0: #{_lambda_.9}
  #allocation0 [shape = 'u32[]', space=smem, size = 0x4, offset = 0x4, fixed_abs, tag = 'smem constant byte address 0x4 - core index']
  #allocation1 [shape = 'u32[144,128]{1,0:T(1,128)}', space=vmem, size = 0x12000, scoped, tag = 'internal scratch']
  #allocation2 [shape = 'f32[18,18,64]{2,1,0:T(8,128)}', space=vmem, size = 0x36000, scoped, tag = 'scratch operand']
  %s0 = inlined_call_operand.vmem [shape: f32[2,64], index: 0, kind: input, shape index: {}]
  %s1 = inlined_call_operand.vmem [shape: f32[1,64], index: 1, kind: input, shape index: {}]
  %s2 = inlined_call_operand.vmem [shape: f32[1,64], index: 2, kind: input, shape index: {}]
  %s3 = inlined_call_operand.vmem [shape: f32[2,16,16,64], index: 3, kind: input, shape index: {}]
  %s4 = inlined_call_operand.vmem [shape: bf16[576,128], index: 4, kind: input, shape index: {}]
  %s5 = inlined_call_operand.vmem [shape: f32[1,128], index: 5, kind: input, shape index: {}]
  %s6 = inlined_call_operand.vmem [shape: f32[2,16,16,128], index: 6, kind: output, shape index: {}]
  %s7 = sld [smem:[#allocation0]]
  $region57: #{_lambda_.9} parent=0
    _
  %s9 = ssub.s32 1, %s7
  %s10 = scalar_select 0, %s9, %s7
  loop: start=0, step=1, limit=4
  $region2: #{_lambda_.9} parent=0 // loop_pre_header
    _
  $region3: #{_lambda_.9} parent=0 // loop_header
    %s12 = sphi 0, %s16
    %p13 = scmp.ge.s32.totalorder %s12, 4
    %s20 = sphi 0, %s20
    %s22 = sphi 0, %s20
    %s23 = sphi 0, %s22
    %s37 = sphi 0, %s23
    %s41 = sphi 0, %s41
    %s43 = sphi 0, %s41
    %s44 = sphi 0, %s43
    %s58 = sphi 0, %s44
    %s62 = sphi 0, %s62
    %s64 = sphi 0, %s62
    %s65 = sphi 0, %s64
    %s79 = sphi 0, %s65
    %s85 = sphi 0, %s87
    %s88 = sphi 0, %s85
    %s89 = sphi 0, %s88
    %s105 = sphi 0, %s89
    %s109 = sphi 0, %s109
    %s111 = sphi 0, %s109
    %s112 = sphi 0, %s111
    %s126 = sphi 0, %s112
    %s130 = sphi 0, %s130
    %s132 = sphi 0, %s130
    %s133 = sphi 0, %s132
    %s147 = sphi 0, %s133
    %s153 = sphi 0, %s155
    %s156 = sphi 0, %s153
    %s157 = sphi 0, %s156
    %s173 = sphi 0, %s157
  $region4: #{_lambda_.9} parent=0 // loop_header_branch
    %15 = sbr.rel (%p13) target = $region8
  $region5: #{_lambda_.9} parent=0 // loop_body
    %s17 = ssub.s32 %s12, 1
    %s18 = ssub.s32 %s12, 2
    %s19 = sadd.s32 %s12, 1
    %s21 = sadd.s32 %s20, 1
    %p24 = scmp.eq.s32.totalorder %s12, 1
    %p25 = scmp.ne.s32.totalorder %s20, %s22
    %p26 = scmp.eq.s32.totalorder %s12, 0
    %p27 = por %p25, %p26
    %p28 = scmp.ne.s32.totalorder %s20, %s22
    %p29 = scmp.eq.s32.totalorder %s17, 1
    %p30 = por %p28, %p29
    %p31 = scmp.ne.s32.totalorder %s22, %s23
    %p32 = scmp.eq.s32.totalorder %s17, 0
    %p33 = por %p31, %p32
    %p34 = scmp.ne.s32.totalorder %s22, %s23
    %p35 = scmp.eq.s32.totalorder %s18, 1
    %p36 = por %p34, %p35
    %p38 = scmp.ne.s32.totalorder %s23, %s37
    %p39 = scmp.eq.s32.totalorder %s18, 0
    %p40 = por %p38, %p39
    %s42 = sadd.s32 %s41, 1
    %p45 = scmp.eq.s32.totalorder %s12, 1
    %p46 = scmp.ne.s32.totalorder %s41, %s43
    %p47 = scmp.eq.s32.totalorder %s12, 0
    %p48 = por %p46, %p47
    %p49 = scmp.ne.s32.totalorder %s41, %s43
    %p50 = scmp.eq.s32.totalorder %s17, 1
    %p51 = por %p49, %p50
    %p52 = scmp.ne.s32.totalorder %s43, %s44
    %p53 = scmp.eq.s32.totalorder %s17, 0
    %p54 = por %p52, %p53
    %p55 = scmp.ne.s32.totalorder %s43, %s44
    %p56 = scmp.eq.s32.totalorder %s18, 1
    %p57 = por %p55, %p56
    %p59 = scmp.ne.s32.totalorder %s44, %s58
    %p60 = scmp.eq.s32.totalorder %s18, 0
    %p61 = por %p59, %p60
    %s63 = sadd.s32 %s62, 1
    %p66 = scmp.eq.s32.totalorder %s12, 1
    %p67 = scmp.ne.s32.totalorder %s62, %s64
    %p68 = scmp.eq.s32.totalorder %s12, 0
    %p69 = por %p67, %p68
    %p70 = scmp.ne.s32.totalorder %s62, %s64
    %p71 = scmp.eq.s32.totalorder %s17, 1
    %p72 = por %p70, %p71
    %p73 = scmp.ne.s32.totalorder %s64, %s65
    %p74 = scmp.eq.s32.totalorder %s17, 0
    %p75 = por %p73, %p74
    %p76 = scmp.ne.s32.totalorder %s64, %s65
    %p77 = scmp.eq.s32.totalorder %s18, 1
    %p78 = por %p76, %p77
    %p80 = scmp.ne.s32.totalorder %s65, %s79
    %p81 = scmp.eq.s32.totalorder %s18, 0
    %p82 = por %p80, %p81
    %s83 = ssub.s32 %s12, %s19
    %p84 = scmp.eq.s32.totalorder %s83, 0
    %s86 = sadd.s32 %s85, 1
    %s87 = scalar_select %p84, %s85, %s86
    %p90 = pneg %p84
    %p91 = scmp.eq.s32.totalorder %s12, 1
    %p92 = por %p90, %p91
    %p93 = scmp.ne.s32.totalorder %s85, %s88
    %p94 = scmp.eq.s32.totalorder %s12, 0
    %p95 = por %p93, %p94
    %p96 = scmp.ne.s32.totalorder %s85, %s88
    %p97 = scmp.eq.s32.totalorder %s17, 1
    %p98 = por %p96, %p97
    %p99 = scmp.ne.s32.totalorder %s88, %s89
    %p100 = scmp.eq.s32.totalorder %s17, 0
    %p101 = por %p99, %p100
    %p102 = scmp.ne.s32.totalorder %s88, %s89
    %p103 = scmp.eq.s32.totalorder %s18, 1
    %p104 = por %p102, %p103
    %p106 = scmp.ne.s32.totalorder %s89, %s105
    %p107 = scmp.eq.s32.totalorder %s18, 0
    %p108 = por %p106, %p107
    %s110 = sadd.s32 %s109, 1
    %p113 = scmp.eq.s32.totalorder %s12, 1
    %p114 = scmp.ne.s32.totalorder %s109, %s111
    %p115 = scmp.eq.s32.totalorder %s12, 0
    %p116 = por %p114, %p115
    %p117 = scmp.ne.s32.totalorder %s109, %s111
    %p118 = scmp.eq.s32.totalorder %s17, 1
    %p119 = por %p117, %p118
    %p120 = scmp.ne.s32.totalorder %s111, %s112
    %p121 = scmp.eq.s32.totalorder %s17, 0
    %p122 = por %p120, %p121
    %p123 = scmp.ne.s32.totalorder %s111, %s112
    %p124 = scmp.eq.s32.totalorder %s18, 1
    %p125 = por %p123, %p124
    %p127 = scmp.ne.s32.totalorder %s112, %s126
    %p128 = scmp.eq.s32.totalorder %s18, 0
    %p129 = por %p127, %p128
    %s131 = sadd.s32 %s130, 1
    %p134 = scmp.eq.s32.totalorder %s12, 1
    %p135 = scmp.ne.s32.totalorder %s130, %s132
    %p136 = scmp.eq.s32.totalorder %s12, 0
    %p137 = por %p135, %p136
    %p138 = scmp.ne.s32.totalorder %s130, %s132
    %p139 = scmp.eq.s32.totalorder %s17, 1
    %p140 = por %p138, %p139
    %p141 = scmp.ne.s32.totalorder %s132, %s133
    %p142 = scmp.eq.s32.totalorder %s17, 0
    %p143 = por %p141, %p142
    %p144 = scmp.ne.s32.totalorder %s132, %s133
    %p145 = scmp.eq.s32.totalorder %s18, 1
    %p146 = por %p144, %p145
    %p148 = scmp.ne.s32.totalorder %s133, %s147
    %p149 = scmp.eq.s32.totalorder %s18, 0
    %p150 = por %p148, %p149
    %s151 = ssub.s32 %s12, %s19
    %p152 = scmp.eq.s32.totalorder %s151, 0
    %s154 = sadd.s32 %s153, 1
    %s155 = scalar_select %p152, %s153, %s154
    %p158 = pneg %p152
    %p159 = scmp.eq.s32.totalorder %s12, 1
    %p160 = por %p158, %p159
    %p161 = scmp.ne.s32.totalorder %s153, %s156
    %p162 = scmp.eq.s32.totalorder %s12, 0
    %p163 = por %p161, %p162
    %p164 = scmp.ne.s32.totalorder %s153, %s156
    %p165 = scmp.eq.s32.totalorder %s17, 1
    %p166 = por %p164, %p165
    %p167 = scmp.ne.s32.totalorder %s156, %s157
    %p168 = scmp.eq.s32.totalorder %s17, 0
    %p169 = por %p167, %p168
    %p170 = scmp.ne.s32.totalorder %s156, %s157
    %p171 = scmp.eq.s32.totalorder %s18, 1
    %p172 = por %p170, %p171
    %p174 = scmp.ne.s32.totalorder %s157, %s173
    %p175 = scmp.eq.s32.totalorder %s18, 0
    %p176 = por %p174, %p175
    %p177 = scmp.le.s32.totalorder 1, %s12
    %p178 = scmp.lt.s32.totalorder %s12, 3
    %p179 = pnand %p177, %p178
    %p180 = pneg %p179
    // Predicated region
    $region9: #{_lambda_.9} parent=5 // pred_check
      _
    $region10: #{_lambda_.9} parent=5 // pred_check_branch
      %182 = sbr.rel (%p179) target = $region12
    $region11: #{_lambda_.9} parent=5 // pred_region
      %s183 = ssub.s32 %s12, 1
      // Predicated region
      $region13: #{_lambda_.9} parent=11 // pred_check
        %p184 = pneg %p33
      $region14: #{_lambda_.9} parent=11 // pred_check_branch
        %186 = sbr.rel (%p184) target = $region16
      $region15: #{_lambda_.9} parent=11 // pred_region
        _
      $region16: #{_lambda_.9} parent=11 // pred_fallthru
        _
      // Predicated region
      $region17: #{_lambda_.9} parent=11 // pred_check
        %p187 = pneg %p54
      $region18: #{_lambda_.9} parent=11 // pred_check_branch
        %189 = sbr.rel (%p187) target = $region20
      $region19: #{_lambda_.9} parent=11 // pred_region
        _
      $region20: #{_lambda_.9} parent=11 // pred_fallthru
        _
      // Predicated region
      $region21: #{_lambda_.9} parent=11 // pred_check
        %p190 = pneg %p75
      $region22: #{_lambda_.9} parent=11 // pred_check_branch
        %192 = sbr.rel (%p190) target = $region24
      $region23: #{_lambda_.9} parent=11 // pred_region
        _
      $region24: #{_lambda_.9} parent=11 // pred_fallthru
        _
      // Predicated region
      $region25: #{_lambda_.9} parent=11 // pred_check
        %p193 = pneg %p122
      $region26: #{_lambda_.9} parent=11 // pred_check_branch
        %195 = sbr.rel (%p193) target = $region28
      $region27: #{_lambda_.9} parent=11 // pred_region
        _
      $region28: #{_lambda_.9} parent=11 // pred_fallthru
        _
      // Predicated region
      $region29: #{_lambda_.9} parent=11 // pred_check
        %p196 = pneg %p143
      $region30: #{_lambda_.9} parent=11 // pred_check_branch
        %198 = sbr.rel (%p196) target = $region32
      $region31: #{_lambda_.9} parent=11 // pred_region
        _
      $region32: #{_lambda_.9} parent=11 // pred_fallthru
        _
    $region12: #{_lambda_.9} parent=5 // pred_fallthru
      _
    %p199 = scmp.lt.s32.totalorder %s12, 2
    // Predicated region
    $region33: #{_lambda_.9} parent=5 // pred_check
      %p200 = pneg %p199
    $region34: #{_lambda_.9} parent=5 // pred_check_branch
      %202 = sbr.rel (%p200) target = $region36
    $region35: #{_lambda_.9} parent=5 // pred_region
      // Predicated region
      $region37: #{_lambda_.9} parent=35 // pred_check
        %p203 = pneg %p95
      $region38: #{_lambda_.9} parent=35 // pred_check_branch
        %205 = sbr.rel (%p203) target = $region40
      $region39: #{_lambda_.9} parent=35 // pred_region
        %p206 = scmp.lt.s32.totalorder %s12, 1
        %s207 = scalar_select %p206, %s12, 1
        %s208 = smul.addr %s207, 32
        %s209 = smul.addr %s208, 8
        %s210 = scalar_lea.vmem %s3, %s209
      $region40: #{_lambda_.9} parent=35 // pred_fallthru
        _
    $region36: #{_lambda_.9} parent=5 // pred_fallthru
      _
    %p211 = scmp.le.s32.totalorder 1, %s12
    %p212 = scmp.lt.s32.totalorder %s12, 3
    %p213 = pnand %p211, %p212
    %p214 = pneg %p213
    // Predicated region
    $region41: #{_lambda_.9} parent=5 // pred_check
      _
    $region42: #{_lambda_.9} parent=5 // pred_check_branch
      %216 = sbr.rel (%p213) target = $region44
    $region43: #{_lambda_.9} parent=5 // pred_region
      %s217 = ssub.s32 %s12, 1
      %p218 = pneg %p33
      %p219 = pneg %p30
      %p220 = pneg %p54
      %p221 = pneg %p51
      %p222 = pneg %p75
      %p223 = pneg %p72
      %p224 = scmp.lt.s32.totalorder %s17, 1
      %s225 = scalar_select %p224, %s17, 1
      %s226 = smul.addr %s225, 32
      %s227 = smul.addr %s226, 8
      %s228 = scalar_lea.vmem %s3, %s227
      %p229 = pneg %p101
      %p230 = pneg %p98
      %p231 = pneg %p122
      %p232 = pneg %p119
      %p233 = pneg %p143
      %p234 = pneg %p140
      %p235 = pneg %p169
      %p236 = pneg %p166
      %p237 = scmp.lt.s32.totalorder %s17, 1
      %s238 = scalar_select %p237, %s17, 1
      %s239 = smul.addr %s238, 32
      %s240 = smul.addr %s239, 8
      %s241 = scalar_lea.vmem %s6, %s240
      %p242 = scmp.lt.s32.totalorder %s17, 1
      %s243 = scalar_select %p242, %s17, 1
      %s244 = smul.addr %s243, 32
      %s245 = smul.addr %s244, 8
      %s246 = scalar_lea.vmem %s3, %s245
      %p247 = scmp.lt.s32.totalorder %s17, 1
      %s248 = scalar_select %p247, %s17, 1
      %s249 = smul.addr %s248, 32
      %s250 = smul.addr %s249, 8
      %s251 = scalar_lea.vmem %s6, %s250
      %v253 = vld [vmem:[%s0] sm:$0x1]
      %v254 = vmul.f32 %v253, 0.001953125
      %v255 = vld [vmem:[%s0 + $0x1] sm:$0x1]
      %v256 = vmul.f32 %v255, 0.001953125
      %v257 = vmul.f32 %v254, %v254
      %v258 = vsub.f32 %v256, %v257
      %v259 = vmax.f32 %v258, 0.0
      %v260 = vld [vmem:[%s1] sm:$0x1]
      %v261 = vadd.f32 %v259, 0.8
      %v262 = vrsqrt.pop %v261
      %v263 = vmul.f32 %v260, %v262
      %v264 = vld [vmem:[%s2] sm:$0x1]
      %v265 = vmul.f32 %v254, %v263
      %v266 = vsub.f32 %v264, %v265
      %v267 = vld [vmem:[%s246] sm:$0xff]
      %v268 = vld [vmem:[%s246 + $0x8] sm:$0xff]
      %v269 = vld [vmem:[%s246 + $0x10] sm:$0xff]
      %v270 = vld [vmem:[%s246 + $0x18] sm:$0xff]
      %v271 = vld [vmem:[%s246 + $0x20] sm:$0xff]
      %v272 = vld [vmem:[%s246 + $0x28] sm:$0xff]
      %v273 = vld [vmem:[%s246 + $0x30] sm:$0xff]
      %v274 = vld [vmem:[%s246 + $0x38] sm:$0xff]
      %v275 = vld [vmem:[%s246 + $0x40] sm:$0xff]
      %v276 = vld [vmem:[%s246 + $0x48] sm:$0xff]
      %v277 = vld [vmem:[%s246 + $0x50] sm:$0xff]
      %v278 = vld [vmem:[%s246 + $0x58] sm:$0xff]
      %v279 = vld [vmem:[%s246 + $0x60] sm:$0xff]
      %v280 = vld [vmem:[%s246 + $0x68] sm:$0xff]
      %v281 = vld [vmem:[%s246 + $0x70] sm:$0xff]
      %v282 = vld [vmem:[%s246 + $0x78] sm:$0xff]
      %v283 = vld [vmem:[%s246 + $0x80] sm:$0xff]
      %v284 = vld [vmem:[%s246 + $0x88] sm:$0xff]
      %v285 = vld [vmem:[%s246 + $0x90] sm:$0xff]
      %v286 = vld [vmem:[%s246 + $0x98] sm:$0xff]
      %v287 = vld [vmem:[%s246 + $0xa0] sm:$0xff]
      %v288 = vld [vmem:[%s246 + $0xa8] sm:$0xff]
      %v289 = vld [vmem:[%s246 + $0xb0] sm:$0xff]
      %v290 = vld [vmem:[%s246 + $0xb8] sm:$0xff]
      %v291 = vld [vmem:[%s246 + $0xc0] sm:$0xff]
      %v292 = vld [vmem:[%s246 + $0xc8] sm:$0xff]
      %v293 = vld [vmem:[%s246 + $0xd0] sm:$0xff]
      %v294 = vld [vmem:[%s246 + $0xd8] sm:$0xff]
      %v295 = vld [vmem:[%s246 + $0xe0] sm:$0xff]
      %v296 = vld [vmem:[%s246 + $0xe8] sm:$0xff]
      %v297 = vld [vmem:[%s246 + $0xf0] sm:$0xff]
      %v298 = vld [vmem:[%s246 + $0xf8] sm:$0xff]
      %v300 = vlaneseq
      %v301 = vshrl.u32 %v300, 7
      %v302 = vsub.s32 0, %v301
      %v303 = vrot.slane %v263, %v302
      %v305 = vmul.f32 %v267, %v303
      %v306 = vmul.f32 %v268, %v303
      %v307 = vmul.f32 %v269, %v303
      %v308 = vmul.f32 %v270, %v303
      %v309 = vmul.f32 %v271, %v303
      %v310 = vmul.f32 %v272, %v303
      %v311 = vmul.f32 %v273, %v303
      %v312 = vmul.f32 %v274, %v303
      %v313 = vmul.f32 %v275, %v303
      %v314 = vmul.f32 %v276, %v303
      %v315 = vmul.f32 %v277, %v303
      %v316 = vmul.f32 %v278, %v303
      %v317 = vmul.f32 %v279, %v303
      %v318 = vmul.f32 %v280, %v303
      %v319 = vmul.f32 %v281, %v303
      %v320 = vmul.f32 %v282, %v303
      %v321 = vmul.f32 %v283, %v303
      %v322 = vmul.f32 %v284, %v303
      %v323 = vmul.f32 %v285, %v303
      %v324 = vmul.f32 %v286, %v303
      %v325 = vmul.f32 %v287, %v303
      %v326 = vmul.f32 %v288, %v303
      %v327 = vmul.f32 %v289, %v303
      %v328 = vmul.f32 %v290, %v303
      %v329 = vmul.f32 %v291, %v303
      %v330 = vmul.f32 %v292, %v303
      %v331 = vmul.f32 %v293, %v303
      %v332 = vmul.f32 %v294, %v303
      %v333 = vmul.f32 %v295, %v303
      %v334 = vmul.f32 %v296, %v303
      %v335 = vmul.f32 %v297, %v303
      %v336 = vmul.f32 %v298, %v303
      %v338 = vlaneseq
      %v339 = vshrl.u32 %v338, 7
      %v340 = vsub.s32 0, %v339
      %v341 = vrot.slane %v266, %v340
      %v343 = vadd.f32 %v305, %v341
      %v344 = vadd.f32 %v306, %v341
      %v345 = vadd.f32 %v307, %v341
      %v346 = vadd.f32 %v308, %v341
      %v347 = vadd.f32 %v309, %v341
      %v348 = vadd.f32 %v310, %v341
      %v349 = vadd.f32 %v311, %v341
      %v350 = vadd.f32 %v312, %v341
      %v351 = vadd.f32 %v313, %v341
      %v352 = vadd.f32 %v314, %v341
      %v353 = vadd.f32 %v315, %v341
      %v354 = vadd.f32 %v316, %v341
      %v355 = vadd.f32 %v317, %v341
      %v356 = vadd.f32 %v318, %v341
      %v357 = vadd.f32 %v319, %v341
      %v358 = vadd.f32 %v320, %v341
      %v359 = vadd.f32 %v321, %v341
      %v360 = vadd.f32 %v322, %v341
      %v361 = vadd.f32 %v323, %v341
      %v362 = vadd.f32 %v324, %v341
      %v363 = vadd.f32 %v325, %v341
      %v364 = vadd.f32 %v326, %v341
      %v365 = vadd.f32 %v327, %v341
      %v366 = vadd.f32 %v328, %v341
      %v367 = vadd.f32 %v329, %v341
      %v368 = vadd.f32 %v330, %v341
      %v369 = vadd.f32 %v331, %v341
      %v370 = vadd.f32 %v332, %v341
      %v371 = vadd.f32 %v333, %v341
      %v372 = vadd.f32 %v334, %v341
      %v373 = vadd.f32 %v335, %v341
      %v374 = vadd.f32 %v336, %v341
      %vm375 = vcmp.ge.f32.partialorder %v343, 0.0
      %vm376 = vcmp.ge.f32.partialorder %v344, 0.0
      %vm377 = vcmp.ge.f32.partialorder %v345, 0.0
      %vm378 = vcmp.ge.f32.partialorder %v346, 0.0
      %vm379 = vcmp.ge.f32.partialorder %v347, 0.0
      %vm380 = vcmp.ge.f32.partialorder %v348, 0.0
      %vm381 = vcmp.ge.f32.partialorder %v349, 0.0
      %vm382 = vcmp.ge.f32.partialorder %v350, 0.0
      %vm383 = vcmp.ge.f32.partialorder %v351, 0.0
      %vm384 = vcmp.ge.f32.partialorder %v352, 0.0
      %vm385 = vcmp.ge.f32.partialorder %v353, 0.0
      %vm386 = vcmp.ge.f32.partialorder %v354, 0.0
      %vm387 = vcmp.ge.f32.partialorder %v355, 0.0
      %vm388 = vcmp.ge.f32.partialorder %v356, 0.0
      %vm389 = vcmp.ge.f32.partialorder %v357, 0.0
      %vm390 = vcmp.ge.f32.partialorder %v358, 0.0
      %vm391 = vcmp.ge.f32.partialorder %v359, 0.0
      %vm392 = vcmp.ge.f32.partialorder %v360, 0.0
      %vm393 = vcmp.ge.f32.partialorder %v361, 0.0
      %vm394 = vcmp.ge.f32.partialorder %v362, 0.0
      %vm395 = vcmp.ge.f32.partialorder %v363, 0.0
      %vm396 = vcmp.ge.f32.partialorder %v364, 0.0
      %vm397 = vcmp.ge.f32.partialorder %v365, 0.0
      %vm398 = vcmp.ge.f32.partialorder %v366, 0.0
      %vm399 = vcmp.ge.f32.partialorder %v367, 0.0
      %vm400 = vcmp.ge.f32.partialorder %v368, 0.0
      %vm401 = vcmp.ge.f32.partialorder %v369, 0.0
      %vm402 = vcmp.ge.f32.partialorder %v370, 0.0
      %vm403 = vcmp.ge.f32.partialorder %v371, 0.0
      %vm404 = vcmp.ge.f32.partialorder %v372, 0.0
      %vm405 = vcmp.ge.f32.partialorder %v373, 0.0
      %vm406 = vcmp.ge.f32.partialorder %v374, 0.0
      %v407 = vmul.f32 %v343, 0.2
      %v408 = vmul.f32 %v344, 0.2
      %v409 = vmul.f32 %v345, 0.2
      %v410 = vmul.f32 %v346, 0.2
      %v411 = vmul.f32 %v347, 0.2
      %v412 = vmul.f32 %v348, 0.2
      %v413 = vmul.f32 %v349, 0.2
      %v414 = vmul.f32 %v350, 0.2
      %v415 = vmul.f32 %v351, 0.2
      %v416 = vmul.f32 %v352, 0.2
      %v417 = vmul.f32 %v353, 0.2
      %v418 = vmul.f32 %v354, 0.2
      %v419 = vmul.f32 %v355, 0.2
      %v420 = vmul.f32 %v356, 0.2
      %v421 = vmul.f32 %v357, 0.2
      %v422 = vmul.f32 %v358, 0.2
      %v423 = vmul.f32 %v359, 0.2
      %v424 = vmul.f32 %v360, 0.2
      %v425 = vmul.f32 %v361, 0.2
      %v426 = vmul.f32 %v362, 0.2
      %v427 = vmul.f32 %v363, 0.2
      %v428 = vmul.f32 %v364, 0.2
      %v429 = vmul.f32 %v365, 0.2
      %v430 = vmul.f32 %v366, 0.2
      %v431 = vmul.f32 %v367, 0.2
      %v432 = vmul.f32 %v368, 0.2
      %v433 = vmul.f32 %v369, 0.2
      %v434 = vmul.f32 %v370, 0.2
      %v435 = vmul.f32 %v371, 0.2
      %v436 = vmul.f32 %v372, 0.2
      %v437 = vmul.f32 %v373, 0.2
      %v438 = vmul.f32 %v374, 0.2
      %v439 = vsel %vm375, %v343, %v407
      %v440 = vsel %vm376, %v344, %v408
      %v441 = vsel %vm377, %v345, %v409
      %v442 = vsel %vm378, %v346, %v410
      %v443 = vsel %vm379, %v347, %v411
      %v444 = vsel %vm380, %v348, %v412
      %v445 = vsel %vm381, %v349, %v413
      %v446 = vsel %vm382, %v350, %v414
      %v447 = vsel %vm383, %v351, %v415
      %v448 = vsel %vm384, %v352, %v416
      %v449 = vsel %vm385, %v353, %v417
      %v450 = vsel %vm386, %v354, %v418
      %v451 = vsel %vm387, %v355, %v419
      %v452 = vsel %vm388, %v356, %v420
      %v453 = vsel %vm389, %v357, %v421
      %v454 = vsel %vm390, %v358, %v422
      %v455 = vsel %vm391, %v359, %v423
      %v456 = vsel %vm392, %v360, %v424
      %v457 = vsel %vm393, %v361, %v425
      %v458 = vsel %vm394, %v362, %v426
      %v459 = vsel %vm395, %v363, %v427
      %v460 = vsel %vm396, %v364, %v428
      %v461 = vsel %vm397, %v365, %v429
      %v462 = vsel %vm398, %v366, %v430
      %v463 = vsel %vm399, %v367, %v431
      %v464 = vsel %vm400, %v368, %v432
      %v465 = vsel %vm401, %v369, %v433
      %v466 = vsel %vm402, %v370, %v434
      %v467 = vsel %vm403, %v371, %v435
      %v468 = vsel %vm404, %v372, %v436
      %v469 = vsel %vm405, %v373, %v437
      %v470 = vsel %vm406, %v374, %v438
      %vm471 = vcmask 523264
      %472 = vst.msk [vmem:[#allocation2] sm:$0xff] %vm471, 0.0
      %473 = vst.msk [vmem:[#allocation2 + $0x8] sm:$0xff] %vm471, 0.0
      %vm474 = vcmask 517120
      %475 = vst.msk [vmem:[#allocation2 + $0x10] sm:$0x3] %vm474, 0.0
      %476 = vst.msk [vmem:[#allocation2 + $0x18] sm:$0xff] %vm471, 0.0
      %477 = vst.msk [vmem:[#allocation2 + $0x20] sm:$0xff] %vm471, 0.0
      %478 = vst.msk [vmem:[#allocation2 + $0x28] sm:$0x3] %vm474, 0.0
      %479 = vst.msk [vmem:[#allocation2 + $0x30] sm:$0xff] %vm471, 0.0
      %480 = vst.msk [vmem:[#allocation2 + $0x38] sm:$0xff] %vm471, 0.0
      %481 = vst.msk [vmem:[#allocation2 + $0x40] sm:$0x3] %vm474, 0.0
      %482 = vst.msk [vmem:[#allocation2 + $0x48] sm:$0xff] %vm471, 0.0
      %483 = vst.msk [vmem:[#allocation2 + $0x50] sm:$0xff] %vm471, 0.0
      %484 = vst.msk [vmem:[#allocation2 + $0x58] sm:$0x3] %vm474, 0.0
      %485 = vst.msk [vmem:[#allocation2 + $0x60] sm:$0xff] %vm471, 0.0
      %486 = vst.msk [vmem:[#allocation2 + $0x68] sm:$0xff] %vm471, 0.0
      %487 = vst.msk [vmem:[#allocation2 + $0x70] sm:$0x3] %vm474, 0.0
      %488 = vst.msk [vmem:[#allocation2 + $0x78] sm:$0xff] %vm471, 0.0
      %489 = vst.msk [vmem:[#allocation2 + $0x80] sm:$0xff] %vm471, 0.0
      %490 = vst.msk [vmem:[#allocation2 + $0x88] sm:$0x3] %vm474, 0.0
      %491 = vst.msk [vmem:[#allocation2 + $0x90] sm:$0xff] %vm471, 0.0
      %492 = vst.msk [vmem:[#allocation2 + $0x98] sm:$0xff] %vm471, 0.0
      %493 = vst.msk [vmem:[#allocation2 + $0xa0] sm:$0x3] %vm474, 0.0
      %494 = vst.msk [vmem:[#allocation2 + $0xa8] sm:$0xff] %vm471, 0.0
      %495 = vst.msk [vmem:[#allocation2 + $0xb0] sm:$0xff] %vm471, 0.0
      %496 = vst.msk [vmem:[#allocation2 + $0xb8] sm:$0x3] %vm474, 0.0
      %497 = vst.msk [vmem:[#allocation2 + $0xc0] sm:$0xff] %vm471, 0.0
      %498 = vst.msk [vmem:[#allocation2 + $0xc8] sm:$0xff] %vm471, 0.0
      %499 = vst.msk [vmem:[#allocation2 + $0xd0] sm:$0x3] %vm474, 0.0
      %500 = vst.msk [vmem:[#allocation2 + $0xd8] sm:$0xff] %vm471, 0.0
      %501 = vst.msk [vmem:[#allocation2 + $0xe0] sm:$0xff] %vm471, 0.0
      %502 = vst.msk [vmem:[#allocation2 + $0xe8] sm:$0x3] %vm474, 0.0
      %503 = vst.msk [vmem:[#allocation2 + $0xf0] sm:$0xff] %vm471, 0.0
      %504 = vst.msk [vmem:[#allocation2 + $0xf8] sm:$0xff] %vm471, 0.0
      %505 = vst.msk [vmem:[#allocation2 + $0x100] sm:$0x3] %vm474, 0.0
      %506 = vst.msk [vmem:[#allocation2 + $0x108] sm:$0xff] %vm471, 0.0
      %507 = vst.msk [vmem:[#allocation2 + $0x110] sm:$0xff] %vm471, 0.0
      %508 = vst.msk [vmem:[#allocation2 + $0x118] sm:$0x3] %vm474, 0.0
      %509 = vst.msk [vmem:[#allocation2 + $0x120] sm:$0xff] %vm471, 0.0
      %510 = vst.msk [vmem:[#allocation2 + $0x128] sm:$0xff] %vm471, 0.0
      %511 = vst.msk [vmem:[#allocation2 + $0x130] sm:$0x3] %vm474, 0.0
      %512 = vst.msk [vmem:[#allocation2 + $0x138] sm:$0xff] %vm471, 0.0
      %513 = vst.msk [vmem:[#allocation2 + $0x140] sm:$0xff] %vm471, 0.0
      %514 = vst.msk [vmem:[#allocation2 + $0x148] sm:$0x3] %vm474, 0.0
      %515 = vst.msk [vmem:[#allocation2 + $0x150] sm:$0xff] %vm471, 0.0
      %516 = vst.msk [vmem:[#allocation2 + $0x158] sm:$0xff] %vm471, 0.0
      %517 = vst.msk [vmem:[#allocation2 + $0x160] sm:$0x3] %vm474, 0.0
      %518 = vst.msk [vmem:[#allocation2 + $0x168] sm:$0xff] %vm471, 0.0
      %519 = vst.msk [vmem:[#allocation2 + $0x170] sm:$0xff] %vm471, 0.0
      %520 = vst.msk [vmem:[#allocation2 + $0x178] sm:$0x3] %vm474, 0.0
      %521 = vst.msk [vmem:[#allocation2 + $0x180] sm:$0xff] %vm471, 0.0
      %522 = vst.msk [vmem:[#allocation2 + $0x188] sm:$0xff] %vm471, 0.0
      %523 = vst.msk [vmem:[#allocation2 + $0x190] sm:$0x3] %vm474, 0.0
      %524 = vst.msk [vmem:[#allocation2 + $0x198] sm:$0xff] %vm471, 0.0
      %525 = vst.msk [vmem:[#allocation2 + $0x1a0] sm:$0xff] %vm471, 0.0
      %526 = vst.msk [vmem:[#allocation2 + $0x1a8] sm:$0x3] %vm474, 0.0
      %s527 = scalar_lea.vmem [#allocation2], 24
      %528 = vst.msk [vmem:[%s527 + $0x1] sm:$0xff] %vm471, %v439
      %529 = vst.msk [vmem:[%s527 + $0x9] sm:$0xff] %vm471, %v440
      %530 = vst.msk [vmem:[%s527 + $0x19] sm:$0xff] %vm471, %v441
      %531 = vst.msk [vmem:[%s527 + $0x21] sm:$0xff] %vm471, %v442
      %532 = vst.msk [vmem:[%s527 + $0x31] sm:$0xff] %vm471, %v443
      %533 = vst.msk [vmem:[%s527 + $0x39] sm:$0xff] %vm471, %v444
      %534 = vst.msk [vmem:[%s527 + $0x49] sm:$0xff] %vm471, %v445
      %535 = vst.msk [vmem:[%s527 + $0x51] sm:$0xff] %vm471, %v446
      %536 = vst.msk [vmem:[%s527 + $0x61] sm:$0xff] %vm471, %v447
      %537 = vst.msk [vmem:[%s527 + $0x69] sm:$0xff] %vm471, %v448
      %538 = vst.msk [vmem:[%s527 + $0x79] sm:$0xff] %vm471, %v449
      %539 = vst.msk [vmem:[%s527 + $0x81] sm:$0xff] %vm471, %v450
      %540 = vst.msk [vmem:[%s527 + $0x91] sm:$0xff] %vm471, %v451
      %541 = vst.msk [vmem:[%s527 + $0x99] sm:$0xff] %vm471, %v452
      %542 = vst.msk [vmem:[%s527 + $0xa9] sm:$0xff] %vm471, %v453
      %543 = vst.msk [vmem:[%s527 + $0xb1] sm:$0xff] %vm471, %v454
      %544 = vst.msk [vmem:[%s527 + $0xc1] sm:$0xff] %vm471, %v455
      %545 = vst.msk [vmem:[%s527 + $0xc9] sm:$0xff] %vm471, %v456
      %546 = vst.msk [vmem:[%s527 + $0xd9] sm:$0xff] %vm471, %v457
      %547 = vst.msk [vmem:[%s527 + $0xe1] sm:$0xff] %vm471, %v458
      %548 = vst.msk [vmem:[%s527 + $0xf1] sm:$0xff] %vm471, %v459
      %549 = vst.msk [vmem:[%s527 + $0xf9] sm:$0xff] %vm471, %v460
      %550 = vst.msk [vmem:[%s527 + $0x109] sm:$0xff] %vm471, %v461
      %551 = vst.msk [vmem:[%s527 + $0x111] sm:$0xff] %vm471, %v462
      %552 = vst.msk [vmem:[%s527 + $0x121] sm:$0xff] %vm471, %v463
      %553 = vst.msk [vmem:[%s527 + $0x129] sm:$0xff] %vm471, %v464
      %554 = vst.msk [vmem:[%s527 + $0x139] sm:$0xff] %vm471, %v465
      %555 = vst.msk [vmem:[%s527 + $0x141] sm:$0xff] %vm471, %v466
      %556 = vst.msk [vmem:[%s527 + $0x151] sm:$0xff] %vm471, %v467
      %557 = vst.msk [vmem:[%s527 + $0x159] sm:$0xff] %vm471, %v468
      %558 = vst.msk [vmem:[%s527 + $0x169] sm:$0xff] %vm471, %v469
      %559 = vst.msk [vmem:[%s527 + $0x171] sm:$0xff] %vm471, %v470
      %v560 = vld [vmem:[#allocation2] sm:$0xff]
      %v561 = vld [vmem:[#allocation2 + $0x8] sm:$0xff]
      %v562 = vld [vmem:[#allocation2 + $0x18] sm:$0xff]
      %v563 = vld [vmem:[#allocation2 + $0x20] sm:$0xff]
      %v564 = vld [vmem:[#allocation2 + $0x30] sm:$0xff]
      %v565 = vld [vmem:[#allocation2 + $0x38] sm:$0xff]
      %v566 = vld [vmem:[#allocation2 + $0x48] sm:$0xff]
      %v567 = vld [vmem:[#allocation2 + $0x50] sm:$0xff]
      %v568 = vld [vmem:[#allocation2 + $0x60] sm:$0xff]
      %v569 = vld [vmem:[#allocation2 + $0x68] sm:$0xff]
      %v570 = vld [vmem:[#allocation2 + $0x78] sm:$0xff]
      %v571 = vld [vmem:[#allocation2 + $0x80] sm:$0xff]
      %v572 = vld [vmem:[#allocation2 + $0x90] sm:$0xff]
      %v573 = vld [vmem:[#allocation2 + $0x98] sm:$0xff]
      %v574 = vld [vmem:[#allocation2 + $0xa8] sm:$0xff]
      %v575 = vld [vmem:[#allocation2 + $0xb0] sm:$0xff]
      %v576 = vld [vmem:[#allocation2 + $0xc0] sm:$0xff]
      %v577 = vld [vmem:[#allocation2 + $0xc8] sm:$0xff]
      %v578 = vld [vmem:[#allocation2 + $0xd8] sm:$0xff]
      %v579 = vld [vmem:[#allocation2 + $0xe0] sm:$0xff]
      %v580 = vld [vmem:[#allocation2 + $0xf0] sm:$0xff]
      %v581 = vld [vmem:[#allocation2 + $0xf8] sm:$0xff]
      %v582 = vld [vmem:[#allocation2 + $0x108] sm:$0xff]
      %v583 = vld [vmem:[#allocation2 + $0x110] sm:$0xff]
      %v584 = vld [vmem:[#allocation2 + $0x120] sm:$0xff]
      %v585 = vld [vmem:[#allocation2 + $0x128] sm:$0xff]
      %v586 = vld [vmem:[#allocation2 + $0x138] sm:$0xff]
      %v587 = vld [vmem:[#allocation2 + $0x140] sm:$0xff]
      %v588 = vld [vmem:[#allocation2 + $0x150] sm:$0xff]
      %v589 = vld [vmem:[#allocation2 + $0x158] sm:$0xff]
      %v590 = vld [vmem:[#allocation2 + $0x168] sm:$0xff]
      %v591 = vld [vmem:[#allocation2 + $0x170] sm:$0xff]
      %v592 = vld [vmem:[#allocation2 + $0x1] sm:$0xff]
      %v593 = vld [vmem:[#allocation2 + $0x9] sm:$0xff]
      %v594 = vld [vmem:[#allocation2 + $0x19] sm:$0xff]
      %v595 = vld [vmem:[#allocation2 + $0x21] sm:$0xff]
      %v596 = vld [vmem:[#allocation2 + $0x31] sm:$0xff]
      %v597 = vld [vmem:[#allocation2 + $0x39] sm:$0xff]
      %v598 = vld [vmem:[#allocation2 + $0x49] sm:$0xff]
      %v599 = vld [vmem:[#allocation2 + $0x51] sm:$0xff]
      %v600 = vld [vmem:[#allocation2 + $0x61] sm:$0xff]
      %v601 = vld [vmem:[#allocation2 + $0x69] sm:$0xff]
      %v602 = vld [vmem:[#allocation2 + $0x79] sm:$0xff]
      %v603 = vld [vmem:[#allocation2 + $0x81] sm:$0xff]
      %v604 = vld [vmem:[#allocation2 + $0x91] sm:$0xff]
      %v605 = vld [vmem:[#allocation2 + $0x99] sm:$0xff]
      %v606 = vld [vmem:[#allocation2 + $0xa9] sm:$0xff]
      %v607 = vld [vmem:[#allocation2 + $0xb1] sm:$0xff]
      %v608 = vld [vmem:[#allocation2 + $0xc1] sm:$0xff]
      %v609 = vld [vmem:[#allocation2 + $0xc9] sm:$0xff]
      %v610 = vld [vmem:[#allocation2 + $0xd9] sm:$0xff]
      %v611 = vld [vmem:[#allocation2 + $0xe1] sm:$0xff]
      %v612 = vld [vmem:[#allocation2 + $0xf1] sm:$0xff]
      %v613 = vld [vmem:[#allocation2 + $0xf9] sm:$0xff]
      %v614 = vld [vmem:[#allocation2 + $0x109] sm:$0xff]
      %v615 = vld [vmem:[#allocation2 + $0x111] sm:$0xff]
      %v616 = vld [vmem:[#allocation2 + $0x121] sm:$0xff]
      %v617 = vld [vmem:[#allocation2 + $0x129] sm:$0xff]
      %v618 = vld [vmem:[#allocation2 + $0x139] sm:$0xff]
      %v619 = vld [vmem:[#allocation2 + $0x141] sm:$0xff]
      %v620 = vld [vmem:[#allocation2 + $0x151] sm:$0xff]
      %v621 = vld [vmem:[#allocation2 + $0x159] sm:$0xff]
      %v622 = vld [vmem:[#allocation2 + $0x169] sm:$0xff]
      %v623 = vld [vmem:[#allocation2 + $0x171] sm:$0xff]
      %v624 = vld [vmem:[#allocation2 + $0x2] sm:$0xff]
      %v625 = vld [vmem:[#allocation2 + $0xa] sm:$0xff]
      %v626 = vld [vmem:[#allocation2 + $0x1a] sm:$0xff]
      %v627 = vld [vmem:[#allocation2 + $0x22] sm:$0xff]
      %v628 = vld [vmem:[#allocation2 + $0x32] sm:$0xff]
      %v629 = vld [vmem:[#allocation2 + $0x3a] sm:$0xff]
      %v630 = vld [vmem:[#allocation2 + $0x4a] sm:$0xff]
      %v631 = vld [vmem:[#allocation2 + $0x52] sm:$0xff]
      %v632 = vld [vmem:[#allocation2 + $0x62] sm:$0xff]
      %v633 = vld [vmem:[#allocation2 + $0x6a] sm:$0xff]
      %v634 = vld [vmem:[#allocation2 + $0x7a] sm:$0xff]
      %v635 = vld [vmem:[#allocation2 + $0x82] sm:$0xff]
      %v636 = vld [vmem:[#allocation2 + $0x92] sm:$0xff]
      %v637 = vld [vmem:[#allocation2 + $0x9a] sm:$0xff]
      %v638 = vld [vmem:[#allocation2 + $0xaa] sm:$0xff]
      %v639 = vld [vmem:[#allocation2 + $0xb2] sm:$0xff]
      %v640 = vld [vmem:[#allocation2 + $0xc2] sm:$0xff]
      %v641 = vld [vmem:[#allocation2 + $0xca] sm:$0xff]
      %v642 = vld [vmem:[#allocation2 + $0xda] sm:$0xff]
      %v643 = vld [vmem:[#allocation2 + $0xe2] sm:$0xff]
      %v644 = vld [vmem:[#allocation2 + $0xf2] sm:$0xff]
      %v645 = vld [vmem:[#allocation2 + $0xfa] sm:$0xff]
      %v646 = vld [vmem:[#allocation2 + $0x10a] sm:$0xff]
      %v647 = vld [vmem:[#allocation2 + $0x112] sm:$0xff]
      %v648 = vld [vmem:[#allocation2 + $0x122] sm:$0xff]
      %v649 = vld [vmem:[#allocation2 + $0x12a] sm:$0xff]
      %v650 = vld [vmem:[#allocation2 + $0x13a] sm:$0xff]
      %v651 = vld [vmem:[#allocation2 + $0x142] sm:$0xff]
      %v652 = vld [vmem:[#allocation2 + $0x152] sm:$0xff]
      %v653 = vld [vmem:[#allocation2 + $0x15a] sm:$0xff]
      %v654 = vld [vmem:[#allocation2 + $0x16a] sm:$0xff]
      %v655 = vld [vmem:[#allocation2 + $0x172] sm:$0xff]
      %v656 = vld [vmem:[%s527] sm:$0xff]
      %v657 = vld [vmem:[%s527 + $0x8] sm:$0xff]
      %v658 = vld [vmem:[%s527 + $0x18] sm:$0xff]
      %v659 = vld [vmem:[%s527 + $0x20] sm:$0xff]
      %v660 = vld [vmem:[%s527 + $0x30] sm:$0xff]
      %v661 = vld [vmem:[%s527 + $0x38] sm:$0xff]
      %v662 = vld [vmem:[%s527 + $0x48] sm:$0xff]
      %v663 = vld [vmem:[%s527 + $0x50] sm:$0xff]
      %v664 = vld [vmem:[%s527 + $0x60] sm:$0xff]
      %v665 = vld [vmem:[%s527 + $0x68] sm:$0xff]
      %v666 = vld [vmem:[%s527 + $0x78] sm:$0xff]
      %v667 = vld [vmem:[%s527 + $0x80] sm:$0xff]
      %v668 = vld [vmem:[%s527 + $0x90] sm:$0xff]
      %v669 = vld [vmem:[%s527 + $0x98] sm:$0xff]
      %v670 = vld [vmem:[%s527 + $0xa8] sm:$0xff]
      %v671 = vld [vmem:[%s527 + $0xb0] sm:$0xff]
      %v672 = vld [vmem:[%s527 + $0xc0] sm:$0xff]
      %v673 = vld [vmem:[%s527 + $0xc8] sm:$0xff]
      %v674 = vld [vmem:[%s527 + $0xd8] sm:$0xff]
      %v675 = vld [vmem:[%s527 + $0xe0] sm:$0xff]
      %v676 = vld [vmem:[%s527 + $0xf0] sm:$0xff]
      %v677 = vld [vmem:[%s527 + $0xf8] sm:$0xff]
      %v678 = vld [vmem:[%s527 + $0x108] sm:$0xff]
      %v679 = vld [vmem:[%s527 + $0x110] sm:$0xff]
      %v680 = vld [vmem:[%s527 + $0x120] sm:$0xff]
      %v681 = vld [vmem:[%s527 + $0x128] sm:$0xff]
      %v682 = vld [vmem:[%s527 + $0x138] sm:$0xff]
      %v683 = vld [vmem:[%s527 + $0x140] sm:$0xff]
      %v684 = vld [vmem:[%s527 + $0x150] sm:$0xff]
      %v685 = vld [vmem:[%s527 + $0x158] sm:$0xff]
      %v686 = vld [vmem:[%s527 + $0x168] sm:$0xff]
      %v687 = vld [vmem:[%s527 + $0x170] sm:$0xff]
      %v688 = vld [vmem:[%s527 + $0x1] sm:$0xff]
      %v689 = vld [vmem:[%s527 + $0x9] sm:$0xff]
      %v690 = vld [vmem:[%s527 + $0x19] sm:$0xff]
      %v691 = vld [vmem:[%s527 + $0x21] sm:$0xff]
      %v692 = vld [vmem:[%s527 + $0x31] sm:$0xff]
      %v693 = vld [vmem:[%s527 + $0x39] sm:$0xff]
      %v694 = vld [vmem:[%s527 + $0x49] sm:$0xff]
      %v695 = vld [vmem:[%s527 + $0x51] sm:$0xff]
      %v696 = vld [vmem:[%s527 + $0x61] sm:$0xff]
      %v697 = vld [vmem:[%s527 + $0x69] sm:$0xff]
      %v698 = vld [vmem:[%s527 + $0x79] sm:$0xff]
      %v699 = vld [vmem:[%s527 + $0x81] sm:$0xff]
      %v700 = vld [vmem:[%s527 + $0x91] sm:$0xff]
      %v701 = vld [vmem:[%s527 + $0x99] sm:$0xff]
      %v702 = vld [vmem:[%s527 + $0xa9] sm:$0xff]
      %v703 = vld [vmem:[%s527 + $0xb1] sm:$0xff]
      %v704 = vld [vmem:[%s527 + $0xc1] sm:$0xff]
      %v705 = vld [vmem:[%s527 + $0xc9] sm:$0xff]
      %v706 = vld [vmem:[%s527 + $0xd9] sm:$0xff]
      %v707 = vld [vmem:[%s527 + $0xe1] sm:$0xff]
      %v708 = vld [vmem:[%s527 + $0xf1] sm:$0xff]
      %v709 = vld [vmem:[%s527 + $0xf9] sm:$0xff]
      %v710 = vld [vmem:[%s527 + $0x109] sm:$0xff]
      %v711 = vld [vmem:[%s527 + $0x111] sm:$0xff]
      %v712 = vld [vmem:[%s527 + $0x121] sm:$0xff]
      %v713 = vld [vmem:[%s527 + $0x129] sm:$0xff]
      %v714 = vld [vmem:[%s527 + $0x139] sm:$0xff]
      %v715 = vld [vmem:[%s527 + $0x141] sm:$0xff]
      %v716 = vld [vmem:[%s527 + $0x151] sm:$0xff]
      %v717 = vld [vmem:[%s527 + $0x159] sm:$0xff]
      %v718 = vld [vmem:[%s527 + $0x169] sm:$0xff]
      %v719 = vld [vmem:[%s527 + $0x171] sm:$0xff]
      %v720 = vld [vmem:[%s527 + $0x2] sm:$0xff]
      %v721 = vld [vmem:[%s527 + $0xa] sm:$0xff]
      %v722 = vld [vmem:[%s527 + $0x1a] sm:$0xff]
      %v723 = vld [vmem:[%s527 + $0x22] sm:$0xff]
      %v724 = vld [vmem:[%s527 + $0x32] sm:$0xff]
      %v725 = vld [vmem:[%s527 + $0x3a] sm:$0xff]
      %v726 = vld [vmem:[%s527 + $0x4a] sm:$0xff]
      %v727 = vld [vmem:[%s527 + $0x52] sm:$0xff]
      %v728 = vld [vmem:[%s527 + $0x62] sm:$0xff]
      %v729 = vld [vmem:[%s527 + $0x6a] sm:$0xff]
      %v730 = vld [vmem:[%s527 + $0x7a] sm:$0xff]
      %v731 = vld [vmem:[%s527 + $0x82] sm:$0xff]
      %v732 = vld [vmem:[%s527 + $0x92] sm:$0xff]
      %v733 = vld [vmem:[%s527 + $0x9a] sm:$0xff]
      %v734 = vld [vmem:[%s527 + $0xaa] sm:$0xff]
      %v735 = vld [vmem:[%s527 + $0xb2] sm:$0xff]
      %v736 = vld [vmem:[%s527 + $0xc2] sm:$0xff]
      %v737 = vld [vmem:[%s527 + $0xca] sm:$0xff]
      %v738 = vld [vmem:[%s527 + $0xda] sm:$0xff]
      %v739 = vld [vmem:[%s527 + $0xe2] sm:$0xff]
      %v740 = vld [vmem:[%s527 + $0xf2] sm:$0xff]
      %v741 = vld [vmem:[%s527 + $0xfa] sm:$0xff]
      %v742 = vld [vmem:[%s527 + $0x10a] sm:$0xff]
      %v743 = vld [vmem:[%s527 + $0x112] sm:$0xff]
      %v744 = vld [vmem:[%s527 + $0x122] sm:$0xff]
      %v745 = vld [vmem:[%s527 + $0x12a] sm:$0xff]
      %v746 = vld [vmem:[%s527 + $0x13a] sm:$0xff]
      %v747 = vld [vmem:[%s527 + $0x142] sm:$0xff]
      %v748 = vld [vmem:[%s527 + $0x152] sm:$0xff]
      %v749 = vld [vmem:[%s527 + $0x15a] sm:$0xff]
      %v750 = vld [vmem:[%s527 + $0x16a] sm:$0xff]
      %v751 = vld [vmem:[%s527 + $0x172] sm:$0xff]
      %s752 = scalar_lea.vmem [#allocation2], 48
      %v753 = vld [vmem:[%s752] sm:$0xff]
      %v754 = vld [vmem:[%s752 + $0x8] sm:$0xff]
      %v755 = vld [vmem:[%s752 + $0x18] sm:$0xff]
      %v756 = vld [vmem:[%s752 + $0x20] sm:$0xff]
      %v757 = vld [vmem:[%s752 + $0x30] sm:$0xff]
      %v758 = vld [vmem:[%s752 + $0x38] sm:$0xff]
      %v759 = vld [vmem:[%s752 + $0x48] sm:$0xff]
      %v760 = vld [vmem:[%s752 + $0x50] sm:$0xff]
      %v761 = vld [vmem:[%s752 + $0x60] sm:$0xff]
      %v762 = vld [vmem:[%s752 + $0x68] sm:$0xff]
      %v763 = vld [vmem:[%s752 + $0x78] sm:$0xff]
      %v764 = vld [vmem:[%s752 + $0x80] sm:$0xff]
      %v765 = vld [vmem:[%s752 + $0x90] sm:$0xff]
      %v766 = vld [vmem:[%s752 + $0x98] sm:$0xff]
      %v767 = vld [vmem:[%s752 + $0xa8] sm:$0xff]
      %v768 = vld [vmem:[%s752 + $0xb0] sm:$0xff]
      %v769 = vld [vmem:[%s752 + $0xc0] sm:$0xff]
      %v770 = vld [vmem:[%s752 + $0xc8] sm:$0xff]
      %v771 = vld [vmem:[%s752 + $0xd8] sm:$0xff]
      %v772 = vld [vmem:[%s752 + $0xe0] sm:$0xff]
      %v773 = vld [vmem:[%s752 + $0xf0] sm:$0xff]
      %v774 = vld [vmem:[%s752 + $0xf8] sm:$0xff]
      %v775 = vld [vmem:[%s752 + $0x108] sm:$0xff]
      %v776 = vld [vmem:[%s752 + $0x110] sm:$0xff]
      %v777 = vld [vmem:[%s752 + $0x120] sm:$0xff]
      %v778 = vld [vmem:[%s752 + $0x128] sm:$0xff]
      %v779 = vld [vmem:[%s752 + $0x138] sm:$0xff]
      %v780 = vld [vmem:[%s752 + $0x140] sm:$0xff]
      %v781 = vld [vmem:[%s752 + $0x150] sm:$0xff]
      %v782 = vld [vmem:[%s752 + $0x158] sm:$0xff]
      %v783 = vld [vmem:[%s752 + $0x168] sm:$0xff]
      %v784 = vld [vmem:[%s752 + $0x170] sm:$0xff]
      %v785 = vld [vmem:[%s752 + $0x1] sm:$0xff]
      %v786 = vld [vmem:[%s752 + $0x9] sm:$0xff]
      %v787 = vld [vmem:[%s752 + $0x19] sm:$0xff]
      %v788 = vld [vmem:[%s752 + $0x21] sm:$0xff]
      %v789 = vld [vmem:[%s752 + $0x31] sm:$0xff]
      %v790 = vld [vmem:[%s752 + $0x39] sm:$0xff]
      %v791 = vld [vmem:[%s752 + $0x49] sm:$0xff]
      %v792 = vld [vmem:[%s752 + $0x51] sm:$0xff]
      %v793 = vld [vmem:[%s752 + $0x61] sm:$0xff]
      %v794 = vld [vmem:[%s752 + $0x69] sm:$0xff]
      %v795 = vld [vmem:[%s752 + $0x79] sm:$0xff]
      %v796 = vld [vmem:[%s752 + $0x81] sm:$0xff]
      %v797 = vld [vmem:[%s752 + $0x91] sm:$0xff]
      %v798 = vld [vmem:[%s752 + $0x99] sm:$0xff]
      %v799 = vld [vmem:[%s752 + $0xa9] sm:$0xff]
      %v800 = vld [vmem:[%s752 + $0xb1] sm:$0xff]
      %v801 = vld [vmem:[%s752 + $0xc1] sm:$0xff]
      %v802 = vld [vmem:[%s752 + $0xc9] sm:$0xff]
      %v803 = vld [vmem:[%s752 + $0xd9] sm:$0xff]
      %v804 = vld [vmem:[%s752 + $0xe1] sm:$0xff]
      %v805 = vld [vmem:[%s752 + $0xf1] sm:$0xff]
      %v806 = vld [vmem:[%s752 + $0xf9] sm:$0xff]
      %v807 = vld [vmem:[%s752 + $0x109] sm:$0xff]
      %v808 = vld [vmem:[%s752 + $0x111] sm:$0xff]
      %v809 = vld [vmem:[%s752 + $0x121] sm:$0xff]
      %v810 = vld [vmem:[%s752 + $0x129] sm:$0xff]
      %v811 = vld [vmem:[%s752 + $0x139] sm:$0xff]
      %v812 = vld [vmem:[%s752 + $0x141] sm:$0xff]
      %v813 = vld [vmem:[%s752 + $0x151] sm:$0xff]
      %v814 = vld [vmem:[%s752 + $0x159] sm:$0xff]
      %v815 = vld [vmem:[%s752 + $0x169] sm:$0xff]
      %v816 = vld [vmem:[%s752 + $0x171] sm:$0xff]
      %v817 = vld [vmem:[%s752 + $0x2] sm:$0xff]
      %v818 = vld [vmem:[%s752 + $0xa] sm:$0xff]
      %v819 = vld [vmem:[%s752 + $0x1a] sm:$0xff]
      %v820 = vld [vmem:[%s752 + $0x22] sm:$0xff]
      %v821 = vld [vmem:[%s752 + $0x32] sm:$0xff]
      %v822 = vld [vmem:[%s752 + $0x3a] sm:$0xff]
      %v823 = vld [vmem:[%s752 + $0x4a] sm:$0xff]
      %v824 = vld [vmem:[%s752 + $0x52] sm:$0xff]
      %v825 = vld [vmem:[%s752 + $0x62] sm:$0xff]
      %v826 = vld [vmem:[%s752 + $0x6a] sm:$0xff]
      %v827 = vld [vmem:[%s752 + $0x7a] sm:$0xff]
      %v828 = vld [vmem:[%s752 + $0x82] sm:$0xff]
      %v829 = vld [vmem:[%s752 + $0x92] sm:$0xff]
      %v830 = vld [vmem:[%s752 + $0x9a] sm:$0xff]
      %v831 = vld [vmem:[%s752 + $0xaa] sm:$0xff]
      %v832 = vld [vmem:[%s752 + $0xb2] sm:$0xff]
      %v833 = vld [vmem:[%s752 + $0xc2] sm:$0xff]
      %v834 = vld [vmem:[%s752 + $0xca] sm:$0xff]
      %v835 = vld [vmem:[%s752 + $0xda] sm:$0xff]
      %v836 = vld [vmem:[%s752 + $0xe2] sm:$0xff]
      %v837 = vld [vmem:[%s752 + $0xf2] sm:$0xff]
      %v838 = vld [vmem:[%s752 + $0xfa] sm:$0xff]
      %v839 = vld [vmem:[%s752 + $0x10a] sm:$0xff]
      %v840 = vld [vmem:[%s752 + $0x112] sm:$0xff]
      %v841 = vld [vmem:[%s752 + $0x122] sm:$0xff]
      %v842 = vld [vmem:[%s752 + $0x12a] sm:$0xff]
      %v843 = vld [vmem:[%s752 + $0x13a] sm:$0xff]
      %v844 = vld [vmem:[%s752 + $0x142] sm:$0xff]
      %v845 = vld [vmem:[%s752 + $0x152] sm:$0xff]
      %v846 = vld [vmem:[%s752 + $0x15a] sm:$0xff]
      %v847 = vld [vmem:[%s752 + $0x16a] sm:$0xff]
      %v848 = vld [vmem:[%s752 + $0x172] sm:$0xff]
      %881 = vrot.lane.b32.xlu0 %v592, 64
      %v882 = vpop.permute.xlu0 %881
      %883 = vrot.lane.b32.xlu0 %v593, 64
      %v884 = vpop.permute.xlu0 %883
      %885 = vrot.lane.b32.xlu0 %v594, 64
      %v886 = vpop.permute.xlu0 %885
      %887 = vrot.lane.b32.xlu0 %v595, 64
      %v888 = vpop.permute.xlu0 %887
      %889 = vrot.lane.b32.xlu0 %v596, 64
      %v890 = vpop.permute.xlu0 %889
      %891 = vrot.lane.b32.xlu0 %v597, 64
      %v892 = vpop.permute.xlu0 %891
      %893 = vrot.lane.b32.xlu0 %v598, 64
      %v894 = vpop.permute.xlu0 %893
      %895 = vrot.lane.b32.xlu0 %v599, 64
      %v896 = vpop.permute.xlu0 %895
      %897 = vrot.lane.b32.xlu0 %v600, 64
      %v898 = vpop.permute.xlu0 %897
      %899 = vrot.lane.b32.xlu0 %v601, 64
      %v900 = vpop.permute.xlu0 %899
      %901 = vrot.lane.b32.xlu0 %v602, 64
      %v902 = vpop.permute.xlu0 %901
      %903 = vrot.lane.b32.xlu0 %v603, 64
      %v904 = vpop.permute.xlu0 %903
      %905 = vrot.lane.b32.xlu0 %v604, 64
      %v906 = vpop.permute.xlu0 %905
      %907 = vrot.lane.b32.xlu0 %v605, 64
      %v908 = vpop.permute.xlu0 %907
      %909 = vrot.lane.b32.xlu0 %v606, 64
      %v910 = vpop.permute.xlu0 %909
      %911 = vrot.lane.b32.xlu0 %v607, 64
      %v912 = vpop.permute.xlu0 %911
      %913 = vrot.lane.b32.xlu0 %v608, 64
      %v914 = vpop.permute.xlu0 %913
      %915 = vrot.lane.b32.xlu0 %v609, 64
      %v916 = vpop.permute.xlu0 %915
      %917 = vrot.lane.b32.xlu0 %v610, 64
      %v918 = vpop.permute.xlu0 %917
      %919 = vrot.lane.b32.xlu0 %v611, 64
      %v920 = vpop.permute.xlu0 %919
      %921 = vrot.lane.b32.xlu0 %v612, 64
      %v922 = vpop.permute.xlu0 %921
      %923 = vrot.lane.b32.xlu0 %v613, 64
      %v924 = vpop.permute.xlu0 %923
      %925 = vrot.lane.b32.xlu0 %v614, 64
      %v926 = vpop.permute.xlu0 %925
      %927 = vrot.lane.b32.xlu0 %v615, 64
      %v928 = vpop.permute.xlu0 %927
      %929 = vrot.lane.b32.xlu0 %v616, 64
      %v930 = vpop.permute.xlu0 %929
      %931 = vrot.lane.b32.xlu0 %v617, 64
      %v932 = vpop.permute.xlu0 %931
      %933 = vrot.lane.b32.xlu0 %v618, 64
      %v934 = vpop.permute.xlu0 %933
      %935 = vrot.lane.b32.xlu0 %v619, 64
      %v936 = vpop.permute.xlu0 %935
      %937 = vrot.lane.b32.xlu0 %v620, 64
      %v938 = vpop.permute.xlu0 %937
      %939 = vrot.lane.b32.xlu0 %v621, 64
      %v940 = vpop.permute.xlu0 %939
      %941 = vrot.lane.b32.xlu0 %v622, 64
      %v942 = vpop.permute.xlu0 %941
      %943 = vrot.lane.b32.xlu0 %v623, 64
      %v944 = vpop.permute.xlu0 %943
      %1009 = vrot.lane.b32.xlu0 %v656, 64
      %v1010 = vpop.permute.xlu0 %1009
      %1011 = vrot.lane.b32.xlu0 %v657, 64
      %v1012 = vpop.permute.xlu0 %1011
      %1013 = vrot.lane.b32.xlu0 %v658, 64
      %v1014 = vpop.permute.xlu0 %1013
      %1015 = vrot.lane.b32.xlu0 %v659, 64
      %v1016 = vpop.permute.xlu0 %1015
      %1017 = vrot.lane.b32.xlu0 %v660, 64
      %v1018 = vpop.permute.xlu0 %1017
      %1019 = vrot.lane.b32.xlu0 %v661, 64
      %v1020 = vpop.permute.xlu0 %1019
      %1021 = vrot.lane.b32.xlu0 %v662, 64
      %v1022 = vpop.permute.xlu0 %1021
      %1023 = vrot.lane.b32.xlu0 %v663, 64
      %v1024 = vpop.permute.xlu0 %1023
      %1025 = vrot.lane.b32.xlu0 %v664, 64
      %v1026 = vpop.permute.xlu0 %1025
      %1027 = vrot.lane.b32.xlu0 %v665, 64
      %v1028 = vpop.permute.xlu0 %1027
      %1029 = vrot.lane.b32.xlu0 %v666, 64
      %v1030 = vpop.permute.xlu0 %1029
      %1031 = vrot.lane.b32.xlu0 %v667, 64
      %v1032 = vpop.permute.xlu0 %1031
      %1033 = vrot.lane.b32.xlu0 %v668, 64
      %v1034 = vpop.permute.xlu0 %1033
      %1035 = vrot.lane.b32.xlu0 %v669, 64
      %v1036 = vpop.permute.xlu0 %1035
      %1037 = vrot.lane.b32.xlu0 %v670, 64
      %v1038 = vpop.permute.xlu0 %1037
      %1039 = vrot.lane.b32.xlu0 %v671, 64
      %v1040 = vpop.permute.xlu0 %1039
      %1041 = vrot.lane.b32.xlu0 %v672, 64
      %v1042 = vpop.permute.xlu0 %1041
      %1043 = vrot.lane.b32.xlu0 %v673, 64
      %v1044 = vpop.permute.xlu0 %1043
      %1045 = vrot.lane.b32.xlu0 %v674, 64
      %v1046 = vpop.permute.xlu0 %1045
      %1047 = vrot.lane.b32.xlu0 %v675, 64
      %v1048 = vpop.permute.xlu0 %1047
      %1049 = vrot.lane.b32.xlu0 %v676, 64
      %v1050 = vpop.permute.xlu0 %1049
      %1051 = vrot.lane.b32.xlu0 %v677, 64
      %v1052 = vpop.permute.xlu0 %1051
      %1053 = vrot.lane.b32.xlu0 %v678, 64
      %v1054 = vpop.permute.xlu0 %1053
      %1055 = vrot.lane.b32.xlu0 %v679, 64
      %v1056 = vpop.permute.xlu0 %1055
      %1057 = vrot.lane.b32.xlu0 %v680, 64
      %v1058 = vpop.permute.xlu0 %1057
      %1059 = vrot.lane.b32.xlu0 %v681, 64
      %v1060 = vpop.permute.xlu0 %1059
      %1061 = vrot.lane.b32.xlu0 %v682, 64
      %v1062 = vpop.permute.xlu0 %1061
      %1063 = vrot.lane.b32.xlu0 %v683, 64
      %v1064 = vpop.permute.xlu0 %1063
      %1065 = vrot.lane.b32.xlu0 %v684, 64
      %v1066 = vpop.permute.xlu0 %1065
      %1067 = vrot.lane.b32.xlu0 %v685, 64
      %v1068 = vpop.permute.xlu0 %1067
      %1069 = vrot.lane.b32.xlu0 %v686, 64
      %v1070 = vpop.permute.xlu0 %1069
      %1071 = vrot.lane.b32.xlu0 %v687, 64
      %v1072 = vpop.permute.xlu0 %1071
      %1137 = vrot.lane.b32.xlu0 %v720, 64
      %v1138 = vpop.permute.xlu0 %1137
      %1139 = vrot.lane.b32.xlu0 %v721, 64
      %v1140 = vpop.permute.xlu0 %1139
      %1141 = vrot.lane.b32.xlu0 %v722, 64
      %v1142 = vpop.permute.xlu0 %1141
      %1143 = vrot.lane.b32.xlu0 %v723, 64
      %v1144 = vpop.permute.xlu0 %1143
      %1145 = vrot.lane.b32.xlu0 %v724, 64
      %v1146 = vpop.permute.xlu0 %1145
      %1147 = vrot.lane.b32.xlu0 %v725, 64
      %v1148 = vpop.permute.xlu0 %1147
      %1149 = vrot.lane.b32.xlu0 %v726, 64
      %v1150 = vpop.permute.xlu0 %1149
      %1151 = vrot.lane.b32.xlu0 %v727, 64
      %v1152 = vpop.permute.xlu0 %1151
      %1153 = vrot.lane.b32.xlu0 %v728, 64
      %v1154 = vpop.permute.xlu0 %1153
      %1155 = vrot.lane.b32.xlu0 %v729, 64
      %v1156 = vpop.permute.xlu0 %1155
      %1157 = vrot.lane.b32.xlu0 %v730, 64
      %v1158 = vpop.permute.xlu0 %1157
      %1159 = vrot.lane.b32.xlu0 %v731, 64
      %v1160 = vpop.permute.xlu0 %1159
      %1161 = vrot.lane.b32.xlu0 %v732, 64
      %v1162 = vpop.permute.xlu0 %1161
      %1163 = vrot.lane.b32.xlu0 %v733, 64
      %v1164 = vpop.permute.xlu0 %1163
      %1165 = vrot.lane.b32.xlu0 %v734, 64
      %v1166 = vpop.permute.xlu0 %1165
      %1167 = vrot.lane.b32.xlu0 %v735, 64
      %v1168 = vpop.permute.xlu0 %1167
      %1169 = vrot.lane.b32.xlu0 %v736, 64
      %v1170 = vpop.permute.xlu0 %1169
      %1171 = vrot.lane.b32.xlu0 %v737, 64
      %v1172 = vpop.permute.xlu0 %1171
      %1173 = vrot.lane.b32.xlu0 %v738, 64
      %v1174 = vpop.permute.xlu0 %1173
      %1175 = vrot.lane.b32.xlu0 %v739, 64
      %v1176 = vpop.permute.xlu0 %1175
      %1177 = vrot.lane.b32.xlu0 %v740, 64
      %v1178 = vpop.permute.xlu0 %1177
      %1179 = vrot.lane.b32.xlu0 %v741, 64
      %v1180 = vpop.permute.xlu0 %1179
      %1181 = vrot.lane.b32.xlu0 %v742, 64
      %v1182 = vpop.permute.xlu0 %1181
      %1183 = vrot.lane.b32.xlu0 %v743, 64
      %v1184 = vpop.permute.xlu0 %1183
      %1185 = vrot.lane.b32.xlu0 %v744, 64
      %v1186 = vpop.permute.xlu0 %1185
      %1187 = vrot.lane.b32.xlu0 %v745, 64
      %v1188 = vpop.permute.xlu0 %1187
      %1189 = vrot.lane.b32.xlu0 %v746, 64
      %v1190 = vpop.permute.xlu0 %1189
      %1191 = vrot.lane.b32.xlu0 %v747, 64
      %v1192 = vpop.permute.xlu0 %1191
      %1193 = vrot.lane.b32.xlu0 %v748, 64
      %v1194 = vpop.permute.xlu0 %1193
      %1195 = vrot.lane.b32.xlu0 %v749, 64
      %v1196 = vpop.permute.xlu0 %1195
      %1197 = vrot.lane.b32.xlu0 %v750, 64
      %v1198 = vpop.permute.xlu0 %1197
      %1199 = vrot.lane.b32.xlu0 %v751, 64
      %v1200 = vpop.permute.xlu0 %1199
      %1265 = vrot.lane.b32.xlu0 %v785, 64
      %v1266 = vpop.permute.xlu0 %1265
      %1267 = vrot.lane.b32.xlu0 %v786, 64
      %v1268 = vpop.permute.xlu0 %1267
      %1269 = vrot.lane.b32.xlu0 %v787, 64
      %v1270 = vpop.permute.xlu0 %1269
      %1271 = vrot.lane.b32.xlu0 %v788, 64
      %v1272 = vpop.permute.xlu0 %1271
      %1273 = vrot.lane.b32.xlu0 %v789, 64
      %v1274 = vpop.permute.xlu0 %1273
      %1275 = vrot.lane.b32.xlu0 %v790, 64
      %v1276 = vpop.permute.xlu0 %1275
      %1277 = vrot.lane.b32.xlu0 %v791, 64
      %v1278 = vpop.permute.xlu0 %1277
      %1279 = vrot.lane.b32.xlu0 %v792, 64
      %v1280 = vpop.permute.xlu0 %1279
      %1281 = vrot.lane.b32.xlu0 %v793, 64
      %v1282 = vpop.permute.xlu0 %1281
      %1283 = vrot.lane.b32.xlu0 %v794, 64
      %v1284 = vpop.permute.xlu0 %1283
      %1285 = vrot.lane.b32.xlu0 %v795, 64
      %v1286 = vpop.permute.xlu0 %1285
      %1287 = vrot.lane.b32.xlu0 %v796, 64
      %v1288 = vpop.permute.xlu0 %1287
      %1289 = vrot.lane.b32.xlu0 %v797, 64
      %v1290 = vpop.permute.xlu0 %1289
      %1291 = vrot.lane.b32.xlu0 %v798, 64
      %v1292 = vpop.permute.xlu0 %1291
      %1293 = vrot.lane.b32.xlu0 %v799, 64
      %v1294 = vpop.permute.xlu0 %1293
      %1295 = vrot.lane.b32.xlu0 %v800, 64
      %v1296 = vpop.permute.xlu0 %1295
      %1297 = vrot.lane.b32.xlu0 %v801, 64
      %v1298 = vpop.permute.xlu0 %1297
      %1299 = vrot.lane.b32.xlu0 %v802, 64
      %v1300 = vpop.permute.xlu0 %1299
      %1301 = vrot.lane.b32.xlu0 %v803, 64
      %v1302 = vpop.permute.xlu0 %1301
      %1303 = vrot.lane.b32.xlu0 %v804, 64
      %v1304 = vpop.permute.xlu0 %1303
      %1305 = vrot.lane.b32.xlu0 %v805, 64
      %v1306 = vpop.permute.xlu0 %1305
      %1307 = vrot.lane.b32.xlu0 %v806, 64
      %v1308 = vpop.permute.xlu0 %1307
      %1309 = vrot.lane.b32.xlu0 %v807, 64
      %v1310 = vpop.permute.xlu0 %1309
      %1311 = vrot.lane.b32.xlu0 %v808, 64
      %v1312 = vpop.permute.xlu0 %1311
      %1313 = vrot.lane.b32.xlu0 %v809, 64
      %v1314 = vpop.permute.xlu0 %1313
      %1315 = vrot.lane.b32.xlu0 %v810, 64
      %v1316 = vpop.permute.xlu0 %1315
      %1317 = vrot.lane.b32.xlu0 %v811, 64
      %v1318 = vpop.permute.xlu0 %1317
      %1319 = vrot.lane.b32.xlu0 %v812, 64
      %v1320 = vpop.permute.xlu0 %1319
      %1321 = vrot.lane.b32.xlu0 %v813, 64
      %v1322 = vpop.permute.xlu0 %1321
      %1323 = vrot.lane.b32.xlu0 %v814, 64
      %v1324 = vpop.permute.xlu0 %1323
      %1325 = vrot.lane.b32.xlu0 %v815, 64
      %v1326 = vpop.permute.xlu0 %1325
      %1327 = vrot.lane.b32.xlu0 %v816, 64
      %v1328 = vpop.permute.xlu0 %1327
      %v1361 = vsel %vm471, %v560, %v882
      %v1362 = vsel %vm471, %v561, %v884
      %v1363 = vsel %vm471, %v562, %v886
      %v1364 = vsel %vm471, %v563, %v888
      %v1365 = vsel %vm471, %v564, %v890
      %v1366 = vsel %vm471, %v565, %v892
      %v1367 = vsel %vm471, %v566, %v894
      %v1368 = vsel %vm471, %v567, %v896
      %v1369 = vsel %vm471, %v568, %v898
      %v1370 = vsel %vm471, %v569, %v900
      %v1371 = vsel %vm471, %v570, %v902
      %v1372 = vsel %vm471, %v571, %v904
      %v1373 = vsel %vm471, %v572, %v906
      %v1374 = vsel %vm471, %v573, %v908
      %v1375 = vsel %vm471, %v574, %v910
      %v1376 = vsel %vm471, %v575, %v912
      %v1377 = vsel %vm471, %v576, %v914
      %v1378 = vsel %vm471, %v577, %v916
      %v1379 = vsel %vm471, %v578, %v918
      %v1380 = vsel %vm471, %v579, %v920
      %v1381 = vsel %vm471, %v580, %v922
      %v1382 = vsel %vm471, %v581, %v924
      %v1383 = vsel %vm471, %v582, %v926
      %v1384 = vsel %vm471, %v583, %v928
      %v1385 = vsel %vm471, %v584, %v930
      %v1386 = vsel %vm471, %v585, %v932
      %v1387 = vsel %vm471, %v586, %v934
      %v1388 = vsel %vm471, %v587, %v936
      %v1389 = vsel %vm471, %v588, %v938
      %v1390 = vsel %vm471, %v589, %v940
      %v1391 = vsel %vm471, %v590, %v942
      %v1392 = vsel %vm471, %v591, %v944
      %v1393 = vsel %vm471, %v624, %v1010
      %v1394 = vsel %vm471, %v625, %v1012
      %v1395 = vsel %vm471, %v626, %v1014
      %v1396 = vsel %vm471, %v627, %v1016
      %v1397 = vsel %vm471, %v628, %v1018
      %v1398 = vsel %vm471, %v629, %v1020
      %v1399 = vsel %vm471, %v630, %v1022
      %v1400 = vsel %vm471, %v631, %v1024
      %v1401 = vsel %vm471, %v632, %v1026
      %v1402 = vsel %vm471, %v633, %v1028
      %v1403 = vsel %vm471, %v634, %v1030
      %v1404 = vsel %vm471, %v635, %v1032
      %v1405 = vsel %vm471, %v636, %v1034
      %v1406 = vsel %vm471, %v637, %v1036
      %v1407 = vsel %vm471, %v638, %v1038
      %v1408 = vsel %vm471, %v639, %v1040
      %v1409 = vsel %vm471, %v640, %v1042
      %v1410 = vsel %vm471, %v641, %v1044
      %v1411 = vsel %vm471, %v642, %v1046
      %v1412 = vsel %vm471, %v643, %v1048
      %v1413 = vsel %vm471, %v644, %v1050
      %v1414 = vsel %vm471, %v645, %v1052
      %v1415 = vsel %vm471, %v646, %v1054
      %v1416 = vsel %vm471, %v647, %v1056
      %v1417 = vsel %vm471, %v648, %v1058
      %v1418 = vsel %vm471, %v649, %v1060
      %v1419 = vsel %vm471, %v650, %v1062
      %v1420 = vsel %vm471, %v651, %v1064
      %v1421 = vsel %vm471, %v652, %v1066
      %v1422 = vsel %vm471, %v653, %v1068
      %v1423 = vsel %vm471, %v654, %v1070
      %v1424 = vsel %vm471, %v655, %v1072
      %v1425 = vsel %vm471, %v688, %v1138
      %v1426 = vsel %vm471, %v689, %v1140
      %v1427 = vsel %vm471, %v690, %v1142
      %v1428 = vsel %vm471, %v691, %v1144
      %v1429 = vsel %vm471, %v692, %v1146
      %v1430 = vsel %vm471, %v693, %v1148
      %v1431 = vsel %vm471, %v694, %v1150
      %v1432 = vsel %vm471, %v695, %v1152
      %v1433 = vsel %vm471, %v696, %v1154
      %v1434 = vsel %vm471, %v697, %v1156
      %v1435 = vsel %vm471, %v698, %v1158
      %v1436 = vsel %vm471, %v699, %v1160
      %v1437 = vsel %vm471, %v700, %v1162
      %v1438 = vsel %vm471, %v701, %v1164
      %v1439 = vsel %vm471, %v702, %v1166
      %v1440 = vsel %vm471, %v703, %v1168
      %v1441 = vsel %vm471, %v704, %v1170
      %v1442 = vsel %vm471, %v705, %v1172
      %v1443 = vsel %vm471, %v706, %v1174
      %v1444 = vsel %vm471, %v707, %v1176
      %v1445 = vsel %vm471, %v708, %v1178
      %v1446 = vsel %vm471, %v709, %v1180
      %v1447 = vsel %vm471, %v710, %v1182
      %v1448 = vsel %vm471, %v711, %v1184
      %v1449 = vsel %vm471, %v712, %v1186
      %v1450 = vsel %vm471, %v713, %v1188
      %v1451 = vsel %vm471, %v714, %v1190
      %v1452 = vsel %vm471, %v715, %v1192
      %v1453 = vsel %vm471, %v716, %v1194
      %v1454 = vsel %vm471, %v717, %v1196
      %v1455 = vsel %vm471, %v718, %v1198
      %v1456 = vsel %vm471, %v719, %v1200
      %v1457 = vsel %vm471, %v753, %v1266
      %v1458 = vsel %vm471, %v754, %v1268
      %v1459 = vsel %vm471, %v755, %v1270
      %v1460 = vsel %vm471, %v756, %v1272
      %v1461 = vsel %vm471, %v757, %v1274
      %v1462 = vsel %vm471, %v758, %v1276
      %v1463 = vsel %vm471, %v759, %v1278
      %v1464 = vsel %vm471, %v760, %v1280
      %v1465 = vsel %vm471, %v761, %v1282
      %v1466 = vsel %vm471, %v762, %v1284
      %v1467 = vsel %vm471, %v763, %v1286
      %v1468 = vsel %vm471, %v764, %v1288
      %v1469 = vsel %vm471, %v765, %v1290
      %v1470 = vsel %vm471, %v766, %v1292
      %v1471 = vsel %vm471, %v767, %v1294
      %v1472 = vsel %vm471, %v768, %v1296
      %v1473 = vsel %vm471, %v769, %v1298
      %v1474 = vsel %vm471, %v770, %v1300
      %v1475 = vsel %vm471, %v771, %v1302
      %v1476 = vsel %vm471, %v772, %v1304
      %v1477 = vsel %vm471, %v773, %v1306
      %v1478 = vsel %vm471, %v774, %v1308
      %v1479 = vsel %vm471, %v775, %v1310
      %v1480 = vsel %vm471, %v776, %v1312
      %v1481 = vsel %vm471, %v777, %v1314
      %v1482 = vsel %vm471, %v778, %v1316
      %v1483 = vsel %vm471, %v779, %v1318
      %v1484 = vsel %vm471, %v780, %v1320
      %v1485 = vsel %vm471, %v781, %v1322
      %v1486 = vsel %vm471, %v782, %v1324
      %v1487 = vsel %vm471, %v783, %v1326
      %v1488 = vsel %vm471, %v784, %v1328
      %v1489 = vpack.c.bf16 %v1362, %v1361
      %v1490 = vpack.c.bf16 %v1394, %v1393
      %v1491 = vpack.c.bf16 %v1426, %v1425
      %v1492 = vpack.c.bf16 %v1458, %v1457
      %v1493 = vpack.c.bf16 %v818, %v817
      %v1494 = vpack.c.bf16 %v1364, %v1363
      %v1495 = vpack.c.bf16 %v1396, %v1395
      %v1496 = vpack.c.bf16 %v1428, %v1427
      %v1497 = vpack.c.bf16 %v1460, %v1459
      %v1498 = vpack.c.bf16 %v820, %v819
      %v1499 = vpack.c.bf16 %v1366, %v1365
      %v1500 = vpack.c.bf16 %v1398, %v1397
      %v1501 = vpack.c.bf16 %v1430, %v1429
      %v1502 = vpack.c.bf16 %v1462, %v1461
      %v1503 = vpack.c.bf16 %v822, %v821
      %v1504 = vpack.c.bf16 %v1368, %v1367
      %v1505 = vpack.c.bf16 %v1400, %v1399
      %v1506 = vpack.c.bf16 %v1432, %v1431
      %v1507 = vpack.c.bf16 %v1464, %v1463
      %v1508 = vpack.c.bf16 %v824, %v823
      %v1509 = vpack.c.bf16 %v1370, %v1369
      %v1510 = vpack.c.bf16 %v1402, %v1401
      %v1511 = vpack.c.bf16 %v1434, %v1433
      %v1512 = vpack.c.bf16 %v1466, %v1465
      %v1513 = vpack.c.bf16 %v826, %v825
      %v1514 = vpack.c.bf16 %v1372, %v1371
      %v1515 = vpack.c.bf16 %v1404, %v1403
      %v1516 = vpack.c.bf16 %v1436, %v1435
      %v1517 = vpack.c.bf16 %v1468, %v1467
      %v1518 = vpack.c.bf16 %v828, %v827
      %v1519 = vpack.c.bf16 %v1374, %v1373
      %v1520 = vpack.c.bf16 %v1406, %v1405
      %v1521 = vpack.c.bf16 %v1438, %v1437
      %v1522 = vpack.c.bf16 %v1470, %v1469
      %v1523 = vpack.c.bf16 %v830, %v829
      %v1524 = vpack.c.bf16 %v1376, %v1375
      %v1525 = vpack.c.bf16 %v1408, %v1407
      %v1526 = vpack.c.bf16 %v1440, %v1439
      %v1527 = vpack.c.bf16 %v1472, %v1471
      %v1528 = vpack.c.bf16 %v832, %v831
      %v1529 = vpack.c.bf16 %v1378, %v1377
      %v1530 = vpack.c.bf16 %v1410, %v1409
      %v1531 = vpack.c.bf16 %v1442, %v1441
      %v1532 = vpack.c.bf16 %v1474, %v1473
      %v1533 = vpack.c.bf16 %v834, %v833
      %v1534 = vpack.c.bf16 %v1380, %v1379
      %v1535 = vpack.c.bf16 %v1412, %v1411
      %v1536 = vpack.c.bf16 %v1444, %v1443
      %v1537 = vpack.c.bf16 %v1476, %v1475
      %v1538 = vpack.c.bf16 %v836, %v835
      %v1539 = vpack.c.bf16 %v1382, %v1381
      %v1540 = vpack.c.bf16 %v1414, %v1413
      %v1541 = vpack.c.bf16 %v1446, %v1445
      %v1542 = vpack.c.bf16 %v1478, %v1477
      %v1543 = vpack.c.bf16 %v838, %v837
      %v1544 = vpack.c.bf16 %v1384, %v1383
      %v1545 = vpack.c.bf16 %v1416, %v1415
      %v1546 = vpack.c.bf16 %v1448, %v1447
      %v1547 = vpack.c.bf16 %v1480, %v1479
      %v1548 = vpack.c.bf16 %v840, %v839
      %v1549 = vpack.c.bf16 %v1386, %v1385
      %v1550 = vpack.c.bf16 %v1418, %v1417
      %v1551 = vpack.c.bf16 %v1450, %v1449
      %v1552 = vpack.c.bf16 %v1482, %v1481
      %v1553 = vpack.c.bf16 %v842, %v841
      %v1554 = vpack.c.bf16 %v1388, %v1387
      %v1555 = vpack.c.bf16 %v1420, %v1419
      %v1556 = vpack.c.bf16 %v1452, %v1451
      %v1557 = vpack.c.bf16 %v1484, %v1483
      %v1558 = vpack.c.bf16 %v844, %v843
      %v1559 = vpack.c.bf16 %v1390, %v1389
      %v1560 = vpack.c.bf16 %v1422, %v1421
      %v1561 = vpack.c.bf16 %v1454, %v1453
      %v1562 = vpack.c.bf16 %v1486, %v1485
      %v1563 = vpack.c.bf16 %v846, %v845
      %v1564 = vpack.c.bf16 %v1392, %v1391
      %v1565 = vpack.c.bf16 %v1424, %v1423
      %v1566 = vpack.c.bf16 %v1456, %v1455
      %v1567 = vpack.c.bf16 %v1488, %v1487
      %v1568 = vpack.c.bf16 %v848, %v847
      %v1569 = vld [vmem:[%s4] sm:$0xf]
      %v1570 = vld [vmem:[%s4 + $0x4] sm:$0xf]
      %v1571 = vld [vmem:[%s4 + $0x8] sm:$0xf]
      %v1572 = vld [vmem:[%s4 + $0xc] sm:$0xf]
      %v1573 = vld [vmem:[%s4 + $0x10] sm:$0xf]
      %v1574 = vld [vmem:[%s4 + $0x14] sm:$0xf]
      %v1575 = vld [vmem:[%s4 + $0x18] sm:$0xf]
      %v1576 = vld [vmem:[%s4 + $0x1c] sm:$0xf]
      %v1577 = vld [vmem:[%s4 + $0x20] sm:$0xf]
      %v1578 = vld [vmem:[%s4 + $0x24] sm:$0xf]
      %v1579 = vld [vmem:[%s4 + $0x28] sm:$0xf]
      %v1580 = vld [vmem:[%s4 + $0x2c] sm:$0xf]
      %v1581 = vld [vmem:[%s4 + $0x30] sm:$0xf]
      %v1582 = vld [vmem:[%s4 + $0x34] sm:$0xf]
      %v1583 = vld [vmem:[%s4 + $0x38] sm:$0xf]
      %v1584 = vld [vmem:[%s4 + $0x3c] sm:$0xf]
      %v1585 = vld [vmem:[%s4 + $0x40] sm:$0xf]
      %v1586 = vld [vmem:[%s4 + $0x44] sm:$0xf]
      %v1587 = vld [vmem:[%s4 + $0x48] sm:$0xf]
      %v1588 = vld [vmem:[%s4 + $0x4c] sm:$0xf]
      %v1589 = vld [vmem:[%s4 + $0x50] sm:$0xf]
      %v1590 = vld [vmem:[%s4 + $0x54] sm:$0xf]
      %v1591 = vld [vmem:[%s4 + $0x58] sm:$0xf]
      %v1592 = vld [vmem:[%s4 + $0x5c] sm:$0xf]
      %v1593 = vld [vmem:[%s4 + $0x60] sm:$0xf]
      %v1594 = vld [vmem:[%s4 + $0x64] sm:$0xf]
      %v1595 = vld [vmem:[%s4 + $0x68] sm:$0xf]
      %v1596 = vld [vmem:[%s4 + $0x6c] sm:$0xf]
      %v1597 = vld [vmem:[%s4 + $0x70] sm:$0xf]
      %v1598 = vld [vmem:[%s4 + $0x74] sm:$0xf]
      %v1599 = vld [vmem:[%s4 + $0x78] sm:$0xf]
      %v1600 = vld [vmem:[%s4 + $0x7c] sm:$0xf]
      %v1601 = vld [vmem:[%s4 + $0x80] sm:$0xf]
      %v1602 = vld [vmem:[%s4 + $0x84] sm:$0xf]
      %v1603 = vld [vmem:[%s4 + $0x88] sm:$0xf]
      %v1604 = vld [vmem:[%s4 + $0x8c] sm:$0xf]
      %v1605 = vld [vmem:[%s4 + $0x90] sm:$0xf]
      %v1606 = vld [vmem:[%s4 + $0x94] sm:$0xf]
      %v1607 = vld [vmem:[%s4 + $0x98] sm:$0xf]
      %v1608 = vld [vmem:[%s4 + $0x9c] sm:$0xf]
      %v1609 = vld [vmem:[%s4 + $0xa0] sm:$0xf]
      %v1610 = vld [vmem:[%s4 + $0xa4] sm:$0xf]
      %v1611 = vld [vmem:[%s4 + $0xa8] sm:$0xf]
      %v1612 = vld [vmem:[%s4 + $0xac] sm:$0xf]
      %v1613 = vld [vmem:[%s4 + $0xb0] sm:$0xf]
      %v1614 = vld [vmem:[%s4 + $0xb4] sm:$0xf]
      %v1615 = vld [vmem:[%s4 + $0xb8] sm:$0xf]
      %v1616 = vld [vmem:[%s4 + $0xbc] sm:$0xf]
      %v1617 = vld [vmem:[%s4 + $0xc0] sm:$0xf]
      %v1618 = vld [vmem:[%s4 + $0xc4] sm:$0xf]
      %v1619 = vld [vmem:[%s4 + $0xc8] sm:$0xf]
      %v1620 = vld [vmem:[%s4 + $0xcc] sm:$0xf]
      %v1621 = vld [vmem:[%s4 + $0xd0] sm:$0xf]
      %v1622 = vld [vmem:[%s4 + $0xd4] sm:$0xf]
      %v1623 = vld [vmem:[%s4 + $0xd8] sm:$0xf]
      %v1624 = vld [vmem:[%s4 + $0xdc] sm:$0xf]
      %v1625 = vld [vmem:[%s4 + $0xe0] sm:$0xf]
      %v1626 = vld [vmem:[%s4 + $0xe4] sm:$0xf]
      %v1627 = vld [vmem:[%s4 + $0xe8] sm:$0xf]
      %v1628 = vld [vmem:[%s4 + $0xec] sm:$0xf]
      %v1629 = vld [vmem:[%s4 + $0xf0] sm:$0xf]
      %v1630 = vld [vmem:[%s4 + $0xf4] sm:$0xf]
      %v1631 = vld [vmem:[%s4 + $0xf8] sm:$0xf]
      %v1632 = vld [vmem:[%s4 + $0xfc] sm:$0xf]
      %v1633 = vld [vmem:[%s4 + $0x100] sm:$0xf]
      %v1634 = vld [vmem:[%s4 + $0x104] sm:$0xf]
      %v1635 = vld [vmem:[%s4 + $0x108] sm:$0xf]
      %v1636 = vld [vmem:[%s4 + $0x10c] sm:$0xf]
      %v1637 = vld [vmem:[%s4 + $0x110] sm:$0xf]
      %v1638 = vld [vmem:[%s4 + $0x114] sm:$0xf]
      %v1639 = vld [vmem:[%s4 + $0x118] sm:$0xf]
      %v1640 = vld [vmem:[%s4 + $0x11c] sm:$0xf]
      %v1641 = vld [vmem:[%s5] sm:$0x1]
      %v1643 = vlaneseq
      %v1644 = vshrl.u32 %v1643, 7
      %v1645 = vsub.s32 0, %v1644
      %v1646 = vrot.slane %v1641, %v1645
      %v1720 = vunpack.c.l.b16 %v1569
      %v1721 = vunpack.c.l.b16 %v1570
      %v1722 = vunpack.c.l.b16 %v1571
      %v1723 = vunpack.c.l.b16 %v1572
      %v1724 = vunpack.c.l.b16 %v1573
      %v1725 = vunpack.c.l.b16 %v1574
      %v1726 = vunpack.c.l.b16 %v1575
      %v1727 = vunpack.c.l.b16 %v1576
      %v1728 = vunpack.c.l.b16 %v1577
      %v1729 = vunpack.c.l.b16 %v1578
      %v1730 = vunpack.c.l.b16 %v1579
      %v1731 = vunpack.c.l.b16 %v1580
      %v1732 = vunpack.c.l.b16 %v1581
      %v1733 = vunpack.c.l.b16 %v1582
      %v1734 = vunpack.c.l.b16 %v1583
      %v1735 = vunpack.c.l.b16 %v1584
      %v1736 = vunpack.c.l.b16 %v1585
      %v1737 = vunpack.c.l.b16 %v1586
      %v1738 = vunpack.c.l.b16 %v1587
      %v1739 = vunpack.c.l.b16 %v1588
      %v1740 = vunpack.c.l.b16 %v1589
      %v1741 = vunpack.c.l.b16 %v1590
      %v1742 = vunpack.c.l.b16 %v1591
      %v1743 = vunpack.c.l.b16 %v1592
      %v1744 = vunpack.c.l.b16 %v1593
      %v1745 = vunpack.c.l.b16 %v1594
      %v1746 = vunpack.c.l.b16 %v1595
      %v1747 = vunpack.c.l.b16 %v1596
      %v1748 = vunpack.c.l.b16 %v1597
      %v1749 = vunpack.c.l.b16 %v1598
      %v1750 = vunpack.c.l.b16 %v1599
      %v1751 = vunpack.c.l.b16 %v1600
      %v1752 = vunpack.c.l.b16 %v1601
      %v1753 = vunpack.c.l.b16 %v1602
      %v1754 = vunpack.c.l.b16 %v1603
      %v1755 = vunpack.c.l.b16 %v1604
      %v1756 = vunpack.c.l.b16 %v1605
      %v1757 = vunpack.c.l.b16 %v1606
      %v1758 = vunpack.c.l.b16 %v1607
      %v1759 = vunpack.c.l.b16 %v1608
      %v1760 = vunpack.c.l.b16 %v1609
      %v1761 = vunpack.c.l.b16 %v1610
      %v1762 = vunpack.c.l.b16 %v1611
      %v1763 = vunpack.c.l.b16 %v1612
      %v1764 = vunpack.c.l.b16 %v1613
      %v1765 = vunpack.c.l.b16 %v1614
      %v1766 = vunpack.c.l.b16 %v1615
      %v1767 = vunpack.c.l.b16 %v1616
      %v1768 = vunpack.c.l.b16 %v1617
      %v1769 = vunpack.c.l.b16 %v1618
      %v1770 = vunpack.c.l.b16 %v1619
      %v1771 = vunpack.c.l.b16 %v1620
      %v1772 = vunpack.c.l.b16 %v1621
      %v1773 = vunpack.c.l.b16 %v1622
      %v1774 = vunpack.c.l.b16 %v1623
      %v1775 = vunpack.c.l.b16 %v1624
      %v1776 = vunpack.c.l.b16 %v1625
      %v1777 = vunpack.c.l.b16 %v1626
      %v1778 = vunpack.c.l.b16 %v1627
      %v1779 = vunpack.c.l.b16 %v1628
      %v1780 = vunpack.c.l.b16 %v1629
      %v1781 = vunpack.c.l.b16 %v1630
      %v1782 = vunpack.c.l.b16 %v1631
      %v1783 = vunpack.c.l.b16 %v1632
      %v1784 = vunpack.c.l.b16 %v1633
      %v1785 = vunpack.c.l.b16 %v1634
      %v1786 = vunpack.c.l.b16 %v1635
      %v1787 = vunpack.c.l.b16 %v1636
      %v1788 = vunpack.c.l.b16 %v1637
      %v1789 = vunpack.c.l.b16 %v1638
      %v1790 = vunpack.c.l.b16 %v1639
      %v1791 = vunpack.c.l.b16 %v1640
      %v1792 = vpack.c.b16 %v1721, %v1720
      %v1793 = vpack.c.b16 %v1723, %v1722
      %v1794 = vpack.c.b16 %v1725, %v1724
      %v1795 = vpack.c.b16 %v1727, %v1726
      %v1796 = vpack.c.b16 %v1729, %v1728
      %v1797 = vpack.c.b16 %v1731, %v1730
      %v1798 = vpack.c.b16 %v1733, %v1732
      %v1799 = vpack.c.b16 %v1735, %v1734
      %v1800 = vpack.c.b16 %v1737, %v1736
      %v1801 = vpack.c.b16 %v1739, %v1738
      %v1802 = vpack.c.b16 %v1741, %v1740
      %v1803 = vpack.c.b16 %v1743, %v1742
      %v1804 = vpack.c.b16 %v1745, %v1744
      %v1805 = vpack.c.b16 %v1747, %v1746
      %v1806 = vpack.c.b16 %v1749, %v1748
      %v1807 = vpack.c.b16 %v1751, %v1750
      %v1808 = vpack.c.b16 %v1753, %v1752
      %v1809 = vpack.c.b16 %v1755, %v1754
      %v1810 = vpack.c.b16 %v1757, %v1756
      %v1811 = vpack.c.b16 %v1759, %v1758
      %v1812 = vpack.c.b16 %v1761, %v1760
      %v1813 = vpack.c.b16 %v1763, %v1762
      %v1814 = vpack.c.b16 %v1765, %v1764
      %v1815 = vpack.c.b16 %v1767, %v1766
      %v1816 = vpack.c.b16 %v1769, %v1768
      %v1817 = vpack.c.b16 %v1771, %v1770
      %v1818 = vpack.c.b16 %v1773, %v1772
      %v1819 = vpack.c.b16 %v1775, %v1774
      %v1820 = vpack.c.b16 %v1777, %v1776
      %v1821 = vpack.c.b16 %v1779, %v1778
      %v1822 = vpack.c.b16 %v1781, %v1780
      %v1823 = vpack.c.b16 %v1783, %v1782
      %v1824 = vpack.c.b16 %v1785, %v1784
      %v1825 = vpack.c.b16 %v1787, %v1786
      %v1826 = vpack.c.b16 %v1789, %v1788
      %v1827 = vpack.c.b16 %v1791, %v1790
      %v1865 = vsel %vm471, %v1493, 0
      %v1868 = vsel %vm471, %v1498, 0
      %v1871 = vsel %vm471, %v1503, 0
      %v1874 = vsel %vm471, %v1508, 0
      %v1877 = vsel %vm471, %v1513, 0
      %v1880 = vsel %vm471, %v1518, 0
      %v1883 = vsel %vm471, %v1523, 0
      %v1886 = vsel %vm471, %v1528, 0
      %v1889 = vsel %vm471, %v1533, 0
      %v1892 = vsel %vm471, %v1538, 0
      %v1895 = vsel %vm471, %v1543, 0
      %v1898 = vsel %vm471, %v1548, 0
      %v1901 = vsel %vm471, %v1553, 0
      %v1904 = vsel %vm471, %v1558, 0
      %v1907 = vsel %vm471, %v1563, 0
      %v1910 = vsel %vm471, %v1568, 0
      %1912 = vmatprep.subr.bf16.mxu0 0
      %1913 = vmatpush1.bf16.msra.mxu0 %v1792
      %1914 = vmatprep.subr.bf16.mxu0 0
      %1915 = vmatpush1.bf16.msra.mxu0 %v1793
      %1916 = vmatprep.subr.bf16.mxu0 0
      %1917 = vmatpush1.bf16.msra.mxu0 %v1794
      %1918 = vmatprep.subr.bf16.mxu0 0
      %1919 = vmatpush1.bf16.msra.mxu0 %v1795
      %1920 = vmatprep.subr.bf16.mxu0 0
      %1921 = vmatpush1.bf16.msra.mxu0 %v1796
      %1922 = vmatprep.subr.bf16.mxu0 0
      %1923 = vmatpush1.bf16.msra.mxu0 %v1797
      %1924 = vmatprep.subr.bf16.mxu0 0
      %1925 = vmatpush1.bf16.msra.mxu0 %v1798
      %1926 = vmatprep.subr.bf16.mxu0 0
      %1927 = vmatpush1.bf16.msra.mxu0 %v1799
      %1928 = vmatprep.subr.bf16.mxu0 0
      %1929 = vmatpush1.bf16.msra.mxu0 %v1800
      %1930 = vmatprep.subr.bf16.mxu0 0
      %1931 = vmatpush1.bf16.msra.mxu0 %v1801
      %1932 = vmatprep.subr.bf16.mxu0 0
      %1933 = vmatpush1.bf16.msra.mxu0 %v1802
      %1934 = vmatprep.subr.bf16.mxu0 0
      %1935 = vmatpush1.bf16.msra.mxu0 %v1803
      %1936 = vmatprep.subr.bf16.mxu0 0
      %1937 = vmatpush1.bf16.msra.mxu0 %v1804
      %1938 = vmatprep.subr.bf16.mxu0 0
      %1939 = vmatpush1.bf16.msra.mxu0 %v1805
      %1940 = vmatprep.subr.bf16.mxu0 0
      %1941 = vmatpush1.bf16.msra.mxu0 %v1806
      %1942 = vmatprep.subr.bf16.mxu0 0
      %1943 = vmatpush1.bf16.msra.mxu0 %v1807
      %1944 = vmatprep.mubr.bf16.mxu0 %v1490
      %1945 = vmatmul.mubr.bf16.gmra.mrb[0].mxu0 %v1489
      %v1946 = vpop.f32.mrb[0].mxu0
      %v1947 = vadd.f32 %v1646, %v1946
      %v1948 = vpop.f32.mrb[0].mxu0
      %v1949 = vpop.f32.mrb[0].mxu0
      %v1950 = vadd.f32 %v1646, %v1949
      %v1951 = vpop.f32.mrb[0].mxu0
      %1952 = vmatprep.mubr.bf16.mxu0 %v1495
      %1953 = vmatmul.mubr.bf16.gmra.mrb[0].mxu0 %v1494
      %v1954 = vpop.f32.mrb[0].mxu0
      %v1955 = vadd.f32 %v1646, %v1954
      %v1956 = vpop.f32.mrb[0].mxu0
      %v1957 = vpop.f32.mrb[0].mxu0
      %v1958 = vadd.f32 %v1646, %v1957
      %v1959 = vpop.f32.mrb[0].mxu0
      %1960 = vmatprep.mubr.bf16.mxu0 %v1500
      %1961 = vmatmul.mubr.bf16.gmra.mrb[0].mxu0 %v1499
      %v1962 = vpop.f32.mrb[0].mxu0
      %v1963 = vadd.f32 %v1646, %v1962
      %v1964 = vpop.f32.mrb[0].mxu0
      %v1965 = vpop.f32.mrb[0].mxu0
      %v1966 = vadd.f32 %v1646, %v1965
      %v1967 = vpop.f32.mrb[0].mxu0
      %1968 = vmatprep.mubr.bf16.mxu0 %v1505
      %1969 = vmatmul.mubr.bf16.gmra.mrb[0].mxu0 %v1504
      %v1970 = vpop.f32.mrb[0].mxu0
      %v1971 = vadd.f32 %v1646, %v1970
      %v1972 = vpop.f32.mrb[0].mxu0
      %v1973 = vpop.f32.mrb[0].mxu0
      %v1974 = vadd.f32 %v1646, %v1973
      %v1975 = vpop.f32.mrb[0].mxu0
      %1976 = vmatprep.mubr.bf16.mxu0 %v1510
      %1977 = vmatmul.mubr.bf16.gmra.mrb[0].mxu0 %v1509
      %v1978 = vpop.f32.mrb[0].mxu0
      %v1979 = vadd.f32 %v1646, %v1978
      %v1980 = vpop.f32.mrb[0].mxu0
      %v1981 = vpop.f32.mrb[0].mxu0
      %v1982 = vadd.f32 %v1646, %v1981
      %v1983 = vpop.f32.mrb[0].mxu0
      %1984 = vmatprep.mubr.bf16.mxu0 %v1515
      %1985 = vmatmul.mubr.bf16.gmra.mrb[0].mxu0 %v1514
      %v1986 = vpop.f32.mrb[0].mxu0
      %v1987 = vadd.f32 %v1646, %v1986
      %v1988 = vpop.f32.mrb[0].mxu0
      %v1989 = vpop.f32.mrb[0].mxu0
      %v1990 = vadd.f32 %v1646, %v1989
      %v1991 = vpop.f32.mrb[0].mxu0
      %1992 = vmatprep.mubr.bf16.mxu0 %v1520
      %1993 = vmatmul.mubr.bf16.gmra.mrb[0].mxu0 %v1519
      %v1994 = vpop.f32.mrb[0].mxu0
      %v1995 = vadd.f32 %v1646, %v1994
      %v1996 = vpop.f32.mrb[0].mxu0
      %v1997 = vpop.f32.mrb[0].mxu0
      %v1998 = vadd.f32 %v1646, %v1997
      %v1999 = vpop.f32.mrb[0].mxu0
      %2000 = vmatprep.mubr.bf16.mxu0 %v1525
      %2001 = vmatmul.mubr.bf16.gmra.mrb[0].mxu0 %v1524
      %v2002 = vpop.f32.mrb[0].mxu0
      %v2003 = vadd.f32 %v1646, %v2002
      %v2004 = vpop.f32.mrb[0].mxu0
      %v2005 = vpop.f32.mrb[0].mxu0
      %v2006 = vadd.f32 %v1646, %v2005
      %v2007 = vpop.f32.mrb[0].mxu0
      %2008 = vmatprep.mubr.bf16.mxu0 %v1530
      %2009 = vmatmul.mubr.bf16.gmra.mrb[0].mxu0 %v1529
      %v2010 = vpop.f32.mrb[0].mxu0
      %v2011 = vadd.f32 %v1646, %v2010
      %v2012 = vpop.f32.mrb[0].mxu0
      %v2013 = vpop.f32.mrb[0].mxu0
      %v2014 = vadd.f32 %v1646, %v2013
      %v2015 = vpop.f32.mrb[0].mxu0
      %2016 = vmatprep.mubr.bf16.mxu0 %v1535
      %2017 = vmatmul.mubr.bf16.gmra.mrb[0].mxu0 %v1534
      %v2018 = vpop.f32.mrb[0].mxu0
      %v2019 = vadd.f32 %v1646, %v2018
      %v2020 = vpop.f32.mrb[0].mxu0
      %v2021 = vpop.f32.mrb[0].mxu0
      %v2022 = vadd.f32 %v1646, %v2021
      %v2023 = vpop.f32.mrb[0].mxu0
      %2024 = vmatprep.mubr.bf16.mxu0 %v1540
      %2025 = vmatmul.mubr.bf16.gmra.mrb[0].mxu0 %v1539
      %v2026 = vpop.f32.mrb[0].mxu0
      %v2027 = vadd.f32 %v1646, %v2026
      %v2028 = vpop.f32.mrb[0].mxu0
      %v2029 = vpop.f32.mrb[0].mxu0
      %v2030 = vadd.f32 %v1646, %v2029
      %v2031 = vpop.f32.mrb[0].mxu0
      %2032 = vmatprep.mubr.bf16.mxu0 %v1545
      %2033 = vmatmul.mubr.bf16.gmra.mrb[0].mxu0 %v1544
      %v2034 = vpop.f32.mrb[0].mxu0
      %v2035 = vadd.f32 %v1646, %v2034
      %v2036 = vpop.f32.mrb[0].mxu0
      %v2037 = vpop.f32.mrb[0].mxu0
      %v2038 = vadd.f32 %v1646, %v2037
      %v2039 = vpop.f32.mrb[0].mxu0
      %2040 = vmatprep.mubr.bf16.mxu0 %v1550
      %2041 = vmatmul.mubr.bf16.gmra.mrb[0].mxu0 %v1549
      %v2042 = vpop.f32.mrb[0].mxu0
      %v2043 = vadd.f32 %v1646, %v2042
      %v2044 = vpop.f32.mrb[0].mxu0
      %v2045 = vpop.f32.mrb[0].mxu0
      %v2046 = vadd.f32 %v1646, %v2045
      %v2047 = vpop.f32.mrb[0].mxu0
      %2048 = vmatprep.mubr.bf16.mxu0 %v1555
      %2049 = vmatmul.mubr.bf16.gmra.mrb[0].mxu0 %v1554
      %v2050 = vpop.f32.mrb[0].mxu0
      %v2051 = vadd.f32 %v1646, %v2050
      %v2052 = vpop.f32.mrb[0].mxu0
      %v2053 = vpop.f32.mrb[0].mxu0
      %v2054 = vadd.f32 %v1646, %v2053
      %v2055 = vpop.f32.mrb[0].mxu0
      %2056 = vmatprep.mubr.bf16.mxu0 %v1560
      %2057 = vmatmul.mubr.bf16.gmra.mrb[0].mxu0 %v1559
      %v2058 = vpop.f32.mrb[0].mxu0
      %v2059 = vadd.f32 %v1646, %v2058
      %v2060 = vpop.f32.mrb[0].mxu0
      %v2061 = vpop.f32.mrb[0].mxu0
      %v2062 = vadd.f32 %v1646, %v2061
      %v2063 = vpop.f32.mrb[0].mxu0
      %2064 = vmatprep.mubr.bf16.mxu0 %v1565
      %2065 = vmatmul.mubr.bf16.gmra.mrb[0].mxu0 %v1564
      %v2066 = vpop.f32.mrb[0].mxu0
      %v2067 = vadd.f32 %v1646, %v2066
      %v2068 = vpop.f32.mrb[0].mxu0
      %v2069 = vpop.f32.mrb[0].mxu0
      %v2070 = vadd.f32 %v1646, %v2069
      %v2071 = vpop.f32.mrb[0].mxu0
      %2072 = vdwg.mxu0
      %2073 = vmatprep.subr.bf16.mxu0 0
      %2074 = vmatpush1.bf16.msra.mxu0 %v1808
      %2075 = vmatprep.subr.bf16.mxu0 0
      %2076 = vmatpush1.bf16.msra.mxu0 %v1809
      %2077 = vmatprep.subr.bf16.mxu0 0
      %2078 = vmatpush1.bf16.msra.mxu0 %v1810
      %2079 = vmatprep.subr.bf16.mxu0 0
      %2080 = vmatpush1.bf16.msra.mxu0 %v1811
      %2081 = vmatprep.subr.bf16.mxu0 0
      %2082 = vmatpush1.bf16.msra.mxu0 %v1812
      %2083 = vmatprep.subr.bf16.mxu0 0
      %2084 = vmatpush1.bf16.msra.mxu0 %v1813
      %2085 = vmatprep.subr.bf16.mxu0 0
      %2086 = vmatpush1.bf16.msra.mxu0 %v1814
      %2087 = vmatprep.subr.bf16.mxu0 0
      %2088 = vmatpush1.bf16.msra.mxu0 %v1815
      %2089 = vmatprep.subr.bf16.mxu0 0
      %2090 = vmatpush1.bf16.msra.mxu0 %v1816
      %2091 = vmatprep.subr.bf16.mxu0 0
      %2092 = vmatpush1.bf16.msra.mxu0 %v1817
      %2093 = vmatprep.subr.bf16.mxu0 0
      %2094 = vmatpush1.bf16.msra.mxu0 %v1818
      %2095 = vmatprep.subr.bf16.mxu0 0
      %2096 = vmatpush1.bf16.msra.mxu0 %v1819
      %2097 = vmatprep.subr.bf16.mxu0 0
      %2098 = vmatpush1.bf16.msra.mxu0 %v1820
      %2099 = vmatprep.subr.bf16.mxu0 0
      %2100 = vmatpush1.bf16.msra.mxu0 %v1821
      %2101 = vmatprep.subr.bf16.mxu0 0
      %2102 = vmatpush1.bf16.msra.mxu0 %v1822
      %2103 = vmatprep.subr.bf16.mxu0 0
      %2104 = vmatpush1.bf16.msra.mxu0 %v1823
      %2105 = vmatprep.mubr.bf16.mxu0 %v1492
      %2106 = vmatmul.mubr.bf16.gmra.mrb[0].mxu0 %v1491
      %v2107 = vpop.f32.mrb[0].mxu0
      %v2108 = vadd.f32 %v1947, %v2107
      %v2109 = vpop.f32.mrb[0].mxu0
      %v2110 = vpop.f32.mrb[0].mxu0
      %v2111 = vadd.f32 %v1950, %v2110
      %v2112 = vpop.f32.mrb[0].mxu0
      %2113 = vmatprep.mubr.bf16.mxu0 %v1497
      %2114 = vmatmul.mubr.bf16.gmra.mrb[0].mxu0 %v1496
      %v2115 = vpop.f32.mrb[0].mxu0
      %v2116 = vadd.f32 %v1955, %v2115
      %v2117 = vpop.f32.mrb[0].mxu0
      %v2118 = vpop.f32.mrb[0].mxu0
      %v2119 = vadd.f32 %v1958, %v2118
      %v2120 = vpop.f32.mrb[0].mxu0
      %2121 = vmatprep.mubr.bf16.mxu0 %v1502
      %2122 = vmatmul.mubr.bf16.gmra.mrb[0].mxu0 %v1501
      %v2123 = vpop.f32.mrb[0].mxu0
      %v2124 = vadd.f32 %v1963, %v2123
      %v2125 = vpop.f32.mrb[0].mxu0
      %v2126 = vpop.f32.mrb[0].mxu0
      %v2127 = vadd.f32 %v1966, %v2126
      %v2128 = vpop.f32.mrb[0].mxu0
      %2129 = vmatprep.mubr.bf16.mxu0 %v1507
      %2130 = vmatmul.mubr.bf16.gmra.mrb[0].mxu0 %v1506
      %v2131 = vpop.f32.mrb[0].mxu0
      %v2132 = vadd.f32 %v1971, %v2131
      %v2133 = vpop.f32.mrb[0].mxu0
      %v2134 = vpop.f32.mrb[0].mxu0
      %v2135 = vadd.f32 %v1974, %v2134
      %v2136 = vpop.f32.mrb[0].mxu0
      %2137 = vmatprep.mubr.bf16.mxu0 %v1512
      %2138 = vmatmul.mubr.bf16.gmra.mrb[0].mxu0 %v1511
      %v2139 = vpop.f32.mrb[0].mxu0
      %v2140 = vadd.f32 %v1979, %v2139
      %v2141 = vpop.f32.mrb[0].mxu0
      %v2142 = vpop.f32.mrb[0].mxu0
      %v2143 = vadd.f32 %v1982, %v2142
      %v2144 = vpop.f32.mrb[0].mxu0
      %2145 = vmatprep.mubr.bf16.mxu0 %v1517
      %2146 = vmatmul.mubr.bf16.gmra.mrb[0].mxu0 %v1516
      %v2147 = vpop.f32.mrb[0].mxu0
      %v2148 = vadd.f32 %v1987, %v2147
      %v2149 = vpop.f32.mrb[0].mxu0
      %v2150 = vpop.f32.mrb[0].mxu0
      %v2151 = vadd.f32 %v1990, %v2150
      %v2152 = vpop.f32.mrb[0].mxu0
      %2153 = vmatprep.mubr.bf16.mxu0 %v1522
      %2154 = vmatmul.mubr.bf16.gmra.mrb[0].mxu0 %v1521
      %v2155 = vpop.f32.mrb[0].mxu0
      %v2156 = vadd.f32 %v1995, %v2155
      %v2157 = vpop.f32.mrb[0].mxu0
      %v2158 = vpop.f32.mrb[0].mxu0
      %v2159 = vadd.f32 %v1998, %v2158
      %v2160 = vpop.f32.mrb[0].mxu0
      %2161 = vmatprep.mubr.bf16.mxu0 %v1527
      %2162 = vmatmul.mubr.bf16.gmra.mrb[0].mxu0 %v1526
      %v2163 = vpop.f32.mrb[0].mxu0
      %v2164 = vadd.f32 %v2003, %v2163
      %v2165 = vpop.f32.mrb[0].mxu0
      %v2166 = vpop.f32.mrb[0].mxu0
      %v2167 = vadd.f32 %v2006, %v2166
      %v2168 = vpop.f32.mrb[0].mxu0
      %2169 = vmatprep.mubr.bf16.mxu0 %v1532
      %2170 = vmatmul.mubr.bf16.gmra.mrb[0].mxu0 %v1531
      %v2171 = vpop.f32.mrb[0].mxu0
      %v2172 = vadd.f32 %v2011, %v2171
      %v2173 = vpop.f32.mrb[0].mxu0
      %v2174 = vpop.f32.mrb[0].mxu0
      %v2175 = vadd.f32 %v2014, %v2174
      %v2176 = vpop.f32.mrb[0].mxu0
      %2177 = vmatprep.mubr.bf16.mxu0 %v1537
      %2178 = vmatmul.mubr.bf16.gmra.mrb[0].mxu0 %v1536
      %v2179 = vpop.f32.mrb[0].mxu0
      %v2180 = vadd.f32 %v2019, %v2179
      %v2181 = vpop.f32.mrb[0].mxu0
      %v2182 = vpop.f32.mrb[0].mxu0
      %v2183 = vadd.f32 %v2022, %v2182
      %v2184 = vpop.f32.mrb[0].mxu0
      %2185 = vmatprep.mubr.bf16.mxu0 %v1542
      %2186 = vmatmul.mubr.bf16.gmra.mrb[0].mxu0 %v1541
      %v2187 = vpop.f32.mrb[0].mxu0
      %v2188 = vadd.f32 %v2027, %v2187
      %v2189 = vpop.f32.mrb[0].mxu0
      %v2190 = vpop.f32.mrb[0].mxu0
      %v2191 = vadd.f32 %v2030, %v2190
      %v2192 = vpop.f32.mrb[0].mxu0
      %2193 = vmatprep.mubr.bf16.mxu0 %v1547
      %2194 = vmatmul.mubr.bf16.gmra.mrb[0].mxu0 %v1546
      %v2195 = vpop.f32.mrb[0].mxu0
      %v2196 = vadd.f32 %v2035, %v2195
      %v2197 = vpop.f32.mrb[0].mxu0
      %v2198 = vpop.f32.mrb[0].mxu0
      %v2199 = vadd.f32 %v2038, %v2198
      %v2200 = vpop.f32.mrb[0].mxu0
      %2201 = vmatprep.mubr.bf16.mxu0 %v1552
      %2202 = vmatmul.mubr.bf16.gmra.mrb[0].mxu0 %v1551
      %v2203 = vpop.f32.mrb[0].mxu0
      %v2204 = vadd.f32 %v2043, %v2203
      %v2205 = vpop.f32.mrb[0].mxu0
      %v2206 = vpop.f32.mrb[0].mxu0
      %v2207 = vadd.f32 %v2046, %v2206
      %v2208 = vpop.f32.mrb[0].mxu0
      %2209 = vmatprep.mubr.bf16.mxu0 %v1557
      %2210 = vmatmul.mubr.bf16.gmra.mrb[0].mxu0 %v1556
      %v2211 = vpop.f32.mrb[0].mxu0
      %v2212 = vadd.f32 %v2051, %v2211
      %v2213 = vpop.f32.mrb[0].mxu0
      %v2214 = vpop.f32.mrb[0].mxu0
      %v2215 = vadd.f32 %v2054, %v2214
      %v2216 = vpop.f32.mrb[0].mxu0
      %2217 = vmatprep.mubr.bf16.mxu0 %v1562
      %2218 = vmatmul.mubr.bf16.gmra.mrb[0].mxu0 %v1561
      %v2219 = vpop.f32.mrb[0].mxu0
      %v2220 = vadd.f32 %v2059, %v2219
      %v2221 = vpop.f32.mrb[0].mxu0
      %v2222 = vpop.f32.mrb[0].mxu0
      %v2223 = vadd.f32 %v2062, %v2222
      %v2224 = vpop.f32.mrb[0].mxu0
      %2225 = vmatprep.mubr.bf16.mxu0 %v1567
      %2226 = vmatmul.mubr.bf16.gmra.mrb[0].mxu0 %v1566
      %v2227 = vpop.f32.mrb[0].mxu0
      %v2228 = vadd.f32 %v2067, %v2227
      %v2229 = vpop.f32.mrb[0].mxu0
      %v2230 = vpop.f32.mrb[0].mxu0
      %v2231 = vadd.f32 %v2070, %v2230
      %v2232 = vpop.f32.mrb[0].mxu0
      %2233 = vdwg.mxu0
      %2234 = vmatprep.subr.bf16.mxu0 0
      %2235 = vmatpush1.bf16.msra.mxu0 %v1824
      %2236 = vmatprep.subr.bf16.mxu0 0
      %2237 = vmatpush1.bf16.msra.mxu0 %v1825
      %2238 = vmatprep.subr.bf16.mxu0 0
      %2239 = vmatpush1.bf16.msra.mxu0 %v1826
      %2240 = vmatprep.subr.bf16.mxu0 0
      %2241 = vmatpush1.bf16.msra.mxu0 %v1827
      %2242 = vmatprep.subr.bf16.mxu0 0
      %2243 = vmatpush1.bf16.msra.mxu0 0
      %2244 = vmatprep.subr.bf16.mxu0 0
      %2245 = vmatpush1.bf16.msra.mxu0 0
      %2246 = vmatprep.subr.bf16.mxu0 0
      %2247 = vmatpush1.bf16.msra.mxu0 0
      %2248 = vmatprep.subr.bf16.mxu0 0
      %2249 = vmatpush1.bf16.msra.mxu0 0
      %2250 = vmatprep.subr.bf16.mxu0 0
      %2251 = vmatpush1.bf16.msra.mxu0 0
      %2252 = vmatprep.subr.bf16.mxu0 0
      %2253 = vmatpush1.bf16.msra.mxu0 0
      %2254 = vmatprep.subr.bf16.mxu0 0
      %2255 = vmatpush1.bf16.msra.mxu0 0
      %2256 = vmatprep.subr.bf16.mxu0 0
      %2257 = vmatpush1.bf16.msra.mxu0 0
      %2258 = vmatprep.subr.bf16.mxu0 0
      %2259 = vmatpush1.bf16.msra.mxu0 0
      %2260 = vmatprep.subr.bf16.mxu0 0
      %2261 = vmatpush1.bf16.msra.mxu0 0
      %2262 = vmatprep.subr.bf16.mxu0 0
      %2263 = vmatpush1.bf16.msra.mxu0 0
      %2264 = vmatprep.subr.bf16.mxu0 0
      %2265 = vmatpush1.bf16.msra.mxu0 0
      %2266 = vmatprep.mubr.bf16.mxu0 0
      %2267 = vmatmul.mubr.bf16.gmra.mrb[0].mxu0 %v1865
      %v2268 = vpop.f32.mrb[0].mxu0
      %v2269 = vadd.f32 %v2108, %v2268
      %v2270 = vpop.f32.mrb[0].mxu0
      %v2271 = vpop.f32.mrb[0].mxu0
      %v2272 = vadd.f32 %v2111, %v2271
      %v2273 = vpop.f32.mrb[0].mxu0
      %2274 = vmatprep.mubr.bf16.mxu0 0
      %2275 = vmatmul.mubr.bf16.gmra.mrb[0].mxu0 %v1868
      %v2276 = vpop.f32.mrb[0].mxu0
      %v2277 = vadd.f32 %v2116, %v2276
      %v2278 = vpop.f32.mrb[0].mxu0
      %v2279 = vpop.f32.mrb[0].mxu0
      %v2280 = vadd.f32 %v2119, %v2279
      %v2281 = vpop.f32.mrb[0].mxu0
      %2282 = vmatprep.mubr.bf16.mxu0 0
      %2283 = vmatmul.mubr.bf16.gmra.mrb[0].mxu0 %v1871
      %v2284 = vpop.f32.mrb[0].mxu0
      %v2285 = vadd.f32 %v2124, %v2284
      %v2286 = vpop.f32.mrb[0].mxu0
      %v2287 = vpop.f32.mrb[0].mxu0
      %v2288 = vadd.f32 %v2127, %v2287
      %v2289 = vpop.f32.mrb[0].mxu0
      %2290 = vmatprep.mubr.bf16.mxu0 0
      %2291 = vmatmul.mubr.bf16.gmra.mrb[0].mxu0 %v1874
      %v2292 = vpop.f32.mrb[0].mxu0
      %v2293 = vadd.f32 %v2132, %v2292
      %v2294 = vpop.f32.mrb[0].mxu0
      %v2295 = vpop.f32.mrb[0].mxu0
      %v2296 = vadd.f32 %v2135, %v2295
      %v2297 = vpop.f32.mrb[0].mxu0
      %2298 = vmatprep.mubr.bf16.mxu0 0
      %2299 = vmatmul.mubr.bf16.gmra.mrb[0].mxu0 %v1877
      %v2300 = vpop.f32.mrb[0].mxu0
      %v2301 = vadd.f32 %v2140, %v2300
      %v2302 = vpop.f32.mrb[0].mxu0
      %v2303 = vpop.f32.mrb[0].mxu0
      %v2304 = vadd.f32 %v2143, %v2303
      %v2305 = vpop.f32.mrb[0].mxu0
      %2306 = vmatprep.mubr.bf16.mxu0 0
      %2307 = vmatmul.mubr.bf16.gmra.mrb[0].mxu0 %v1880
      %v2308 = vpop.f32.mrb[0].mxu0
      %v2309 = vadd.f32 %v2148, %v2308
      %v2310 = vpop.f32.mrb[0].mxu0
      %v2311 = vpop.f32.mrb[0].mxu0
      %v2312 = vadd.f32 %v2151, %v2311
      %v2313 = vpop.f32.mrb[0].mxu0
      %2314 = vmatprep.mubr.bf16.mxu0 0
      %2315 = vmatmul.mubr.bf16.gmra.mrb[0].mxu0 %v1883
      %v2316 = vpop.f32.mrb[0].mxu0
      %v2317 = vadd.f32 %v2156, %v2316
      %v2318 = vpop.f32.mrb[0].mxu0
      %v2319 = vpop.f32.mrb[0].mxu0
      %v2320 = vadd.f32 %v2159, %v2319
      %v2321 = vpop.f32.mrb[0].mxu0
      %2322 = vmatprep.mubr.bf16.mxu0 0
      %2323 = vmatmul.mubr.bf16.gmra.mrb[0].mxu0 %v1886
      %v2324 = vpop.f32.mrb[0].mxu0
      %v2325 = vadd.f32 %v2164, %v2324
      %v2326 = vpop.f32.mrb[0].mxu0
      %v2327 = vpop.f32.mrb[0].mxu0
      %v2328 = vadd.f32 %v2167, %v2327
      %v2329 = vpop.f32.mrb[0].mxu0
      %2330 = vmatprep.mubr.bf16.mxu0 0
      %2331 = vmatmul.mubr.bf16.gmra.mrb[0].mxu0 %v1889
      %v2332 = vpop.f32.mrb[0].mxu0
      %v2333 = vadd.f32 %v2172, %v2332
      %v2334 = vpop.f32.mrb[0].mxu0
      %v2335 = vpop.f32.mrb[0].mxu0
      %v2336 = vadd.f32 %v2175, %v2335
      %v2337 = vpop.f32.mrb[0].mxu0
      %2338 = vmatprep.mubr.bf16.mxu0 0
      %2339 = vmatmul.mubr.bf16.gmra.mrb[0].mxu0 %v1892
      %v2340 = vpop.f32.mrb[0].mxu0
      %v2341 = vadd.f32 %v2180, %v2340
      %v2342 = vpop.f32.mrb[0].mxu0
      %v2343 = vpop.f32.mrb[0].mxu0
      %v2344 = vadd.f32 %v2183, %v2343
      %v2345 = vpop.f32.mrb[0].mxu0
      %2346 = vmatprep.mubr.bf16.mxu0 0
      %2347 = vmatmul.mubr.bf16.gmra.mrb[0].mxu0 %v1895
      %v2348 = vpop.f32.mrb[0].mxu0
      %v2349 = vadd.f32 %v2188, %v2348
      %v2350 = vpop.f32.mrb[0].mxu0
      %v2351 = vpop.f32.mrb[0].mxu0
      %v2352 = vadd.f32 %v2191, %v2351
      %v2353 = vpop.f32.mrb[0].mxu0
      %2354 = vmatprep.mubr.bf16.mxu0 0
      %2355 = vmatmul.mubr.bf16.gmra.mrb[0].mxu0 %v1898
      %v2356 = vpop.f32.mrb[0].mxu0
      %v2357 = vadd.f32 %v2196, %v2356
      %v2358 = vpop.f32.mrb[0].mxu0
      %v2359 = vpop.f32.mrb[0].mxu0
      %v2360 = vadd.f32 %v2199, %v2359
      %v2361 = vpop.f32.mrb[0].mxu0
      %2362 = vmatprep.mubr.bf16.mxu0 0
      %2363 = vmatmul.mubr.bf16.gmra.mrb[0].mxu0 %v1901
      %v2364 = vpop.f32.mrb[0].mxu0
      %v2365 = vadd.f32 %v2204, %v2364
      %v2366 = vpop.f32.mrb[0].mxu0
      %v2367 = vpop.f32.mrb[0].mxu0
      %v2368 = vadd.f32 %v2207, %v2367
      %v2369 = vpop.f32.mrb[0].mxu0
      %2370 = vmatprep.mubr.bf16.mxu0 0
      %2371 = vmatmul.mubr.bf16.gmra.mrb[0].mxu0 %v1904
      %v2372 = vpop.f32.mrb[0].mxu0
      %v2373 = vadd.f32 %v2212, %v2372
      %v2374 = vpop.f32.mrb[0].mxu0
      %v2375 = vpop.f32.mrb[0].mxu0
      %v2376 = vadd.f32 %v2215, %v2375
      %v2377 = vpop.f32.mrb[0].mxu0
      %2378 = vmatprep.mubr.bf16.mxu0 0
      %2379 = vmatmul.mubr.bf16.gmra.mrb[0].mxu0 %v1907
      %v2380 = vpop.f32.mrb[0].mxu0
      %v2381 = vadd.f32 %v2220, %v2380
      %v2382 = vpop.f32.mrb[0].mxu0
      %v2383 = vpop.f32.mrb[0].mxu0
      %v2384 = vadd.f32 %v2223, %v2383
      %v2385 = vpop.f32.mrb[0].mxu0
      %2386 = vmatprep.mubr.bf16.mxu0 0
      %2387 = vmatmul.mubr.bf16.gmra.mrb[0].mxu0 %v1910
      %v2388 = vpop.f32.mrb[0].mxu0
      %v2389 = vadd.f32 %v2228, %v2388
      %v2390 = vpop.f32.mrb[0].mxu0
      %v2391 = vpop.f32.mrb[0].mxu0
      %v2392 = vadd.f32 %v2231, %v2391
      %v2393 = vpop.f32.mrb[0].mxu0
      %2394 = vdwg.mxu0
      %v2395 = vtanh.pop %v2269
      %v2396 = vtanh.pop %v2272
      %v2397 = vtanh.pop %v2277
      %v2398 = vtanh.pop %v2280
      %v2399 = vtanh.pop %v2285
      %v2400 = vtanh.pop %v2288
      %v2401 = vtanh.pop %v2293
      %v2402 = vtanh.pop %v2296
      %v2403 = vtanh.pop %v2301
      %v2404 = vtanh.pop %v2304
      %v2405 = vtanh.pop %v2309
      %v2406 = vtanh.pop %v2312
      %v2407 = vtanh.pop %v2317
      %v2408 = vtanh.pop %v2320
      %v2409 = vtanh.pop %v2325
      %v2410 = vtanh.pop %v2328
      %v2411 = vtanh.pop %v2333
      %v2412 = vtanh.pop %v2336
      %v2413 = vtanh.pop %v2341
      %v2414 = vtanh.pop %v2344
      %v2415 = vtanh.pop %v2349
      %v2416 = vtanh.pop %v2352
      %v2417 = vtanh.pop %v2357
      %v2418 = vtanh.pop %v2360
      %v2419 = vtanh.pop %v2365
      %v2420 = vtanh.pop %v2368
      %v2421 = vtanh.pop %v2373
      %v2422 = vtanh.pop %v2376
      %v2423 = vtanh.pop %v2381
      %v2424 = vtanh.pop %v2384
      %v2425 = vtanh.pop %v2389
      %v2426 = vtanh.pop %v2392
      %2427 = vst [vmem:[%s251] sm:$0xff] %v2395
      %2428 = vst [vmem:[%s251 + $0x8] sm:$0xff] %v2396
      %2429 = vst [vmem:[%s251 + $0x10] sm:$0xff] %v2397
      %2430 = vst [vmem:[%s251 + $0x18] sm:$0xff] %v2398
      %2431 = vst [vmem:[%s251 + $0x20] sm:$0xff] %v2399
      %2432 = vst [vmem:[%s251 + $0x28] sm:$0xff] %v2400
      %2433 = vst [vmem:[%s251 + $0x30] sm:$0xff] %v2401
      %2434 = vst [vmem:[%s251 + $0x38] sm:$0xff] %v2402
      %2435 = vst [vmem:[%s251 + $0x40] sm:$0xff] %v2403
      %2436 = vst [vmem:[%s251 + $0x48] sm:$0xff] %v2404
      %2437 = vst [vmem:[%s251 + $0x50] sm:$0xff] %v2405
      %2438 = vst [vmem:[%s251 + $0x58] sm:$0xff] %v2406
      %2439 = vst [vmem:[%s251 + $0x60] sm:$0xff] %v2407
      %2440 = vst [vmem:[%s251 + $0x68] sm:$0xff] %v2408
      %2441 = vst [vmem:[%s251 + $0x70] sm:$0xff] %v2409
      %2442 = vst [vmem:[%s251 + $0x78] sm:$0xff] %v2410
      %2443 = vst [vmem:[%s251 + $0x80] sm:$0xff] %v2411
      %2444 = vst [vmem:[%s251 + $0x88] sm:$0xff] %v2412
      %2445 = vst [vmem:[%s251 + $0x90] sm:$0xff] %v2413
      %2446 = vst [vmem:[%s251 + $0x98] sm:$0xff] %v2414
      %2447 = vst [vmem:[%s251 + $0xa0] sm:$0xff] %v2415
      %2448 = vst [vmem:[%s251 + $0xa8] sm:$0xff] %v2416
      %2449 = vst [vmem:[%s251 + $0xb0] sm:$0xff] %v2417
      %2450 = vst [vmem:[%s251 + $0xb8] sm:$0xff] %v2418
      %2451 = vst [vmem:[%s251 + $0xc0] sm:$0xff] %v2419
      %2452 = vst [vmem:[%s251 + $0xc8] sm:$0xff] %v2420
      %2453 = vst [vmem:[%s251 + $0xd0] sm:$0xff] %v2421
      %2454 = vst [vmem:[%s251 + $0xd8] sm:$0xff] %v2422
      %2455 = vst [vmem:[%s251 + $0xe0] sm:$0xff] %v2423
      %2456 = vst [vmem:[%s251 + $0xe8] sm:$0xff] %v2424
      %2457 = vst [vmem:[%s251 + $0xf0] sm:$0xff] %v2425
      %2458 = vst [vmem:[%s251 + $0xf8] sm:$0xff] %v2426
      %p2459 = scmp.lt.s32.totalorder %s17, 1
      %s2460 = scalar_select %p2459, %s17, 1
      %s2461 = smul.addr %s2460, 32
      %s2462 = smul.addr %s2461, 8
      %s2463 = scalar_lea.vmem %s6, %s2462
      // Predicated region
      $region45: #{_lambda_.9} parent=43 // pred_check
        %p2464 = pneg %p166
      $region46: #{_lambda_.9} parent=43 // pred_check_branch
        %2466 = sbr.rel (%p2464) target = $region48
      $region47: #{_lambda_.9} parent=43 // pred_region
        _
      $region48: #{_lambda_.9} parent=43 // pred_fallthru
        _
    $region44: #{_lambda_.9} parent=5 // pred_fallthru
      _
    %p2467 = scmp.le.s32.totalorder 2, %s12
    // Predicated region
    $region49: #{_lambda_.9} parent=5 // pred_check
      %p2468 = pneg %p2467
    $region50: #{_lambda_.9} parent=5 // pred_check_branch
      %2470 = sbr.rel (%p2468) target = $region52
    $region51: #{_lambda_.9} parent=5 // pred_region
      %s2471 = ssub.s32 %s12, 2
      // Predicated region
      $region53: #{_lambda_.9} parent=51 // pred_check
        %p2472 = pneg %p172
      $region54: #{_lambda_.9} parent=51 // pred_check_branch
        %2474 = sbr.rel (%p2472) target = $region56
      $region55: #{_lambda_.9} parent=51 // pred_region
        %p2475 = scmp.lt.s32.totalorder %s18, 1
        %s2476 = scalar_select %p2475, %s18, 1
        %s2477 = smul.addr %s2476, 32
        %s2478 = smul.addr %s2477, 8
        %s2479 = scalar_lea.vmem %s6, %s2478
      $region56: #{_lambda_.9} parent=51 // pred_fallthru
        _
    $region52: #{_lambda_.9} parent=5 // pred_fallthru
      _
  $region6: #{_lambda_.9} parent=0 // loop_footer
    %s16 = sadd.s32 1, %s12
  $region7: #{_lambda_.9} parent=0 // loop_footer_branch
    %11 = sbr.rel target = $region3
  $region8: #{_lambda_.9} parent=0 // loop_exit
    _

</llo_original>
